<compile_context>
chip_gen: v5e
topology: v5e:2x2
jax: 0.10.0
libtpu: 0.0.40
codegen_flags: <defaults>
</compile_context>

<pallas_src>
import jax
import jax.numpy as jnp
from jax.experimental import pallas as pl

# ---------------- small RoBERTa-like config ----------------
B, S, H = 2, 8, 32          # batch, seq len, hidden size
N_LAYERS = 4                # hidden_states has N_LAYERS + 1 entries
N_HEADS = 4
D_HEAD = H // N_HEADS
FFN = 4 * H
VOCAB = 100
MAX_POS = 64
TYPE_VOCAB = 2
EPS = 1e-5
SCALE = 1.0 / (D_HEAD ** 0.5)
M = B * S                   # flattened tokens


def _layernorm(x, g, b, eps=EPS):
    mean = jnp.mean(x, axis=-1, keepdims=True)
    var = jnp.mean(jnp.square(x - mean), axis=-1, keepdims=True)
    return (x - mean) * jax.lax.rsqrt(var + eps) * g + b


# ---------------- single fused encoder kernel (no grid) ----------------
def _encoder_kernel(emb_ref, mask_ref, emb_ln_ref,
                    wqkv_ref, bqkv_ref, wo_ref, vec_ref,
                    w1_ref, b1_ref, w2_ref,
                    out_ref):
    # hidden_states[0]: embedding LayerNorm
    x = _layernorm(emb_ref[...], emb_ln_ref[0], emb_ln_ref[1])

    # Additive attention-mask bias, hoisted out of the layer loop:
    # 0 where keep, -1e9 where masked; broadcasts over the query axis.
    bias = ((1.0 - mask_ref[...]) * (-1e9))[:, None, :]          # (B, 1, S)

    # Running sum of the last-4 hidden states. hidden_states[s] is in the
    # last-4 iff s >= (N_LAYERS + 1) - 4; s = 0 is the embedding output.
    acc = x if (N_LAYERS + 1) <= 4 else jnp.zeros_like(x)

    for layer in range(N_LAYERS):                 # fully unrolled, static idx
        # ---- multi-head self-attention (leading-dim weight slices only) ----
        attn = jnp.zeros((M, H), jnp.float32)
        for h in range(N_HEADS):
            qi = (layer * 3 + 0) * N_HEADS + h
            ki = (layer * 3 + 1) * N_HEADS + h
            vi = (layer * 3 + 2) * N_HEADS + h
            qh = jnp.dot(x, wqkv_ref[qi],
                         preferred_element_type=jnp.float32) + bqkv_ref[qi]
            kh = jnp.dot(x, wqkv_ref[ki],
                         preferred_element_type=jnp.float32) + bqkv_ref[ki]
            vh = jnp.dot(x, wqkv_ref[vi],
                         preferred_element_type=jnp.float32) + bqkv_ref[vi]
            qh = qh.reshape(B, S, D_HEAD)          # leading-dim split: free
            kh = kh.reshape(B, S, D_HEAD)
            vh = vh.reshape(B, S, D_HEAD)
            s = jnp.einsum('bqd,bkd->bqk', qh, kh,
                           preferred_element_type=jnp.float32) * SCALE + bias
            s = s - jnp.max(s, axis=-1, keepdims=True)
            p = jnp.exp(s)
            p = p * pl.reciprocal(jnp.sum(p, axis=-1, keepdims=True),
                                  approx=True)
            ctx = jnp.einsum('bqk,bkd->bqd', p, vh,
                             preferred_element_type=jnp.float32)
            ctx = ctx.reshape(M, D_HEAD)
            # Output projection decomposed per head: sum_h ctx_h @ Wo[h-rows]
            attn = attn + jnp.dot(ctx, wo_ref[layer * N_HEADS + h],
                                  preferred_element_type=jnp.float32)
        attn = attn + vec_ref[layer * 6 + 0]                      # bo
        x1 = _layernorm(attn + x,
                        vec_ref[layer * 6 + 1], vec_ref[layer * 6 + 2])

        # ---- FFN + residual + LayerNorm ----
        h1 = jnp.dot(x1, w1_ref[layer],
                     preferred_element_type=jnp.float32) + b1_ref[layer]
        # TODO(synk): HF RoBERTa uses exact (erf) GELU; tanh approximation here.
        h1 = jax.nn.gelu(h1, approximate=True)
        ffn = jnp.dot(h1, w2_ref[layer],
                      preferred_element_type=jnp.float32) + vec_ref[layer * 6 + 3]
        x = _layernorm(ffn + x1,
                       vec_ref[layer * 6 + 4], vec_ref[layer * 6 + 5])

        if layer >= N_LAYERS - 4:                 # hidden_states[layer + 1]
            acc = acc + x

    # NOTE: (16, 32) output -> 32-lane masked store; negligible at 2 KB. A
    # lane-dense (4, 128) store only pays off if B/S/H are scaled up.
    out_ref[...] = acc.astype(out_ref.dtype)


# ---------------- parameters (deterministic synthetic init) ----------------
def init_params(key):
    def nrm(k, shape, scale=0.02):
        return scale * jax.random.normal(k, shape, dtype=jnp.float32)

    keys = iter(jax.random.split(key, 8))

    # Per-layer small vectors packed per layer as rows:
    #   [bo, ln1_g, ln1_b, b2, ln2_g, ln2_b]
    layer_vecs = jnp.stack([
        jnp.zeros((1, H), jnp.float32),   # bo
        jnp.ones((1, H), jnp.float32),    # ln1_g
        jnp.zeros((1, H), jnp.float32),   # ln1_b
        jnp.zeros((1, H), jnp.float32),   # b2
        jnp.ones((1, H), jnp.float32),    # ln2_g
        jnp.zeros((1, H), jnp.float32),   # ln2_b
    ], axis=0)                                                     # (6, 1, H)

    return {
        "word_emb": nrm(next(keys), (VOCAB, H)),
        "pos_emb": nrm(next(keys), (MAX_POS, H)),
        "type_emb": nrm(next(keys), (TYPE_VOCAB, H)),
        "emb_ln": jnp.concatenate(
            [jnp.ones((1, 1, H), jnp.float32),
             jnp.zeros((1, 1, H), jnp.float32)], axis=0),          # (2, 1, H)
        # Q/K/V weights, per layer / type(q,k,v) / head, flattened on the
        # leading axis so all in-kernel slicing is leading-dim (free).
        "wqkv": nrm(next(keys), (N_LAYERS * 3 * N_HEADS, H, D_HEAD)),
        "bqkv": jnp.zeros((N_LAYERS * 3 * N_HEADS, 1, D_HEAD), jnp.float32),
        # Attention output projection, per layer / head: (dh, H) row blocks.
        "wo": nrm(next(keys), (N_LAYERS * N_HEADS, D_HEAD, H)),
        "vecs": jnp.tile(layer_vecs, (N_LAYERS, 1, 1)),            # (L*6,1,H)
        "w1": nrm(next(keys), (N_LAYERS, H, FFN)),
        "b1": jnp.zeros((N_LAYERS, 1, FFN), jnp.float32),
        "w2": nrm(next(keys), (N_LAYERS, FFN, H)),
    }


# ---------------- forward ----------------
def comparison_sentence_words_embeddings(params, input_ids, token_type_ids,
                                         attention_mask):
    # Embedding table gathers are glue (plain JAX); everything else runs
    # inside one fused, grid-less Pallas kernel with all weights VMEM-resident.
    positions = jnp.arange(S)
    emb = (params["word_emb"][input_ids]
           + params["pos_emb"][positions][None, :, :]
           + params["type_emb"][token_type_ids])                   # (B, S, H)
    emb = emb.reshape(M, H).astype(jnp.float32)
    mask_f = attention_mask.astype(jnp.float32)                    # (B, S)

    out = pl.pallas_call(
        _encoder_kernel,
        out_shape=jax.ShapeDtypeStruct((M, H), jnp.float32),
    )(emb, mask_f, params["emb_ln"],
      params["wqkv"], params["bqkv"], params["wo"], params["vecs"],
      params["w1"], params["b1"], params["w2"])

    return out.reshape(B, S, H)


if __name__ == "__main__":
    key = jax.random.PRNGKey(0)
    pkey, ikey = jax.random.split(key)
    params = init_params(pkey)

    input_ids = jax.random.randint(ikey, (B, S), 0, VOCAB, dtype=jnp.int32)
    token_type_ids = jnp.zeros((B, S), dtype=jnp.int32)
    attention_mask = jnp.ones((B, S), dtype=jnp.int32)

    fwd = jax.jit(comparison_sentence_words_embeddings)
    out = fwd(params, input_ids, token_type_ids, attention_mask)
    out = jax.block_until_ready(out)
    assert out.shape == (B, S, H) and out.dtype == jnp.float32
    assert bool(jnp.all(jnp.isfinite(out)))
    print("KERNEL_OK")
</pallas_src>

<mosaic_0001>
module attributes {stable_mosaic.version = 11 : i64} {
  func.func @_encoder_kernel(%arg0: memref<16x32xf32, #tpu.memory_space<vmem>>, %arg1: memref<2x8xf32, #tpu.memory_space<vmem>>, %arg2: memref<2x1x32xf32, #tpu.memory_space<vmem>>, %arg3: memref<48x32x8xf32, #tpu.memory_space<vmem>>, %arg4: memref<48x1x8xf32, #tpu.memory_space<vmem>>, %arg5: memref<16x8x32xf32, #tpu.memory_space<vmem>>, %arg6: memref<24x1x32xf32, #tpu.memory_space<vmem>>, %arg7: memref<4x32x128xf32, #tpu.memory_space<vmem>>, %arg8: memref<4x1x128xf32, #tpu.memory_space<vmem>>, %arg9: memref<4x128x32xf32, #tpu.memory_space<vmem>>, %arg10: memref<16x32xf32, #tpu.memory_space<vmem>>) attributes {dimension_semantics = [], scalar_prefetch = 0 : i64, scratch_operands = 0 : i64, tpu.core_type = #tpu.core_type<tc>} {
    %c0 = arith.constant 0 : index
    %c0_0 = arith.constant 0 : index
    %0 = vector.load %arg0[%c0, %c0_0] : memref<16x32xf32, #tpu.memory_space<vmem>>, vector<16x32xf32>
    %c0_1 = arith.constant 0 : index
    %c0_2 = arith.constant 0 : index
    %c0_3 = arith.constant 0 : index
    %1 = vector.load %arg2[%c0_1, %c0_2, %c0_3] : memref<2x1x32xf32, #tpu.memory_space<vmem>>, vector<1x1x32xf32>
    %2 = vector.shape_cast %1 : vector<1x1x32xf32> to vector<1x32xf32>
    %c1 = arith.constant 1 : index
    %c0_4 = arith.constant 0 : index
    %c0_5 = arith.constant 0 : index
    %3 = vector.load %arg2[%c1, %c0_4, %c0_5] : memref<2x1x32xf32, #tpu.memory_space<vmem>>, vector<1x1x32xf32>
    %4 = vector.shape_cast %3 : vector<1x1x32xf32> to vector<1x32xf32>
    %cst = arith.constant dense<0.000000e+00> : vector<16xf32>
    %5 = vector.multi_reduction <add>, %0, %cst [1] : vector<16x32xf32> to vector<16xf32>
    %6 = vector.shape_cast %5 : vector<16xf32> to vector<16x1xf32>
    %cst_6 = arith.constant 3.200000e+01 : f32
    %7 = vector.broadcast %cst_6 : f32 to vector<16x1xf32>
    %8 = arith.divf %6, %7 : vector<16x1xf32>
    %9 = vector.broadcast %8 : vector<16x1xf32> to vector<16x32xf32>
    %10 = arith.subf %0, %9 : vector<16x32xf32>
    %11 = arith.mulf %10, %10 : vector<16x32xf32>
    %cst_7 = arith.constant dense<0.000000e+00> : vector<16xf32>
    %12 = vector.multi_reduction <add>, %11, %cst_7 [1] : vector<16x32xf32> to vector<16xf32>
    %13 = vector.shape_cast %12 : vector<16xf32> to vector<16x1xf32>
    %cst_8 = arith.constant 3.200000e+01 : f32
    %14 = vector.broadcast %cst_8 : f32 to vector<16x1xf32>
    %15 = arith.divf %13, %14 : vector<16x1xf32>
    %16 = vector.broadcast %8 : vector<16x1xf32> to vector<16x32xf32>
    %17 = arith.subf %0, %16 : vector<16x32xf32>
    %cst_9 = arith.constant 9.99999974E-6 : f32
    %18 = vector.broadcast %cst_9 : f32 to vector<16x1xf32>
    %19 = arith.addf %15, %18 : vector<16x1xf32>
    %20 = math.rsqrt %19 : vector<16x1xf32>
    %21 = vector.broadcast %20 : vector<16x1xf32> to vector<16x32xf32>
    %22 = arith.mulf %17, %21 : vector<16x32xf32>
    %23 = vector.broadcast %2 : vector<1x32xf32> to vector<16x32xf32>
    %24 = arith.mulf %22, %23 : vector<16x32xf32>
    %25 = vector.broadcast %4 : vector<1x32xf32> to vector<16x32xf32>
    %26 = arith.addf %24, %25 : vector<16x32xf32>
    %c0_10 = arith.constant 0 : index
    %c0_11 = arith.constant 0 : index
    %27 = vector.load %arg1[%c0_10, %c0_11] : memref<2x8xf32, #tpu.memory_space<vmem>>, vector<2x8xf32>
    %cst_12 = arith.constant 1.000000e+00 : f32
    %28 = vector.broadcast %cst_12 : f32 to vector<2x8xf32>
    %29 = arith.subf %28, %27 : vector<2x8xf32>
    %cst_13 = arith.constant -1.000000e+09 : f32
    %30 = vector.broadcast %cst_13 : f32 to vector<2x8xf32>
    %31 = arith.mulf %29, %30 : vector<2x8xf32>
    %32 = vector.shape_cast %31 : vector<2x8xf32> to vector<2x1x8xf32>
    %cst_14 = arith.constant 0.000000e+00 : f32
    %33 = vector.broadcast %cst_14 : f32 to vector<16x32xf32>
    %cst_15 = arith.constant 0.000000e+00 : f32
    %34 = vector.broadcast %cst_15 : f32 to vector<16x32xf32>
    %c0_16 = arith.constant 0 : index
    %c0_17 = arith.constant 0 : index
    %c0_18 = arith.constant 0 : index
    %35 = vector.load %arg3[%c0_16, %c0_17, %c0_18] : memref<48x32x8xf32, #tpu.memory_space<vmem>>, vector<1x32x8xf32>
    %36 = vector.shape_cast %35 : vector<1x32x8xf32> to vector<32x8xf32>
    %cst_19 = arith.constant dense<0.000000e+00> : vector<16x8xf32>
    %37 = tpu.matmul %26, %36, %cst_19 {dimension_numbers = #tpu.dot_dimension_numbers<[1], [0], [0], [1], [0, 0, 1, 1], [], []>} : vector<16x32xf32>, vector<32x8xf32>, vector<16x8xf32> -> vector<16x8xf32>
    %c0_20 = arith.constant 0 : index
    %c0_21 = arith.constant 0 : index
    %c0_22 = arith.constant 0 : index
    %38 = vector.load %arg4[%c0_20, %c0_21, %c0_22] : memref<48x1x8xf32, #tpu.memory_space<vmem>>, vector<1x1x8xf32>
    %39 = vector.shape_cast %38 : vector<1x1x8xf32> to vector<1x8xf32>
    %40 = vector.broadcast %39 : vector<1x8xf32> to vector<16x8xf32>
    %41 = arith.addf %37, %40 : vector<16x8xf32>
    %c4 = arith.constant 4 : index
    %c0_23 = arith.constant 0 : index
    %c0_24 = arith.constant 0 : index
    %42 = vector.load %arg3[%c4, %c0_23, %c0_24] : memref<48x32x8xf32, #tpu.memory_space<vmem>>, vector<1x32x8xf32>
    %43 = vector.shape_cast %42 : vector<1x32x8xf32> to vector<32x8xf32>
    %cst_25 = arith.constant dense<0.000000e+00> : vector<16x8xf32>
    %44 = tpu.matmul %26, %43, %cst_25 {dimension_numbers = #tpu.dot_dimension_numbers<[1], [0], [0], [1], [0, 0, 1, 1], [], []>} : vector<16x32xf32>, vector<32x8xf32>, vector<16x8xf32> -> vector<16x8xf32>
    %c4_26 = arith.constant 4 : index
    %c0_27 = arith.constant 0 : index
    %c0_28 = arith.constant 0 : index
    %45 = vector.load %arg4[%c4_26, %c0_27, %c0_28] : memref<48x1x8xf32, #tpu.memory_space<vmem>>, vector<1x1x8xf32>
    %46 = vector.shape_cast %45 : vector<1x1x8xf32> to vector<1x8xf32>
    %47 = vector.broadcast %46 : vector<1x8xf32> to vector<16x8xf32>
    %48 = arith.addf %44, %47 : vector<16x8xf32>
    %c8 = arith.constant 8 : index
    %c0_29 = arith.constant 0 : index
    %c0_30 = arith.constant 0 : index
    %49 = vector.load %arg3[%c8, %c0_29, %c0_30] : memref<48x32x8xf32, #tpu.memory_space<vmem>>, vector<1x32x8xf32>
    %50 = vector.shape_cast %49 : vector<1x32x8xf32> to vector<32x8xf32>
    %cst_31 = arith.constant dense<0.000000e+00> : vector<16x8xf32>
    %51 = tpu.matmul %26, %50, %cst_31 {dimension_numbers = #tpu.dot_dimension_numbers<[1], [0], [0], [1], [0, 0, 1, 1], [], []>} : vector<16x32xf32>, vector<32x8xf32>, vector<16x8xf32> -> vector<16x8xf32>
    %c8_32 = arith.constant 8 : index
    %c0_33 = arith.constant 0 : index
    %c0_34 = arith.constant 0 : index
    %52 = vector.load %arg4[%c8_32, %c0_33, %c0_34] : memref<48x1x8xf32, #tpu.memory_space<vmem>>, vector<1x1x8xf32>
    %53 = vector.shape_cast %52 : vector<1x1x8xf32> to vector<1x8xf32>
    %54 = vector.broadcast %53 : vector<1x8xf32> to vector<16x8xf32>
    %55 = arith.addf %51, %54 : vector<16x8xf32>
    %56 = vector.shape_cast %41 : vector<16x8xf32> to vector<2x8x8xf32>
    %57 = vector.shape_cast %48 : vector<16x8xf32> to vector<2x8x8xf32>
    %58 = vector.shape_cast %55 : vector<16x8xf32> to vector<2x8x8xf32>
    "tpu.trace_start"() <{level = 10 : i32, message = "bqd,bkd->bqk"}> : () -> ()
    %cst_35 = arith.constant dense<0.000000e+00> : vector<2x8x8xf32>
    %59 = tpu.matmul %56, %57, %cst_35 {dimension_numbers = #tpu.dot_dimension_numbers<[2], [2], [1], [1], [0, 0, 0, 1, 1, 1], [0], [0]>} : vector<2x8x8xf32>, vector<2x8x8xf32>, vector<2x8x8xf32> -> vector<2x8x8xf32>
    "tpu.trace_stop"() : () -> ()
    %cst_36 = arith.constant 0.353553385 : f32
    %60 = vector.broadcast %cst_36 : f32 to vector<2x8x8xf32>
    %61 = arith.mulf %59, %60 : vector<2x8x8xf32>
    %62 = vector.broadcast %32 : vector<2x1x8xf32> to vector<2x8x8xf32>
    %63 = arith.addf %61, %62 : vector<2x8x8xf32>
    %cst_37 = arith.constant dense<0xFF800000> : vector<2x8xf32>
    %64 = vector.multi_reduction <maximumf>, %63, %cst_37 [2] : vector<2x8x8xf32> to vector<2x8xf32>
    %65 = vector.shape_cast %64 : vector<2x8xf32> to vector<2x8x1xf32>
    %66 = vector.broadcast %65 : vector<2x8x1xf32> to vector<2x8x8xf32>
    %67 = arith.subf %63, %66 : vector<2x8x8xf32>
    %68 = math.exp %67 : vector<2x8x8xf32>
    %cst_38 = arith.constant dense<0.000000e+00> : vector<2x8xf32>
    %69 = vector.multi_reduction <add>, %68, %cst_38 [2] : vector<2x8x8xf32> to vector<2x8xf32>
    %70 = vector.shape_cast %69 : vector<2x8xf32> to vector<2x8x1xf32>
    %71 = tpu.reciprocal %70 {approx = true} : vector<2x8x1xf32> -> vector<2x8x1xf32>
    %72 = vector.broadcast %71 : vector<2x8x1xf32> to vector<2x8x8xf32>
    %73 = arith.mulf %68, %72 : vector<2x8x8xf32>
    "tpu.trace_start"() <{level = 10 : i32, message = "bqk,bkd->bqd"}> : () -> ()
    %cst_39 = arith.constant dense<0.000000e+00> : vector<2x8x8xf32>
    %74 = tpu.matmul %73, %58, %cst_39 {dimension_numbers = #tpu.dot_dimension_numbers<[2], [1], [1], [2], [0, 0, 0, 1, 1, 2], [0], [0]>} : vector<2x8x8xf32>, vector<2x8x8xf32>, vector<2x8x8xf32> -> vector<2x8x8xf32>
    "tpu.trace_stop"() : () -> ()
    %75 = vector.shape_cast %74 : vector<2x8x8xf32> to vector<16x8xf32>
    %c0_40 = arith.constant 0 : index
    %c0_41 = arith.constant 0 : index
    %c0_42 = arith.constant 0 : index
    %76 = vector.load %arg5[%c0_40, %c0_41, %c0_42] : memref<16x8x32xf32, #tpu.memory_space<vmem>>, vector<1x8x32xf32>
    %77 = vector.shape_cast %76 : vector<1x8x32xf32> to vector<8x32xf32>
    %cst_43 = arith.constant dense<0.000000e+00> : vector<16x32xf32>
    %78 = tpu.matmul %75, %77, %cst_43 {dimension_numbers = #tpu.dot_dimension_numbers<[1], [0], [0], [1], [0, 0, 1, 1], [], []>} : vector<16x8xf32>, vector<8x32xf32>, vector<16x32xf32> -> vector<16x32xf32>
    %79 = arith.addf %34, %78 : vector<16x32xf32>
    %c1_44 = arith.constant 1 : index
    %c0_45 = arith.constant 0 : index
    %c0_46 = arith.constant 0 : index
    %80 = vector.load %arg3[%c1_44, %c0_45, %c0_46] : memref<48x32x8xf32, #tpu.memory_space<vmem>>, vector<1x32x8xf32>
    %81 = vector.shape_cast %80 : vector<1x32x8xf32> to vector<32x8xf32>
    %cst_47 = arith.constant dense<0.000000e+00> : vector<16x8xf32>
    %82 = tpu.matmul %26, %81, %cst_47 {dimension_numbers = #tpu.dot_dimension_numbers<[1], [0], [0], [1], [0, 0, 1, 1], [], []>} : vector<16x32xf32>, vector<32x8xf32>, vector<16x8xf32> -> vector<16x8xf32>
    %c1_48 = arith.constant 1 : index
    %c0_49 = arith.constant 0 : index
    %c0_50 = arith.constant 0 : index
    %83 = vector.load %arg4[%c1_48, %c0_49, %c0_50] : memref<48x1x8xf32, #tpu.memory_space<vmem>>, vector<1x1x8xf32>
    %84 = vector.shape_cast %83 : vector<1x1x8xf32> to vector<1x8xf32>
    %85 = vector.broadcast %84 : vector<1x8xf32> to vector<16x8xf32>
    %86 = arith.addf %82, %85 : vector<16x8xf32>
    %c5 = arith.constant 5 : index
    %c0_51 = arith.constant 0 : index
    %c0_52 = arith.constant 0 : index
    %87 = vector.load %arg3[%c5, %c0_51, %c0_52] : memref<48x32x8xf32, #tpu.memory_space<vmem>>, vector<1x32x8xf32>
    %88 = vector.shape_cast %87 : vector<1x32x8xf32> to vector<32x8xf32>
    %cst_53 = arith.constant dense<0.000000e+00> : vector<16x8xf32>
    %89 = tpu.matmul %26, %88, %cst_53 {dimension_numbers = #tpu.dot_dimension_numbers<[1], [0], [0], [1], [0, 0, 1, 1], [], []>} : vector<16x32xf32>, vector<32x8xf32>, vector<16x8xf32> -> vector<16x8xf32>
    %c5_54 = arith.constant 5 : index
    %c0_55 = arith.constant 0 : index
    %c0_56 = arith.constant 0 : index
    %90 = vector.load %arg4[%c5_54, %c0_55, %c0_56] : memref<48x1x8xf32, #tpu.memory_space<vmem>>, vector<1x1x8xf32>
    %91 = vector.shape_cast %90 : vector<1x1x8xf32> to vector<1x8xf32>
    %92 = vector.broadcast %91 : vector<1x8xf32> to vector<16x8xf32>
    %93 = arith.addf %89, %92 : vector<16x8xf32>
    %c9 = arith.constant 9 : index
    %c0_57 = arith.constant 0 : index
    %c0_58 = arith.constant 0 : index
    %94 = vector.load %arg3[%c9, %c0_57, %c0_58] : memref<48x32x8xf32, #tpu.memory_space<vmem>>, vector<1x32x8xf32>
    %95 = vector.shape_cast %94 : vector<1x32x8xf32> to vector<32x8xf32>
    %cst_59 = arith.constant dense<0.000000e+00> : vector<16x8xf32>
    %96 = tpu.matmul %26, %95, %cst_59 {dimension_numbers = #tpu.dot_dimension_numbers<[1], [0], [0], [1], [0, 0, 1, 1], [], []>} : vector<16x32xf32>, vector<32x8xf32>, vector<16x8xf32> -> vector<16x8xf32>
    %c9_60 = arith.constant 9 : index
    %c0_61 = arith.constant 0 : index
    %c0_62 = arith.constant 0 : index
    %97 = vector.load %arg4[%c9_60, %c0_61, %c0_62] : memref<48x1x8xf32, #tpu.memory_space<vmem>>, vector<1x1x8xf32>
    %98 = vector.shape_cast %97 : vector<1x1x8xf32> to vector<1x8xf32>
    %99 = vector.broadcast %98 : vector<1x8xf32> to vector<16x8xf32>
    %100 = arith.addf %96, %99 : vector<16x8xf32>
    %101 = vector.shape_cast %86 : vector<16x8xf32> to vector<2x8x8xf32>
    %102 = vector.shape_cast %93 : vector<16x8xf32> to vector<2x8x8xf32>
    %103 = vector.shape_cast %100 : vector<16x8xf32> to vector<2x8x8xf32>
    "tpu.trace_start"() <{level = 10 : i32, message = "bqd,bkd->bqk"}> : () -> ()
    %cst_63 = arith.constant dense<0.000000e+00> : vector<2x8x8xf32>
    %104 = tpu.matmul %101, %102, %cst_63 {dimension_numbers = #tpu.dot_dimension_numbers<[2], [2], [1], [1], [0, 0, 0, 1, 1, 1], [0], [0]>} : vector<2x8x8xf32>, vector<2x8x8xf32>, vector<2x8x8xf32> -> vector<2x8x8xf32>
    "tpu.trace_stop"() : () -> ()
    %cst_64 = arith.constant 0.353553385 : f32
    %105 = vector.broadcast %cst_64 : f32 to vector<2x8x8xf32>
    %106 = arith.mulf %104, %105 : vector<2x8x8xf32>
    %107 = vector.broadcast %32 : vector<2x1x8xf32> to vector<2x8x8xf32>
    %108 = arith.addf %106, %107 : vector<2x8x8xf32>
    %cst_65 = arith.constant dense<0xFF800000> : vector<2x8xf32>
    %109 = vector.multi_reduction <maximumf>, %108, %cst_65 [2] : vector<2x8x8xf32> to vector<2x8xf32>
    %110 = vector.shape_cast %109 : vector<2x8xf32> to vector<2x8x1xf32>
    %111 = vector.broadcast %110 : vector<2x8x1xf32> to vector<2x8x8xf32>
    %112 = arith.subf %108, %111 : vector<2x8x8xf32>
    %113 = math.exp %112 : vector<2x8x8xf32>
    %cst_66 = arith.constant dense<0.000000e+00> : vector<2x8xf32>
    %114 = vector.multi_reduction <add>, %113, %cst_66 [2] : vector<2x8x8xf32> to vector<2x8xf32>
    %115 = vector.shape_cast %114 : vector<2x8xf32> to vector<2x8x1xf32>
    %116 = tpu.reciprocal %115 {approx = true} : vector<2x8x1xf32> -> vector<2x8x1xf32>
    %117 = vector.broadcast %116 : vector<2x8x1xf32> to vector<2x8x8xf32>
    %118 = arith.mulf %113, %117 : vector<2x8x8xf32>
    "tpu.trace_start"() <{level = 10 : i32, message = "bqk,bkd->bqd"}> : () -> ()
    %cst_67 = arith.constant dense<0.000000e+00> : vector<2x8x8xf32>
    %119 = tpu.matmul %118, %103, %cst_67 {dimension_numbers = #tpu.dot_dimension_numbers<[2], [1], [1], [2], [0, 0, 0, 1, 1, 2], [0], [0]>} : vector<2x8x8xf32>, vector<2x8x8xf32>, vector<2x8x8xf32> -> vector<2x8x8xf32>
    "tpu.trace_stop"() : () -> ()
    %120 = vector.shape_cast %119 : vector<2x8x8xf32> to vector<16x8xf32>
    %c1_68 = arith.constant 1 : index
    %c0_69 = arith.constant 0 : index
    %c0_70 = arith.constant 0 : index
    %121 = vector.load %arg5[%c1_68, %c0_69, %c0_70] : memref<16x8x32xf32, #tpu.memory_space<vmem>>, vector<1x8x32xf32>
    %122 = vector.shape_cast %121 : vector<1x8x32xf32> to vector<8x32xf32>
    %cst_71 = arith.constant dense<0.000000e+00> : vector<16x32xf32>
    %123 = tpu.matmul %120, %122, %cst_71 {dimension_numbers = #tpu.dot_dimension_numbers<[1], [0], [0], [1], [0, 0, 1, 1], [], []>} : vector<16x8xf32>, vector<8x32xf32>, vector<16x32xf32> -> vector<16x32xf32>
    %124 = arith.addf %79, %123 : vector<16x32xf32>
    %c2 = arith.constant 2 : index
    %c0_72 = arith.constant 0 : index
    %c0_73 = arith.constant 0 : index
    %125 = vector.load %arg3[%c2, %c0_72, %c0_73] : memref<48x32x8xf32, #tpu.memory_space<vmem>>, vector<1x32x8xf32>
    %126 = vector.shape_cast %125 : vector<1x32x8xf32> to vector<32x8xf32>
    %cst_74 = arith.constant dense<0.000000e+00> : vector<16x8xf32>
    %127 = tpu.matmul %26, %126, %cst_74 {dimension_numbers = #tpu.dot_dimension_numbers<[1], [0], [0], [1], [0, 0, 1, 1], [], []>} : vector<16x32xf32>, vector<32x8xf32>, vector<16x8xf32> -> vector<16x8xf32>
    %c2_75 = arith.constant 2 : index
    %c0_76 = arith.constant 0 : index
    %c0_77 = arith.constant 0 : index
    %128 = vector.load %arg4[%c2_75, %c0_76, %c0_77] : memref<48x1x8xf32, #tpu.memory_space<vmem>>, vector<1x1x8xf32>
    %129 = vector.shape_cast %128 : vector<1x1x8xf32> to vector<1x8xf32>
    %130 = vector.broadcast %129 : vector<1x8xf32> to vector<16x8xf32>
    %131 = arith.addf %127, %130 : vector<16x8xf32>
    %c6 = arith.constant 6 : index
    %c0_78 = arith.constant 0 : index
    %c0_79 = arith.constant 0 : index
    %132 = vector.load %arg3[%c6, %c0_78, %c0_79] : memref<48x32x8xf32, #tpu.memory_space<vmem>>, vector<1x32x8xf32>
    %133 = vector.shape_cast %132 : vector<1x32x8xf32> to vector<32x8xf32>
    %cst_80 = arith.constant dense<0.000000e+00> : vector<16x8xf32>
    %134 = tpu.matmul %26, %133, %cst_80 {dimension_numbers = #tpu.dot_dimension_numbers<[1], [0], [0], [1], [0, 0, 1, 1], [], []>} : vector<16x32xf32>, vector<32x8xf32>, vector<16x8xf32> -> vector<16x8xf32>
    %c6_81 = arith.constant 6 : index
    %c0_82 = arith.constant 0 : index
    %c0_83 = arith.constant 0 : index
    %135 = vector.load %arg4[%c6_81, %c0_82, %c0_83] : memref<48x1x8xf32, #tpu.memory_space<vmem>>, vector<1x1x8xf32>
    %136 = vector.shape_cast %135 : vector<1x1x8xf32> to vector<1x8xf32>
    %137 = vector.broadcast %136 : vector<1x8xf32> to vector<16x8xf32>
    %138 = arith.addf %134, %137 : vector<16x8xf32>
    %c10 = arith.constant 10 : index
    %c0_84 = arith.constant 0 : index
    %c0_85 = arith.constant 0 : index
    %139 = vector.load %arg3[%c10, %c0_84, %c0_85] : memref<48x32x8xf32, #tpu.memory_space<vmem>>, vector<1x32x8xf32>
    %140 = vector.shape_cast %139 : vector<1x32x8xf32> to vector<32x8xf32>
    %cst_86 = arith.constant dense<0.000000e+00> : vector<16x8xf32>
    %141 = tpu.matmul %26, %140, %cst_86 {dimension_numbers = #tpu.dot_dimension_numbers<[1], [0], [0], [1], [0, 0, 1, 1], [], []>} : vector<16x32xf32>, vector<32x8xf32>, vector<16x8xf32> -> vector<16x8xf32>
    %c10_87 = arith.constant 10 : index
    %c0_88 = arith.constant 0 : index
    %c0_89 = arith.constant 0 : index
    %142 = vector.load %arg4[%c10_87, %c0_88, %c0_89] : memref<48x1x8xf32, #tpu.memory_space<vmem>>, vector<1x1x8xf32>
    %143 = vector.shape_cast %142 : vector<1x1x8xf32> to vector<1x8xf32>
    %144 = vector.broadcast %143 : vector<1x8xf32> to vector<16x8xf32>
    %145 = arith.addf %141, %144 : vector<16x8xf32>
    %146 = vector.shape_cast %131 : vector<16x8xf32> to vector<2x8x8xf32>
    %147 = vector.shape_cast %138 : vector<16x8xf32> to vector<2x8x8xf32>
    %148 = vector.shape_cast %145 : vector<16x8xf32> to vector<2x8x8xf32>
    "tpu.trace_start"() <{level = 10 : i32, message = "bqd,bkd->bqk"}> : () -> ()
    %cst_90 = arith.constant dense<0.000000e+00> : vector<2x8x8xf32>
    %149 = tpu.matmul %146, %147, %cst_90 {dimension_numbers = #tpu.dot_dimension_numbers<[2], [2], [1], [1], [0, 0, 0, 1, 1, 1], [0], [0]>} : vector<2x8x8xf32>, vector<2x8x8xf32>, vector<2x8x8xf32> -> vector<2x8x8xf32>
    "tpu.trace_stop"() : () -> ()
    %cst_91 = arith.constant 0.353553385 : f32
    %150 = vector.broadcast %cst_91 : f32 to vector<2x8x8xf32>
    %151 = arith.mulf %149, %150 : vector<2x8x8xf32>
    %152 = vector.broadcast %32 : vector<2x1x8xf32> to vector<2x8x8xf32>
    %153 = arith.addf %151, %152 : vector<2x8x8xf32>
    %cst_92 = arith.constant dense<0xFF800000> : vector<2x8xf32>
    %154 = vector.multi_reduction <maximumf>, %153, %cst_92 [2] : vector<2x8x8xf32> to vector<2x8xf32>
    %155 = vector.shape_cast %154 : vector<2x8xf32> to vector<2x8x1xf32>
    %156 = vector.broadcast %155 : vector<2x8x1xf32> to vector<2x8x8xf32>
    %157 = arith.subf %153, %156 : vector<2x8x8xf32>
    %158 = math.exp %157 : vector<2x8x8xf32>
    %cst_93 = arith.constant dense<0.000000e+00> : vector<2x8xf32>
    %159 = vector.multi_reduction <add>, %158, %cst_93 [2] : vector<2x8x8xf32> to vector<2x8xf32>
    %160 = vector.shape_cast %159 : vector<2x8xf32> to vector<2x8x1xf32>
    %161 = tpu.reciprocal %160 {approx = true} : vector<2x8x1xf32> -> vector<2x8x1xf32>
    %162 = vector.broadcast %161 : vector<2x8x1xf32> to vector<2x8x8xf32>
    %163 = arith.mulf %158, %162 : vector<2x8x8xf32>
    "tpu.trace_start"() <{level = 10 : i32, message = "bqk,bkd->bqd"}> : () -> ()
    %cst_94 = arith.constant dense<0.000000e+00> : vector<2x8x8xf32>
    %164 = tpu.matmul %163, %148, %cst_94 {dimension_numbers = #tpu.dot_dimension_numbers<[2], [1], [1], [2], [0, 0, 0, 1, 1, 2], [0], [0]>} : vector<2x8x8xf32>, vector<2x8x8xf32>, vector<2x8x8xf32> -> vector<2x8x8xf32>
    "tpu.trace_stop"() : () -> ()
    %165 = vector.shape_cast %164 : vector<2x8x8xf32> to vector<16x8xf32>
    %c2_95 = arith.constant 2 : index
    %c0_96 = arith.constant 0 : index
    %c0_97 = arith.constant 0 : index
    %166 = vector.load %arg5[%c2_95, %c0_96, %c0_97] : memref<16x8x32xf32, #tpu.memory_space<vmem>>, vector<1x8x32xf32>
    %167 = vector.shape_cast %166 : vector<1x8x32xf32> to vector<8x32xf32>
    %cst_98 = arith.constant dense<0.000000e+00> : vector<16x32xf32>
    %168 = tpu.matmul %165, %167, %cst_98 {dimension_numbers = #tpu.dot_dimension_numbers<[1], [0], [0], [1], [0, 0, 1, 1], [], []>} : vector<16x8xf32>, vector<8x32xf32>, vector<16x32xf32> -> vector<16x32xf32>
    %169 = arith.addf %124, %168 : vector<16x32xf32>
    %c3 = arith.constant 3 : index
    %c0_99 = arith.constant 0 : index
    %c0_100 = arith.constant 0 : index
    %170 = vector.load %arg3[%c3, %c0_99, %c0_100] : memref<48x32x8xf32, #tpu.memory_space<vmem>>, vector<1x32x8xf32>
    %171 = vector.shape_cast %170 : vector<1x32x8xf32> to vector<32x8xf32>
    %cst_101 = arith.constant dense<0.000000e+00> : vector<16x8xf32>
    %172 = tpu.matmul %26, %171, %cst_101 {dimension_numbers = #tpu.dot_dimension_numbers<[1], [0], [0], [1], [0, 0, 1, 1], [], []>} : vector<16x32xf32>, vector<32x8xf32>, vector<16x8xf32> -> vector<16x8xf32>
    %c3_102 = arith.constant 3 : index
    %c0_103 = arith.constant 0 : index
    %c0_104 = arith.constant 0 : index
    %173 = vector.load %arg4[%c3_102, %c0_103, %c0_104] : memref<48x1x8xf32, #tpu.memory_space<vmem>>, vector<1x1x8xf32>
    %174 = vector.shape_cast %173 : vector<1x1x8xf32> to vector<1x8xf32>
    %175 = vector.broadcast %174 : vector<1x8xf32> to vector<16x8xf32>
    %176 = arith.addf %172, %175 : vector<16x8xf32>
    %c7 = arith.constant 7 : index
    %c0_105 = arith.constant 0 : index
    %c0_106 = arith.constant 0 : index
    %177 = vector.load %arg3[%c7, %c0_105, %c0_106] : memref<48x32x8xf32, #tpu.memory_space<vmem>>, vector<1x32x8xf32>
    %178 = vector.shape_cast %177 : vector<1x32x8xf32> to vector<32x8xf32>
    %cst_107 = arith.constant dense<0.000000e+00> : vector<16x8xf32>
    %179 = tpu.matmul %26, %178, %cst_107 {dimension_numbers = #tpu.dot_dimension_numbers<[1], [0], [0], [1], [0, 0, 1, 1], [], []>} : vector<16x32xf32>, vector<32x8xf32>, vector<16x8xf32> -> vector<16x8xf32>
    %c7_108 = arith.constant 7 : index
    %c0_109 = arith.constant 0 : index
    %c0_110 = arith.constant 0 : index
    %180 = vector.load %arg4[%c7_108, %c0_109, %c0_110] : memref<48x1x8xf32, #tpu.memory_space<vmem>>, vector<1x1x8xf32>
    %181 = vector.shape_cast %180 : vector<1x1x8xf32> to vector<1x8xf32>
    %182 = vector.broadcast %181 : vector<1x8xf32> to vector<16x8xf32>
    %183 = arith.addf %179, %182 : vector<16x8xf32>
    %c11 = arith.constant 11 : index
    %c0_111 = arith.constant 0 : index
    %c0_112 = arith.constant 0 : index
    %184 = vector.load %arg3[%c11, %c0_111, %c0_112] : memref<48x32x8xf32, #tpu.memory_space<vmem>>, vector<1x32x8xf32>
    %185 = vector.shape_cast %184 : vector<1x32x8xf32> to vector<32x8xf32>
    %cst_113 = arith.constant dense<0.000000e+00> : vector<16x8xf32>
    %186 = tpu.matmul %26, %185, %cst_113 {dimension_numbers = #tpu.dot_dimension_numbers<[1], [0], [0], [1], [0, 0, 1, 1], [], []>} : vector<16x32xf32>, vector<32x8xf32>, vector<16x8xf32> -> vector<16x8xf32>
    %c11_114 = arith.constant 11 : index
    %c0_115 = arith.constant 0 : index
    %c0_116 = arith.constant 0 : index
    %187 = vector.load %arg4[%c11_114, %c0_115, %c0_116] : memref<48x1x8xf32, #tpu.memory_space<vmem>>, vector<1x1x8xf32>
    %188 = vector.shape_cast %187 : vector<1x1x8xf32> to vector<1x8xf32>
    %189 = vector.broadcast %188 : vector<1x8xf32> to vector<16x8xf32>
    %190 = arith.addf %186, %189 : vector<16x8xf32>
    %191 = vector.shape_cast %176 : vector<16x8xf32> to vector<2x8x8xf32>
    %192 = vector.shape_cast %183 : vector<16x8xf32> to vector<2x8x8xf32>
    %193 = vector.shape_cast %190 : vector<16x8xf32> to vector<2x8x8xf32>
    "tpu.trace_start"() <{level = 10 : i32, message = "bqd,bkd->bqk"}> : () -> ()
    %cst_117 = arith.constant dense<0.000000e+00> : vector<2x8x8xf32>
    %194 = tpu.matmul %191, %192, %cst_117 {dimension_numbers = #tpu.dot_dimension_numbers<[2], [2], [1], [1], [0, 0, 0, 1, 1, 1], [0], [0]>} : vector<2x8x8xf32>, vector<2x8x8xf32>, vector<2x8x8xf32> -> vector<2x8x8xf32>
    "tpu.trace_stop"() : () -> ()
    %cst_118 = arith.constant 0.353553385 : f32
    %195 = vector.broadcast %cst_118 : f32 to vector<2x8x8xf32>
    %196 = arith.mulf %194, %195 : vector<2x8x8xf32>
    %197 = vector.broadcast %32 : vector<2x1x8xf32> to vector<2x8x8xf32>
    %198 = arith.addf %196, %197 : vector<2x8x8xf32>
    %cst_119 = arith.constant dense<0xFF800000> : vector<2x8xf32>
    %199 = vector.multi_reduction <maximumf>, %198, %cst_119 [2] : vector<2x8x8xf32> to vector<2x8xf32>
    %200 = vector.shape_cast %199 : vector<2x8xf32> to vector<2x8x1xf32>
    %201 = vector.broadcast %200 : vector<2x8x1xf32> to vector<2x8x8xf32>
    %202 = arith.subf %198, %201 : vector<2x8x8xf32>
    %203 = math.exp %202 : vector<2x8x8xf32>
    %cst_120 = arith.constant dense<0.000000e+00> : vector<2x8xf32>
    %204 = vector.multi_reduction <add>, %203, %cst_120 [2] : vector<2x8x8xf32> to vector<2x8xf32>
    %205 = vector.shape_cast %204 : vector<2x8xf32> to vector<2x8x1xf32>
    %206 = tpu.reciprocal %205 {approx = true} : vector<2x8x1xf32> -> vector<2x8x1xf32>
    %207 = vector.broadcast %206 : vector<2x8x1xf32> to vector<2x8x8xf32>
    %208 = arith.mulf %203, %207 : vector<2x8x8xf32>
    "tpu.trace_start"() <{level = 10 : i32, message = "bqk,bkd->bqd"}> : () -> ()
    %cst_121 = arith.constant dense<0.000000e+00> : vector<2x8x8xf32>
    %209 = tpu.matmul %208, %193, %cst_121 {dimension_numbers = #tpu.dot_dimension_numbers<[2], [1], [1], [2], [0, 0, 0, 1, 1, 2], [0], [0]>} : vector<2x8x8xf32>, vector<2x8x8xf32>, vector<2x8x8xf32> -> vector<2x8x8xf32>
    "tpu.trace_stop"() : () -> ()
    %210 = vector.shape_cast %209 : vector<2x8x8xf32> to vector<16x8xf32>
    %c3_122 = arith.constant 3 : index
    %c0_123 = arith.constant 0 : index
    %c0_124 = arith.constant 0 : index
    %211 = vector.load %arg5[%c3_122, %c0_123, %c0_124] : memref<16x8x32xf32, #tpu.memory_space<vmem>>, vector<1x8x32xf32>
    %212 = vector.shape_cast %211 : vector<1x8x32xf32> to vector<8x32xf32>
    %cst_125 = arith.constant dense<0.000000e+00> : vector<16x32xf32>
    %213 = tpu.matmul %210, %212, %cst_125 {dimension_numbers = #tpu.dot_dimension_numbers<[1], [0], [0], [1], [0, 0, 1, 1], [], []>} : vector<16x8xf32>, vector<8x32xf32>, vector<16x32xf32> -> vector<16x32xf32>
    %214 = arith.addf %169, %213 : vector<16x32xf32>
    %c0_126 = arith.constant 0 : index
    %c0_127 = arith.constant 0 : index
    %c0_128 = arith.constant 0 : index
    %215 = vector.load %arg6[%c0_126, %c0_127, %c0_128] : memref<24x1x32xf32, #tpu.memory_space<vmem>>, vector<1x1x32xf32>
    %216 = vector.shape_cast %215 : vector<1x1x32xf32> to vector<1x32xf32>
    %217 = vector.broadcast %216 : vector<1x32xf32> to vector<16x32xf32>
    %218 = arith.addf %214, %217 : vector<16x32xf32>
    %219 = arith.addf %218, %26 : vector<16x32xf32>
    %c1_129 = arith.constant 1 : index
    %c0_130 = arith.constant 0 : index
    %c0_131 = arith.constant 0 : index
    %220 = vector.load %arg6[%c1_129, %c0_130, %c0_131] : memref<24x1x32xf32, #tpu.memory_space<vmem>>, vector<1x1x32xf32>
    %221 = vector.shape_cast %220 : vector<1x1x32xf32> to vector<1x32xf32>
    %c2_132 = arith.constant 2 : index
    %c0_133 = arith.constant 0 : index
    %c0_134 = arith.constant 0 : index
    %222 = vector.load %arg6[%c2_132, %c0_133, %c0_134] : memref<24x1x32xf32, #tpu.memory_space<vmem>>, vector<1x1x32xf32>
    %223 = vector.shape_cast %222 : vector<1x1x32xf32> to vector<1x32xf32>
    %cst_135 = arith.constant dense<0.000000e+00> : vector<16xf32>
    %224 = vector.multi_reduction <add>, %219, %cst_135 [1] : vector<16x32xf32> to vector<16xf32>
    %225 = vector.shape_cast %224 : vector<16xf32> to vector<16x1xf32>
    %cst_136 = arith.constant 3.200000e+01 : f32
    %226 = vector.broadcast %cst_136 : f32 to vector<16x1xf32>
    %227 = arith.divf %225, %226 : vector<16x1xf32>
    %228 = vector.broadcast %227 : vector<16x1xf32> to vector<16x32xf32>
    %229 = arith.subf %219, %228 : vector<16x32xf32>
    %230 = arith.mulf %229, %229 : vector<16x32xf32>
    %cst_137 = arith.constant dense<0.000000e+00> : vector<16xf32>
    %231 = vector.multi_reduction <add>, %230, %cst_137 [1] : vector<16x32xf32> to vector<16xf32>
    %232 = vector.shape_cast %231 : vector<16xf32> to vector<16x1xf32>
    %cst_138 = arith.constant 3.200000e+01 : f32
    %233 = vector.broadcast %cst_138 : f32 to vector<16x1xf32>
    %234 = arith.divf %232, %233 : vector<16x1xf32>
    %235 = vector.broadcast %227 : vector<16x1xf32> to vector<16x32xf32>
    %236 = arith.subf %219, %235 : vector<16x32xf32>
    %cst_139 = arith.constant 9.99999974E-6 : f32
    %237 = vector.broadcast %cst_139 : f32 to vector<16x1xf32>
    %238 = arith.addf %234, %237 : vector<16x1xf32>
    %239 = math.rsqrt %238 : vector<16x1xf32>
    %240 = vector.broadcast %239 : vector<16x1xf32> to vector<16x32xf32>
    %241 = arith.mulf %236, %240 : vector<16x32xf32>
    %242 = vector.broadcast %221 : vector<1x32xf32> to vector<16x32xf32>
    %243 = arith.mulf %241, %242 : vector<16x32xf32>
    %244 = vector.broadcast %223 : vector<1x32xf32> to vector<16x32xf32>
    %245 = arith.addf %243, %244 : vector<16x32xf32>
    %c0_140 = arith.constant 0 : index
    %c0_141 = arith.constant 0 : index
    %c0_142 = arith.constant 0 : index
    %246 = vector.load %arg7[%c0_140, %c0_141, %c0_142] : memref<4x32x128xf32, #tpu.memory_space<vmem>>, vector<1x32x128xf32>
    %247 = vector.shape_cast %246 : vector<1x32x128xf32> to vector<32x128xf32>
    %cst_143 = arith.constant dense<0.000000e+00> : vector<16x128xf32>
    %248 = tpu.matmul %245, %247, %cst_143 {dimension_numbers = #tpu.dot_dimension_numbers<[1], [0], [0], [1], [0, 0, 1, 1], [], []>} : vector<16x32xf32>, vector<32x128xf32>, vector<16x128xf32> -> vector<16x128xf32>
    %c0_144 = arith.constant 0 : index
    %c0_145 = arith.constant 0 : index
    %c0_146 = arith.constant 0 : index
    %249 = vector.load %arg8[%c0_144, %c0_145, %c0_146] : memref<4x1x128xf32, #tpu.memory_space<vmem>>, vector<1x1x128xf32>
    %250 = vector.shape_cast %249 : vector<1x1x128xf32> to vector<1x128xf32>
    %251 = vector.broadcast %250 : vector<1x128xf32> to vector<16x128xf32>
    %252 = arith.addf %248, %251 : vector<16x128xf32>
    %253 = arith.mulf %252, %252 : vector<16x128xf32>
    %254 = arith.mulf %252, %253 : vector<16x128xf32>
    %cst_147 = arith.constant 4.471500e-02 : f32
    %255 = vector.broadcast %cst_147 : f32 to vector<16x128xf32>
    %256 = arith.mulf %255, %254 : vector<16x128xf32>
    %257 = arith.addf %252, %256 : vector<16x128xf32>
    %cst_148 = arith.constant 0.797884583 : f32
    %258 = vector.broadcast %cst_148 : f32 to vector<16x128xf32>
    %259 = arith.mulf %258, %257 : vector<16x128xf32>
    %260 = math.tanh %259 : vector<16x128xf32>
    %cst_149 = arith.constant 1.000000e+00 : f32
    %261 = vector.broadcast %cst_149 : f32 to vector<16x128xf32>
    %262 = arith.addf %261, %260 : vector<16x128xf32>
    %cst_150 = arith.constant 5.000000e-01 : f32
    %263 = vector.broadcast %cst_150 : f32 to vector<16x128xf32>
    %264 = arith.mulf %263, %262 : vector<16x128xf32>
    %265 = arith.mulf %252, %264 : vector<16x128xf32>
    %c0_151 = arith.constant 0 : index
    %c0_152 = arith.constant 0 : index
    %c0_153 = arith.constant 0 : index
    %266 = vector.load %arg9[%c0_151, %c0_152, %c0_153] : memref<4x128x32xf32, #tpu.memory_space<vmem>>, vector<1x128x32xf32>
    %267 = vector.shape_cast %266 : vector<1x128x32xf32> to vector<128x32xf32>
    %cst_154 = arith.constant dense<0.000000e+00> : vector<16x32xf32>
    %268 = tpu.matmul %265, %267, %cst_154 {dimension_numbers = #tpu.dot_dimension_numbers<[1], [0], [0], [1], [0, 0, 1, 1], [], []>} : vector<16x128xf32>, vector<128x32xf32>, vector<16x32xf32> -> vector<16x32xf32>
    %c3_155 = arith.constant 3 : index
    %c0_156 = arith.constant 0 : index
    %c0_157 = arith.constant 0 : index
    %269 = vector.load %arg6[%c3_155, %c0_156, %c0_157] : memref<24x1x32xf32, #tpu.memory_space<vmem>>, vector<1x1x32xf32>
    %270 = vector.shape_cast %269 : vector<1x1x32xf32> to vector<1x32xf32>
    %271 = vector.broadcast %270 : vector<1x32xf32> to vector<16x32xf32>
    %272 = arith.addf %268, %271 : vector<16x32xf32>
    %273 = arith.addf %272, %245 : vector<16x32xf32>
    %c4_158 = arith.constant 4 : index
    %c0_159 = arith.constant 0 : index
    %c0_160 = arith.constant 0 : index
    %274 = vector.load %arg6[%c4_158, %c0_159, %c0_160] : memref<24x1x32xf32, #tpu.memory_space<vmem>>, vector<1x1x32xf32>
    %275 = vector.shape_cast %274 : vector<1x1x32xf32> to vector<1x32xf32>
    %c5_161 = arith.constant 5 : index
    %c0_162 = arith.constant 0 : index
    %c0_163 = arith.constant 0 : index
    %276 = vector.load %arg6[%c5_161, %c0_162, %c0_163] : memref<24x1x32xf32, #tpu.memory_space<vmem>>, vector<1x1x32xf32>
    %277 = vector.shape_cast %276 : vector<1x1x32xf32> to vector<1x32xf32>
    %cst_164 = arith.constant dense<0.000000e+00> : vector<16xf32>
    %278 = vector.multi_reduction <add>, %273, %cst_164 [1] : vector<16x32xf32> to vector<16xf32>
    %279 = vector.shape_cast %278 : vector<16xf32> to vector<16x1xf32>
    %cst_165 = arith.constant 3.200000e+01 : f32
    %280 = vector.broadcast %cst_165 : f32 to vector<16x1xf32>
    %281 = arith.divf %279, %280 : vector<16x1xf32>
    %282 = vector.broadcast %281 : vector<16x1xf32> to vector<16x32xf32>
    %283 = arith.subf %273, %282 : vector<16x32xf32>
    %284 = arith.mulf %283, %283 : vector<16x32xf32>
    %cst_166 = arith.constant dense<0.000000e+00> : vector<16xf32>
    %285 = vector.multi_reduction <add>, %284, %cst_166 [1] : vector<16x32xf32> to vector<16xf32>
    %286 = vector.shape_cast %285 : vector<16xf32> to vector<16x1xf32>
    %cst_167 = arith.constant 3.200000e+01 : f32
    %287 = vector.broadcast %cst_167 : f32 to vector<16x1xf32>
    %288 = arith.divf %286, %287 : vector<16x1xf32>
    %289 = vector.broadcast %281 : vector<16x1xf32> to vector<16x32xf32>
    %290 = arith.subf %273, %289 : vector<16x32xf32>
    %cst_168 = arith.constant 9.99999974E-6 : f32
    %291 = vector.broadcast %cst_168 : f32 to vector<16x1xf32>
    %292 = arith.addf %288, %291 : vector<16x1xf32>
    %293 = math.rsqrt %292 : vector<16x1xf32>
    %294 = vector.broadcast %293 : vector<16x1xf32> to vector<16x32xf32>
    %295 = arith.mulf %290, %294 : vector<16x32xf32>
    %296 = vector.broadcast %275 : vector<1x32xf32> to vector<16x32xf32>
    %297 = arith.mulf %295, %296 : vector<16x32xf32>
    %298 = vector.broadcast %277 : vector<1x32xf32> to vector<16x32xf32>
    %299 = arith.addf %297, %298 : vector<16x32xf32>
    %300 = arith.addf %33, %299 : vector<16x32xf32>
    %cst_169 = arith.constant 0.000000e+00 : f32
    %301 = vector.broadcast %cst_169 : f32 to vector<16x32xf32>
    %c12 = arith.constant 12 : index
    %c0_170 = arith.constant 0 : index
    %c0_171 = arith.constant 0 : index
    %302 = vector.load %arg3[%c12, %c0_170, %c0_171] : memref<48x32x8xf32, #tpu.memory_space<vmem>>, vector<1x32x8xf32>
    %303 = vector.shape_cast %302 : vector<1x32x8xf32> to vector<32x8xf32>
    %cst_172 = arith.constant dense<0.000000e+00> : vector<16x8xf32>
    %304 = tpu.matmul %299, %303, %cst_172 {dimension_numbers = #tpu.dot_dimension_numbers<[1], [0], [0], [1], [0, 0, 1, 1], [], []>} : vector<16x32xf32>, vector<32x8xf32>, vector<16x8xf32> -> vector<16x8xf32>
    %c12_173 = arith.constant 12 : index
    %c0_174 = arith.constant 0 : index
    %c0_175 = arith.constant 0 : index
    %305 = vector.load %arg4[%c12_173, %c0_174, %c0_175] : memref<48x1x8xf32, #tpu.memory_space<vmem>>, vector<1x1x8xf32>
    %306 = vector.shape_cast %305 : vector<1x1x8xf32> to vector<1x8xf32>
    %307 = vector.broadcast %306 : vector<1x8xf32> to vector<16x8xf32>
    %308 = arith.addf %304, %307 : vector<16x8xf32>
    %c16 = arith.constant 16 : index
    %c0_176 = arith.constant 0 : index
    %c0_177 = arith.constant 0 : index
    %309 = vector.load %arg3[%c16, %c0_176, %c0_177] : memref<48x32x8xf32, #tpu.memory_space<vmem>>, vector<1x32x8xf32>
    %310 = vector.shape_cast %309 : vector<1x32x8xf32> to vector<32x8xf32>
    %cst_178 = arith.constant dense<0.000000e+00> : vector<16x8xf32>
    %311 = tpu.matmul %299, %310, %cst_178 {dimension_numbers = #tpu.dot_dimension_numbers<[1], [0], [0], [1], [0, 0, 1, 1], [], []>} : vector<16x32xf32>, vector<32x8xf32>, vector<16x8xf32> -> vector<16x8xf32>
    %c16_179 = arith.constant 16 : index
    %c0_180 = arith.constant 0 : index
    %c0_181 = arith.constant 0 : index
    %312 = vector.load %arg4[%c16_179, %c0_180, %c0_181] : memref<48x1x8xf32, #tpu.memory_space<vmem>>, vector<1x1x8xf32>
    %313 = vector.shape_cast %312 : vector<1x1x8xf32> to vector<1x8xf32>
    %314 = vector.broadcast %313 : vector<1x8xf32> to vector<16x8xf32>
    %315 = arith.addf %311, %314 : vector<16x8xf32>
    %c20 = arith.constant 20 : index
    %c0_182 = arith.constant 0 : index
    %c0_183 = arith.constant 0 : index
    %316 = vector.load %arg3[%c20, %c0_182, %c0_183] : memref<48x32x8xf32, #tpu.memory_space<vmem>>, vector<1x32x8xf32>
    %317 = vector.shape_cast %316 : vector<1x32x8xf32> to vector<32x8xf32>
    %cst_184 = arith.constant dense<0.000000e+00> : vector<16x8xf32>
    %318 = tpu.matmul %299, %317, %cst_184 {dimension_numbers = #tpu.dot_dimension_numbers<[1], [0], [0], [1], [0, 0, 1, 1], [], []>} : vector<16x32xf32>, vector<32x8xf32>, vector<16x8xf32> -> vector<16x8xf32>
    %c20_185 = arith.constant 20 : index
    %c0_186 = arith.constant 0 : index
    %c0_187 = arith.constant 0 : index
    %319 = vector.load %arg4[%c20_185, %c0_186, %c0_187] : memref<48x1x8xf32, #tpu.memory_space<vmem>>, vector<1x1x8xf32>
    %320 = vector.shape_cast %319 : vector<1x1x8xf32> to vector<1x8xf32>
    %321 = vector.broadcast %320 : vector<1x8xf32> to vector<16x8xf32>
    %322 = arith.addf %318, %321 : vector<16x8xf32>
    %323 = vector.shape_cast %308 : vector<16x8xf32> to vector<2x8x8xf32>
    %324 = vector.shape_cast %315 : vector<16x8xf32> to vector<2x8x8xf32>
    %325 = vector.shape_cast %322 : vector<16x8xf32> to vector<2x8x8xf32>
    "tpu.trace_start"() <{level = 10 : i32, message = "bqd,bkd->bqk"}> : () -> ()
    %cst_188 = arith.constant dense<0.000000e+00> : vector<2x8x8xf32>
    %326 = tpu.matmul %323, %324, %cst_188 {dimension_numbers = #tpu.dot_dimension_numbers<[2], [2], [1], [1], [0, 0, 0, 1, 1, 1], [0], [0]>} : vector<2x8x8xf32>, vector<2x8x8xf32>, vector<2x8x8xf32> -> vector<2x8x8xf32>
    "tpu.trace_stop"() : () -> ()
    %cst_189 = arith.constant 0.353553385 : f32
    %327 = vector.broadcast %cst_189 : f32 to vector<2x8x8xf32>
    %328 = arith.mulf %326, %327 : vector<2x8x8xf32>
    %329 = vector.broadcast %32 : vector<2x1x8xf32> to vector<2x8x8xf32>
    %330 = arith.addf %328, %329 : vector<2x8x8xf32>
    %cst_190 = arith.constant dense<0xFF800000> : vector<2x8xf32>
    %331 = vector.multi_reduction <maximumf>, %330, %cst_190 [2] : vector<2x8x8xf32> to vector<2x8xf32>
    %332 = vector.shape_cast %331 : vector<2x8xf32> to vector<2x8x1xf32>
    %333 = vector.broadcast %332 : vector<2x8x1xf32> to vector<2x8x8xf32>
    %334 = arith.subf %330, %333 : vector<2x8x8xf32>
    %335 = math.exp %334 : vector<2x8x8xf32>
    %cst_191 = arith.constant dense<0.000000e+00> : vector<2x8xf32>
    %336 = vector.multi_reduction <add>, %335, %cst_191 [2] : vector<2x8x8xf32> to vector<2x8xf32>
    %337 = vector.shape_cast %336 : vector<2x8xf32> to vector<2x8x1xf32>
    %338 = tpu.reciprocal %337 {approx = true} : vector<2x8x1xf32> -> vector<2x8x1xf32>
    %339 = vector.broadcast %338 : vector<2x8x1xf32> to vector<2x8x8xf32>
    %340 = arith.mulf %335, %339 : vector<2x8x8xf32>
    "tpu.trace_start"() <{level = 10 : i32, message = "bqk,bkd->bqd"}> : () -> ()
    %cst_192 = arith.constant dense<0.000000e+00> : vector<2x8x8xf32>
    %341 = tpu.matmul %340, %325, %cst_192 {dimension_numbers = #tpu.dot_dimension_numbers<[2], [1], [1], [2], [0, 0, 0, 1, 1, 2], [0], [0]>} : vector<2x8x8xf32>, vector<2x8x8xf32>, vector<2x8x8xf32> -> vector<2x8x8xf32>
    "tpu.trace_stop"() : () -> ()
    %342 = vector.shape_cast %341 : vector<2x8x8xf32> to vector<16x8xf32>
    %c4_193 = arith.constant 4 : index
    %c0_194 = arith.constant 0 : index
    %c0_195 = arith.constant 0 : index
    %343 = vector.load %arg5[%c4_193, %c0_194, %c0_195] : memref<16x8x32xf32, #tpu.memory_space<vmem>>, vector<1x8x32xf32>
    %344 = vector.shape_cast %343 : vector<1x8x32xf32> to vector<8x32xf32>
    %cst_196 = arith.constant dense<0.000000e+00> : vector<16x32xf32>
    %345 = tpu.matmul %342, %344, %cst_196 {dimension_numbers = #tpu.dot_dimension_numbers<[1], [0], [0], [1], [0, 0, 1, 1], [], []>} : vector<16x8xf32>, vector<8x32xf32>, vector<16x32xf32> -> vector<16x32xf32>
    %346 = arith.addf %301, %345 : vector<16x32xf32>
    %c13 = arith.constant 13 : index
    %c0_197 = arith.constant 0 : index
    %c0_198 = arith.constant 0 : index
    %347 = vector.load %arg3[%c13, %c0_197, %c0_198] : memref<48x32x8xf32, #tpu.memory_space<vmem>>, vector<1x32x8xf32>
    %348 = vector.shape_cast %347 : vector<1x32x8xf32> to vector<32x8xf32>
    %cst_199 = arith.constant dense<0.000000e+00> : vector<16x8xf32>
    %349 = tpu.matmul %299, %348, %cst_199 {dimension_numbers = #tpu.dot_dimension_numbers<[1], [0], [0], [1], [0, 0, 1, 1], [], []>} : vector<16x32xf32>, vector<32x8xf32>, vector<16x8xf32> -> vector<16x8xf32>
    %c13_200 = arith.constant 13 : index
    %c0_201 = arith.constant 0 : index
    %c0_202 = arith.constant 0 : index
    %350 = vector.load %arg4[%c13_200, %c0_201, %c0_202] : memref<48x1x8xf32, #tpu.memory_space<vmem>>, vector<1x1x8xf32>
    %351 = vector.shape_cast %350 : vector<1x1x8xf32> to vector<1x8xf32>
    %352 = vector.broadcast %351 : vector<1x8xf32> to vector<16x8xf32>
    %353 = arith.addf %349, %352 : vector<16x8xf32>
    %c17 = arith.constant 17 : index
    %c0_203 = arith.constant 0 : index
    %c0_204 = arith.constant 0 : index
    %354 = vector.load %arg3[%c17, %c0_203, %c0_204] : memref<48x32x8xf32, #tpu.memory_space<vmem>>, vector<1x32x8xf32>
    %355 = vector.shape_cast %354 : vector<1x32x8xf32> to vector<32x8xf32>
    %cst_205 = arith.constant dense<0.000000e+00> : vector<16x8xf32>
    %356 = tpu.matmul %299, %355, %cst_205 {dimension_numbers = #tpu.dot_dimension_numbers<[1], [0], [0], [1], [0, 0, 1, 1], [], []>} : vector<16x32xf32>, vector<32x8xf32>, vector<16x8xf32> -> vector<16x8xf32>
    %c17_206 = arith.constant 17 : index
    %c0_207 = arith.constant 0 : index
    %c0_208 = arith.constant 0 : index
    %357 = vector.load %arg4[%c17_206, %c0_207, %c0_208] : memref<48x1x8xf32, #tpu.memory_space<vmem>>, vector<1x1x8xf32>
    %358 = vector.shape_cast %357 : vector<1x1x8xf32> to vector<1x8xf32>
    %359 = vector.broadcast %358 : vector<1x8xf32> to vector<16x8xf32>
    %360 = arith.addf %356, %359 : vector<16x8xf32>
    %c21 = arith.constant 21 : index
    %c0_209 = arith.constant 0 : index
    %c0_210 = arith.constant 0 : index
    %361 = vector.load %arg3[%c21, %c0_209, %c0_210] : memref<48x32x8xf32, #tpu.memory_space<vmem>>, vector<1x32x8xf32>
    %362 = vector.shape_cast %361 : vector<1x32x8xf32> to vector<32x8xf32>
    %cst_211 = arith.constant dense<0.000000e+00> : vector<16x8xf32>
    %363 = tpu.matmul %299, %362, %cst_211 {dimension_numbers = #tpu.dot_dimension_numbers<[1], [0], [0], [1], [0, 0, 1, 1], [], []>} : vector<16x32xf32>, vector<32x8xf32>, vector<16x8xf32> -> vector<16x8xf32>
    %c21_212 = arith.constant 21 : index
    %c0_213 = arith.constant 0 : index
    %c0_214 = arith.constant 0 : index
    %364 = vector.load %arg4[%c21_212, %c0_213, %c0_214] : memref<48x1x8xf32, #tpu.memory_space<vmem>>, vector<1x1x8xf32>
    %365 = vector.shape_cast %364 : vector<1x1x8xf32> to vector<1x8xf32>
    %366 = vector.broadcast %365 : vector<1x8xf32> to vector<16x8xf32>
    %367 = arith.addf %363, %366 : vector<16x8xf32>
    %368 = vector.shape_cast %353 : vector<16x8xf32> to vector<2x8x8xf32>
    %369 = vector.shape_cast %360 : vector<16x8xf32> to vector<2x8x8xf32>
    %370 = vector.shape_cast %367 : vector<16x8xf32> to vector<2x8x8xf32>
    "tpu.trace_start"() <{level = 10 : i32, message = "bqd,bkd->bqk"}> : () -> ()
    %cst_215 = arith.constant dense<0.000000e+00> : vector<2x8x8xf32>
    %371 = tpu.matmul %368, %369, %cst_215 {dimension_numbers = #tpu.dot_dimension_numbers<[2], [2], [1], [1], [0, 0, 0, 1, 1, 1], [0], [0]>} : vector<2x8x8xf32>, vector<2x8x8xf32>, vector<2x8x8xf32> -> vector<2x8x8xf32>
    "tpu.trace_stop"() : () -> ()
    %cst_216 = arith.constant 0.353553385 : f32
    %372 = vector.broadcast %cst_216 : f32 to vector<2x8x8xf32>
    %373 = arith.mulf %371, %372 : vector<2x8x8xf32>
    %374 = vector.broadcast %32 : vector<2x1x8xf32> to vector<2x8x8xf32>
    %375 = arith.addf %373, %374 : vector<2x8x8xf32>
    %cst_217 = arith.constant dense<0xFF800000> : vector<2x8xf32>
    %376 = vector.multi_reduction <maximumf>, %375, %cst_217 [2] : vector<2x8x8xf32> to vector<2x8xf32>
    %377 = vector.shape_cast %376 : vector<2x8xf32> to vector<2x8x1xf32>
    %378 = vector.broadcast %377 : vector<2x8x1xf32> to vector<2x8x8xf32>
    %379 = arith.subf %375, %378 : vector<2x8x8xf32>
    %380 = math.exp %379 : vector<2x8x8xf32>
    %cst_218 = arith.constant dense<0.000000e+00> : vector<2x8xf32>
    %381 = vector.multi_reduction <add>, %380, %cst_218 [2] : vector<2x8x8xf32> to vector<2x8xf32>
    %382 = vector.shape_cast %381 : vector<2x8xf32> to vector<2x8x1xf32>
    %383 = tpu.reciprocal %382 {approx = true} : vector<2x8x1xf32> -> vector<2x8x1xf32>
    %384 = vector.broadcast %383 : vector<2x8x1xf32> to vector<2x8x8xf32>
    %385 = arith.mulf %380, %384 : vector<2x8x8xf32>
    "tpu.trace_start"() <{level = 10 : i32, message = "bqk,bkd->bqd"}> : () -> ()
    %cst_219 = arith.constant dense<0.000000e+00> : vector<2x8x8xf32>
    %386 = tpu.matmul %385, %370, %cst_219 {dimension_numbers = #tpu.dot_dimension_numbers<[2], [1], [1], [2], [0, 0, 0, 1, 1, 2], [0], [0]>} : vector<2x8x8xf32>, vector<2x8x8xf32>, vector<2x8x8xf32> -> vector<2x8x8xf32>
    "tpu.trace_stop"() : () -> ()
    %387 = vector.shape_cast %386 : vector<2x8x8xf32> to vector<16x8xf32>
    %c5_220 = arith.constant 5 : index
    %c0_221 = arith.constant 0 : index
    %c0_222 = arith.constant 0 : index
    %388 = vector.load %arg5[%c5_220, %c0_221, %c0_222] : memref<16x8x32xf32, #tpu.memory_space<vmem>>, vector<1x8x32xf32>
    %389 = vector.shape_cast %388 : vector<1x8x32xf32> to vector<8x32xf32>
    %cst_223 = arith.constant dense<0.000000e+00> : vector<16x32xf32>
    %390 = tpu.matmul %387, %389, %cst_223 {dimension_numbers = #tpu.dot_dimension_numbers<[1], [0], [0], [1], [0, 0, 1, 1], [], []>} : vector<16x8xf32>, vector<8x32xf32>, vector<16x32xf32> -> vector<16x32xf32>
    %391 = arith.addf %346, %390 : vector<16x32xf32>
    %c14 = arith.constant 14 : index
    %c0_224 = arith.constant 0 : index
    %c0_225 = arith.constant 0 : index
    %392 = vector.load %arg3[%c14, %c0_224, %c0_225] : memref<48x32x8xf32, #tpu.memory_space<vmem>>, vector<1x32x8xf32>
    %393 = vector.shape_cast %392 : vector<1x32x8xf32> to vector<32x8xf32>
    %cst_226 = arith.constant dense<0.000000e+00> : vector<16x8xf32>
    %394 = tpu.matmul %299, %393, %cst_226 {dimension_numbers = #tpu.dot_dimension_numbers<[1], [0], [0], [1], [0, 0, 1, 1], [], []>} : vector<16x32xf32>, vector<32x8xf32>, vector<16x8xf32> -> vector<16x8xf32>
    %c14_227 = arith.constant 14 : index
    %c0_228 = arith.constant 0 : index
    %c0_229 = arith.constant 0 : index
    %395 = vector.load %arg4[%c14_227, %c0_228, %c0_229] : memref<48x1x8xf32, #tpu.memory_space<vmem>>, vector<1x1x8xf32>
    %396 = vector.shape_cast %395 : vector<1x1x8xf32> to vector<1x8xf32>
    %397 = vector.broadcast %396 : vector<1x8xf32> to vector<16x8xf32>
    %398 = arith.addf %394, %397 : vector<16x8xf32>
    %c18 = arith.constant 18 : index
    %c0_230 = arith.constant 0 : index
    %c0_231 = arith.constant 0 : index
    %399 = vector.load %arg3[%c18, %c0_230, %c0_231] : memref<48x32x8xf32, #tpu.memory_space<vmem>>, vector<1x32x8xf32>
    %400 = vector.shape_cast %399 : vector<1x32x8xf32> to vector<32x8xf32>
    %cst_232 = arith.constant dense<0.000000e+00> : vector<16x8xf32>
    %401 = tpu.matmul %299, %400, %cst_232 {dimension_numbers = #tpu.dot_dimension_numbers<[1], [0], [0], [1], [0, 0, 1, 1], [], []>} : vector<16x32xf32>, vector<32x8xf32>, vector<16x8xf32> -> vector<16x8xf32>
    %c18_233 = arith.constant 18 : index
    %c0_234 = arith.constant 0 : index
    %c0_235 = arith.constant 0 : index
    %402 = vector.load %arg4[%c18_233, %c0_234, %c0_235] : memref<48x1x8xf32, #tpu.memory_space<vmem>>, vector<1x1x8xf32>
    %403 = vector.shape_cast %402 : vector<1x1x8xf32> to vector<1x8xf32>
    %404 = vector.broadcast %403 : vector<1x8xf32> to vector<16x8xf32>
    %405 = arith.addf %401, %404 : vector<16x8xf32>
    %c22 = arith.constant 22 : index
    %c0_236 = arith.constant 0 : index
    %c0_237 = arith.constant 0 : index
    %406 = vector.load %arg3[%c22, %c0_236, %c0_237] : memref<48x32x8xf32, #tpu.memory_space<vmem>>, vector<1x32x8xf32>
    %407 = vector.shape_cast %406 : vector<1x32x8xf32> to vector<32x8xf32>
    %cst_238 = arith.constant dense<0.000000e+00> : vector<16x8xf32>
    %408 = tpu.matmul %299, %407, %cst_238 {dimension_numbers = #tpu.dot_dimension_numbers<[1], [0], [0], [1], [0, 0, 1, 1], [], []>} : vector<16x32xf32>, vector<32x8xf32>, vector<16x8xf32> -> vector<16x8xf32>
    %c22_239 = arith.constant 22 : index
    %c0_240 = arith.constant 0 : index
    %c0_241 = arith.constant 0 : index
    %409 = vector.load %arg4[%c22_239, %c0_240, %c0_241] : memref<48x1x8xf32, #tpu.memory_space<vmem>>, vector<1x1x8xf32>
    %410 = vector.shape_cast %409 : vector<1x1x8xf32> to vector<1x8xf32>
    %411 = vector.broadcast %410 : vector<1x8xf32> to vector<16x8xf32>
    %412 = arith.addf %408, %411 : vector<16x8xf32>
    %413 = vector.shape_cast %398 : vector<16x8xf32> to vector<2x8x8xf32>
    %414 = vector.shape_cast %405 : vector<16x8xf32> to vector<2x8x8xf32>
    %415 = vector.shape_cast %412 : vector<16x8xf32> to vector<2x8x8xf32>
    "tpu.trace_start"() <{level = 10 : i32, message = "bqd,bkd->bqk"}> : () -> ()
    %cst_242 = arith.constant dense<0.000000e+00> : vector<2x8x8xf32>
    %416 = tpu.matmul %413, %414, %cst_242 {dimension_numbers = #tpu.dot_dimension_numbers<[2], [2], [1], [1], [0, 0, 0, 1, 1, 1], [0], [0]>} : vector<2x8x8xf32>, vector<2x8x8xf32>, vector<2x8x8xf32> -> vector<2x8x8xf32>
    "tpu.trace_stop"() : () -> ()
    %cst_243 = arith.constant 0.353553385 : f32
    %417 = vector.broadcast %cst_243 : f32 to vector<2x8x8xf32>
    %418 = arith.mulf %416, %417 : vector<2x8x8xf32>
    %419 = vector.broadcast %32 : vector<2x1x8xf32> to vector<2x8x8xf32>
    %420 = arith.addf %418, %419 : vector<2x8x8xf32>
    %cst_244 = arith.constant dense<0xFF800000> : vector<2x8xf32>
    %421 = vector.multi_reduction <maximumf>, %420, %cst_244 [2] : vector<2x8x8xf32> to vector<2x8xf32>
    %422 = vector.shape_cast %421 : vector<2x8xf32> to vector<2x8x1xf32>
    %423 = vector.broadcast %422 : vector<2x8x1xf32> to vector<2x8x8xf32>
    %424 = arith.subf %420, %423 : vector<2x8x8xf32>
    %425 = math.exp %424 : vector<2x8x8xf32>
    %cst_245 = arith.constant dense<0.000000e+00> : vector<2x8xf32>
    %426 = vector.multi_reduction <add>, %425, %cst_245 [2] : vector<2x8x8xf32> to vector<2x8xf32>
    %427 = vector.shape_cast %426 : vector<2x8xf32> to vector<2x8x1xf32>
    %428 = tpu.reciprocal %427 {approx = true} : vector<2x8x1xf32> -> vector<2x8x1xf32>
    %429 = vector.broadcast %428 : vector<2x8x1xf32> to vector<2x8x8xf32>
    %430 = arith.mulf %425, %429 : vector<2x8x8xf32>
    "tpu.trace_start"() <{level = 10 : i32, message = "bqk,bkd->bqd"}> : () -> ()
    %cst_246 = arith.constant dense<0.000000e+00> : vector<2x8x8xf32>
    %431 = tpu.matmul %430, %415, %cst_246 {dimension_numbers = #tpu.dot_dimension_numbers<[2], [1], [1], [2], [0, 0, 0, 1, 1, 2], [0], [0]>} : vector<2x8x8xf32>, vector<2x8x8xf32>, vector<2x8x8xf32> -> vector<2x8x8xf32>
    "tpu.trace_stop"() : () -> ()
    %432 = vector.shape_cast %431 : vector<2x8x8xf32> to vector<16x8xf32>
    %c6_247 = arith.constant 6 : index
    %c0_248 = arith.constant 0 : index
    %c0_249 = arith.constant 0 : index
    %433 = vector.load %arg5[%c6_247, %c0_248, %c0_249] : memref<16x8x32xf32, #tpu.memory_space<vmem>>, vector<1x8x32xf32>
    %434 = vector.shape_cast %433 : vector<1x8x32xf32> to vector<8x32xf32>
    %cst_250 = arith.constant dense<0.000000e+00> : vector<16x32xf32>
    %435 = tpu.matmul %432, %434, %cst_250 {dimension_numbers = #tpu.dot_dimension_numbers<[1], [0], [0], [1], [0, 0, 1, 1], [], []>} : vector<16x8xf32>, vector<8x32xf32>, vector<16x32xf32> -> vector<16x32xf32>
    %436 = arith.addf %391, %435 : vector<16x32xf32>
    %c15 = arith.constant 15 : index
    %c0_251 = arith.constant 0 : index
    %c0_252 = arith.constant 0 : index
    %437 = vector.load %arg3[%c15, %c0_251, %c0_252] : memref<48x32x8xf32, #tpu.memory_space<vmem>>, vector<1x32x8xf32>
    %438 = vector.shape_cast %437 : vector<1x32x8xf32> to vector<32x8xf32>
    %cst_253 = arith.constant dense<0.000000e+00> : vector<16x8xf32>
    %439 = tpu.matmul %299, %438, %cst_253 {dimension_numbers = #tpu.dot_dimension_numbers<[1], [0], [0], [1], [0, 0, 1, 1], [], []>} : vector<16x32xf32>, vector<32x8xf32>, vector<16x8xf32> -> vector<16x8xf32>
    %c15_254 = arith.constant 15 : index
    %c0_255 = arith.constant 0 : index
    %c0_256 = arith.constant 0 : index
    %440 = vector.load %arg4[%c15_254, %c0_255, %c0_256] : memref<48x1x8xf32, #tpu.memory_space<vmem>>, vector<1x1x8xf32>
    %441 = vector.shape_cast %440 : vector<1x1x8xf32> to vector<1x8xf32>
    %442 = vector.broadcast %441 : vector<1x8xf32> to vector<16x8xf32>
    %443 = arith.addf %439, %442 : vector<16x8xf32>
    %c19 = arith.constant 19 : index
    %c0_257 = arith.constant 0 : index
    %c0_258 = arith.constant 0 : index
    %444 = vector.load %arg3[%c19, %c0_257, %c0_258] : memref<48x32x8xf32, #tpu.memory_space<vmem>>, vector<1x32x8xf32>
    %445 = vector.shape_cast %444 : vector<1x32x8xf32> to vector<32x8xf32>
    %cst_259 = arith.constant dense<0.000000e+00> : vector<16x8xf32>
    %446 = tpu.matmul %299, %445, %cst_259 {dimension_numbers = #tpu.dot_dimension_numbers<[1], [0], [0], [1], [0, 0, 1, 1], [], []>} : vector<16x32xf32>, vector<32x8xf32>, vector<16x8xf32> -> vector<16x8xf32>
    %c19_260 = arith.constant 19 : index
    %c0_261 = arith.constant 0 : index
    %c0_262 = arith.constant 0 : index
    %447 = vector.load %arg4[%c19_260, %c0_261, %c0_262] : memref<48x1x8xf32, #tpu.memory_space<vmem>>, vector<1x1x8xf32>
    %448 = vector.shape_cast %447 : vector<1x1x8xf32> to vector<1x8xf32>
    %449 = vector.broadcast %448 : vector<1x8xf32> to vector<16x8xf32>
    %450 = arith.addf %446, %449 : vector<16x8xf32>
    %c23 = arith.constant 23 : index
    %c0_263 = arith.constant 0 : index
    %c0_264 = arith.constant 0 : index
    %451 = vector.load %arg3[%c23, %c0_263, %c0_264] : memref<48x32x8xf32, #tpu.memory_space<vmem>>, vector<1x32x8xf32>
    %452 = vector.shape_cast %451 : vector<1x32x8xf32> to vector<32x8xf32>
    %cst_265 = arith.constant dense<0.000000e+00> : vector<16x8xf32>
    %453 = tpu.matmul %299, %452, %cst_265 {dimension_numbers = #tpu.dot_dimension_numbers<[1], [0], [0], [1], [0, 0, 1, 1], [], []>} : vector<16x32xf32>, vector<32x8xf32>, vector<16x8xf32> -> vector<16x8xf32>
    %c23_266 = arith.constant 23 : index
    %c0_267 = arith.constant 0 : index
    %c0_268 = arith.constant 0 : index
    %454 = vector.load %arg4[%c23_266, %c0_267, %c0_268] : memref<48x1x8xf32, #tpu.memory_space<vmem>>, vector<1x1x8xf32>
    %455 = vector.shape_cast %454 : vector<1x1x8xf32> to vector<1x8xf32>
    %456 = vector.broadcast %455 : vector<1x8xf32> to vector<16x8xf32>
    %457 = arith.addf %453, %456 : vector<16x8xf32>
    %458 = vector.shape_cast %443 : vector<16x8xf32> to vector<2x8x8xf32>
    %459 = vector.shape_cast %450 : vector<16x8xf32> to vector<2x8x8xf32>
    %460 = vector.shape_cast %457 : vector<16x8xf32> to vector<2x8x8xf32>
    "tpu.trace_start"() <{level = 10 : i32, message = "bqd,bkd->bqk"}> : () -> ()
    %cst_269 = arith.constant dense<0.000000e+00> : vector<2x8x8xf32>
    %461 = tpu.matmul %458, %459, %cst_269 {dimension_numbers = #tpu.dot_dimension_numbers<[2], [2], [1], [1], [0, 0, 0, 1, 1, 1], [0], [0]>} : vector<2x8x8xf32>, vector<2x8x8xf32>, vector<2x8x8xf32> -> vector<2x8x8xf32>
    "tpu.trace_stop"() : () -> ()
    %cst_270 = arith.constant 0.353553385 : f32
    %462 = vector.broadcast %cst_270 : f32 to vector<2x8x8xf32>
    %463 = arith.mulf %461, %462 : vector<2x8x8xf32>
    %464 = vector.broadcast %32 : vector<2x1x8xf32> to vector<2x8x8xf32>
    %465 = arith.addf %463, %464 : vector<2x8x8xf32>
    %cst_271 = arith.constant dense<0xFF800000> : vector<2x8xf32>
    %466 = vector.multi_reduction <maximumf>, %465, %cst_271 [2] : vector<2x8x8xf32> to vector<2x8xf32>
    %467 = vector.shape_cast %466 : vector<2x8xf32> to vector<2x8x1xf32>
    %468 = vector.broadcast %467 : vector<2x8x1xf32> to vector<2x8x8xf32>
    %469 = arith.subf %465, %468 : vector<2x8x8xf32>
    %470 = math.exp %469 : vector<2x8x8xf32>
    %cst_272 = arith.constant dense<0.000000e+00> : vector<2x8xf32>
    %471 = vector.multi_reduction <add>, %470, %cst_272 [2] : vector<2x8x8xf32> to vector<2x8xf32>
    %472 = vector.shape_cast %471 : vector<2x8xf32> to vector<2x8x1xf32>
    %473 = tpu.reciprocal %472 {approx = true} : vector<2x8x1xf32> -> vector<2x8x1xf32>
    %474 = vector.broadcast %473 : vector<2x8x1xf32> to vector<2x8x8xf32>
    %475 = arith.mulf %470, %474 : vector<2x8x8xf32>
    "tpu.trace_start"() <{level = 10 : i32, message = "bqk,bkd->bqd"}> : () -> ()
    %cst_273 = arith.constant dense<0.000000e+00> : vector<2x8x8xf32>
    %476 = tpu.matmul %475, %460, %cst_273 {dimension_numbers = #tpu.dot_dimension_numbers<[2], [1], [1], [2], [0, 0, 0, 1, 1, 2], [0], [0]>} : vector<2x8x8xf32>, vector<2x8x8xf32>, vector<2x8x8xf32> -> vector<2x8x8xf32>
    "tpu.trace_stop"() : () -> ()
    %477 = vector.shape_cast %476 : vector<2x8x8xf32> to vector<16x8xf32>
    %c7_274 = arith.constant 7 : index
    %c0_275 = arith.constant 0 : index
    %c0_276 = arith.constant 0 : index
    %478 = vector.load %arg5[%c7_274, %c0_275, %c0_276] : memref<16x8x32xf32, #tpu.memory_space<vmem>>, vector<1x8x32xf32>
    %479 = vector.shape_cast %478 : vector<1x8x32xf32> to vector<8x32xf32>
    %cst_277 = arith.constant dense<0.000000e+00> : vector<16x32xf32>
    %480 = tpu.matmul %477, %479, %cst_277 {dimension_numbers = #tpu.dot_dimension_numbers<[1], [0], [0], [1], [0, 0, 1, 1], [], []>} : vector<16x8xf32>, vector<8x32xf32>, vector<16x32xf32> -> vector<16x32xf32>
    %481 = arith.addf %436, %480 : vector<16x32xf32>
    %c6_278 = arith.constant 6 : index
    %c0_279 = arith.constant 0 : index
    %c0_280 = arith.constant 0 : index
    %482 = vector.load %arg6[%c6_278, %c0_279, %c0_280] : memref<24x1x32xf32, #tpu.memory_space<vmem>>, vector<1x1x32xf32>
    %483 = vector.shape_cast %482 : vector<1x1x32xf32> to vector<1x32xf32>
    %484 = vector.broadcast %483 : vector<1x32xf32> to vector<16x32xf32>
    %485 = arith.addf %481, %484 : vector<16x32xf32>
    %486 = arith.addf %485, %299 : vector<16x32xf32>
    %c7_281 = arith.constant 7 : index
    %c0_282 = arith.constant 0 : index
    %c0_283 = arith.constant 0 : index
    %487 = vector.load %arg6[%c7_281, %c0_282, %c0_283] : memref<24x1x32xf32, #tpu.memory_space<vmem>>, vector<1x1x32xf32>
    %488 = vector.shape_cast %487 : vector<1x1x32xf32> to vector<1x32xf32>
    %c8_284 = arith.constant 8 : index
    %c0_285 = arith.constant 0 : index
    %c0_286 = arith.constant 0 : index
    %489 = vector.load %arg6[%c8_284, %c0_285, %c0_286] : memref<24x1x32xf32, #tpu.memory_space<vmem>>, vector<1x1x32xf32>
    %490 = vector.shape_cast %489 : vector<1x1x32xf32> to vector<1x32xf32>
    %cst_287 = arith.constant dense<0.000000e+00> : vector<16xf32>
    %491 = vector.multi_reduction <add>, %486, %cst_287 [1] : vector<16x32xf32> to vector<16xf32>
    %492 = vector.shape_cast %491 : vector<16xf32> to vector<16x1xf32>
    %cst_288 = arith.constant 3.200000e+01 : f32
    %493 = vector.broadcast %cst_288 : f32 to vector<16x1xf32>
    %494 = arith.divf %492, %493 : vector<16x1xf32>
    %495 = vector.broadcast %494 : vector<16x1xf32> to vector<16x32xf32>
    %496 = arith.subf %486, %495 : vector<16x32xf32>
    %497 = arith.mulf %496, %496 : vector<16x32xf32>
    %cst_289 = arith.constant dense<0.000000e+00> : vector<16xf32>
    %498 = vector.multi_reduction <add>, %497, %cst_289 [1] : vector<16x32xf32> to vector<16xf32>
    %499 = vector.shape_cast %498 : vector<16xf32> to vector<16x1xf32>
    %cst_290 = arith.constant 3.200000e+01 : f32
    %500 = vector.broadcast %cst_290 : f32 to vector<16x1xf32>
    %501 = arith.divf %499, %500 : vector<16x1xf32>
    %502 = vector.broadcast %494 : vector<16x1xf32> to vector<16x32xf32>
    %503 = arith.subf %486, %502 : vector<16x32xf32>
    %cst_291 = arith.constant 9.99999974E-6 : f32
    %504 = vector.broadcast %cst_291 : f32 to vector<16x1xf32>
    %505 = arith.addf %501, %504 : vector<16x1xf32>
    %506 = math.rsqrt %505 : vector<16x1xf32>
    %507 = vector.broadcast %506 : vector<16x1xf32> to vector<16x32xf32>
    %508 = arith.mulf %503, %507 : vector<16x32xf32>
    %509 = vector.broadcast %488 : vector<1x32xf32> to vector<16x32xf32>
    %510 = arith.mulf %508, %509 : vector<16x32xf32>
    %511 = vector.broadcast %490 : vector<1x32xf32> to vector<16x32xf32>
    %512 = arith.addf %510, %511 : vector<16x32xf32>
    %c1_292 = arith.constant 1 : index
    %c0_293 = arith.constant 0 : index
    %c0_294 = arith.constant 0 : index
    %513 = vector.load %arg7[%c1_292, %c0_293, %c0_294] : memref<4x32x128xf32, #tpu.memory_space<vmem>>, vector<1x32x128xf32>
    %514 = vector.shape_cast %513 : vector<1x32x128xf32> to vector<32x128xf32>
    %cst_295 = arith.constant dense<0.000000e+00> : vector<16x128xf32>
    %515 = tpu.matmul %512, %514, %cst_295 {dimension_numbers = #tpu.dot_dimension_numbers<[1], [0], [0], [1], [0, 0, 1, 1], [], []>} : vector<16x32xf32>, vector<32x128xf32>, vector<16x128xf32> -> vector<16x128xf32>
    %c1_296 = arith.constant 1 : index
    %c0_297 = arith.constant 0 : index
    %c0_298 = arith.constant 0 : index
    %516 = vector.load %arg8[%c1_296, %c0_297, %c0_298] : memref<4x1x128xf32, #tpu.memory_space<vmem>>, vector<1x1x128xf32>
    %517 = vector.shape_cast %516 : vector<1x1x128xf32> to vector<1x128xf32>
    %518 = vector.broadcast %517 : vector<1x128xf32> to vector<16x128xf32>
    %519 = arith.addf %515, %518 : vector<16x128xf32>
    %520 = arith.mulf %519, %519 : vector<16x128xf32>
    %521 = arith.mulf %519, %520 : vector<16x128xf32>
    %cst_299 = arith.constant 4.471500e-02 : f32
    %522 = vector.broadcast %cst_299 : f32 to vector<16x128xf32>
    %523 = arith.mulf %522, %521 : vector<16x128xf32>
    %524 = arith.addf %519, %523 : vector<16x128xf32>
    %cst_300 = arith.constant 0.797884583 : f32
    %525 = vector.broadcast %cst_300 : f32 to vector<16x128xf32>
    %526 = arith.mulf %525, %524 : vector<16x128xf32>
    %527 = math.tanh %526 : vector<16x128xf32>
    %cst_301 = arith.constant 1.000000e+00 : f32
    %528 = vector.broadcast %cst_301 : f32 to vector<16x128xf32>
    %529 = arith.addf %528, %527 : vector<16x128xf32>
    %cst_302 = arith.constant 5.000000e-01 : f32
    %530 = vector.broadcast %cst_302 : f32 to vector<16x128xf32>
    %531 = arith.mulf %530, %529 : vector<16x128xf32>
    %532 = arith.mulf %519, %531 : vector<16x128xf32>
    %c1_303 = arith.constant 1 : index
    %c0_304 = arith.constant 0 : index
    %c0_305 = arith.constant 0 : index
    %533 = vector.load %arg9[%c1_303, %c0_304, %c0_305] : memref<4x128x32xf32, #tpu.memory_space<vmem>>, vector<1x128x32xf32>
    %534 = vector.shape_cast %533 : vector<1x128x32xf32> to vector<128x32xf32>
    %cst_306 = arith.constant dense<0.000000e+00> : vector<16x32xf32>
    %535 = tpu.matmul %532, %534, %cst_306 {dimension_numbers = #tpu.dot_dimension_numbers<[1], [0], [0], [1], [0, 0, 1, 1], [], []>} : vector<16x128xf32>, vector<128x32xf32>, vector<16x32xf32> -> vector<16x32xf32>
    %c9_307 = arith.constant 9 : index
    %c0_308 = arith.constant 0 : index
    %c0_309 = arith.constant 0 : index
    %536 = vector.load %arg6[%c9_307, %c0_308, %c0_309] : memref<24x1x32xf32, #tpu.memory_space<vmem>>, vector<1x1x32xf32>
    %537 = vector.shape_cast %536 : vector<1x1x32xf32> to vector<1x32xf32>
    %538 = vector.broadcast %537 : vector<1x32xf32> to vector<16x32xf32>
    %539 = arith.addf %535, %538 : vector<16x32xf32>
    %540 = arith.addf %539, %512 : vector<16x32xf32>
    %c10_310 = arith.constant 10 : index
    %c0_311 = arith.constant 0 : index
    %c0_312 = arith.constant 0 : index
    %541 = vector.load %arg6[%c10_310, %c0_311, %c0_312] : memref<24x1x32xf32, #tpu.memory_space<vmem>>, vector<1x1x32xf32>
    %542 = vector.shape_cast %541 : vector<1x1x32xf32> to vector<1x32xf32>
    %c11_313 = arith.constant 11 : index
    %c0_314 = arith.constant 0 : index
    %c0_315 = arith.constant 0 : index
    %543 = vector.load %arg6[%c11_313, %c0_314, %c0_315] : memref<24x1x32xf32, #tpu.memory_space<vmem>>, vector<1x1x32xf32>
    %544 = vector.shape_cast %543 : vector<1x1x32xf32> to vector<1x32xf32>
    %cst_316 = arith.constant dense<0.000000e+00> : vector<16xf32>
    %545 = vector.multi_reduction <add>, %540, %cst_316 [1] : vector<16x32xf32> to vector<16xf32>
    %546 = vector.shape_cast %545 : vector<16xf32> to vector<16x1xf32>
    %cst_317 = arith.constant 3.200000e+01 : f32
    %547 = vector.broadcast %cst_317 : f32 to vector<16x1xf32>
    %548 = arith.divf %546, %547 : vector<16x1xf32>
    %549 = vector.broadcast %548 : vector<16x1xf32> to vector<16x32xf32>
    %550 = arith.subf %540, %549 : vector<16x32xf32>
    %551 = arith.mulf %550, %550 : vector<16x32xf32>
    %cst_318 = arith.constant dense<0.000000e+00> : vector<16xf32>
    %552 = vector.multi_reduction <add>, %551, %cst_318 [1] : vector<16x32xf32> to vector<16xf32>
    %553 = vector.shape_cast %552 : vector<16xf32> to vector<16x1xf32>
    %cst_319 = arith.constant 3.200000e+01 : f32
    %554 = vector.broadcast %cst_319 : f32 to vector<16x1xf32>
    %555 = arith.divf %553, %554 : vector<16x1xf32>
    %556 = vector.broadcast %548 : vector<16x1xf32> to vector<16x32xf32>
    %557 = arith.subf %540, %556 : vector<16x32xf32>
    %cst_320 = arith.constant 9.99999974E-6 : f32
    %558 = vector.broadcast %cst_320 : f32 to vector<16x1xf32>
    %559 = arith.addf %555, %558 : vector<16x1xf32>
    %560 = math.rsqrt %559 : vector<16x1xf32>
    %561 = vector.broadcast %560 : vector<16x1xf32> to vector<16x32xf32>
    %562 = arith.mulf %557, %561 : vector<16x32xf32>
    %563 = vector.broadcast %542 : vector<1x32xf32> to vector<16x32xf32>
    %564 = arith.mulf %562, %563 : vector<16x32xf32>
    %565 = vector.broadcast %544 : vector<1x32xf32> to vector<16x32xf32>
    %566 = arith.addf %564, %565 : vector<16x32xf32>
    %567 = arith.addf %300, %566 : vector<16x32xf32>
    %cst_321 = arith.constant 0.000000e+00 : f32
    %568 = vector.broadcast %cst_321 : f32 to vector<16x32xf32>
    %c24 = arith.constant 24 : index
    %c0_322 = arith.constant 0 : index
    %c0_323 = arith.constant 0 : index
    %569 = vector.load %arg3[%c24, %c0_322, %c0_323] : memref<48x32x8xf32, #tpu.memory_space<vmem>>, vector<1x32x8xf32>
    %570 = vector.shape_cast %569 : vector<1x32x8xf32> to vector<32x8xf32>
    %cst_324 = arith.constant dense<0.000000e+00> : vector<16x8xf32>
    %571 = tpu.matmul %566, %570, %cst_324 {dimension_numbers = #tpu.dot_dimension_numbers<[1], [0], [0], [1], [0, 0, 1, 1], [], []>} : vector<16x32xf32>, vector<32x8xf32>, vector<16x8xf32> -> vector<16x8xf32>
    %c24_325 = arith.constant 24 : index
    %c0_326 = arith.constant 0 : index
    %c0_327 = arith.constant 0 : index
    %572 = vector.load %arg4[%c24_325, %c0_326, %c0_327] : memref<48x1x8xf32, #tpu.memory_space<vmem>>, vector<1x1x8xf32>
    %573 = vector.shape_cast %572 : vector<1x1x8xf32> to vector<1x8xf32>
    %574 = vector.broadcast %573 : vector<1x8xf32> to vector<16x8xf32>
    %575 = arith.addf %571, %574 : vector<16x8xf32>
    %c28 = arith.constant 28 : index
    %c0_328 = arith.constant 0 : index
    %c0_329 = arith.constant 0 : index
    %576 = vector.load %arg3[%c28, %c0_328, %c0_329] : memref<48x32x8xf32, #tpu.memory_space<vmem>>, vector<1x32x8xf32>
    %577 = vector.shape_cast %576 : vector<1x32x8xf32> to vector<32x8xf32>
    %cst_330 = arith.constant dense<0.000000e+00> : vector<16x8xf32>
    %578 = tpu.matmul %566, %577, %cst_330 {dimension_numbers = #tpu.dot_dimension_numbers<[1], [0], [0], [1], [0, 0, 1, 1], [], []>} : vector<16x32xf32>, vector<32x8xf32>, vector<16x8xf32> -> vector<16x8xf32>
    %c28_331 = arith.constant 28 : index
    %c0_332 = arith.constant 0 : index
    %c0_333 = arith.constant 0 : index
    %579 = vector.load %arg4[%c28_331, %c0_332, %c0_333] : memref<48x1x8xf32, #tpu.memory_space<vmem>>, vector<1x1x8xf32>
    %580 = vector.shape_cast %579 : vector<1x1x8xf32> to vector<1x8xf32>
    %581 = vector.broadcast %580 : vector<1x8xf32> to vector<16x8xf32>
    %582 = arith.addf %578, %581 : vector<16x8xf32>
    %c32 = arith.constant 32 : index
    %c0_334 = arith.constant 0 : index
    %c0_335 = arith.constant 0 : index
    %583 = vector.load %arg3[%c32, %c0_334, %c0_335] : memref<48x32x8xf32, #tpu.memory_space<vmem>>, vector<1x32x8xf32>
    %584 = vector.shape_cast %583 : vector<1x32x8xf32> to vector<32x8xf32>
    %cst_336 = arith.constant dense<0.000000e+00> : vector<16x8xf32>
    %585 = tpu.matmul %566, %584, %cst_336 {dimension_numbers = #tpu.dot_dimension_numbers<[1], [0], [0], [1], [0, 0, 1, 1], [], []>} : vector<16x32xf32>, vector<32x8xf32>, vector<16x8xf32> -> vector<16x8xf32>
    %c32_337 = arith.constant 32 : index
    %c0_338 = arith.constant 0 : index
    %c0_339 = arith.constant 0 : index
    %586 = vector.load %arg4[%c32_337, %c0_338, %c0_339] : memref<48x1x8xf32, #tpu.memory_space<vmem>>, vector<1x1x8xf32>
    %587 = vector.shape_cast %586 : vector<1x1x8xf32> to vector<1x8xf32>
    %588 = vector.broadcast %587 : vector<1x8xf32> to vector<16x8xf32>
    %589 = arith.addf %585, %588 : vector<16x8xf32>
    %590 = vector.shape_cast %575 : vector<16x8xf32> to vector<2x8x8xf32>
    %591 = vector.shape_cast %582 : vector<16x8xf32> to vector<2x8x8xf32>
    %592 = vector.shape_cast %589 : vector<16x8xf32> to vector<2x8x8xf32>
    "tpu.trace_start"() <{level = 10 : i32, message = "bqd,bkd->bqk"}> : () -> ()
    %cst_340 = arith.constant dense<0.000000e+00> : vector<2x8x8xf32>
    %593 = tpu.matmul %590, %591, %cst_340 {dimension_numbers = #tpu.dot_dimension_numbers<[2], [2], [1], [1], [0, 0, 0, 1, 1, 1], [0], [0]>} : vector<2x8x8xf32>, vector<2x8x8xf32>, vector<2x8x8xf32> -> vector<2x8x8xf32>
    "tpu.trace_stop"() : () -> ()
    %cst_341 = arith.constant 0.353553385 : f32
    %594 = vector.broadcast %cst_341 : f32 to vector<2x8x8xf32>
    %595 = arith.mulf %593, %594 : vector<2x8x8xf32>
    %596 = vector.broadcast %32 : vector<2x1x8xf32> to vector<2x8x8xf32>
    %597 = arith.addf %595, %596 : vector<2x8x8xf32>
    %cst_342 = arith.constant dense<0xFF800000> : vector<2x8xf32>
    %598 = vector.multi_reduction <maximumf>, %597, %cst_342 [2] : vector<2x8x8xf32> to vector<2x8xf32>
    %599 = vector.shape_cast %598 : vector<2x8xf32> to vector<2x8x1xf32>
    %600 = vector.broadcast %599 : vector<2x8x1xf32> to vector<2x8x8xf32>
    %601 = arith.subf %597, %600 : vector<2x8x8xf32>
    %602 = math.exp %601 : vector<2x8x8xf32>
    %cst_343 = arith.constant dense<0.000000e+00> : vector<2x8xf32>
    %603 = vector.multi_reduction <add>, %602, %cst_343 [2] : vector<2x8x8xf32> to vector<2x8xf32>
    %604 = vector.shape_cast %603 : vector<2x8xf32> to vector<2x8x1xf32>
    %605 = tpu.reciprocal %604 {approx = true} : vector<2x8x1xf32> -> vector<2x8x1xf32>
    %606 = vector.broadcast %605 : vector<2x8x1xf32> to vector<2x8x8xf32>
    %607 = arith.mulf %602, %606 : vector<2x8x8xf32>
    "tpu.trace_start"() <{level = 10 : i32, message = "bqk,bkd->bqd"}> : () -> ()
    %cst_344 = arith.constant dense<0.000000e+00> : vector<2x8x8xf32>
    %608 = tpu.matmul %607, %592, %cst_344 {dimension_numbers = #tpu.dot_dimension_numbers<[2], [1], [1], [2], [0, 0, 0, 1, 1, 2], [0], [0]>} : vector<2x8x8xf32>, vector<2x8x8xf32>, vector<2x8x8xf32> -> vector<2x8x8xf32>
    "tpu.trace_stop"() : () -> ()
    %609 = vector.shape_cast %608 : vector<2x8x8xf32> to vector<16x8xf32>
    %c8_345 = arith.constant 8 : index
    %c0_346 = arith.constant 0 : index
    %c0_347 = arith.constant 0 : index
    %610 = vector.load %arg5[%c8_345, %c0_346, %c0_347] : memref<16x8x32xf32, #tpu.memory_space<vmem>>, vector<1x8x32xf32>
    %611 = vector.shape_cast %610 : vector<1x8x32xf32> to vector<8x32xf32>
    %cst_348 = arith.constant dense<0.000000e+00> : vector<16x32xf32>
    %612 = tpu.matmul %609, %611, %cst_348 {dimension_numbers = #tpu.dot_dimension_numbers<[1], [0], [0], [1], [0, 0, 1, 1], [], []>} : vector<16x8xf32>, vector<8x32xf32>, vector<16x32xf32> -> vector<16x32xf32>
    %613 = arith.addf %568, %612 : vector<16x32xf32>
    %c25 = arith.constant 25 : index
    %c0_349 = arith.constant 0 : index
    %c0_350 = arith.constant 0 : index
    %614 = vector.load %arg3[%c25, %c0_349, %c0_350] : memref<48x32x8xf32, #tpu.memory_space<vmem>>, vector<1x32x8xf32>
    %615 = vector.shape_cast %614 : vector<1x32x8xf32> to vector<32x8xf32>
    %cst_351 = arith.constant dense<0.000000e+00> : vector<16x8xf32>
    %616 = tpu.matmul %566, %615, %cst_351 {dimension_numbers = #tpu.dot_dimension_numbers<[1], [0], [0], [1], [0, 0, 1, 1], [], []>} : vector<16x32xf32>, vector<32x8xf32>, vector<16x8xf32> -> vector<16x8xf32>
    %c25_352 = arith.constant 25 : index
    %c0_353 = arith.constant 0 : index
    %c0_354 = arith.constant 0 : index
    %617 = vector.load %arg4[%c25_352, %c0_353, %c0_354] : memref<48x1x8xf32, #tpu.memory_space<vmem>>, vector<1x1x8xf32>
    %618 = vector.shape_cast %617 : vector<1x1x8xf32> to vector<1x8xf32>
    %619 = vector.broadcast %618 : vector<1x8xf32> to vector<16x8xf32>
    %620 = arith.addf %616, %619 : vector<16x8xf32>
    %c29 = arith.constant 29 : index
    %c0_355 = arith.constant 0 : index
    %c0_356 = arith.constant 0 : index
    %621 = vector.load %arg3[%c29, %c0_355, %c0_356] : memref<48x32x8xf32, #tpu.memory_space<vmem>>, vector<1x32x8xf32>
    %622 = vector.shape_cast %621 : vector<1x32x8xf32> to vector<32x8xf32>
    %cst_357 = arith.constant dense<0.000000e+00> : vector<16x8xf32>
    %623 = tpu.matmul %566, %622, %cst_357 {dimension_numbers = #tpu.dot_dimension_numbers<[1], [0], [0], [1], [0, 0, 1, 1], [], []>} : vector<16x32xf32>, vector<32x8xf32>, vector<16x8xf32> -> vector<16x8xf32>
    %c29_358 = arith.constant 29 : index
    %c0_359 = arith.constant 0 : index
    %c0_360 = arith.constant 0 : index
    %624 = vector.load %arg4[%c29_358, %c0_359, %c0_360] : memref<48x1x8xf32, #tpu.memory_space<vmem>>, vector<1x1x8xf32>
    %625 = vector.shape_cast %624 : vector<1x1x8xf32> to vector<1x8xf32>
    %626 = vector.broadcast %625 : vector<1x8xf32> to vector<16x8xf32>
    %627 = arith.addf %623, %626 : vector<16x8xf32>
    %c33 = arith.constant 33 : index
    %c0_361 = arith.constant 0 : index
    %c0_362 = arith.constant 0 : index
    %628 = vector.load %arg3[%c33, %c0_361, %c0_362] : memref<48x32x8xf32, #tpu.memory_space<vmem>>, vector<1x32x8xf32>
    %629 = vector.shape_cast %628 : vector<1x32x8xf32> to vector<32x8xf32>
    %cst_363 = arith.constant dense<0.000000e+00> : vector<16x8xf32>
    %630 = tpu.matmul %566, %629, %cst_363 {dimension_numbers = #tpu.dot_dimension_numbers<[1], [0], [0], [1], [0, 0, 1, 1], [], []>} : vector<16x32xf32>, vector<32x8xf32>, vector<16x8xf32> -> vector<16x8xf32>
    %c33_364 = arith.constant 33 : index
    %c0_365 = arith.constant 0 : index
    %c0_366 = arith.constant 0 : index
    %631 = vector.load %arg4[%c33_364, %c0_365, %c0_366] : memref<48x1x8xf32, #tpu.memory_space<vmem>>, vector<1x1x8xf32>
    %632 = vector.shape_cast %631 : vector<1x1x8xf32> to vector<1x8xf32>
    %633 = vector.broadcast %632 : vector<1x8xf32> to vector<16x8xf32>
    %634 = arith.addf %630, %633 : vector<16x8xf32>
    %635 = vector.shape_cast %620 : vector<16x8xf32> to vector<2x8x8xf32>
    %636 = vector.shape_cast %627 : vector<16x8xf32> to vector<2x8x8xf32>
    %637 = vector.shape_cast %634 : vector<16x8xf32> to vector<2x8x8xf32>
    "tpu.trace_start"() <{level = 10 : i32, message = "bqd,bkd->bqk"}> : () -> ()
    %cst_367 = arith.constant dense<0.000000e+00> : vector<2x8x8xf32>
    %638 = tpu.matmul %635, %636, %cst_367 {dimension_numbers = #tpu.dot_dimension_numbers<[2], [2], [1], [1], [0, 0, 0, 1, 1, 1], [0], [0]>} : vector<2x8x8xf32>, vector<2x8x8xf32>, vector<2x8x8xf32> -> vector<2x8x8xf32>
    "tpu.trace_stop"() : () -> ()
    %cst_368 = arith.constant 0.353553385 : f32
    %639 = vector.broadcast %cst_368 : f32 to vector<2x8x8xf32>
    %640 = arith.mulf %638, %639 : vector<2x8x8xf32>
    %641 = vector.broadcast %32 : vector<2x1x8xf32> to vector<2x8x8xf32>
    %642 = arith.addf %640, %641 : vector<2x8x8xf32>
    %cst_369 = arith.constant dense<0xFF800000> : vector<2x8xf32>
    %643 = vector.multi_reduction <maximumf>, %642, %cst_369 [2] : vector<2x8x8xf32> to vector<2x8xf32>
    %644 = vector.shape_cast %643 : vector<2x8xf32> to vector<2x8x1xf32>
    %645 = vector.broadcast %644 : vector<2x8x1xf32> to vector<2x8x8xf32>
    %646 = arith.subf %642, %645 : vector<2x8x8xf32>
    %647 = math.exp %646 : vector<2x8x8xf32>
    %cst_370 = arith.constant dense<0.000000e+00> : vector<2x8xf32>
    %648 = vector.multi_reduction <add>, %647, %cst_370 [2] : vector<2x8x8xf32> to vector<2x8xf32>
    %649 = vector.shape_cast %648 : vector<2x8xf32> to vector<2x8x1xf32>
    %650 = tpu.reciprocal %649 {approx = true} : vector<2x8x1xf32> -> vector<2x8x1xf32>
    %651 = vector.broadcast %650 : vector<2x8x1xf32> to vector<2x8x8xf32>
    %652 = arith.mulf %647, %651 : vector<2x8x8xf32>
    "tpu.trace_start"() <{level = 10 : i32, message = "bqk,bkd->bqd"}> : () -> ()
    %cst_371 = arith.constant dense<0.000000e+00> : vector<2x8x8xf32>
    %653 = tpu.matmul %652, %637, %cst_371 {dimension_numbers = #tpu.dot_dimension_numbers<[2], [1], [1], [2], [0, 0, 0, 1, 1, 2], [0], [0]>} : vector<2x8x8xf32>, vector<2x8x8xf32>, vector<2x8x8xf32> -> vector<2x8x8xf32>
    "tpu.trace_stop"() : () -> ()
    %654 = vector.shape_cast %653 : vector<2x8x8xf32> to vector<16x8xf32>
    %c9_372 = arith.constant 9 : index
    %c0_373 = arith.constant 0 : index
    %c0_374 = arith.constant 0 : index
    %655 = vector.load %arg5[%c9_372, %c0_373, %c0_374] : memref<16x8x32xf32, #tpu.memory_space<vmem>>, vector<1x8x32xf32>
    %656 = vector.shape_cast %655 : vector<1x8x32xf32> to vector<8x32xf32>
    %cst_375 = arith.constant dense<0.000000e+00> : vector<16x32xf32>
    %657 = tpu.matmul %654, %656, %cst_375 {dimension_numbers = #tpu.dot_dimension_numbers<[1], [0], [0], [1], [0, 0, 1, 1], [], []>} : vector<16x8xf32>, vector<8x32xf32>, vector<16x32xf32> -> vector<16x32xf32>
    %658 = arith.addf %613, %657 : vector<16x32xf32>
    %c26 = arith.constant 26 : index
    %c0_376 = arith.constant 0 : index
    %c0_377 = arith.constant 0 : index
    %659 = vector.load %arg3[%c26, %c0_376, %c0_377] : memref<48x32x8xf32, #tpu.memory_space<vmem>>, vector<1x32x8xf32>
    %660 = vector.shape_cast %659 : vector<1x32x8xf32> to vector<32x8xf32>
    %cst_378 = arith.constant dense<0.000000e+00> : vector<16x8xf32>
    %661 = tpu.matmul %566, %660, %cst_378 {dimension_numbers = #tpu.dot_dimension_numbers<[1], [0], [0], [1], [0, 0, 1, 1], [], []>} : vector<16x32xf32>, vector<32x8xf32>, vector<16x8xf32> -> vector<16x8xf32>
    %c26_379 = arith.constant 26 : index
    %c0_380 = arith.constant 0 : index
    %c0_381 = arith.constant 0 : index
    %662 = vector.load %arg4[%c26_379, %c0_380, %c0_381] : memref<48x1x8xf32, #tpu.memory_space<vmem>>, vector<1x1x8xf32>
    %663 = vector.shape_cast %662 : vector<1x1x8xf32> to vector<1x8xf32>
    %664 = vector.broadcast %663 : vector<1x8xf32> to vector<16x8xf32>
    %665 = arith.addf %661, %664 : vector<16x8xf32>
    %c30 = arith.constant 30 : index
    %c0_382 = arith.constant 0 : index
    %c0_383 = arith.constant 0 : index
    %666 = vector.load %arg3[%c30, %c0_382, %c0_383] : memref<48x32x8xf32, #tpu.memory_space<vmem>>, vector<1x32x8xf32>
    %667 = vector.shape_cast %666 : vector<1x32x8xf32> to vector<32x8xf32>
    %cst_384 = arith.constant dense<0.000000e+00> : vector<16x8xf32>
    %668 = tpu.matmul %566, %667, %cst_384 {dimension_numbers = #tpu.dot_dimension_numbers<[1], [0], [0], [1], [0, 0, 1, 1], [], []>} : vector<16x32xf32>, vector<32x8xf32>, vector<16x8xf32> -> vector<16x8xf32>
    %c30_385 = arith.constant 30 : index
    %c0_386 = arith.constant 0 : index
    %c0_387 = arith.constant 0 : index
    %669 = vector.load %arg4[%c30_385, %c0_386, %c0_387] : memref<48x1x8xf32, #tpu.memory_space<vmem>>, vector<1x1x8xf32>
    %670 = vector.shape_cast %669 : vector<1x1x8xf32> to vector<1x8xf32>
    %671 = vector.broadcast %670 : vector<1x8xf32> to vector<16x8xf32>
    %672 = arith.addf %668, %671 : vector<16x8xf32>
    %c34 = arith.constant 34 : index
    %c0_388 = arith.constant 0 : index
    %c0_389 = arith.constant 0 : index
    %673 = vector.load %arg3[%c34, %c0_388, %c0_389] : memref<48x32x8xf32, #tpu.memory_space<vmem>>, vector<1x32x8xf32>
    %674 = vector.shape_cast %673 : vector<1x32x8xf32> to vector<32x8xf32>
    %cst_390 = arith.constant dense<0.000000e+00> : vector<16x8xf32>
    %675 = tpu.matmul %566, %674, %cst_390 {dimension_numbers = #tpu.dot_dimension_numbers<[1], [0], [0], [1], [0, 0, 1, 1], [], []>} : vector<16x32xf32>, vector<32x8xf32>, vector<16x8xf32> -> vector<16x8xf32>
    %c34_391 = arith.constant 34 : index
    %c0_392 = arith.constant 0 : index
    %c0_393 = arith.constant 0 : index
    %676 = vector.load %arg4[%c34_391, %c0_392, %c0_393] : memref<48x1x8xf32, #tpu.memory_space<vmem>>, vector<1x1x8xf32>
    %677 = vector.shape_cast %676 : vector<1x1x8xf32> to vector<1x8xf32>
    %678 = vector.broadcast %677 : vector<1x8xf32> to vector<16x8xf32>
    %679 = arith.addf %675, %678 : vector<16x8xf32>
    %680 = vector.shape_cast %665 : vector<16x8xf32> to vector<2x8x8xf32>
    %681 = vector.shape_cast %672 : vector<16x8xf32> to vector<2x8x8xf32>
    %682 = vector.shape_cast %679 : vector<16x8xf32> to vector<2x8x8xf32>
    "tpu.trace_start"() <{level = 10 : i32, message = "bqd,bkd->bqk"}> : () -> ()
    %cst_394 = arith.constant dense<0.000000e+00> : vector<2x8x8xf32>
    %683 = tpu.matmul %680, %681, %cst_394 {dimension_numbers = #tpu.dot_dimension_numbers<[2], [2], [1], [1], [0, 0, 0, 1, 1, 1], [0], [0]>} : vector<2x8x8xf32>, vector<2x8x8xf32>, vector<2x8x8xf32> -> vector<2x8x8xf32>
    "tpu.trace_stop"() : () -> ()
    %cst_395 = arith.constant 0.353553385 : f32
    %684 = vector.broadcast %cst_395 : f32 to vector<2x8x8xf32>
    %685 = arith.mulf %683, %684 : vector<2x8x8xf32>
    %686 = vector.broadcast %32 : vector<2x1x8xf32> to vector<2x8x8xf32>
    %687 = arith.addf %685, %686 : vector<2x8x8xf32>
    %cst_396 = arith.constant dense<0xFF800000> : vector<2x8xf32>
    %688 = vector.multi_reduction <maximumf>, %687, %cst_396 [2] : vector<2x8x8xf32> to vector<2x8xf32>
    %689 = vector.shape_cast %688 : vector<2x8xf32> to vector<2x8x1xf32>
    %690 = vector.broadcast %689 : vector<2x8x1xf32> to vector<2x8x8xf32>
    %691 = arith.subf %687, %690 : vector<2x8x8xf32>
    %692 = math.exp %691 : vector<2x8x8xf32>
    %cst_397 = arith.constant dense<0.000000e+00> : vector<2x8xf32>
    %693 = vector.multi_reduction <add>, %692, %cst_397 [2] : vector<2x8x8xf32> to vector<2x8xf32>
    %694 = vector.shape_cast %693 : vector<2x8xf32> to vector<2x8x1xf32>
    %695 = tpu.reciprocal %694 {approx = true} : vector<2x8x1xf32> -> vector<2x8x1xf32>
    %696 = vector.broadcast %695 : vector<2x8x1xf32> to vector<2x8x8xf32>
    %697 = arith.mulf %692, %696 : vector<2x8x8xf32>
    "tpu.trace_start"() <{level = 10 : i32, message = "bqk,bkd->bqd"}> : () -> ()
    %cst_398 = arith.constant dense<0.000000e+00> : vector<2x8x8xf32>
    %698 = tpu.matmul %697, %682, %cst_398 {dimension_numbers = #tpu.dot_dimension_numbers<[2], [1], [1], [2], [0, 0, 0, 1, 1, 2], [0], [0]>} : vector<2x8x8xf32>, vector<2x8x8xf32>, vector<2x8x8xf32> -> vector<2x8x8xf32>
    "tpu.trace_stop"() : () -> ()
    %699 = vector.shape_cast %698 : vector<2x8x8xf32> to vector<16x8xf32>
    %c10_399 = arith.constant 10 : index
    %c0_400 = arith.constant 0 : index
    %c0_401 = arith.constant 0 : index
    %700 = vector.load %arg5[%c10_399, %c0_400, %c0_401] : memref<16x8x32xf32, #tpu.memory_space<vmem>>, vector<1x8x32xf32>
    %701 = vector.shape_cast %700 : vector<1x8x32xf32> to vector<8x32xf32>
    %cst_402 = arith.constant dense<0.000000e+00> : vector<16x32xf32>
    %702 = tpu.matmul %699, %701, %cst_402 {dimension_numbers = #tpu.dot_dimension_numbers<[1], [0], [0], [1], [0, 0, 1, 1], [], []>} : vector<16x8xf32>, vector<8x32xf32>, vector<16x32xf32> -> vector<16x32xf32>
    %703 = arith.addf %658, %702 : vector<16x32xf32>
    %c27 = arith.constant 27 : index
    %c0_403 = arith.constant 0 : index
    %c0_404 = arith.constant 0 : index
    %704 = vector.load %arg3[%c27, %c0_403, %c0_404] : memref<48x32x8xf32, #tpu.memory_space<vmem>>, vector<1x32x8xf32>
    %705 = vector.shape_cast %704 : vector<1x32x8xf32> to vector<32x8xf32>
    %cst_405 = arith.constant dense<0.000000e+00> : vector<16x8xf32>
    %706 = tpu.matmul %566, %705, %cst_405 {dimension_numbers = #tpu.dot_dimension_numbers<[1], [0], [0], [1], [0, 0, 1, 1], [], []>} : vector<16x32xf32>, vector<32x8xf32>, vector<16x8xf32> -> vector<16x8xf32>
    %c27_406 = arith.constant 27 : index
    %c0_407 = arith.constant 0 : index
    %c0_408 = arith.constant 0 : index
    %707 = vector.load %arg4[%c27_406, %c0_407, %c0_408] : memref<48x1x8xf32, #tpu.memory_space<vmem>>, vector<1x1x8xf32>
    %708 = vector.shape_cast %707 : vector<1x1x8xf32> to vector<1x8xf32>
    %709 = vector.broadcast %708 : vector<1x8xf32> to vector<16x8xf32>
    %710 = arith.addf %706, %709 : vector<16x8xf32>
    %c31 = arith.constant 31 : index
    %c0_409 = arith.constant 0 : index
    %c0_410 = arith.constant 0 : index
    %711 = vector.load %arg3[%c31, %c0_409, %c0_410] : memref<48x32x8xf32, #tpu.memory_space<vmem>>, vector<1x32x8xf32>
    %712 = vector.shape_cast %711 : vector<1x32x8xf32> to vector<32x8xf32>
    %cst_411 = arith.constant dense<0.000000e+00> : vector<16x8xf32>
    %713 = tpu.matmul %566, %712, %cst_411 {dimension_numbers = #tpu.dot_dimension_numbers<[1], [0], [0], [1], [0, 0, 1, 1], [], []>} : vector<16x32xf32>, vector<32x8xf32>, vector<16x8xf32> -> vector<16x8xf32>
    %c31_412 = arith.constant 31 : index
    %c0_413 = arith.constant 0 : index
    %c0_414 = arith.constant 0 : index
    %714 = vector.load %arg4[%c31_412, %c0_413, %c0_414] : memref<48x1x8xf32, #tpu.memory_space<vmem>>, vector<1x1x8xf32>
    %715 = vector.shape_cast %714 : vector<1x1x8xf32> to vector<1x8xf32>
    %716 = vector.broadcast %715 : vector<1x8xf32> to vector<16x8xf32>
    %717 = arith.addf %713, %716 : vector<16x8xf32>
    %c35 = arith.constant 35 : index
    %c0_415 = arith.constant 0 : index
    %c0_416 = arith.constant 0 : index
    %718 = vector.load %arg3[%c35, %c0_415, %c0_416] : memref<48x32x8xf32, #tpu.memory_space<vmem>>, vector<1x32x8xf32>
    %719 = vector.shape_cast %718 : vector<1x32x8xf32> to vector<32x8xf32>
    %cst_417 = arith.constant dense<0.000000e+00> : vector<16x8xf32>
    %720 = tpu.matmul %566, %719, %cst_417 {dimension_numbers = #tpu.dot_dimension_numbers<[1], [0], [0], [1], [0, 0, 1, 1], [], []>} : vector<16x32xf32>, vector<32x8xf32>, vector<16x8xf32> -> vector<16x8xf32>
    %c35_418 = arith.constant 35 : index
    %c0_419 = arith.constant 0 : index
    %c0_420 = arith.constant 0 : index
    %721 = vector.load %arg4[%c35_418, %c0_419, %c0_420] : memref<48x1x8xf32, #tpu.memory_space<vmem>>, vector<1x1x8xf32>
    %722 = vector.shape_cast %721 : vector<1x1x8xf32> to vector<1x8xf32>
    %723 = vector.broadcast %722 : vector<1x8xf32> to vector<16x8xf32>
    %724 = arith.addf %720, %723 : vector<16x8xf32>
    %725 = vector.shape_cast %710 : vector<16x8xf32> to vector<2x8x8xf32>
    %726 = vector.shape_cast %717 : vector<16x8xf32> to vector<2x8x8xf32>
    %727 = vector.shape_cast %724 : vector<16x8xf32> to vector<2x8x8xf32>
    "tpu.trace_start"() <{level = 10 : i32, message = "bqd,bkd->bqk"}> : () -> ()
    %cst_421 = arith.constant dense<0.000000e+00> : vector<2x8x8xf32>
    %728 = tpu.matmul %725, %726, %cst_421 {dimension_numbers = #tpu.dot_dimension_numbers<[2], [2], [1], [1], [0, 0, 0, 1, 1, 1], [0], [0]>} : vector<2x8x8xf32>, vector<2x8x8xf32>, vector<2x8x8xf32> -> vector<2x8x8xf32>
    "tpu.trace_stop"() : () -> ()
    %cst_422 = arith.constant 0.353553385 : f32
    %729 = vector.broadcast %cst_422 : f32 to vector<2x8x8xf32>
    %730 = arith.mulf %728, %729 : vector<2x8x8xf32>
    %731 = vector.broadcast %32 : vector<2x1x8xf32> to vector<2x8x8xf32>
    %732 = arith.addf %730, %731 : vector<2x8x8xf32>
    %cst_423 = arith.constant dense<0xFF800000> : vector<2x8xf32>
    %733 = vector.multi_reduction <maximumf>, %732, %cst_423 [2] : vector<2x8x8xf32> to vector<2x8xf32>
    %734 = vector.shape_cast %733 : vector<2x8xf32> to vector<2x8x1xf32>
    %735 = vector.broadcast %734 : vector<2x8x1xf32> to vector<2x8x8xf32>
    %736 = arith.subf %732, %735 : vector<2x8x8xf32>
    %737 = math.exp %736 : vector<2x8x8xf32>
    %cst_424 = arith.constant dense<0.000000e+00> : vector<2x8xf32>
    %738 = vector.multi_reduction <add>, %737, %cst_424 [2] : vector<2x8x8xf32> to vector<2x8xf32>
    %739 = vector.shape_cast %738 : vector<2x8xf32> to vector<2x8x1xf32>
    %740 = tpu.reciprocal %739 {approx = true} : vector<2x8x1xf32> -> vector<2x8x1xf32>
    %741 = vector.broadcast %740 : vector<2x8x1xf32> to vector<2x8x8xf32>
    %742 = arith.mulf %737, %741 : vector<2x8x8xf32>
    "tpu.trace_start"() <{level = 10 : i32, message = "bqk,bkd->bqd"}> : () -> ()
    %cst_425 = arith.constant dense<0.000000e+00> : vector<2x8x8xf32>
    %743 = tpu.matmul %742, %727, %cst_425 {dimension_numbers = #tpu.dot_dimension_numbers<[2], [1], [1], [2], [0, 0, 0, 1, 1, 2], [0], [0]>} : vector<2x8x8xf32>, vector<2x8x8xf32>, vector<2x8x8xf32> -> vector<2x8x8xf32>
    "tpu.trace_stop"() : () -> ()
    %744 = vector.shape_cast %743 : vector<2x8x8xf32> to vector<16x8xf32>
    %c11_426 = arith.constant 11 : index
    %c0_427 = arith.constant 0 : index
    %c0_428 = arith.constant 0 : index
    %745 = vector.load %arg5[%c11_426, %c0_427, %c0_428] : memref<16x8x32xf32, #tpu.memory_space<vmem>>, vector<1x8x32xf32>
    %746 = vector.shape_cast %745 : vector<1x8x32xf32> to vector<8x32xf32>
    %cst_429 = arith.constant dense<0.000000e+00> : vector<16x32xf32>
    %747 = tpu.matmul %744, %746, %cst_429 {dimension_numbers = #tpu.dot_dimension_numbers<[1], [0], [0], [1], [0, 0, 1, 1], [], []>} : vector<16x8xf32>, vector<8x32xf32>, vector<16x32xf32> -> vector<16x32xf32>
    %748 = arith.addf %703, %747 : vector<16x32xf32>
    %c12_430 = arith.constant 12 : index
    %c0_431 = arith.constant 0 : index
    %c0_432 = arith.constant 0 : index
    %749 = vector.load %arg6[%c12_430, %c0_431, %c0_432] : memref<24x1x32xf32, #tpu.memory_space<vmem>>, vector<1x1x32xf32>
    %750 = vector.shape_cast %749 : vector<1x1x32xf32> to vector<1x32xf32>
    %751 = vector.broadcast %750 : vector<1x32xf32> to vector<16x32xf32>
    %752 = arith.addf %748, %751 : vector<16x32xf32>
    %753 = arith.addf %752, %566 : vector<16x32xf32>
    %c13_433 = arith.constant 13 : index
    %c0_434 = arith.constant 0 : index
    %c0_435 = arith.constant 0 : index
    %754 = vector.load %arg6[%c13_433, %c0_434, %c0_435] : memref<24x1x32xf32, #tpu.memory_space<vmem>>, vector<1x1x32xf32>
    %755 = vector.shape_cast %754 : vector<1x1x32xf32> to vector<1x32xf32>
    %c14_436 = arith.constant 14 : index
    %c0_437 = arith.constant 0 : index
    %c0_438 = arith.constant 0 : index
    %756 = vector.load %arg6[%c14_436, %c0_437, %c0_438] : memref<24x1x32xf32, #tpu.memory_space<vmem>>, vector<1x1x32xf32>
    %757 = vector.shape_cast %756 : vector<1x1x32xf32> to vector<1x32xf32>
    %cst_439 = arith.constant dense<0.000000e+00> : vector<16xf32>
    %758 = vector.multi_reduction <add>, %753, %cst_439 [1] : vector<16x32xf32> to vector<16xf32>
    %759 = vector.shape_cast %758 : vector<16xf32> to vector<16x1xf32>
    %cst_440 = arith.constant 3.200000e+01 : f32
    %760 = vector.broadcast %cst_440 : f32 to vector<16x1xf32>
    %761 = arith.divf %759, %760 : vector<16x1xf32>
    %762 = vector.broadcast %761 : vector<16x1xf32> to vector<16x32xf32>
    %763 = arith.subf %753, %762 : vector<16x32xf32>
    %764 = arith.mulf %763, %763 : vector<16x32xf32>
    %cst_441 = arith.constant dense<0.000000e+00> : vector<16xf32>
    %765 = vector.multi_reduction <add>, %764, %cst_441 [1] : vector<16x32xf32> to vector<16xf32>
    %766 = vector.shape_cast %765 : vector<16xf32> to vector<16x1xf32>
    %cst_442 = arith.constant 3.200000e+01 : f32
    %767 = vector.broadcast %cst_442 : f32 to vector<16x1xf32>
    %768 = arith.divf %766, %767 : vector<16x1xf32>
    %769 = vector.broadcast %761 : vector<16x1xf32> to vector<16x32xf32>
    %770 = arith.subf %753, %769 : vector<16x32xf32>
    %cst_443 = arith.constant 9.99999974E-6 : f32
    %771 = vector.broadcast %cst_443 : f32 to vector<16x1xf32>
    %772 = arith.addf %768, %771 : vector<16x1xf32>
    %773 = math.rsqrt %772 : vector<16x1xf32>
    %774 = vector.broadcast %773 : vector<16x1xf32> to vector<16x32xf32>
    %775 = arith.mulf %770, %774 : vector<16x32xf32>
    %776 = vector.broadcast %755 : vector<1x32xf32> to vector<16x32xf32>
    %777 = arith.mulf %775, %776 : vector<16x32xf32>
    %778 = vector.broadcast %757 : vector<1x32xf32> to vector<16x32xf32>
    %779 = arith.addf %777, %778 : vector<16x32xf32>
    %c2_444 = arith.constant 2 : index
    %c0_445 = arith.constant 0 : index
    %c0_446 = arith.constant 0 : index
    %780 = vector.load %arg7[%c2_444, %c0_445, %c0_446] : memref<4x32x128xf32, #tpu.memory_space<vmem>>, vector<1x32x128xf32>
    %781 = vector.shape_cast %780 : vector<1x32x128xf32> to vector<32x128xf32>
    %cst_447 = arith.constant dense<0.000000e+00> : vector<16x128xf32>
    %782 = tpu.matmul %779, %781, %cst_447 {dimension_numbers = #tpu.dot_dimension_numbers<[1], [0], [0], [1], [0, 0, 1, 1], [], []>} : vector<16x32xf32>, vector<32x128xf32>, vector<16x128xf32> -> vector<16x128xf32>
    %c2_448 = arith.constant 2 : index
    %c0_449 = arith.constant 0 : index
    %c0_450 = arith.constant 0 : index
    %783 = vector.load %arg8[%c2_448, %c0_449, %c0_450] : memref<4x1x128xf32, #tpu.memory_space<vmem>>, vector<1x1x128xf32>
    %784 = vector.shape_cast %783 : vector<1x1x128xf32> to vector<1x128xf32>
    %785 = vector.broadcast %784 : vector<1x128xf32> to vector<16x128xf32>
    %786 = arith.addf %782, %785 : vector<16x128xf32>
    %787 = arith.mulf %786, %786 : vector<16x128xf32>
    %788 = arith.mulf %786, %787 : vector<16x128xf32>
    %cst_451 = arith.constant 4.471500e-02 : f32
    %789 = vector.broadcast %cst_451 : f32 to vector<16x128xf32>
    %790 = arith.mulf %789, %788 : vector<16x128xf32>
    %791 = arith.addf %786, %790 : vector<16x128xf32>
    %cst_452 = arith.constant 0.797884583 : f32
    %792 = vector.broadcast %cst_452 : f32 to vector<16x128xf32>
    %793 = arith.mulf %792, %791 : vector<16x128xf32>
    %794 = math.tanh %793 : vector<16x128xf32>
    %cst_453 = arith.constant 1.000000e+00 : f32
    %795 = vector.broadcast %cst_453 : f32 to vector<16x128xf32>
    %796 = arith.addf %795, %794 : vector<16x128xf32>
    %cst_454 = arith.constant 5.000000e-01 : f32
    %797 = vector.broadcast %cst_454 : f32 to vector<16x128xf32>
    %798 = arith.mulf %797, %796 : vector<16x128xf32>
    %799 = arith.mulf %786, %798 : vector<16x128xf32>
    %c2_455 = arith.constant 2 : index
    %c0_456 = arith.constant 0 : index
    %c0_457 = arith.constant 0 : index
    %800 = vector.load %arg9[%c2_455, %c0_456, %c0_457] : memref<4x128x32xf32, #tpu.memory_space<vmem>>, vector<1x128x32xf32>
    %801 = vector.shape_cast %800 : vector<1x128x32xf32> to vector<128x32xf32>
    %cst_458 = arith.constant dense<0.000000e+00> : vector<16x32xf32>
    %802 = tpu.matmul %799, %801, %cst_458 {dimension_numbers = #tpu.dot_dimension_numbers<[1], [0], [0], [1], [0, 0, 1, 1], [], []>} : vector<16x128xf32>, vector<128x32xf32>, vector<16x32xf32> -> vector<16x32xf32>
    %c15_459 = arith.constant 15 : index
    %c0_460 = arith.constant 0 : index
    %c0_461 = arith.constant 0 : index
    %803 = vector.load %arg6[%c15_459, %c0_460, %c0_461] : memref<24x1x32xf32, #tpu.memory_space<vmem>>, vector<1x1x32xf32>
    %804 = vector.shape_cast %803 : vector<1x1x32xf32> to vector<1x32xf32>
    %805 = vector.broadcast %804 : vector<1x32xf32> to vector<16x32xf32>
    %806 = arith.addf %802, %805 : vector<16x32xf32>
    %807 = arith.addf %806, %779 : vector<16x32xf32>
    %c16_462 = arith.constant 16 : index
    %c0_463 = arith.constant 0 : index
    %c0_464 = arith.constant 0 : index
    %808 = vector.load %arg6[%c16_462, %c0_463, %c0_464] : memref<24x1x32xf32, #tpu.memory_space<vmem>>, vector<1x1x32xf32>
    %809 = vector.shape_cast %808 : vector<1x1x32xf32> to vector<1x32xf32>
    %c17_465 = arith.constant 17 : index
    %c0_466 = arith.constant 0 : index
    %c0_467 = arith.constant 0 : index
    %810 = vector.load %arg6[%c17_465, %c0_466, %c0_467] : memref<24x1x32xf32, #tpu.memory_space<vmem>>, vector<1x1x32xf32>
    %811 = vector.shape_cast %810 : vector<1x1x32xf32> to vector<1x32xf32>
    %cst_468 = arith.constant dense<0.000000e+00> : vector<16xf32>
    %812 = vector.multi_reduction <add>, %807, %cst_468 [1] : vector<16x32xf32> to vector<16xf32>
    %813 = vector.shape_cast %812 : vector<16xf32> to vector<16x1xf32>
    %cst_469 = arith.constant 3.200000e+01 : f32
    %814 = vector.broadcast %cst_469 : f32 to vector<16x1xf32>
    %815 = arith.divf %813, %814 : vector<16x1xf32>
    %816 = vector.broadcast %815 : vector<16x1xf32> to vector<16x32xf32>
    %817 = arith.subf %807, %816 : vector<16x32xf32>
    %818 = arith.mulf %817, %817 : vector<16x32xf32>
    %cst_470 = arith.constant dense<0.000000e+00> : vector<16xf32>
    %819 = vector.multi_reduction <add>, %818, %cst_470 [1] : vector<16x32xf32> to vector<16xf32>
    %820 = vector.shape_cast %819 : vector<16xf32> to vector<16x1xf32>
    %cst_471 = arith.constant 3.200000e+01 : f32
    %821 = vector.broadcast %cst_471 : f32 to vector<16x1xf32>
    %822 = arith.divf %820, %821 : vector<16x1xf32>
    %823 = vector.broadcast %815 : vector<16x1xf32> to vector<16x32xf32>
    %824 = arith.subf %807, %823 : vector<16x32xf32>
    %cst_472 = arith.constant 9.99999974E-6 : f32
    %825 = vector.broadcast %cst_472 : f32 to vector<16x1xf32>
    %826 = arith.addf %822, %825 : vector<16x1xf32>
    %827 = math.rsqrt %826 : vector<16x1xf32>
    %828 = vector.broadcast %827 : vector<16x1xf32> to vector<16x32xf32>
    %829 = arith.mulf %824, %828 : vector<16x32xf32>
    %830 = vector.broadcast %809 : vector<1x32xf32> to vector<16x32xf32>
    %831 = arith.mulf %829, %830 : vector<16x32xf32>
    %832 = vector.broadcast %811 : vector<1x32xf32> to vector<16x32xf32>
    %833 = arith.addf %831, %832 : vector<16x32xf32>
    %834 = arith.addf %567, %833 : vector<16x32xf32>
    %cst_473 = arith.constant 0.000000e+00 : f32
    %835 = vector.broadcast %cst_473 : f32 to vector<16x32xf32>
    %c36 = arith.constant 36 : index
    %c0_474 = arith.constant 0 : index
    %c0_475 = arith.constant 0 : index
    %836 = vector.load %arg3[%c36, %c0_474, %c0_475] : memref<48x32x8xf32, #tpu.memory_space<vmem>>, vector<1x32x8xf32>
    %837 = vector.shape_cast %836 : vector<1x32x8xf32> to vector<32x8xf32>
    %cst_476 = arith.constant dense<0.000000e+00> : vector<16x8xf32>
    %838 = tpu.matmul %833, %837, %cst_476 {dimension_numbers = #tpu.dot_dimension_numbers<[1], [0], [0], [1], [0, 0, 1, 1], [], []>} : vector<16x32xf32>, vector<32x8xf32>, vector<16x8xf32> -> vector<16x8xf32>
    %c36_477 = arith.constant 36 : index
    %c0_478 = arith.constant 0 : index
    %c0_479 = arith.constant 0 : index
    %839 = vector.load %arg4[%c36_477, %c0_478, %c0_479] : memref<48x1x8xf32, #tpu.memory_space<vmem>>, vector<1x1x8xf32>
    %840 = vector.shape_cast %839 : vector<1x1x8xf32> to vector<1x8xf32>
    %841 = vector.broadcast %840 : vector<1x8xf32> to vector<16x8xf32>
    %842 = arith.addf %838, %841 : vector<16x8xf32>
    %c40 = arith.constant 40 : index
    %c0_480 = arith.constant 0 : index
    %c0_481 = arith.constant 0 : index
    %843 = vector.load %arg3[%c40, %c0_480, %c0_481] : memref<48x32x8xf32, #tpu.memory_space<vmem>>, vector<1x32x8xf32>
    %844 = vector.shape_cast %843 : vector<1x32x8xf32> to vector<32x8xf32>
    %cst_482 = arith.constant dense<0.000000e+00> : vector<16x8xf32>
    %845 = tpu.matmul %833, %844, %cst_482 {dimension_numbers = #tpu.dot_dimension_numbers<[1], [0], [0], [1], [0, 0, 1, 1], [], []>} : vector<16x32xf32>, vector<32x8xf32>, vector<16x8xf32> -> vector<16x8xf32>
    %c40_483 = arith.constant 40 : index
    %c0_484 = arith.constant 0 : index
    %c0_485 = arith.constant 0 : index
    %846 = vector.load %arg4[%c40_483, %c0_484, %c0_485] : memref<48x1x8xf32, #tpu.memory_space<vmem>>, vector<1x1x8xf32>
    %847 = vector.shape_cast %846 : vector<1x1x8xf32> to vector<1x8xf32>
    %848 = vector.broadcast %847 : vector<1x8xf32> to vector<16x8xf32>
    %849 = arith.addf %845, %848 : vector<16x8xf32>
    %c44 = arith.constant 44 : index
    %c0_486 = arith.constant 0 : index
    %c0_487 = arith.constant 0 : index
    %850 = vector.load %arg3[%c44, %c0_486, %c0_487] : memref<48x32x8xf32, #tpu.memory_space<vmem>>, vector<1x32x8xf32>
    %851 = vector.shape_cast %850 : vector<1x32x8xf32> to vector<32x8xf32>
    %cst_488 = arith.constant dense<0.000000e+00> : vector<16x8xf32>
    %852 = tpu.matmul %833, %851, %cst_488 {dimension_numbers = #tpu.dot_dimension_numbers<[1], [0], [0], [1], [0, 0, 1, 1], [], []>} : vector<16x32xf32>, vector<32x8xf32>, vector<16x8xf32> -> vector<16x8xf32>
    %c44_489 = arith.constant 44 : index
    %c0_490 = arith.constant 0 : index
    %c0_491 = arith.constant 0 : index
    %853 = vector.load %arg4[%c44_489, %c0_490, %c0_491] : memref<48x1x8xf32, #tpu.memory_space<vmem>>, vector<1x1x8xf32>
    %854 = vector.shape_cast %853 : vector<1x1x8xf32> to vector<1x8xf32>
    %855 = vector.broadcast %854 : vector<1x8xf32> to vector<16x8xf32>
    %856 = arith.addf %852, %855 : vector<16x8xf32>
    %857 = vector.shape_cast %842 : vector<16x8xf32> to vector<2x8x8xf32>
    %858 = vector.shape_cast %849 : vector<16x8xf32> to vector<2x8x8xf32>
    %859 = vector.shape_cast %856 : vector<16x8xf32> to vector<2x8x8xf32>
    "tpu.trace_start"() <{level = 10 : i32, message = "bqd,bkd->bqk"}> : () -> ()
    %cst_492 = arith.constant dense<0.000000e+00> : vector<2x8x8xf32>
    %860 = tpu.matmul %857, %858, %cst_492 {dimension_numbers = #tpu.dot_dimension_numbers<[2], [2], [1], [1], [0, 0, 0, 1, 1, 1], [0], [0]>} : vector<2x8x8xf32>, vector<2x8x8xf32>, vector<2x8x8xf32> -> vector<2x8x8xf32>
    "tpu.trace_stop"() : () -> ()
    %cst_493 = arith.constant 0.353553385 : f32
    %861 = vector.broadcast %cst_493 : f32 to vector<2x8x8xf32>
    %862 = arith.mulf %860, %861 : vector<2x8x8xf32>
    %863 = vector.broadcast %32 : vector<2x1x8xf32> to vector<2x8x8xf32>
    %864 = arith.addf %862, %863 : vector<2x8x8xf32>
    %cst_494 = arith.constant dense<0xFF800000> : vector<2x8xf32>
    %865 = vector.multi_reduction <maximumf>, %864, %cst_494 [2] : vector<2x8x8xf32> to vector<2x8xf32>
    %866 = vector.shape_cast %865 : vector<2x8xf32> to vector<2x8x1xf32>
    %867 = vector.broadcast %866 : vector<2x8x1xf32> to vector<2x8x8xf32>
    %868 = arith.subf %864, %867 : vector<2x8x8xf32>
    %869 = math.exp %868 : vector<2x8x8xf32>
    %cst_495 = arith.constant dense<0.000000e+00> : vector<2x8xf32>
    %870 = vector.multi_reduction <add>, %869, %cst_495 [2] : vector<2x8x8xf32> to vector<2x8xf32>
    %871 = vector.shape_cast %870 : vector<2x8xf32> to vector<2x8x1xf32>
    %872 = tpu.reciprocal %871 {approx = true} : vector<2x8x1xf32> -> vector<2x8x1xf32>
    %873 = vector.broadcast %872 : vector<2x8x1xf32> to vector<2x8x8xf32>
    %874 = arith.mulf %869, %873 : vector<2x8x8xf32>
    "tpu.trace_start"() <{level = 10 : i32, message = "bqk,bkd->bqd"}> : () -> ()
    %cst_496 = arith.constant dense<0.000000e+00> : vector<2x8x8xf32>
    %875 = tpu.matmul %874, %859, %cst_496 {dimension_numbers = #tpu.dot_dimension_numbers<[2], [1], [1], [2], [0, 0, 0, 1, 1, 2], [0], [0]>} : vector<2x8x8xf32>, vector<2x8x8xf32>, vector<2x8x8xf32> -> vector<2x8x8xf32>
    "tpu.trace_stop"() : () -> ()
    %876 = vector.shape_cast %875 : vector<2x8x8xf32> to vector<16x8xf32>
    %c12_497 = arith.constant 12 : index
    %c0_498 = arith.constant 0 : index
    %c0_499 = arith.constant 0 : index
    %877 = vector.load %arg5[%c12_497, %c0_498, %c0_499] : memref<16x8x32xf32, #tpu.memory_space<vmem>>, vector<1x8x32xf32>
    %878 = vector.shape_cast %877 : vector<1x8x32xf32> to vector<8x32xf32>
    %cst_500 = arith.constant dense<0.000000e+00> : vector<16x32xf32>
    %879 = tpu.matmul %876, %878, %cst_500 {dimension_numbers = #tpu.dot_dimension_numbers<[1], [0], [0], [1], [0, 0, 1, 1], [], []>} : vector<16x8xf32>, vector<8x32xf32>, vector<16x32xf32> -> vector<16x32xf32>
    %880 = arith.addf %835, %879 : vector<16x32xf32>
    %c37 = arith.constant 37 : index
    %c0_501 = arith.constant 0 : index
    %c0_502 = arith.constant 0 : index
    %881 = vector.load %arg3[%c37, %c0_501, %c0_502] : memref<48x32x8xf32, #tpu.memory_space<vmem>>, vector<1x32x8xf32>
    %882 = vector.shape_cast %881 : vector<1x32x8xf32> to vector<32x8xf32>
    %cst_503 = arith.constant dense<0.000000e+00> : vector<16x8xf32>
    %883 = tpu.matmul %833, %882, %cst_503 {dimension_numbers = #tpu.dot_dimension_numbers<[1], [0], [0], [1], [0, 0, 1, 1], [], []>} : vector<16x32xf32>, vector<32x8xf32>, vector<16x8xf32> -> vector<16x8xf32>
    %c37_504 = arith.constant 37 : index
    %c0_505 = arith.constant 0 : index
    %c0_506 = arith.constant 0 : index
    %884 = vector.load %arg4[%c37_504, %c0_505, %c0_506] : memref<48x1x8xf32, #tpu.memory_space<vmem>>, vector<1x1x8xf32>
    %885 = vector.shape_cast %884 : vector<1x1x8xf32> to vector<1x8xf32>
    %886 = vector.broadcast %885 : vector<1x8xf32> to vector<16x8xf32>
    %887 = arith.addf %883, %886 : vector<16x8xf32>
    %c41 = arith.constant 41 : index
    %c0_507 = arith.constant 0 : index
    %c0_508 = arith.constant 0 : index
    %888 = vector.load %arg3[%c41, %c0_507, %c0_508] : memref<48x32x8xf32, #tpu.memory_space<vmem>>, vector<1x32x8xf32>
    %889 = vector.shape_cast %888 : vector<1x32x8xf32> to vector<32x8xf32>
    %cst_509 = arith.constant dense<0.000000e+00> : vector<16x8xf32>
    %890 = tpu.matmul %833, %889, %cst_509 {dimension_numbers = #tpu.dot_dimension_numbers<[1], [0], [0], [1], [0, 0, 1, 1], [], []>} : vector<16x32xf32>, vector<32x8xf32>, vector<16x8xf32> -> vector<16x8xf32>
    %c41_510 = arith.constant 41 : index
    %c0_511 = arith.constant 0 : index
    %c0_512 = arith.constant 0 : index
    %891 = vector.load %arg4[%c41_510, %c0_511, %c0_512] : memref<48x1x8xf32, #tpu.memory_space<vmem>>, vector<1x1x8xf32>
    %892 = vector.shape_cast %891 : vector<1x1x8xf32> to vector<1x8xf32>
    %893 = vector.broadcast %892 : vector<1x8xf32> to vector<16x8xf32>
    %894 = arith.addf %890, %893 : vector<16x8xf32>
    %c45 = arith.constant 45 : index
    %c0_513 = arith.constant 0 : index
    %c0_514 = arith.constant 0 : index
    %895 = vector.load %arg3[%c45, %c0_513, %c0_514] : memref<48x32x8xf32, #tpu.memory_space<vmem>>, vector<1x32x8xf32>
    %896 = vector.shape_cast %895 : vector<1x32x8xf32> to vector<32x8xf32>
    %cst_515 = arith.constant dense<0.000000e+00> : vector<16x8xf32>
    %897 = tpu.matmul %833, %896, %cst_515 {dimension_numbers = #tpu.dot_dimension_numbers<[1], [0], [0], [1], [0, 0, 1, 1], [], []>} : vector<16x32xf32>, vector<32x8xf32>, vector<16x8xf32> -> vector<16x8xf32>
    %c45_516 = arith.constant 45 : index
    %c0_517 = arith.constant 0 : index
    %c0_518 = arith.constant 0 : index
    %898 = vector.load %arg4[%c45_516, %c0_517, %c0_518] : memref<48x1x8xf32, #tpu.memory_space<vmem>>, vector<1x1x8xf32>
    %899 = vector.shape_cast %898 : vector<1x1x8xf32> to vector<1x8xf32>
    %900 = vector.broadcast %899 : vector<1x8xf32> to vector<16x8xf32>
    %901 = arith.addf %897, %900 : vector<16x8xf32>
    %902 = vector.shape_cast %887 : vector<16x8xf32> to vector<2x8x8xf32>
    %903 = vector.shape_cast %894 : vector<16x8xf32> to vector<2x8x8xf32>
    %904 = vector.shape_cast %901 : vector<16x8xf32> to vector<2x8x8xf32>
    "tpu.trace_start"() <{level = 10 : i32, message = "bqd,bkd->bqk"}> : () -> ()
    %cst_519 = arith.constant dense<0.000000e+00> : vector<2x8x8xf32>
    %905 = tpu.matmul %902, %903, %cst_519 {dimension_numbers = #tpu.dot_dimension_numbers<[2], [2], [1], [1], [0, 0, 0, 1, 1, 1], [0], [0]>} : vector<2x8x8xf32>, vector<2x8x8xf32>, vector<2x8x8xf32> -> vector<2x8x8xf32>
    "tpu.trace_stop"() : () -> ()
    %cst_520 = arith.constant 0.353553385 : f32
    %906 = vector.broadcast %cst_520 : f32 to vector<2x8x8xf32>
    %907 = arith.mulf %905, %906 : vector<2x8x8xf32>
    %908 = vector.broadcast %32 : vector<2x1x8xf32> to vector<2x8x8xf32>
    %909 = arith.addf %907, %908 : vector<2x8x8xf32>
    %cst_521 = arith.constant dense<0xFF800000> : vector<2x8xf32>
    %910 = vector.multi_reduction <maximumf>, %909, %cst_521 [2] : vector<2x8x8xf32> to vector<2x8xf32>
    %911 = vector.shape_cast %910 : vector<2x8xf32> to vector<2x8x1xf32>
    %912 = vector.broadcast %911 : vector<2x8x1xf32> to vector<2x8x8xf32>
    %913 = arith.subf %909, %912 : vector<2x8x8xf32>
    %914 = math.exp %913 : vector<2x8x8xf32>
    %cst_522 = arith.constant dense<0.000000e+00> : vector<2x8xf32>
    %915 = vector.multi_reduction <add>, %914, %cst_522 [2] : vector<2x8x8xf32> to vector<2x8xf32>
    %916 = vector.shape_cast %915 : vector<2x8xf32> to vector<2x8x1xf32>
    %917 = tpu.reciprocal %916 {approx = true} : vector<2x8x1xf32> -> vector<2x8x1xf32>
    %918 = vector.broadcast %917 : vector<2x8x1xf32> to vector<2x8x8xf32>
    %919 = arith.mulf %914, %918 : vector<2x8x8xf32>
    "tpu.trace_start"() <{level = 10 : i32, message = "bqk,bkd->bqd"}> : () -> ()
    %cst_523 = arith.constant dense<0.000000e+00> : vector<2x8x8xf32>
    %920 = tpu.matmul %919, %904, %cst_523 {dimension_numbers = #tpu.dot_dimension_numbers<[2], [1], [1], [2], [0, 0, 0, 1, 1, 2], [0], [0]>} : vector<2x8x8xf32>, vector<2x8x8xf32>, vector<2x8x8xf32> -> vector<2x8x8xf32>
    "tpu.trace_stop"() : () -> ()
    %921 = vector.shape_cast %920 : vector<2x8x8xf32> to vector<16x8xf32>
    %c13_524 = arith.constant 13 : index
    %c0_525 = arith.constant 0 : index
    %c0_526 = arith.constant 0 : index
    %922 = vector.load %arg5[%c13_524, %c0_525, %c0_526] : memref<16x8x32xf32, #tpu.memory_space<vmem>>, vector<1x8x32xf32>
    %923 = vector.shape_cast %922 : vector<1x8x32xf32> to vector<8x32xf32>
    %cst_527 = arith.constant dense<0.000000e+00> : vector<16x32xf32>
    %924 = tpu.matmul %921, %923, %cst_527 {dimension_numbers = #tpu.dot_dimension_numbers<[1], [0], [0], [1], [0, 0, 1, 1], [], []>} : vector<16x8xf32>, vector<8x32xf32>, vector<16x32xf32> -> vector<16x32xf32>
    %925 = arith.addf %880, %924 : vector<16x32xf32>
    %c38 = arith.constant 38 : index
    %c0_528 = arith.constant 0 : index
    %c0_529 = arith.constant 0 : index
    %926 = vector.load %arg3[%c38, %c0_528, %c0_529] : memref<48x32x8xf32, #tpu.memory_space<vmem>>, vector<1x32x8xf32>
    %927 = vector.shape_cast %926 : vector<1x32x8xf32> to vector<32x8xf32>
    %cst_530 = arith.constant dense<0.000000e+00> : vector<16x8xf32>
    %928 = tpu.matmul %833, %927, %cst_530 {dimension_numbers = #tpu.dot_dimension_numbers<[1], [0], [0], [1], [0, 0, 1, 1], [], []>} : vector<16x32xf32>, vector<32x8xf32>, vector<16x8xf32> -> vector<16x8xf32>
    %c38_531 = arith.constant 38 : index
    %c0_532 = arith.constant 0 : index
    %c0_533 = arith.constant 0 : index
    %929 = vector.load %arg4[%c38_531, %c0_532, %c0_533] : memref<48x1x8xf32, #tpu.memory_space<vmem>>, vector<1x1x8xf32>
    %930 = vector.shape_cast %929 : vector<1x1x8xf32> to vector<1x8xf32>
    %931 = vector.broadcast %930 : vector<1x8xf32> to vector<16x8xf32>
    %932 = arith.addf %928, %931 : vector<16x8xf32>
    %c42 = arith.constant 42 : index
    %c0_534 = arith.constant 0 : index
    %c0_535 = arith.constant 0 : index
    %933 = vector.load %arg3[%c42, %c0_534, %c0_535] : memref<48x32x8xf32, #tpu.memory_space<vmem>>, vector<1x32x8xf32>
    %934 = vector.shape_cast %933 : vector<1x32x8xf32> to vector<32x8xf32>
    %cst_536 = arith.constant dense<0.000000e+00> : vector<16x8xf32>
    %935 = tpu.matmul %833, %934, %cst_536 {dimension_numbers = #tpu.dot_dimension_numbers<[1], [0], [0], [1], [0, 0, 1, 1], [], []>} : vector<16x32xf32>, vector<32x8xf32>, vector<16x8xf32> -> vector<16x8xf32>
    %c42_537 = arith.constant 42 : index
    %c0_538 = arith.constant 0 : index
    %c0_539 = arith.constant 0 : index
    %936 = vector.load %arg4[%c42_537, %c0_538, %c0_539] : memref<48x1x8xf32, #tpu.memory_space<vmem>>, vector<1x1x8xf32>
    %937 = vector.shape_cast %936 : vector<1x1x8xf32> to vector<1x8xf32>
    %938 = vector.broadcast %937 : vector<1x8xf32> to vector<16x8xf32>
    %939 = arith.addf %935, %938 : vector<16x8xf32>
    %c46 = arith.constant 46 : index
    %c0_540 = arith.constant 0 : index
    %c0_541 = arith.constant 0 : index
    %940 = vector.load %arg3[%c46, %c0_540, %c0_541] : memref<48x32x8xf32, #tpu.memory_space<vmem>>, vector<1x32x8xf32>
    %941 = vector.shape_cast %940 : vector<1x32x8xf32> to vector<32x8xf32>
    %cst_542 = arith.constant dense<0.000000e+00> : vector<16x8xf32>
    %942 = tpu.matmul %833, %941, %cst_542 {dimension_numbers = #tpu.dot_dimension_numbers<[1], [0], [0], [1], [0, 0, 1, 1], [], []>} : vector<16x32xf32>, vector<32x8xf32>, vector<16x8xf32> -> vector<16x8xf32>
    %c46_543 = arith.constant 46 : index
    %c0_544 = arith.constant 0 : index
    %c0_545 = arith.constant 0 : index
    %943 = vector.load %arg4[%c46_543, %c0_544, %c0_545] : memref<48x1x8xf32, #tpu.memory_space<vmem>>, vector<1x1x8xf32>
    %944 = vector.shape_cast %943 : vector<1x1x8xf32> to vector<1x8xf32>
    %945 = vector.broadcast %944 : vector<1x8xf32> to vector<16x8xf32>
    %946 = arith.addf %942, %945 : vector<16x8xf32>
    %947 = vector.shape_cast %932 : vector<16x8xf32> to vector<2x8x8xf32>
    %948 = vector.shape_cast %939 : vector<16x8xf32> to vector<2x8x8xf32>
    %949 = vector.shape_cast %946 : vector<16x8xf32> to vector<2x8x8xf32>
    "tpu.trace_start"() <{level = 10 : i32, message = "bqd,bkd->bqk"}> : () -> ()
    %cst_546 = arith.constant dense<0.000000e+00> : vector<2x8x8xf32>
    %950 = tpu.matmul %947, %948, %cst_546 {dimension_numbers = #tpu.dot_dimension_numbers<[2], [2], [1], [1], [0, 0, 0, 1, 1, 1], [0], [0]>} : vector<2x8x8xf32>, vector<2x8x8xf32>, vector<2x8x8xf32> -> vector<2x8x8xf32>
    "tpu.trace_stop"() : () -> ()
    %cst_547 = arith.constant 0.353553385 : f32
    %951 = vector.broadcast %cst_547 : f32 to vector<2x8x8xf32>
    %952 = arith.mulf %950, %951 : vector<2x8x8xf32>
    %953 = vector.broadcast %32 : vector<2x1x8xf32> to vector<2x8x8xf32>
    %954 = arith.addf %952, %953 : vector<2x8x8xf32>
    %cst_548 = arith.constant dense<0xFF800000> : vector<2x8xf32>
    %955 = vector.multi_reduction <maximumf>, %954, %cst_548 [2] : vector<2x8x8xf32> to vector<2x8xf32>
    %956 = vector.shape_cast %955 : vector<2x8xf32> to vector<2x8x1xf32>
    %957 = vector.broadcast %956 : vector<2x8x1xf32> to vector<2x8x8xf32>
    %958 = arith.subf %954, %957 : vector<2x8x8xf32>
    %959 = math.exp %958 : vector<2x8x8xf32>
    %cst_549 = arith.constant dense<0.000000e+00> : vector<2x8xf32>
    %960 = vector.multi_reduction <add>, %959, %cst_549 [2] : vector<2x8x8xf32> to vector<2x8xf32>
    %961 = vector.shape_cast %960 : vector<2x8xf32> to vector<2x8x1xf32>
    %962 = tpu.reciprocal %961 {approx = true} : vector<2x8x1xf32> -> vector<2x8x1xf32>
    %963 = vector.broadcast %962 : vector<2x8x1xf32> to vector<2x8x8xf32>
    %964 = arith.mulf %959, %963 : vector<2x8x8xf32>
    "tpu.trace_start"() <{level = 10 : i32, message = "bqk,bkd->bqd"}> : () -> ()
    %cst_550 = arith.constant dense<0.000000e+00> : vector<2x8x8xf32>
    %965 = tpu.matmul %964, %949, %cst_550 {dimension_numbers = #tpu.dot_dimension_numbers<[2], [1], [1], [2], [0, 0, 0, 1, 1, 2], [0], [0]>} : vector<2x8x8xf32>, vector<2x8x8xf32>, vector<2x8x8xf32> -> vector<2x8x8xf32>
    "tpu.trace_stop"() : () -> ()
    %966 = vector.shape_cast %965 : vector<2x8x8xf32> to vector<16x8xf32>
    %c14_551 = arith.constant 14 : index
    %c0_552 = arith.constant 0 : index
    %c0_553 = arith.constant 0 : index
    %967 = vector.load %arg5[%c14_551, %c0_552, %c0_553] : memref<16x8x32xf32, #tpu.memory_space<vmem>>, vector<1x8x32xf32>
    %968 = vector.shape_cast %967 : vector<1x8x32xf32> to vector<8x32xf32>
    %cst_554 = arith.constant dense<0.000000e+00> : vector<16x32xf32>
    %969 = tpu.matmul %966, %968, %cst_554 {dimension_numbers = #tpu.dot_dimension_numbers<[1], [0], [0], [1], [0, 0, 1, 1], [], []>} : vector<16x8xf32>, vector<8x32xf32>, vector<16x32xf32> -> vector<16x32xf32>
    %970 = arith.addf %925, %969 : vector<16x32xf32>
    %c39 = arith.constant 39 : index
    %c0_555 = arith.constant 0 : index
    %c0_556 = arith.constant 0 : index
    %971 = vector.load %arg3[%c39, %c0_555, %c0_556] : memref<48x32x8xf32, #tpu.memory_space<vmem>>, vector<1x32x8xf32>
    %972 = vector.shape_cast %971 : vector<1x32x8xf32> to vector<32x8xf32>
    %cst_557 = arith.constant dense<0.000000e+00> : vector<16x8xf32>
    %973 = tpu.matmul %833, %972, %cst_557 {dimension_numbers = #tpu.dot_dimension_numbers<[1], [0], [0], [1], [0, 0, 1, 1], [], []>} : vector<16x32xf32>, vector<32x8xf32>, vector<16x8xf32> -> vector<16x8xf32>
    %c39_558 = arith.constant 39 : index
    %c0_559 = arith.constant 0 : index
    %c0_560 = arith.constant 0 : index
    %974 = vector.load %arg4[%c39_558, %c0_559, %c0_560] : memref<48x1x8xf32, #tpu.memory_space<vmem>>, vector<1x1x8xf32>
    %975 = vector.shape_cast %974 : vector<1x1x8xf32> to vector<1x8xf32>
    %976 = vector.broadcast %975 : vector<1x8xf32> to vector<16x8xf32>
    %977 = arith.addf %973, %976 : vector<16x8xf32>
    %c43 = arith.constant 43 : index
    %c0_561 = arith.constant 0 : index
    %c0_562 = arith.constant 0 : index
    %978 = vector.load %arg3[%c43, %c0_561, %c0_562] : memref<48x32x8xf32, #tpu.memory_space<vmem>>, vector<1x32x8xf32>
    %979 = vector.shape_cast %978 : vector<1x32x8xf32> to vector<32x8xf32>
    %cst_563 = arith.constant dense<0.000000e+00> : vector<16x8xf32>
    %980 = tpu.matmul %833, %979, %cst_563 {dimension_numbers = #tpu.dot_dimension_numbers<[1], [0], [0], [1], [0, 0, 1, 1], [], []>} : vector<16x32xf32>, vector<32x8xf32>, vector<16x8xf32> -> vector<16x8xf32>
    %c43_564 = arith.constant 43 : index
    %c0_565 = arith.constant 0 : index
    %c0_566 = arith.constant 0 : index
    %981 = vector.load %arg4[%c43_564, %c0_565, %c0_566] : memref<48x1x8xf32, #tpu.memory_space<vmem>>, vector<1x1x8xf32>
    %982 = vector.shape_cast %981 : vector<1x1x8xf32> to vector<1x8xf32>
    %983 = vector.broadcast %982 : vector<1x8xf32> to vector<16x8xf32>
    %984 = arith.addf %980, %983 : vector<16x8xf32>
    %c47 = arith.constant 47 : index
    %c0_567 = arith.constant 0 : index
    %c0_568 = arith.constant 0 : index
    %985 = vector.load %arg3[%c47, %c0_567, %c0_568] : memref<48x32x8xf32, #tpu.memory_space<vmem>>, vector<1x32x8xf32>
    %986 = vector.shape_cast %985 : vector<1x32x8xf32> to vector<32x8xf32>
    %cst_569 = arith.constant dense<0.000000e+00> : vector<16x8xf32>
    %987 = tpu.matmul %833, %986, %cst_569 {dimension_numbers = #tpu.dot_dimension_numbers<[1], [0], [0], [1], [0, 0, 1, 1], [], []>} : vector<16x32xf32>, vector<32x8xf32>, vector<16x8xf32> -> vector<16x8xf32>
    %c47_570 = arith.constant 47 : index
    %c0_571 = arith.constant 0 : index
    %c0_572 = arith.constant 0 : index
    %988 = vector.load %arg4[%c47_570, %c0_571, %c0_572] : memref<48x1x8xf32, #tpu.memory_space<vmem>>, vector<1x1x8xf32>
    %989 = vector.shape_cast %988 : vector<1x1x8xf32> to vector<1x8xf32>
    %990 = vector.broadcast %989 : vector<1x8xf32> to vector<16x8xf32>
    %991 = arith.addf %987, %990 : vector<16x8xf32>
    %992 = vector.shape_cast %977 : vector<16x8xf32> to vector<2x8x8xf32>
    %993 = vector.shape_cast %984 : vector<16x8xf32> to vector<2x8x8xf32>
    %994 = vector.shape_cast %991 : vector<16x8xf32> to vector<2x8x8xf32>
    "tpu.trace_start"() <{level = 10 : i32, message = "bqd,bkd->bqk"}> : () -> ()
    %cst_573 = arith.constant dense<0.000000e+00> : vector<2x8x8xf32>
    %995 = tpu.matmul %992, %993, %cst_573 {dimension_numbers = #tpu.dot_dimension_numbers<[2], [2], [1], [1], [0, 0, 0, 1, 1, 1], [0], [0]>} : vector<2x8x8xf32>, vector<2x8x8xf32>, vector<2x8x8xf32> -> vector<2x8x8xf32>
    "tpu.trace_stop"() : () -> ()
    %cst_574 = arith.constant 0.353553385 : f32
    %996 = vector.broadcast %cst_574 : f32 to vector<2x8x8xf32>
    %997 = arith.mulf %995, %996 : vector<2x8x8xf32>
    %998 = vector.broadcast %32 : vector<2x1x8xf32> to vector<2x8x8xf32>
    %999 = arith.addf %997, %998 : vector<2x8x8xf32>
    %cst_575 = arith.constant dense<0xFF800000> : vector<2x8xf32>
    %1000 = vector.multi_reduction <maximumf>, %999, %cst_575 [2] : vector<2x8x8xf32> to vector<2x8xf32>
    %1001 = vector.shape_cast %1000 : vector<2x8xf32> to vector<2x8x1xf32>
    %1002 = vector.broadcast %1001 : vector<2x8x1xf32> to vector<2x8x8xf32>
    %1003 = arith.subf %999, %1002 : vector<2x8x8xf32>
    %1004 = math.exp %1003 : vector<2x8x8xf32>
    %cst_576 = arith.constant dense<0.000000e+00> : vector<2x8xf32>
    %1005 = vector.multi_reduction <add>, %1004, %cst_576 [2] : vector<2x8x8xf32> to vector<2x8xf32>
    %1006 = vector.shape_cast %1005 : vector<2x8xf32> to vector<2x8x1xf32>
    %1007 = tpu.reciprocal %1006 {approx = true} : vector<2x8x1xf32> -> vector<2x8x1xf32>
    %1008 = vector.broadcast %1007 : vector<2x8x1xf32> to vector<2x8x8xf32>
    %1009 = arith.mulf %1004, %1008 : vector<2x8x8xf32>
    "tpu.trace_start"() <{level = 10 : i32, message = "bqk,bkd->bqd"}> : () -> ()
    %cst_577 = arith.constant dense<0.000000e+00> : vector<2x8x8xf32>
    %1010 = tpu.matmul %1009, %994, %cst_577 {dimension_numbers = #tpu.dot_dimension_numbers<[2], [1], [1], [2], [0, 0, 0, 1, 1, 2], [0], [0]>} : vector<2x8x8xf32>, vector<2x8x8xf32>, vector<2x8x8xf32> -> vector<2x8x8xf32>
    "tpu.trace_stop"() : () -> ()
    %1011 = vector.shape_cast %1010 : vector<2x8x8xf32> to vector<16x8xf32>
    %c15_578 = arith.constant 15 : index
    %c0_579 = arith.constant 0 : index
    %c0_580 = arith.constant 0 : index
    %1012 = vector.load %arg5[%c15_578, %c0_579, %c0_580] : memref<16x8x32xf32, #tpu.memory_space<vmem>>, vector<1x8x32xf32>
    %1013 = vector.shape_cast %1012 : vector<1x8x32xf32> to vector<8x32xf32>
    %cst_581 = arith.constant dense<0.000000e+00> : vector<16x32xf32>
    %1014 = tpu.matmul %1011, %1013, %cst_581 {dimension_numbers = #tpu.dot_dimension_numbers<[1], [0], [0], [1], [0, 0, 1, 1], [], []>} : vector<16x8xf32>, vector<8x32xf32>, vector<16x32xf32> -> vector<16x32xf32>
    %1015 = arith.addf %970, %1014 : vector<16x32xf32>
    %c18_582 = arith.constant 18 : index
    %c0_583 = arith.constant 0 : index
    %c0_584 = arith.constant 0 : index
    %1016 = vector.load %arg6[%c18_582, %c0_583, %c0_584] : memref<24x1x32xf32, #tpu.memory_space<vmem>>, vector<1x1x32xf32>
    %1017 = vector.shape_cast %1016 : vector<1x1x32xf32> to vector<1x32xf32>
    %1018 = vector.broadcast %1017 : vector<1x32xf32> to vector<16x32xf32>
    %1019 = arith.addf %1015, %1018 : vector<16x32xf32>
    %1020 = arith.addf %1019, %833 : vector<16x32xf32>
    %c19_585 = arith.constant 19 : index
    %c0_586 = arith.constant 0 : index
    %c0_587 = arith.constant 0 : index
    %1021 = vector.load %arg6[%c19_585, %c0_586, %c0_587] : memref<24x1x32xf32, #tpu.memory_space<vmem>>, vector<1x1x32xf32>
    %1022 = vector.shape_cast %1021 : vector<1x1x32xf32> to vector<1x32xf32>
    %c20_588 = arith.constant 20 : index
    %c0_589 = arith.constant 0 : index
    %c0_590 = arith.constant 0 : index
    %1023 = vector.load %arg6[%c20_588, %c0_589, %c0_590] : memref<24x1x32xf32, #tpu.memory_space<vmem>>, vector<1x1x32xf32>
    %1024 = vector.shape_cast %1023 : vector<1x1x32xf32> to vector<1x32xf32>
    %cst_591 = arith.constant dense<0.000000e+00> : vector<16xf32>
    %1025 = vector.multi_reduction <add>, %1020, %cst_591 [1] : vector<16x32xf32> to vector<16xf32>
    %1026 = vector.shape_cast %1025 : vector<16xf32> to vector<16x1xf32>
    %cst_592 = arith.constant 3.200000e+01 : f32
    %1027 = vector.broadcast %cst_592 : f32 to vector<16x1xf32>
    %1028 = arith.divf %1026, %1027 : vector<16x1xf32>
    %1029 = vector.broadcast %1028 : vector<16x1xf32> to vector<16x32xf32>
    %1030 = arith.subf %1020, %1029 : vector<16x32xf32>
    %1031 = arith.mulf %1030, %1030 : vector<16x32xf32>
    %cst_593 = arith.constant dense<0.000000e+00> : vector<16xf32>
    %1032 = vector.multi_reduction <add>, %1031, %cst_593 [1] : vector<16x32xf32> to vector<16xf32>
    %1033 = vector.shape_cast %1032 : vector<16xf32> to vector<16x1xf32>
    %cst_594 = arith.constant 3.200000e+01 : f32
    %1034 = vector.broadcast %cst_594 : f32 to vector<16x1xf32>
    %1035 = arith.divf %1033, %1034 : vector<16x1xf32>
    %1036 = vector.broadcast %1028 : vector<16x1xf32> to vector<16x32xf32>
    %1037 = arith.subf %1020, %1036 : vector<16x32xf32>
    %cst_595 = arith.constant 9.99999974E-6 : f32
    %1038 = vector.broadcast %cst_595 : f32 to vector<16x1xf32>
    %1039 = arith.addf %1035, %1038 : vector<16x1xf32>
    %1040 = math.rsqrt %1039 : vector<16x1xf32>
    %1041 = vector.broadcast %1040 : vector<16x1xf32> to vector<16x32xf32>
    %1042 = arith.mulf %1037, %1041 : vector<16x32xf32>
    %1043 = vector.broadcast %1022 : vector<1x32xf32> to vector<16x32xf32>
    %1044 = arith.mulf %1042, %1043 : vector<16x32xf32>
    %1045 = vector.broadcast %1024 : vector<1x32xf32> to vector<16x32xf32>
    %1046 = arith.addf %1044, %1045 : vector<16x32xf32>
    %c3_596 = arith.constant 3 : index
    %c0_597 = arith.constant 0 : index
    %c0_598 = arith.constant 0 : index
    %1047 = vector.load %arg7[%c3_596, %c0_597, %c0_598] : memref<4x32x128xf32, #tpu.memory_space<vmem>>, vector<1x32x128xf32>
    %1048 = vector.shape_cast %1047 : vector<1x32x128xf32> to vector<32x128xf32>
    %cst_599 = arith.constant dense<0.000000e+00> : vector<16x128xf32>
    %1049 = tpu.matmul %1046, %1048, %cst_599 {dimension_numbers = #tpu.dot_dimension_numbers<[1], [0], [0], [1], [0, 0, 1, 1], [], []>} : vector<16x32xf32>, vector<32x128xf32>, vector<16x128xf32> -> vector<16x128xf32>
    %c3_600 = arith.constant 3 : index
    %c0_601 = arith.constant 0 : index
    %c0_602 = arith.constant 0 : index
    %1050 = vector.load %arg8[%c3_600, %c0_601, %c0_602] : memref<4x1x128xf32, #tpu.memory_space<vmem>>, vector<1x1x128xf32>
    %1051 = vector.shape_cast %1050 : vector<1x1x128xf32> to vector<1x128xf32>
    %1052 = vector.broadcast %1051 : vector<1x128xf32> to vector<16x128xf32>
    %1053 = arith.addf %1049, %1052 : vector<16x128xf32>
    %1054 = arith.mulf %1053, %1053 : vector<16x128xf32>
    %1055 = arith.mulf %1053, %1054 : vector<16x128xf32>
    %cst_603 = arith.constant 4.471500e-02 : f32
    %1056 = vector.broadcast %cst_603 : f32 to vector<16x128xf32>
    %1057 = arith.mulf %1056, %1055 : vector<16x128xf32>
    %1058 = arith.addf %1053, %1057 : vector<16x128xf32>
    %cst_604 = arith.constant 0.797884583 : f32
    %1059 = vector.broadcast %cst_604 : f32 to vector<16x128xf32>
    %1060 = arith.mulf %1059, %1058 : vector<16x128xf32>
    %1061 = math.tanh %1060 : vector<16x128xf32>
    %cst_605 = arith.constant 1.000000e+00 : f32
    %1062 = vector.broadcast %cst_605 : f32 to vector<16x128xf32>
    %1063 = arith.addf %1062, %1061 : vector<16x128xf32>
    %cst_606 = arith.constant 5.000000e-01 : f32
    %1064 = vector.broadcast %cst_606 : f32 to vector<16x128xf32>
    %1065 = arith.mulf %1064, %1063 : vector<16x128xf32>
    %1066 = arith.mulf %1053, %1065 : vector<16x128xf32>
    %c3_607 = arith.constant 3 : index
    %c0_608 = arith.constant 0 : index
    %c0_609 = arith.constant 0 : index
    %1067 = vector.load %arg9[%c3_607, %c0_608, %c0_609] : memref<4x128x32xf32, #tpu.memory_space<vmem>>, vector<1x128x32xf32>
    %1068 = vector.shape_cast %1067 : vector<1x128x32xf32> to vector<128x32xf32>
    %cst_610 = arith.constant dense<0.000000e+00> : vector<16x32xf32>
    %1069 = tpu.matmul %1066, %1068, %cst_610 {dimension_numbers = #tpu.dot_dimension_numbers<[1], [0], [0], [1], [0, 0, 1, 1], [], []>} : vector<16x128xf32>, vector<128x32xf32>, vector<16x32xf32> -> vector<16x32xf32>
    %c21_611 = arith.constant 21 : index
    %c0_612 = arith.constant 0 : index
    %c0_613 = arith.constant 0 : index
    %1070 = vector.load %arg6[%c21_611, %c0_612, %c0_613] : memref<24x1x32xf32, #tpu.memory_space<vmem>>, vector<1x1x32xf32>
    %1071 = vector.shape_cast %1070 : vector<1x1x32xf32> to vector<1x32xf32>
    %1072 = vector.broadcast %1071 : vector<1x32xf32> to vector<16x32xf32>
    %1073 = arith.addf %1069, %1072 : vector<16x32xf32>
    %1074 = arith.addf %1073, %1046 : vector<16x32xf32>
    %c22_614 = arith.constant 22 : index
    %c0_615 = arith.constant 0 : index
    %c0_616 = arith.constant 0 : index
    %1075 = vector.load %arg6[%c22_614, %c0_615, %c0_616] : memref<24x1x32xf32, #tpu.memory_space<vmem>>, vector<1x1x32xf32>
    %1076 = vector.shape_cast %1075 : vector<1x1x32xf32> to vector<1x32xf32>
    %c23_617 = arith.constant 23 : index
    %c0_618 = arith.constant 0 : index
    %c0_619 = arith.constant 0 : index
    %1077 = vector.load %arg6[%c23_617, %c0_618, %c0_619] : memref<24x1x32xf32, #tpu.memory_space<vmem>>, vector<1x1x32xf32>
    %1078 = vector.shape_cast %1077 : vector<1x1x32xf32> to vector<1x32xf32>
    %cst_620 = arith.constant dense<0.000000e+00> : vector<16xf32>
    %1079 = vector.multi_reduction <add>, %1074, %cst_620 [1] : vector<16x32xf32> to vector<16xf32>
    %1080 = vector.shape_cast %1079 : vector<16xf32> to vector<16x1xf32>
    %cst_621 = arith.constant 3.200000e+01 : f32
    %1081 = vector.broadcast %cst_621 : f32 to vector<16x1xf32>
    %1082 = arith.divf %1080, %1081 : vector<16x1xf32>
    %1083 = vector.broadcast %1082 : vector<16x1xf32> to vector<16x32xf32>
    %1084 = arith.subf %1074, %1083 : vector<16x32xf32>
    %1085 = arith.mulf %1084, %1084 : vector<16x32xf32>
    %cst_622 = arith.constant dense<0.000000e+00> : vector<16xf32>
    %1086 = vector.multi_reduction <add>, %1085, %cst_622 [1] : vector<16x32xf32> to vector<16xf32>
    %1087 = vector.shape_cast %1086 : vector<16xf32> to vector<16x1xf32>
    %cst_623 = arith.constant 3.200000e+01 : f32
    %1088 = vector.broadcast %cst_623 : f32 to vector<16x1xf32>
    %1089 = arith.divf %1087, %1088 : vector<16x1xf32>
    %1090 = vector.broadcast %1082 : vector<16x1xf32> to vector<16x32xf32>
    %1091 = arith.subf %1074, %1090 : vector<16x32xf32>
    %cst_624 = arith.constant 9.99999974E-6 : f32
    %1092 = vector.broadcast %cst_624 : f32 to vector<16x1xf32>
    %1093 = arith.addf %1089, %1092 : vector<16x1xf32>
    %1094 = math.rsqrt %1093 : vector<16x1xf32>
    %1095 = vector.broadcast %1094 : vector<16x1xf32> to vector<16x32xf32>
    %1096 = arith.mulf %1091, %1095 : vector<16x32xf32>
    %1097 = vector.broadcast %1076 : vector<1x32xf32> to vector<16x32xf32>
    %1098 = arith.mulf %1096, %1097 : vector<16x32xf32>
    %1099 = vector.broadcast %1078 : vector<1x32xf32> to vector<16x32xf32>
    %1100 = arith.addf %1098, %1099 : vector<16x32xf32>
    %1101 = arith.addf %834, %1100 : vector<16x32xf32>
    %c0_625 = arith.constant 0 : index
    %c0_626 = arith.constant 0 : index
    %1102 = vector.load %arg10[%c0_625, %c0_626] : memref<16x32xf32, #tpu.memory_space<vmem>>, vector<16x32xf32>
    tpu.vector_store %arg10[%c0_625, %c0_626], %1101 {strides = array<i32>} : memref<16x32xf32, #tpu.memory_space<vmem>>, vector<16x32xf32>,
    return
  }
}

</mosaic_0001>

<llo_original>
// kernel: comparison_sentence_words_embeddings.1
$region0: #{comparison_sentence_words_embeddings.1}
  #allocation0 [shape = 'u32[]', space=smem, size = 0x4, offset = 0x4, fixed_abs, tag = 'smem constant byte address 0x4 - core index']
  #allocation1 [shape = 'u32[72,128]{1,0:T(1,128)}', space=vmem, size = 0x9000, scoped, tag = 'internal scratch']
  %s0 = inlined_call_operand.vmem [shape: f32[16,32], index: 0, kind: input, shape index: {}]
  %s1 = inlined_call_operand.vmem [shape: f32[2,8], index: 1, kind: input, shape index: {}]
  %s2 = inlined_call_operand.vmem [shape: f32[2,1,32], index: 2, kind: input, shape index: {}]
  %s3 = inlined_call_operand.vmem [shape: f32[48,32,8], index: 3, kind: input, shape index: {}]
  %s4 = inlined_call_operand.vmem [shape: f32[48,1,8], index: 4, kind: input, shape index: {}]
  %s5 = inlined_call_operand.vmem [shape: f32[16,8,32], index: 5, kind: input, shape index: {}]
  %s6 = inlined_call_operand.vmem [shape: f32[24,1,32], index: 6, kind: input, shape index: {}]
  %s7 = inlined_call_operand.vmem [shape: f32[4,32,128], index: 7, kind: input, shape index: {}]
  %s8 = inlined_call_operand.vmem [shape: f32[4,1,128], index: 8, kind: input, shape index: {}]
  %s9 = inlined_call_operand.vmem [shape: f32[4,128,32], index: 9, kind: input, shape index: {}]
  %s10 = inlined_call_operand.hbm [shape: f32[16,32], index: 10, kind: output, shape index: {}]
  %s11 = sld [smem:[#allocation0]]
  $region50: #{comparison_sentence_words_embeddings.1} parent=0
    _
  %s13 = ssub.s32 1, %s11
  %s14 = scalar_select 0, %s13, %s11
  $region1: #{comparison_sentence_words_embeddings.1} parent=0
    #allocation2 [shape = 'u8[8192]{0}', space=vmem, size = 0x2000, scoped, tag = 'output window, operand 0, single buffered']
    #allocation3 [shape = 's32[1]{0}', space=sflag, size = 0x4, scoped, tag = 'scoped memory for comparison_sentence_words_embeddings.1']
    %15 = vsyncpa [#allocation3], 0
    // Predicated region
    $region2: #{comparison_sentence_words_embeddings.1} parent=1 // pred_check
      _
    $region3: #{comparison_sentence_words_embeddings.1} parent=1 // pred_check_branch
      %17 = sbr.rel (0) target = $region5
    $region4: #{comparison_sentence_words_embeddings.1} parent=1 // pred_region
      _
    $region5: #{comparison_sentence_words_embeddings.1} parent=1 // pred_fallthru
      _
    // Predicated region
    $region6: #{comparison_sentence_words_embeddings.1} parent=1 // pred_check
      _
    $region7: #{comparison_sentence_words_embeddings.1} parent=1 // pred_check_branch
      %19 = sbr.rel (0) target = $region9
    $region8: #{comparison_sentence_words_embeddings.1} parent=1 // pred_region
      _
    $region9: #{comparison_sentence_words_embeddings.1} parent=1 // pred_fallthru
      _
    // Predicated region
    $region10: #{comparison_sentence_words_embeddings.1} parent=1 // pred_check
      _
    $region11: #{comparison_sentence_words_embeddings.1} parent=1 // pred_check_branch
      %21 = sbr.rel (0) target = $region13
    $region12: #{comparison_sentence_words_embeddings.1} parent=1 // pred_region
      _
    $region13: #{comparison_sentence_words_embeddings.1} parent=1 // pred_fallthru
      _
    // Predicated region
    $region14: #{comparison_sentence_words_embeddings.1} parent=1 // pred_check
      _
    $region15: #{comparison_sentence_words_embeddings.1} parent=1 // pred_check_branch
      %23 = sbr.rel (0) target = $region17
    $region16: #{comparison_sentence_words_embeddings.1} parent=1 // pred_region
      _
    $region17: #{comparison_sentence_words_embeddings.1} parent=1 // pred_fallthru
      _
    // Predicated region
    $region18: #{comparison_sentence_words_embeddings.1} parent=1 // pred_check
      _
    $region19: #{comparison_sentence_words_embeddings.1} parent=1 // pred_check_branch
      %25 = sbr.rel (0) target = $region21
    $region20: #{comparison_sentence_words_embeddings.1} parent=1 // pred_region
      _
    $region21: #{comparison_sentence_words_embeddings.1} parent=1 // pred_fallthru
      _
    // Predicated region
    $region22: #{comparison_sentence_words_embeddings.1} parent=1 // pred_check
      _
    $region23: #{comparison_sentence_words_embeddings.1} parent=1 // pred_check_branch
      %27 = sbr.rel (0) target = $region25
    $region24: #{comparison_sentence_words_embeddings.1} parent=1 // pred_region
      _
    $region25: #{comparison_sentence_words_embeddings.1} parent=1 // pred_fallthru
      _
    // Predicated region
    $region26: #{comparison_sentence_words_embeddings.1} parent=1 // pred_check
      _
    $region27: #{comparison_sentence_words_embeddings.1} parent=1 // pred_check_branch
      %29 = sbr.rel (0) target = $region29
    $region28: #{comparison_sentence_words_embeddings.1} parent=1 // pred_region
      _
    $region29: #{comparison_sentence_words_embeddings.1} parent=1 // pred_fallthru
      _
    // Predicated region
    $region30: #{comparison_sentence_words_embeddings.1} parent=1 // pred_check
      _
    $region31: #{comparison_sentence_words_embeddings.1} parent=1 // pred_check_branch
      %31 = sbr.rel (0) target = $region33
    $region32: #{comparison_sentence_words_embeddings.1} parent=1 // pred_region
      _
    $region33: #{comparison_sentence_words_embeddings.1} parent=1 // pred_fallthru
      _
    // Predicated region
    $region34: #{comparison_sentence_words_embeddings.1} parent=1 // pred_check
      _
    $region35: #{comparison_sentence_words_embeddings.1} parent=1 // pred_check_branch
      %33 = sbr.rel (0) target = $region37
    $region36: #{comparison_sentence_words_embeddings.1} parent=1 // pred_region
      _
    $region37: #{comparison_sentence_words_embeddings.1} parent=1 // pred_fallthru
      _
    // Predicated region
    $region38: #{comparison_sentence_words_embeddings.1} parent=1 // pred_check
      _
    $region39: #{comparison_sentence_words_embeddings.1} parent=1 // pred_check_branch
      %35 = sbr.rel (0) target = $region41
    $region40: #{comparison_sentence_words_embeddings.1} parent=1 // pred_region
      _
    $region41: #{comparison_sentence_words_embeddings.1} parent=1 // pred_fallthru
      _
    %v36 = vld [vmem:[%s0] sm:$0xff]
    %v37 = vld [vmem:[%s0 + $0x8] sm:$0xff]
    %v38 = vld [vmem:[%s2] sm:$0x1]
    %s39 = scalar_lea.vmem %s2, 1
    %v40 = vld [vmem:[%s39] sm:$0x1]
    %vm41 = vcmask 261120
    %v42 = vsel %vm41, %v36, 0.0
    %43 = vadd.xlane.f32.xlu0 %v42
    %v44 = vpop.xlane.xlu0 %43
    %v45 = vsel %vm41, %v37, 0.0
    %46 = vadd.xlane.f32.xlu0 %v45
    %v47 = vpop.xlane.xlu0 %46
    %v48 = vrcp.pop 32.0
    %v49 = vmul.f32 32.0, %v48
    %v50 = vsub.f32 1.0, %v49
    %v51 = vmul.f32 %v48, %v50
    %v52 = vadd.f32 %v48, %v51
    %vm53 = vweird.f32 %v48
    %v54 = vsel %vm53, %v48, %v52
    %v55 = vmul.f32 %v44, %v54
    %v56 = vmul.f32 %v47, %v54
    %v57 = vsub.f32 %v36, %v55
    %v58 = vsub.f32 %v37, %v56
    %v59 = vmul.f32 %v57, %v57
    %v60 = vmul.f32 %v58, %v58
    %v61 = vsel %vm41, %v59, 0.0
    %62 = vadd.xlane.f32.xlu0 %v61
    %v63 = vpop.xlane.xlu0 %62
    %v64 = vsel %vm41, %v60, 0.0
    %65 = vadd.xlane.f32.xlu0 %v64
    %v66 = vpop.xlane.xlu0 %65
    %v67 = vmul.f32 %v63, %v54
    %v68 = vmul.f32 %v66, %v54
    %v69 = vadd.f32 %v67, 1e-05
    %v70 = vadd.f32 %v68, 1e-05
    %v71 = vrsqrt.pop %v69
    %v72 = vmul.f32 %v71, %v69
    %v73 = vmul.f32 %v72, %v71
    %v74 = vmul.f32 0.5, %v73
    %v75 = vsub.f32 1.5, %v74
    %v76 = vmul.f32 %v71, %v75
    %vm77 = vweird.f32 %v69
    %vm78 = vweird.f32 %v71
    %vm79 = vmor %vm77, %vm78
    %v80 = vsel %vm79, %v71, %v76
    %v81 = vrsqrt.pop %v70
    %v82 = vmul.f32 %v81, %v70
    %v83 = vmul.f32 %v82, %v81
    %v84 = vmul.f32 0.5, %v83
    %v85 = vsub.f32 1.5, %v84
    %v86 = vmul.f32 %v81, %v85
    %vm87 = vweird.f32 %v70
    %vm88 = vweird.f32 %v81
    %vm89 = vmor %vm87, %vm88
    %v90 = vsel %vm89, %v81, %v86
    %v91 = vmul.f32 %v57, %v80
    %v92 = vmul.f32 %v58, %v90
    %v94 = vperm.slane %v38, 0
    %v96 = vmul.f32 %v91, %v94
    %v97 = vmul.f32 %v92, %v94
    %v99 = vperm.slane %v40, 0
    %v101 = vadd.f32 %v96, %v99
    %v102 = vadd.f32 %v97, %v99
    %v103 = vld [vmem:[%s1] sm:$0x3]
    %v104 = vsub.f32 1.0, %v103
    %v105 = vmul.f32 %v104, -1e+09
    %v107 = vrot.slane %v105, 1
    %v108 = vld [vmem:[%s3] sm:$0xff]
    %v109 = vld [vmem:[%s3 + $0x8] sm:$0xff]
    %v110 = vld [vmem:[%s3 + $0x10] sm:$0xff]
    %v111 = vld [vmem:[%s3 + $0x18] sm:$0xff]
    %v112 = vld [vmem:[%s4] sm:$0x1]
    %v114 = vperm.slane %v112, 0
    %v117 = vsel %vm41, %v101, 0
    %v120 = vsel %vm41, %v102, 0
    %122 = vmatpush.msra.mxu0 0.0
    %123 = vmatpush.msra.mxu0 0.0
    %124 = vmatpush.msra.mxu0 0.0
    %125 = vmatpush.msra.mxu0 0.0
    %126 = vmatpush.msra.mxu0 0.0
    %127 = vmatpush.msra.mxu0 0.0
    %128 = vmatpush.msra.mxu0 0.0
    %129 = vmatpush.msra.mxu0 0.0
    %130 = vmatpush.msra.mxu0 0.0
    %131 = vmatpush.msra.mxu0 0.0
    %132 = vmatpush.msra.mxu0 0.0
    %133 = vmatpush.msra.mxu0 0.0
    %134 = vmatpush.msra.mxu0 %v111
    %135 = vmatpush.msra.mxu0 %v110
    %136 = vmatpush.msra.mxu0 %v109
    %137 = vmatpush.msra.mxu0 %v108
    %138 = vmatmul.f32.gmra.mxu0 %v117
    %v139 = vpop.f32.mrf.mxu0
    %v140 = vadd.f32 %v114, %v139
    %141 = vmatmul.f32.gmra.mxu0 %v120
    %v142 = vpop.f32.mrf.mxu0
    %v143 = vadd.f32 %v114, %v142
    %144 = vdwg.mxu0
    %s145 = scalar_lea.vmem %s3, 128
    %v146 = vld [vmem:[%s145] sm:$0xff]
    %v147 = vld [vmem:[%s145 + $0x8] sm:$0xff]
    %v148 = vld [vmem:[%s145 + $0x10] sm:$0xff]
    %v149 = vld [vmem:[%s145 + $0x18] sm:$0xff]
    %s150 = scalar_lea.vmem %s4, 4
    %v151 = vld [vmem:[%s150] sm:$0x1]
    %v153 = vperm.slane %v151, 0
    %155 = vmatpush.msra.mxu0 0.0
    %156 = vmatpush.msra.mxu0 0.0
    %157 = vmatpush.msra.mxu0 0.0
    %158 = vmatpush.msra.mxu0 0.0
    %159 = vmatpush.msra.mxu0 0.0
    %160 = vmatpush.msra.mxu0 0.0
    %161 = vmatpush.msra.mxu0 0.0
    %162 = vmatpush.msra.mxu0 0.0
    %163 = vmatpush.msra.mxu0 0.0
    %164 = vmatpush.msra.mxu0 0.0
    %165 = vmatpush.msra.mxu0 0.0
    %166 = vmatpush.msra.mxu0 0.0
    %167 = vmatpush.msra.mxu0 %v149
    %168 = vmatpush.msra.mxu0 %v148
    %169 = vmatpush.msra.mxu0 %v147
    %170 = vmatpush.msra.mxu0 %v146
    %171 = vmatmul.f32.gmra.mxu0 %v117
    %v172 = vpop.f32.mrf.mxu0
    %v173 = vadd.f32 %v153, %v172
    %174 = vmatmul.f32.gmra.mxu0 %v120
    %v175 = vpop.f32.mrf.mxu0
    %v176 = vadd.f32 %v153, %v175
    %177 = vdwg.mxu0
    %s178 = scalar_lea.vmem %s3, 256
    %v179 = vld [vmem:[%s178] sm:$0xff]
    %v180 = vld [vmem:[%s178 + $0x8] sm:$0xff]
    %v181 = vld [vmem:[%s178 + $0x10] sm:$0xff]
    %v182 = vld [vmem:[%s178 + $0x18] sm:$0xff]
    %s183 = scalar_lea.vmem %s4, 8
    %v184 = vld [vmem:[%s183] sm:$0x1]
    %v186 = vperm.slane %v184, 0
    %188 = vmatpush.msra.mxu0 0.0
    %189 = vmatpush.msra.mxu0 0.0
    %190 = vmatpush.msra.mxu0 0.0
    %191 = vmatpush.msra.mxu0 0.0
    %192 = vmatpush.msra.mxu0 0.0
    %193 = vmatpush.msra.mxu0 0.0
    %194 = vmatpush.msra.mxu0 0.0
    %195 = vmatpush.msra.mxu0 0.0
    %196 = vmatpush.msra.mxu0 0.0
    %197 = vmatpush.msra.mxu0 0.0
    %198 = vmatpush.msra.mxu0 0.0
    %199 = vmatpush.msra.mxu0 0.0
    %200 = vmatpush.msra.mxu0 %v182
    %201 = vmatpush.msra.mxu0 %v181
    %202 = vmatpush.msra.mxu0 %v180
    %203 = vmatpush.msra.mxu0 %v179
    %204 = vmatmul.f32.gmra.mxu0 %v117
    %v205 = vpop.f32.mrf.mxu0
    %v206 = vadd.f32 %v186, %v205
    %207 = vmatmul.f32.gmra.mxu0 %v120
    %v208 = vpop.f32.mrf.mxu0
    %v209 = vadd.f32 %v186, %v208
    %210 = vdwg.mxu0
    %vm211 = vcmask 64512
    %v213 = vsel %vm211, %v140, 0
    %v216 = vsel %vm211, %v173, 0
    %218 = vmatpush.xpose.msra.mxu0 0.0
    %219 = vmatpush.xpose.msra.mxu0 0.0
    %220 = vmatpush.xpose.msra.mxu0 0.0
    %221 = vmatpush.xpose.msra.mxu0 0.0
    %222 = vmatpush.xpose.msra.mxu0 0.0
    %223 = vmatpush.xpose.msra.mxu0 0.0
    %224 = vmatpush.xpose.msra.mxu0 0.0
    %225 = vmatpush.xpose.msra.mxu0 0.0
    %226 = vmatpush.xpose.msra.mxu0 0.0
    %227 = vmatpush.xpose.msra.mxu0 0.0
    %228 = vmatpush.xpose.msra.mxu0 0.0
    %229 = vmatpush.xpose.msra.mxu0 0.0
    %230 = vmatpush.xpose.msra.mxu0 0.0
    %231 = vmatpush.xpose.msra.mxu0 0.0
    %232 = vmatpush.xpose.msra.mxu0 0.0
    %233 = vmatpush.xpose.msra.mxu0 %v216
    %234 = vmatmul.f32.gmra.mxu0 %v213
    %v235 = vpop.f32.mrf.mxu0
    %v236 = vadd.f32 0.0, %v235
    %237 = vdwg.mxu0
    %v239 = vsel %vm211, %v143, 0
    %v242 = vsel %vm211, %v176, 0
    %244 = vmatpush.xpose.msra.mxu0 0.0
    %245 = vmatpush.xpose.msra.mxu0 0.0
    %246 = vmatpush.xpose.msra.mxu0 0.0
    %247 = vmatpush.xpose.msra.mxu0 0.0
    %248 = vmatpush.xpose.msra.mxu0 0.0
    %249 = vmatpush.xpose.msra.mxu0 0.0
    %250 = vmatpush.xpose.msra.mxu0 0.0
    %251 = vmatpush.xpose.msra.mxu0 0.0
    %252 = vmatpush.xpose.msra.mxu0 0.0
    %253 = vmatpush.xpose.msra.mxu0 0.0
    %254 = vmatpush.xpose.msra.mxu0 0.0
    %255 = vmatpush.xpose.msra.mxu0 0.0
    %256 = vmatpush.xpose.msra.mxu0 0.0
    %257 = vmatpush.xpose.msra.mxu0 0.0
    %258 = vmatpush.xpose.msra.mxu0 0.0
    %259 = vmatpush.xpose.msra.mxu0 %v242
    %260 = vmatmul.f32.gmra.mxu0 %v239
    %v261 = vpop.f32.mrf.mxu0
    %v262 = vadd.f32 0.0, %v261
    %263 = vdwg.mxu0
    %v264 = vmul.f32 %v236, 0.35355338
    %v265 = vmul.f32 %v262, 0.35355338
    %v266 = vperm.slane %v105, 0
    %v267 = vperm.slane %v107, 0
    %v270 = vadd.f32 %v264, %v266
    %v271 = vadd.f32 %v265, %v267
    %v272 = vsel %vm211, %v270, -inf
    %273 = vmax.xlane.f32.xlu0 %v272
    %v274 = vpop.xlane.xlu0 %273
    %v275 = vsel %vm211, %v271, -inf
    %276 = vmax.xlane.f32.xlu0 %v275
    %v277 = vpop.xlane.xlu0 %276
    %v278 = vsub.f32 %v270, %v274
    %v279 = vsub.f32 %v271, %v277
    %v280 = vmul.f32 %v278, 1.442695
    %v281 = vpow.pop %v280
    %v282 = vmul.f32 %v279, 1.442695
    %v283 = vpow.pop %v282
    %v284 = vsel %vm211, %v281, 0.0
    %285 = vadd.xlane.f32.xlu0 %v284
    %v286 = vpop.xlane.xlu0 %285
    %v287 = vsel %vm211, %v283, 0.0
    %288 = vadd.xlane.f32.xlu0 %v287
    %v289 = vpop.xlane.xlu0 %288
    %v290 = vrcp.pop %v286
    %v291 = vrcp.pop %v289
    %v292 = vmul.f32 %v281, %v290
    %v293 = vmul.f32 %v283, %v291
    %v295 = vsel %vm211, %v292, 0
    %297 = vmatpush.msra.mxu0 0.0
    %298 = vmatpush.msra.mxu0 0.0
    %299 = vmatpush.msra.mxu0 0.0
    %300 = vmatpush.msra.mxu0 0.0
    %301 = vmatpush.msra.mxu0 0.0
    %302 = vmatpush.msra.mxu0 0.0
    %303 = vmatpush.msra.mxu0 0.0
    %304 = vmatpush.msra.mxu0 0.0
    %305 = vmatpush.msra.mxu0 0.0
    %306 = vmatpush.msra.mxu0 0.0
    %307 = vmatpush.msra.mxu0 0.0
    %308 = vmatpush.msra.mxu0 0.0
    %309 = vmatpush.msra.mxu0 0.0
    %310 = vmatpush.msra.mxu0 0.0
    %311 = vmatpush.msra.mxu0 0.0
    %312 = vmatpush.msra.mxu0 %v206
    %313 = vmatmul.f32.gmra.mxu0 %v295
    %v314 = vpop.f32.mrf.mxu0
    %v315 = vadd.f32 0.0, %v314
    %316 = vdwg.mxu0
    %v318 = vsel %vm211, %v293, 0
    %320 = vmatpush.msra.mxu0 0.0
    %321 = vmatpush.msra.mxu0 0.0
    %322 = vmatpush.msra.mxu0 0.0
    %323 = vmatpush.msra.mxu0 0.0
    %324 = vmatpush.msra.mxu0 0.0
    %325 = vmatpush.msra.mxu0 0.0
    %326 = vmatpush.msra.mxu0 0.0
    %327 = vmatpush.msra.mxu0 0.0
    %328 = vmatpush.msra.mxu0 0.0
    %329 = vmatpush.msra.mxu0 0.0
    %330 = vmatpush.msra.mxu0 0.0
    %331 = vmatpush.msra.mxu0 0.0
    %332 = vmatpush.msra.mxu0 0.0
    %333 = vmatpush.msra.mxu0 0.0
    %334 = vmatpush.msra.mxu0 0.0
    %335 = vmatpush.msra.mxu0 %v209
    %336 = vmatmul.f32.gmra.mxu0 %v318
    %v337 = vpop.f32.mrf.mxu0
    %v338 = vadd.f32 0.0, %v337
    %339 = vdwg.mxu0
    %v340 = vld [vmem:[%s5] sm:$0xff]
    %s341 = scalar_lea.vmem %s3, 32
    %v342 = vld [vmem:[%s341] sm:$0xff]
    %v343 = vld [vmem:[%s341 + $0x8] sm:$0xff]
    %v344 = vld [vmem:[%s341 + $0x10] sm:$0xff]
    %v345 = vld [vmem:[%s341 + $0x18] sm:$0xff]
    %s346 = scalar_lea.vmem %s4, 1
    %v347 = vld [vmem:[%s346] sm:$0x1]
    %v349 = vperm.slane %v347, 0
    %351 = vmatpush.msra.mxu0 0.0
    %352 = vmatpush.msra.mxu0 0.0
    %353 = vmatpush.msra.mxu0 0.0
    %354 = vmatpush.msra.mxu0 0.0
    %355 = vmatpush.msra.mxu0 0.0
    %356 = vmatpush.msra.mxu0 0.0
    %357 = vmatpush.msra.mxu0 0.0
    %358 = vmatpush.msra.mxu0 0.0
    %359 = vmatpush.msra.mxu0 0.0
    %360 = vmatpush.msra.mxu0 0.0
    %361 = vmatpush.msra.mxu0 0.0
    %362 = vmatpush.msra.mxu0 0.0
    %363 = vmatpush.msra.mxu0 %v345
    %364 = vmatpush.msra.mxu0 %v344
    %365 = vmatpush.msra.mxu0 %v343
    %366 = vmatpush.msra.mxu0 %v342
    %367 = vmatmul.f32.gmra.mxu0 %v117
    %v368 = vpop.f32.mrf.mxu0
    %v369 = vadd.f32 %v349, %v368
    %370 = vmatmul.f32.gmra.mxu0 %v120
    %v371 = vpop.f32.mrf.mxu0
    %v372 = vadd.f32 %v349, %v371
    %373 = vdwg.mxu0
    %s374 = scalar_lea.vmem %s3, 160
    %v375 = vld [vmem:[%s374] sm:$0xff]
    %v376 = vld [vmem:[%s374 + $0x8] sm:$0xff]
    %v377 = vld [vmem:[%s374 + $0x10] sm:$0xff]
    %v378 = vld [vmem:[%s374 + $0x18] sm:$0xff]
    %s379 = scalar_lea.vmem %s4, 5
    %v380 = vld [vmem:[%s379] sm:$0x1]
    %v382 = vperm.slane %v380, 0
    %384 = vmatpush.msra.mxu0 0.0
    %385 = vmatpush.msra.mxu0 0.0
    %386 = vmatpush.msra.mxu0 0.0
    %387 = vmatpush.msra.mxu0 0.0
    %388 = vmatpush.msra.mxu0 0.0
    %389 = vmatpush.msra.mxu0 0.0
    %390 = vmatpush.msra.mxu0 0.0
    %391 = vmatpush.msra.mxu0 0.0
    %392 = vmatpush.msra.mxu0 0.0
    %393 = vmatpush.msra.mxu0 0.0
    %394 = vmatpush.msra.mxu0 0.0
    %395 = vmatpush.msra.mxu0 0.0
    %396 = vmatpush.msra.mxu0 %v378
    %397 = vmatpush.msra.mxu0 %v377
    %398 = vmatpush.msra.mxu0 %v376
    %399 = vmatpush.msra.mxu0 %v375
    %400 = vmatmul.f32.gmra.mxu0 %v117
    %v401 = vpop.f32.mrf.mxu0
    %v402 = vadd.f32 %v382, %v401
    %403 = vmatmul.f32.gmra.mxu0 %v120
    %v404 = vpop.f32.mrf.mxu0
    %v405 = vadd.f32 %v382, %v404
    %406 = vdwg.mxu0
    %s407 = scalar_lea.vmem %s3, 288
    %v408 = vld [vmem:[%s407] sm:$0xff]
    %v409 = vld [vmem:[%s407 + $0x8] sm:$0xff]
    %v410 = vld [vmem:[%s407 + $0x10] sm:$0xff]
    %v411 = vld [vmem:[%s407 + $0x18] sm:$0xff]
    %s412 = scalar_lea.vmem %s4, 9
    %v413 = vld [vmem:[%s412] sm:$0x1]
    %v415 = vperm.slane %v413, 0
    %417 = vmatpush.msra.mxu0 0.0
    %418 = vmatpush.msra.mxu0 0.0
    %419 = vmatpush.msra.mxu0 0.0
    %420 = vmatpush.msra.mxu0 0.0
    %421 = vmatpush.msra.mxu0 0.0
    %422 = vmatpush.msra.mxu0 0.0
    %423 = vmatpush.msra.mxu0 0.0
    %424 = vmatpush.msra.mxu0 0.0
    %425 = vmatpush.msra.mxu0 0.0
    %426 = vmatpush.msra.mxu0 0.0
    %427 = vmatpush.msra.mxu0 0.0
    %428 = vmatpush.msra.mxu0 0.0
    %429 = vmatpush.msra.mxu0 %v411
    %430 = vmatpush.msra.mxu0 %v410
    %431 = vmatpush.msra.mxu0 %v409
    %432 = vmatpush.msra.mxu0 %v408
    %433 = vmatmul.f32.gmra.mxu0 %v117
    %v434 = vpop.f32.mrf.mxu0
    %v435 = vadd.f32 %v415, %v434
    %436 = vmatmul.f32.gmra.mxu0 %v120
    %v437 = vpop.f32.mrf.mxu0
    %v438 = vadd.f32 %v415, %v437
    %439 = vdwg.mxu0
    %v441 = vsel %vm211, %v369, 0
    %v444 = vsel %vm211, %v402, 0
    %446 = vmatpush.xpose.msra.mxu0 0.0
    %447 = vmatpush.xpose.msra.mxu0 0.0
    %448 = vmatpush.xpose.msra.mxu0 0.0
    %449 = vmatpush.xpose.msra.mxu0 0.0
    %450 = vmatpush.xpose.msra.mxu0 0.0
    %451 = vmatpush.xpose.msra.mxu0 0.0
    %452 = vmatpush.xpose.msra.mxu0 0.0
    %453 = vmatpush.xpose.msra.mxu0 0.0
    %454 = vmatpush.xpose.msra.mxu0 0.0
    %455 = vmatpush.xpose.msra.mxu0 0.0
    %456 = vmatpush.xpose.msra.mxu0 0.0
    %457 = vmatpush.xpose.msra.mxu0 0.0
    %458 = vmatpush.xpose.msra.mxu0 0.0
    %459 = vmatpush.xpose.msra.mxu0 0.0
    %460 = vmatpush.xpose.msra.mxu0 0.0
    %461 = vmatpush.xpose.msra.mxu0 %v444
    %462 = vmatmul.f32.gmra.mxu0 %v441
    %v463 = vpop.f32.mrf.mxu0
    %v464 = vadd.f32 0.0, %v463
    %465 = vdwg.mxu0
    %v467 = vsel %vm211, %v372, 0
    %v470 = vsel %vm211, %v405, 0
    %472 = vmatpush.xpose.msra.mxu0 0.0
    %473 = vmatpush.xpose.msra.mxu0 0.0
    %474 = vmatpush.xpose.msra.mxu0 0.0
    %475 = vmatpush.xpose.msra.mxu0 0.0
    %476 = vmatpush.xpose.msra.mxu0 0.0
    %477 = vmatpush.xpose.msra.mxu0 0.0
    %478 = vmatpush.xpose.msra.mxu0 0.0
    %479 = vmatpush.xpose.msra.mxu0 0.0
    %480 = vmatpush.xpose.msra.mxu0 0.0
    %481 = vmatpush.xpose.msra.mxu0 0.0
    %482 = vmatpush.xpose.msra.mxu0 0.0
    %483 = vmatpush.xpose.msra.mxu0 0.0
    %484 = vmatpush.xpose.msra.mxu0 0.0
    %485 = vmatpush.xpose.msra.mxu0 0.0
    %486 = vmatpush.xpose.msra.mxu0 0.0
    %487 = vmatpush.xpose.msra.mxu0 %v470
    %488 = vmatmul.f32.gmra.mxu0 %v467
    %v489 = vpop.f32.mrf.mxu0
    %v490 = vadd.f32 0.0, %v489
    %491 = vdwg.mxu0
    %v492 = vmul.f32 %v464, 0.35355338
    %v493 = vmul.f32 %v490, 0.35355338
    %v494 = vadd.f32 %v492, %v266
    %v495 = vadd.f32 %v493, %v267
    %v496 = vsel %vm211, %v494, -inf
    %497 = vmax.xlane.f32.xlu0 %v496
    %v498 = vpop.xlane.xlu0 %497
    %v499 = vsel %vm211, %v495, -inf
    %500 = vmax.xlane.f32.xlu0 %v499
    %v501 = vpop.xlane.xlu0 %500
    %v502 = vsub.f32 %v494, %v498
    %v503 = vsub.f32 %v495, %v501
    %v504 = vmul.f32 %v502, 1.442695
    %v505 = vpow.pop %v504
    %v506 = vmul.f32 %v503, 1.442695
    %v507 = vpow.pop %v506
    %v508 = vsel %vm211, %v505, 0.0
    %509 = vadd.xlane.f32.xlu0 %v508
    %v510 = vpop.xlane.xlu0 %509
    %v511 = vsel %vm211, %v507, 0.0
    %512 = vadd.xlane.f32.xlu0 %v511
    %v513 = vpop.xlane.xlu0 %512
    %v514 = vrcp.pop %v510
    %v515 = vrcp.pop %v513
    %v516 = vmul.f32 %v505, %v514
    %v517 = vmul.f32 %v507, %v515
    %v519 = vsel %vm211, %v516, 0
    %521 = vmatpush.msra.mxu0 0.0
    %522 = vmatpush.msra.mxu0 0.0
    %523 = vmatpush.msra.mxu0 0.0
    %524 = vmatpush.msra.mxu0 0.0
    %525 = vmatpush.msra.mxu0 0.0
    %526 = vmatpush.msra.mxu0 0.0
    %527 = vmatpush.msra.mxu0 0.0
    %528 = vmatpush.msra.mxu0 0.0
    %529 = vmatpush.msra.mxu0 0.0
    %530 = vmatpush.msra.mxu0 0.0
    %531 = vmatpush.msra.mxu0 0.0
    %532 = vmatpush.msra.mxu0 0.0
    %533 = vmatpush.msra.mxu0 0.0
    %534 = vmatpush.msra.mxu0 0.0
    %535 = vmatpush.msra.mxu0 0.0
    %536 = vmatpush.msra.mxu0 %v435
    %537 = vmatmul.f32.gmra.mxu0 %v519
    %v538 = vpop.f32.mrf.mxu0
    %v539 = vadd.f32 0.0, %v538
    %540 = vdwg.mxu0
    %v542 = vsel %vm211, %v517, 0
    %544 = vmatpush.msra.mxu0 0.0
    %545 = vmatpush.msra.mxu0 0.0
    %546 = vmatpush.msra.mxu0 0.0
    %547 = vmatpush.msra.mxu0 0.0
    %548 = vmatpush.msra.mxu0 0.0
    %549 = vmatpush.msra.mxu0 0.0
    %550 = vmatpush.msra.mxu0 0.0
    %551 = vmatpush.msra.mxu0 0.0
    %552 = vmatpush.msra.mxu0 0.0
    %553 = vmatpush.msra.mxu0 0.0
    %554 = vmatpush.msra.mxu0 0.0
    %555 = vmatpush.msra.mxu0 0.0
    %556 = vmatpush.msra.mxu0 0.0
    %557 = vmatpush.msra.mxu0 0.0
    %558 = vmatpush.msra.mxu0 0.0
    %559 = vmatpush.msra.mxu0 %v438
    %560 = vmatmul.f32.gmra.mxu0 %v542
    %v561 = vpop.f32.mrf.mxu0
    %v562 = vadd.f32 0.0, %v561
    %563 = vdwg.mxu0
    %s564 = scalar_lea.vmem %s5, 8
    %v565 = vld [vmem:[%s564] sm:$0xff]
    %v567 = vsel %vm211, %v539, 0
    %v570 = vsel %vm211, %v562, 0
    %572 = vmatpush.msra.mxu0 0.0
    %573 = vmatpush.msra.mxu0 0.0
    %574 = vmatpush.msra.mxu0 0.0
    %575 = vmatpush.msra.mxu0 0.0
    %576 = vmatpush.msra.mxu0 0.0
    %577 = vmatpush.msra.mxu0 0.0
    %578 = vmatpush.msra.mxu0 0.0
    %579 = vmatpush.msra.mxu0 0.0
    %580 = vmatpush.msra.mxu0 0.0
    %581 = vmatpush.msra.mxu0 0.0
    %582 = vmatpush.msra.mxu0 0.0
    %583 = vmatpush.msra.mxu0 0.0
    %584 = vmatpush.msra.mxu0 0.0
    %585 = vmatpush.msra.mxu0 0.0
    %586 = vmatpush.msra.mxu0 0.0
    %587 = vmatpush.msra.mxu0 %v565
    %588 = vmatmul.f32.gmra.mxu0 %v567
    %v589 = vpop.f32.mrf.mxu0
    %v590 = vadd.f32 0.0, %v589
    %591 = vmatmul.f32.gmra.mxu0 %v570
    %v592 = vpop.f32.mrf.mxu0
    %v593 = vadd.f32 0.0, %v592
    %594 = vdwg.mxu0
    %v596 = vsel %vm211, %v315, 0
    %v599 = vsel %vm211, %v338, 0
    %601 = vmatpush.msra.mxu0 0.0
    %602 = vmatpush.msra.mxu0 0.0
    %603 = vmatpush.msra.mxu0 0.0
    %604 = vmatpush.msra.mxu0 0.0
    %605 = vmatpush.msra.mxu0 0.0
    %606 = vmatpush.msra.mxu0 0.0
    %607 = vmatpush.msra.mxu0 0.0
    %608 = vmatpush.msra.mxu0 0.0
    %609 = vmatpush.msra.mxu0 0.0
    %610 = vmatpush.msra.mxu0 0.0
    %611 = vmatpush.msra.mxu0 0.0
    %612 = vmatpush.msra.mxu0 0.0
    %613 = vmatpush.msra.mxu0 0.0
    %614 = vmatpush.msra.mxu0 0.0
    %615 = vmatpush.msra.mxu0 0.0
    %616 = vmatpush.msra.mxu0 %v340
    %617 = vmatmul.f32.gmra.mxu0 %v596
    %v618 = vpop.f32.mrf.mxu0
    %v619 = vadd.f32 %v590, %v618
    %620 = vmatmul.f32.gmra.mxu0 %v599
    %v621 = vpop.f32.mrf.mxu0
    %v622 = vadd.f32 %v593, %v621
    %623 = vdwg.mxu0
    %s624 = scalar_lea.vmem %s3, 64
    %v625 = vld [vmem:[%s624] sm:$0xff]
    %v626 = vld [vmem:[%s624 + $0x8] sm:$0xff]
    %v627 = vld [vmem:[%s624 + $0x10] sm:$0xff]
    %v628 = vld [vmem:[%s624 + $0x18] sm:$0xff]
    %s629 = scalar_lea.vmem %s4, 2
    %v630 = vld [vmem:[%s629] sm:$0x1]
    %v632 = vperm.slane %v630, 0
    %634 = vmatpush.msra.mxu0 0.0
    %635 = vmatpush.msra.mxu0 0.0
    %636 = vmatpush.msra.mxu0 0.0
    %637 = vmatpush.msra.mxu0 0.0
    %638 = vmatpush.msra.mxu0 0.0
    %639 = vmatpush.msra.mxu0 0.0
    %640 = vmatpush.msra.mxu0 0.0
    %641 = vmatpush.msra.mxu0 0.0
    %642 = vmatpush.msra.mxu0 0.0
    %643 = vmatpush.msra.mxu0 0.0
    %644 = vmatpush.msra.mxu0 0.0
    %645 = vmatpush.msra.mxu0 0.0
    %646 = vmatpush.msra.mxu0 %v628
    %647 = vmatpush.msra.mxu0 %v627
    %648 = vmatpush.msra.mxu0 %v626
    %649 = vmatpush.msra.mxu0 %v625
    %650 = vmatmul.f32.gmra.mxu0 %v117
    %v651 = vpop.f32.mrf.mxu0
    %v652 = vadd.f32 %v632, %v651
    %653 = vmatmul.f32.gmra.mxu0 %v120
    %v654 = vpop.f32.mrf.mxu0
    %v655 = vadd.f32 %v632, %v654
    %656 = vdwg.mxu0
    %s657 = scalar_lea.vmem %s3, 192
    %v658 = vld [vmem:[%s657] sm:$0xff]
    %v659 = vld [vmem:[%s657 + $0x8] sm:$0xff]
    %v660 = vld [vmem:[%s657 + $0x10] sm:$0xff]
    %v661 = vld [vmem:[%s657 + $0x18] sm:$0xff]
    %s662 = scalar_lea.vmem %s4, 6
    %v663 = vld [vmem:[%s662] sm:$0x1]
    %v665 = vperm.slane %v663, 0
    %667 = vmatpush.msra.mxu0 0.0
    %668 = vmatpush.msra.mxu0 0.0
    %669 = vmatpush.msra.mxu0 0.0
    %670 = vmatpush.msra.mxu0 0.0
    %671 = vmatpush.msra.mxu0 0.0
    %672 = vmatpush.msra.mxu0 0.0
    %673 = vmatpush.msra.mxu0 0.0
    %674 = vmatpush.msra.mxu0 0.0
    %675 = vmatpush.msra.mxu0 0.0
    %676 = vmatpush.msra.mxu0 0.0
    %677 = vmatpush.msra.mxu0 0.0
    %678 = vmatpush.msra.mxu0 0.0
    %679 = vmatpush.msra.mxu0 %v661
    %680 = vmatpush.msra.mxu0 %v660
    %681 = vmatpush.msra.mxu0 %v659
    %682 = vmatpush.msra.mxu0 %v658
    %683 = vmatmul.f32.gmra.mxu0 %v117
    %v684 = vpop.f32.mrf.mxu0
    %v685 = vadd.f32 %v665, %v684
    %686 = vmatmul.f32.gmra.mxu0 %v120
    %v687 = vpop.f32.mrf.mxu0
    %v688 = vadd.f32 %v665, %v687
    %689 = vdwg.mxu0
    %s690 = scalar_lea.vmem %s3, 320
    %v691 = vld [vmem:[%s690] sm:$0xff]
    %v692 = vld [vmem:[%s690 + $0x8] sm:$0xff]
    %v693 = vld [vmem:[%s690 + $0x10] sm:$0xff]
    %v694 = vld [vmem:[%s690 + $0x18] sm:$0xff]
    %s695 = scalar_lea.vmem %s4, 10
    %v696 = vld [vmem:[%s695] sm:$0x1]
    %v698 = vperm.slane %v696, 0
    %700 = vmatpush.msra.mxu0 0.0
    %701 = vmatpush.msra.mxu0 0.0
    %702 = vmatpush.msra.mxu0 0.0
    %703 = vmatpush.msra.mxu0 0.0
    %704 = vmatpush.msra.mxu0 0.0
    %705 = vmatpush.msra.mxu0 0.0
    %706 = vmatpush.msra.mxu0 0.0
    %707 = vmatpush.msra.mxu0 0.0
    %708 = vmatpush.msra.mxu0 0.0
    %709 = vmatpush.msra.mxu0 0.0
    %710 = vmatpush.msra.mxu0 0.0
    %711 = vmatpush.msra.mxu0 0.0
    %712 = vmatpush.msra.mxu0 %v694
    %713 = vmatpush.msra.mxu0 %v693
    %714 = vmatpush.msra.mxu0 %v692
    %715 = vmatpush.msra.mxu0 %v691
    %716 = vmatmul.f32.gmra.mxu0 %v117
    %v717 = vpop.f32.mrf.mxu0
    %v718 = vadd.f32 %v698, %v717
    %719 = vmatmul.f32.gmra.mxu0 %v120
    %v720 = vpop.f32.mrf.mxu0
    %v721 = vadd.f32 %v698, %v720
    %722 = vdwg.mxu0
    %v724 = vsel %vm211, %v652, 0
    %v727 = vsel %vm211, %v685, 0
    %729 = vmatpush.xpose.msra.mxu0 0.0
    %730 = vmatpush.xpose.msra.mxu0 0.0
    %731 = vmatpush.xpose.msra.mxu0 0.0
    %732 = vmatpush.xpose.msra.mxu0 0.0
    %733 = vmatpush.xpose.msra.mxu0 0.0
    %734 = vmatpush.xpose.msra.mxu0 0.0
    %735 = vmatpush.xpose.msra.mxu0 0.0
    %736 = vmatpush.xpose.msra.mxu0 0.0
    %737 = vmatpush.xpose.msra.mxu0 0.0
    %738 = vmatpush.xpose.msra.mxu0 0.0
    %739 = vmatpush.xpose.msra.mxu0 0.0
    %740 = vmatpush.xpose.msra.mxu0 0.0
    %741 = vmatpush.xpose.msra.mxu0 0.0
    %742 = vmatpush.xpose.msra.mxu0 0.0
    %743 = vmatpush.xpose.msra.mxu0 0.0
    %744 = vmatpush.xpose.msra.mxu0 %v727
    %745 = vmatmul.f32.gmra.mxu0 %v724
    %v746 = vpop.f32.mrf.mxu0
    %v747 = vadd.f32 0.0, %v746
    %748 = vdwg.mxu0
    %v750 = vsel %vm211, %v655, 0
    %v753 = vsel %vm211, %v688, 0
    %755 = vmatpush.xpose.msra.mxu0 0.0
    %756 = vmatpush.xpose.msra.mxu0 0.0
    %757 = vmatpush.xpose.msra.mxu0 0.0
    %758 = vmatpush.xpose.msra.mxu0 0.0
    %759 = vmatpush.xpose.msra.mxu0 0.0
    %760 = vmatpush.xpose.msra.mxu0 0.0
    %761 = vmatpush.xpose.msra.mxu0 0.0
    %762 = vmatpush.xpose.msra.mxu0 0.0
    %763 = vmatpush.xpose.msra.mxu0 0.0
    %764 = vmatpush.xpose.msra.mxu0 0.0
    %765 = vmatpush.xpose.msra.mxu0 0.0
    %766 = vmatpush.xpose.msra.mxu0 0.0
    %767 = vmatpush.xpose.msra.mxu0 0.0
    %768 = vmatpush.xpose.msra.mxu0 0.0
    %769 = vmatpush.xpose.msra.mxu0 0.0
    %770 = vmatpush.xpose.msra.mxu0 %v753
    %771 = vmatmul.f32.gmra.mxu0 %v750
    %v772 = vpop.f32.mrf.mxu0
    %v773 = vadd.f32 0.0, %v772
    %774 = vdwg.mxu0
    %v775 = vmul.f32 %v747, 0.35355338
    %v776 = vmul.f32 %v773, 0.35355338
    %v777 = vadd.f32 %v775, %v266
    %v778 = vadd.f32 %v776, %v267
    %v779 = vsel %vm211, %v777, -inf
    %780 = vmax.xlane.f32.xlu0 %v779
    %v781 = vpop.xlane.xlu0 %780
    %v782 = vsel %vm211, %v778, -inf
    %783 = vmax.xlane.f32.xlu0 %v782
    %v784 = vpop.xlane.xlu0 %783
    %v785 = vsub.f32 %v777, %v781
    %v786 = vsub.f32 %v778, %v784
    %v787 = vmul.f32 %v785, 1.442695
    %v788 = vpow.pop %v787
    %v789 = vmul.f32 %v786, 1.442695
    %v790 = vpow.pop %v789
    %v791 = vsel %vm211, %v788, 0.0
    %792 = vadd.xlane.f32.xlu0 %v791
    %v793 = vpop.xlane.xlu0 %792
    %v794 = vsel %vm211, %v790, 0.0
    %795 = vadd.xlane.f32.xlu0 %v794
    %v796 = vpop.xlane.xlu0 %795
    %v797 = vrcp.pop %v793
    %v798 = vrcp.pop %v796
    %v799 = vmul.f32 %v788, %v797
    %v800 = vmul.f32 %v790, %v798
    %v802 = vsel %vm211, %v799, 0
    %804 = vmatpush.msra.mxu0 0.0
    %805 = vmatpush.msra.mxu0 0.0
    %806 = vmatpush.msra.mxu0 0.0
    %807 = vmatpush.msra.mxu0 0.0
    %808 = vmatpush.msra.mxu0 0.0
    %809 = vmatpush.msra.mxu0 0.0
    %810 = vmatpush.msra.mxu0 0.0
    %811 = vmatpush.msra.mxu0 0.0
    %812 = vmatpush.msra.mxu0 0.0
    %813 = vmatpush.msra.mxu0 0.0
    %814 = vmatpush.msra.mxu0 0.0
    %815 = vmatpush.msra.mxu0 0.0
    %816 = vmatpush.msra.mxu0 0.0
    %817 = vmatpush.msra.mxu0 0.0
    %818 = vmatpush.msra.mxu0 0.0
    %819 = vmatpush.msra.mxu0 %v718
    %820 = vmatmul.f32.gmra.mxu0 %v802
    %v821 = vpop.f32.mrf.mxu0
    %v822 = vadd.f32 0.0, %v821
    %823 = vdwg.mxu0
    %v825 = vsel %vm211, %v800, 0
    %827 = vmatpush.msra.mxu0 0.0
    %828 = vmatpush.msra.mxu0 0.0
    %829 = vmatpush.msra.mxu0 0.0
    %830 = vmatpush.msra.mxu0 0.0
    %831 = vmatpush.msra.mxu0 0.0
    %832 = vmatpush.msra.mxu0 0.0
    %833 = vmatpush.msra.mxu0 0.0
    %834 = vmatpush.msra.mxu0 0.0
    %835 = vmatpush.msra.mxu0 0.0
    %836 = vmatpush.msra.mxu0 0.0
    %837 = vmatpush.msra.mxu0 0.0
    %838 = vmatpush.msra.mxu0 0.0
    %839 = vmatpush.msra.mxu0 0.0
    %840 = vmatpush.msra.mxu0 0.0
    %841 = vmatpush.msra.mxu0 0.0
    %842 = vmatpush.msra.mxu0 %v721
    %843 = vmatmul.f32.gmra.mxu0 %v825
    %v844 = vpop.f32.mrf.mxu0
    %v845 = vadd.f32 0.0, %v844
    %846 = vdwg.mxu0
    %s847 = scalar_lea.vmem %s5, 16
    %v848 = vld [vmem:[%s847] sm:$0xff]
    %v850 = vsel %vm211, %v822, 0
    %v853 = vsel %vm211, %v845, 0
    %855 = vmatpush.msra.mxu0 0.0
    %856 = vmatpush.msra.mxu0 0.0
    %857 = vmatpush.msra.mxu0 0.0
    %858 = vmatpush.msra.mxu0 0.0
    %859 = vmatpush.msra.mxu0 0.0
    %860 = vmatpush.msra.mxu0 0.0
    %861 = vmatpush.msra.mxu0 0.0
    %862 = vmatpush.msra.mxu0 0.0
    %863 = vmatpush.msra.mxu0 0.0
    %864 = vmatpush.msra.mxu0 0.0
    %865 = vmatpush.msra.mxu0 0.0
    %866 = vmatpush.msra.mxu0 0.0
    %867 = vmatpush.msra.mxu0 0.0
    %868 = vmatpush.msra.mxu0 0.0
    %869 = vmatpush.msra.mxu0 0.0
    %870 = vmatpush.msra.mxu0 %v848
    %871 = vmatmul.f32.gmra.mxu0 %v850
    %v872 = vpop.f32.mrf.mxu0
    %v873 = vadd.f32 0.0, %v872
    %874 = vmatmul.f32.gmra.mxu0 %v853
    %v875 = vpop.f32.mrf.mxu0
    %v876 = vadd.f32 0.0, %v875
    %877 = vdwg.mxu0
    %v878 = vadd.f32 %v619, %v873
    %v879 = vadd.f32 %v622, %v876
    %s880 = scalar_lea.vmem %s3, 96
    %v881 = vld [vmem:[%s880] sm:$0xff]
    %v882 = vld [vmem:[%s880 + $0x8] sm:$0xff]
    %v883 = vld [vmem:[%s880 + $0x10] sm:$0xff]
    %v884 = vld [vmem:[%s880 + $0x18] sm:$0xff]
    %s885 = scalar_lea.vmem %s4, 3
    %v886 = vld [vmem:[%s885] sm:$0x1]
    %v888 = vperm.slane %v886, 0
    %890 = vmatpush.msra.mxu0 0.0
    %891 = vmatpush.msra.mxu0 0.0
    %892 = vmatpush.msra.mxu0 0.0
    %893 = vmatpush.msra.mxu0 0.0
    %894 = vmatpush.msra.mxu0 0.0
    %895 = vmatpush.msra.mxu0 0.0
    %896 = vmatpush.msra.mxu0 0.0
    %897 = vmatpush.msra.mxu0 0.0
    %898 = vmatpush.msra.mxu0 0.0
    %899 = vmatpush.msra.mxu0 0.0
    %900 = vmatpush.msra.mxu0 0.0
    %901 = vmatpush.msra.mxu0 0.0
    %902 = vmatpush.msra.mxu0 %v884
    %903 = vmatpush.msra.mxu0 %v883
    %904 = vmatpush.msra.mxu0 %v882
    %905 = vmatpush.msra.mxu0 %v881
    %906 = vmatmul.f32.gmra.mxu0 %v117
    %v907 = vpop.f32.mrf.mxu0
    %v908 = vadd.f32 %v888, %v907
    %909 = vmatmul.f32.gmra.mxu0 %v120
    %v910 = vpop.f32.mrf.mxu0
    %v911 = vadd.f32 %v888, %v910
    %912 = vdwg.mxu0
    %s913 = scalar_lea.vmem %s3, 224
    %v914 = vld [vmem:[%s913] sm:$0xff]
    %v915 = vld [vmem:[%s913 + $0x8] sm:$0xff]
    %v916 = vld [vmem:[%s913 + $0x10] sm:$0xff]
    %v917 = vld [vmem:[%s913 + $0x18] sm:$0xff]
    %s918 = scalar_lea.vmem %s4, 7
    %v919 = vld [vmem:[%s918] sm:$0x1]
    %v921 = vperm.slane %v919, 0
    %923 = vmatpush.msra.mxu0 0.0
    %924 = vmatpush.msra.mxu0 0.0
    %925 = vmatpush.msra.mxu0 0.0
    %926 = vmatpush.msra.mxu0 0.0
    %927 = vmatpush.msra.mxu0 0.0
    %928 = vmatpush.msra.mxu0 0.0
    %929 = vmatpush.msra.mxu0 0.0
    %930 = vmatpush.msra.mxu0 0.0
    %931 = vmatpush.msra.mxu0 0.0
    %932 = vmatpush.msra.mxu0 0.0
    %933 = vmatpush.msra.mxu0 0.0
    %934 = vmatpush.msra.mxu0 0.0
    %935 = vmatpush.msra.mxu0 %v917
    %936 = vmatpush.msra.mxu0 %v916
    %937 = vmatpush.msra.mxu0 %v915
    %938 = vmatpush.msra.mxu0 %v914
    %939 = vmatmul.f32.gmra.mxu0 %v117
    %v940 = vpop.f32.mrf.mxu0
    %v941 = vadd.f32 %v921, %v940
    %942 = vmatmul.f32.gmra.mxu0 %v120
    %v943 = vpop.f32.mrf.mxu0
    %v944 = vadd.f32 %v921, %v943
    %945 = vdwg.mxu0
    %s946 = scalar_lea.vmem %s3, 352
    %v947 = vld [vmem:[%s946] sm:$0xff]
    %v948 = vld [vmem:[%s946 + $0x8] sm:$0xff]
    %v949 = vld [vmem:[%s946 + $0x10] sm:$0xff]
    %v950 = vld [vmem:[%s946 + $0x18] sm:$0xff]
    %s951 = scalar_lea.vmem %s4, 11
    %v952 = vld [vmem:[%s951] sm:$0x1]
    %v954 = vperm.slane %v952, 0
    %956 = vmatpush.msra.mxu0 0.0
    %957 = vmatpush.msra.mxu0 0.0
    %958 = vmatpush.msra.mxu0 0.0
    %959 = vmatpush.msra.mxu0 0.0
    %960 = vmatpush.msra.mxu0 0.0
    %961 = vmatpush.msra.mxu0 0.0
    %962 = vmatpush.msra.mxu0 0.0
    %963 = vmatpush.msra.mxu0 0.0
    %964 = vmatpush.msra.mxu0 0.0
    %965 = vmatpush.msra.mxu0 0.0
    %966 = vmatpush.msra.mxu0 0.0
    %967 = vmatpush.msra.mxu0 0.0
    %968 = vmatpush.msra.mxu0 %v950
    %969 = vmatpush.msra.mxu0 %v949
    %970 = vmatpush.msra.mxu0 %v948
    %971 = vmatpush.msra.mxu0 %v947
    %972 = vmatmul.f32.gmra.mxu0 %v117
    %v973 = vpop.f32.mrf.mxu0
    %v974 = vadd.f32 %v954, %v973
    %975 = vmatmul.f32.gmra.mxu0 %v120
    %v976 = vpop.f32.mrf.mxu0
    %v977 = vadd.f32 %v954, %v976
    %978 = vdwg.mxu0
    %v980 = vsel %vm211, %v908, 0
    %v983 = vsel %vm211, %v941, 0
    %985 = vmatpush.xpose.msra.mxu0 0.0
    %986 = vmatpush.xpose.msra.mxu0 0.0
    %987 = vmatpush.xpose.msra.mxu0 0.0
    %988 = vmatpush.xpose.msra.mxu0 0.0
    %989 = vmatpush.xpose.msra.mxu0 0.0
    %990 = vmatpush.xpose.msra.mxu0 0.0
    %991 = vmatpush.xpose.msra.mxu0 0.0
    %992 = vmatpush.xpose.msra.mxu0 0.0
    %993 = vmatpush.xpose.msra.mxu0 0.0
    %994 = vmatpush.xpose.msra.mxu0 0.0
    %995 = vmatpush.xpose.msra.mxu0 0.0
    %996 = vmatpush.xpose.msra.mxu0 0.0
    %997 = vmatpush.xpose.msra.mxu0 0.0
    %998 = vmatpush.xpose.msra.mxu0 0.0
    %999 = vmatpush.xpose.msra.mxu0 0.0
    %1000 = vmatpush.xpose.msra.mxu0 %v983
    %1001 = vmatmul.f32.gmra.mxu0 %v980
    %v1002 = vpop.f32.mrf.mxu0
    %v1003 = vadd.f32 0.0, %v1002
    %1004 = vdwg.mxu0
    %v1006 = vsel %vm211, %v911, 0
    %v1009 = vsel %vm211, %v944, 0
    %1011 = vmatpush.xpose.msra.mxu0 0.0
    %1012 = vmatpush.xpose.msra.mxu0 0.0
    %1013 = vmatpush.xpose.msra.mxu0 0.0
    %1014 = vmatpush.xpose.msra.mxu0 0.0
    %1015 = vmatpush.xpose.msra.mxu0 0.0
    %1016 = vmatpush.xpose.msra.mxu0 0.0
    %1017 = vmatpush.xpose.msra.mxu0 0.0
    %1018 = vmatpush.xpose.msra.mxu0 0.0
    %1019 = vmatpush.xpose.msra.mxu0 0.0
    %1020 = vmatpush.xpose.msra.mxu0 0.0
    %1021 = vmatpush.xpose.msra.mxu0 0.0
    %1022 = vmatpush.xpose.msra.mxu0 0.0
    %1023 = vmatpush.xpose.msra.mxu0 0.0
    %1024 = vmatpush.xpose.msra.mxu0 0.0
    %1025 = vmatpush.xpose.msra.mxu0 0.0
    %1026 = vmatpush.xpose.msra.mxu0 %v1009
    %1027 = vmatmul.f32.gmra.mxu0 %v1006
    %v1028 = vpop.f32.mrf.mxu0
    %v1029 = vadd.f32 0.0, %v1028
    %1030 = vdwg.mxu0
    %v1031 = vmul.f32 %v1003, 0.35355338
    %v1032 = vmul.f32 %v1029, 0.35355338
    %v1033 = vadd.f32 %v1031, %v266
    %v1034 = vadd.f32 %v1032, %v267
    %v1035 = vsel %vm211, %v1033, -inf
    %1036 = vmax.xlane.f32.xlu0 %v1035
    %v1037 = vpop.xlane.xlu0 %1036
    %v1038 = vsel %vm211, %v1034, -inf
    %1039 = vmax.xlane.f32.xlu0 %v1038
    %v1040 = vpop.xlane.xlu0 %1039
    %v1041 = vsub.f32 %v1033, %v1037
    %v1042 = vsub.f32 %v1034, %v1040
    %v1043 = vmul.f32 %v1041, 1.442695
    %v1044 = vpow.pop %v1043
    %v1045 = vmul.f32 %v1042, 1.442695
    %v1046 = vpow.pop %v1045
    %v1047 = vsel %vm211, %v1044, 0.0
    %1048 = vadd.xlane.f32.xlu0 %v1047
    %v1049 = vpop.xlane.xlu0 %1048
    %v1050 = vsel %vm211, %v1046, 0.0
    %1051 = vadd.xlane.f32.xlu0 %v1050
    %v1052 = vpop.xlane.xlu0 %1051
    %v1053 = vrcp.pop %v1049
    %v1054 = vrcp.pop %v1052
    %v1055 = vmul.f32 %v1044, %v1053
    %v1056 = vmul.f32 %v1046, %v1054
    %v1058 = vsel %vm211, %v1055, 0
    %1060 = vmatpush.msra.mxu0 0.0
    %1061 = vmatpush.msra.mxu0 0.0
    %1062 = vmatpush.msra.mxu0 0.0
    %1063 = vmatpush.msra.mxu0 0.0
    %1064 = vmatpush.msra.mxu0 0.0
    %1065 = vmatpush.msra.mxu0 0.0
    %1066 = vmatpush.msra.mxu0 0.0
    %1067 = vmatpush.msra.mxu0 0.0
    %1068 = vmatpush.msra.mxu0 0.0
    %1069 = vmatpush.msra.mxu0 0.0
    %1070 = vmatpush.msra.mxu0 0.0
    %1071 = vmatpush.msra.mxu0 0.0
    %1072 = vmatpush.msra.mxu0 0.0
    %1073 = vmatpush.msra.mxu0 0.0
    %1074 = vmatpush.msra.mxu0 0.0
    %1075 = vmatpush.msra.mxu0 %v974
    %1076 = vmatmul.f32.gmra.mxu0 %v1058
    %v1077 = vpop.f32.mrf.mxu0
    %v1078 = vadd.f32 0.0, %v1077
    %1079 = vdwg.mxu0
    %v1081 = vsel %vm211, %v1056, 0
    %1083 = vmatpush.msra.mxu0 0.0
    %1084 = vmatpush.msra.mxu0 0.0
    %1085 = vmatpush.msra.mxu0 0.0
    %1086 = vmatpush.msra.mxu0 0.0
    %1087 = vmatpush.msra.mxu0 0.0
    %1088 = vmatpush.msra.mxu0 0.0
    %1089 = vmatpush.msra.mxu0 0.0
    %1090 = vmatpush.msra.mxu0 0.0
    %1091 = vmatpush.msra.mxu0 0.0
    %1092 = vmatpush.msra.mxu0 0.0
    %1093 = vmatpush.msra.mxu0 0.0
    %1094 = vmatpush.msra.mxu0 0.0
    %1095 = vmatpush.msra.mxu0 0.0
    %1096 = vmatpush.msra.mxu0 0.0
    %1097 = vmatpush.msra.mxu0 0.0
    %1098 = vmatpush.msra.mxu0 %v977
    %1099 = vmatmul.f32.gmra.mxu0 %v1081
    %v1100 = vpop.f32.mrf.mxu0
    %v1101 = vadd.f32 0.0, %v1100
    %1102 = vdwg.mxu0
    %s1103 = scalar_lea.vmem %s5, 24
    %v1104 = vld [vmem:[%s1103] sm:$0xff]
    %v1106 = vsel %vm211, %v1078, 0
    %v1109 = vsel %vm211, %v1101, 0
    %1111 = vmatpush.msra.mxu0 0.0
    %1112 = vmatpush.msra.mxu0 0.0
    %1113 = vmatpush.msra.mxu0 0.0
    %1114 = vmatpush.msra.mxu0 0.0
    %1115 = vmatpush.msra.mxu0 0.0
    %1116 = vmatpush.msra.mxu0 0.0
    %1117 = vmatpush.msra.mxu0 0.0
    %1118 = vmatpush.msra.mxu0 0.0
    %1119 = vmatpush.msra.mxu0 0.0
    %1120 = vmatpush.msra.mxu0 0.0
    %1121 = vmatpush.msra.mxu0 0.0
    %1122 = vmatpush.msra.mxu0 0.0
    %1123 = vmatpush.msra.mxu0 0.0
    %1124 = vmatpush.msra.mxu0 0.0
    %1125 = vmatpush.msra.mxu0 0.0
    %1126 = vmatpush.msra.mxu0 %v1104
    %1127 = vmatmul.f32.gmra.mxu0 %v1106
    %v1128 = vpop.f32.mrf.mxu0
    %v1129 = vadd.f32 0.0, %v1128
    %1130 = vmatmul.f32.gmra.mxu0 %v1109
    %v1131 = vpop.f32.mrf.mxu0
    %v1132 = vadd.f32 0.0, %v1131
    %1133 = vdwg.mxu0
    %v1134 = vadd.f32 %v878, %v1129
    %v1135 = vadd.f32 %v879, %v1132
    %v1136 = vld [vmem:[%s6] sm:$0x1]
    %v1138 = vperm.slane %v1136, 0
    %v1140 = vadd.f32 %v1134, %v1138
    %v1141 = vadd.f32 %v1135, %v1138
    %v1142 = vadd.f32 %v1140, %v101
    %v1143 = vadd.f32 %v1141, %v102
    %s1144 = scalar_lea.vmem %s6, 1
    %v1145 = vld [vmem:[%s1144] sm:$0x1]
    %s1146 = scalar_lea.vmem %s6, 2
    %v1147 = vld [vmem:[%s1146] sm:$0x1]
    %v1148 = vsel %vm41, %v1142, 0.0
    %1149 = vadd.xlane.f32.xlu0 %v1148
    %v1150 = vpop.xlane.xlu0 %1149
    %v1151 = vsel %vm41, %v1143, 0.0
    %1152 = vadd.xlane.f32.xlu0 %v1151
    %v1153 = vpop.xlane.xlu0 %1152
    %v1154 = vmul.f32 %v1150, %v54
    %v1155 = vmul.f32 %v1153, %v54
    %v1156 = vsub.f32 %v1142, %v1154
    %v1157 = vsub.f32 %v1143, %v1155
    %v1158 = vmul.f32 %v1156, %v1156
    %v1159 = vmul.f32 %v1157, %v1157
    %v1160 = vsel %vm41, %v1158, 0.0
    %1161 = vadd.xlane.f32.xlu0 %v1160
    %v1162 = vpop.xlane.xlu0 %1161
    %v1163 = vsel %vm41, %v1159, 0.0
    %1164 = vadd.xlane.f32.xlu0 %v1163
    %v1165 = vpop.xlane.xlu0 %1164
    %v1166 = vmul.f32 %v1162, %v54
    %v1167 = vmul.f32 %v1165, %v54
    %v1168 = vadd.f32 %v1166, 1e-05
    %v1169 = vadd.f32 %v1167, 1e-05
    %v1170 = vrsqrt.pop %v1168
    %v1171 = vmul.f32 %v1170, %v1168
    %v1172 = vmul.f32 %v1171, %v1170
    %v1173 = vmul.f32 0.5, %v1172
    %v1174 = vsub.f32 1.5, %v1173
    %v1175 = vmul.f32 %v1170, %v1174
    %vm1176 = vweird.f32 %v1168
    %vm1177 = vweird.f32 %v1170
    %vm1178 = vmor %vm1176, %vm1177
    %v1179 = vsel %vm1178, %v1170, %v1175
    %v1180 = vrsqrt.pop %v1169
    %v1181 = vmul.f32 %v1180, %v1169
    %v1182 = vmul.f32 %v1181, %v1180
    %v1183 = vmul.f32 0.5, %v1182
    %v1184 = vsub.f32 1.5, %v1183
    %v1185 = vmul.f32 %v1180, %v1184
    %vm1186 = vweird.f32 %v1169
    %vm1187 = vweird.f32 %v1180
    %vm1188 = vmor %vm1186, %vm1187
    %v1189 = vsel %vm1188, %v1180, %v1185
    %v1190 = vmul.f32 %v1156, %v1179
    %v1191 = vmul.f32 %v1157, %v1189
    %v1193 = vperm.slane %v1145, 0
    %v1195 = vmul.f32 %v1190, %v1193
    %v1196 = vmul.f32 %v1191, %v1193
    %v1198 = vperm.slane %v1147, 0
    %v1200 = vadd.f32 %v1195, %v1198
    %v1201 = vadd.f32 %v1196, %v1198
    %v1202 = vld [vmem:[%s7] sm:$0xff]
    %v1203 = vld [vmem:[%s7 + $0x8] sm:$0xff]
    %v1204 = vld [vmem:[%s7 + $0x10] sm:$0xff]
    %v1205 = vld [vmem:[%s7 + $0x18] sm:$0xff]
    %v1206 = vld [vmem:[%s8] sm:$0x1]
    %v1208 = vperm.slane %v1206, 0
    %v1211 = vsel %vm41, %v1200, 0
    %v1214 = vsel %vm41, %v1201, 0
    %1216 = vmatpush.msra.mxu0 0.0
    %1217 = vmatpush.msra.mxu0 0.0
    %1218 = vmatpush.msra.mxu0 0.0
    %1219 = vmatpush.msra.mxu0 0.0
    %1220 = vmatpush.msra.mxu0 0.0
    %1221 = vmatpush.msra.mxu0 0.0
    %1222 = vmatpush.msra.mxu0 0.0
    %1223 = vmatpush.msra.mxu0 0.0
    %1224 = vmatpush.msra.mxu0 0.0
    %1225 = vmatpush.msra.mxu0 0.0
    %1226 = vmatpush.msra.mxu0 0.0
    %1227 = vmatpush.msra.mxu0 0.0
    %1228 = vmatpush.msra.mxu0 %v1205
    %1229 = vmatpush.msra.mxu0 %v1204
    %1230 = vmatpush.msra.mxu0 %v1203
    %1231 = vmatpush.msra.mxu0 %v1202
    %1232 = vmatmul.f32.gmra.mxu0 %v1211
    %v1233 = vpop.f32.mrf.mxu0
    %v1234 = vadd.f32 %v1208, %v1233
    %1235 = vmatmul.f32.gmra.mxu0 %v1214
    %v1236 = vpop.f32.mrf.mxu0
    %v1237 = vadd.f32 %v1208, %v1236
    %1238 = vdwg.mxu0
    %v1239 = vmul.f32 %v1234, %v1234
    %v1240 = vmul.f32 %v1237, %v1237
    %v1241 = vmul.f32 %v1234, %v1239
    %v1242 = vmul.f32 %v1237, %v1240
    %v1243 = vmul.f32 %v1241, 0.044715
    %v1244 = vmul.f32 %v1242, 0.044715
    %v1245 = vadd.f32 %v1234, %v1243
    %v1246 = vadd.f32 %v1237, %v1244
    %v1247 = vmul.f32 %v1245, 0.7978846
    %v1248 = vmul.f32 %v1246, 0.7978846
    %v1249 = vtanh.pop %v1247
    %v1250 = vtanh.pop %v1248
    %v1251 = vadd.f32 %v1249, 1.0
    %v1252 = vadd.f32 %v1250, 1.0
    %v1253 = vmul.f32 %v1251, 0.5
    %v1254 = vmul.f32 %v1252, 0.5
    %v1255 = vmul.f32 %v1234, %v1253
    %v1256 = vmul.f32 %v1237, %v1254
    %v1257 = vld [vmem:[%s9] sm:$0xff]
    %v1258 = vld [vmem:[%s9 + $0x8] sm:$0xff]
    %v1259 = vld [vmem:[%s9 + $0x10] sm:$0xff]
    %v1260 = vld [vmem:[%s9 + $0x18] sm:$0xff]
    %v1261 = vld [vmem:[%s9 + $0x20] sm:$0xff]
    %v1262 = vld [vmem:[%s9 + $0x28] sm:$0xff]
    %v1263 = vld [vmem:[%s9 + $0x30] sm:$0xff]
    %v1264 = vld [vmem:[%s9 + $0x38] sm:$0xff]
    %v1265 = vld [vmem:[%s9 + $0x40] sm:$0xff]
    %v1266 = vld [vmem:[%s9 + $0x48] sm:$0xff]
    %v1267 = vld [vmem:[%s9 + $0x50] sm:$0xff]
    %v1268 = vld [vmem:[%s9 + $0x58] sm:$0xff]
    %v1269 = vld [vmem:[%s9 + $0x60] sm:$0xff]
    %v1270 = vld [vmem:[%s9 + $0x68] sm:$0xff]
    %v1271 = vld [vmem:[%s9 + $0x70] sm:$0xff]
    %v1272 = vld [vmem:[%s9 + $0x78] sm:$0xff]
    %s1273 = scalar_lea.vmem %s6, 3
    %v1274 = vld [vmem:[%s1273] sm:$0x1]
    %v1276 = vperm.slane %v1274, 0
    %1278 = vmatpush.msra.mxu0 %v1272
    %1279 = vmatpush.msra.mxu0 %v1271
    %1280 = vmatpush.msra.mxu0 %v1270
    %1281 = vmatpush.msra.mxu0 %v1269
    %1282 = vmatpush.msra.mxu0 %v1268
    %1283 = vmatpush.msra.mxu0 %v1267
    %1284 = vmatpush.msra.mxu0 %v1266
    %1285 = vmatpush.msra.mxu0 %v1265
    %1286 = vmatpush.msra.mxu0 %v1264
    %1287 = vmatpush.msra.mxu0 %v1263
    %1288 = vmatpush.msra.mxu0 %v1262
    %1289 = vmatpush.msra.mxu0 %v1261
    %1290 = vmatpush.msra.mxu0 %v1260
    %1291 = vmatpush.msra.mxu0 %v1259
    %1292 = vmatpush.msra.mxu0 %v1258
    %1293 = vmatpush.msra.mxu0 %v1257
    %1294 = vmatmul.f32.gmra.mxu0 %v1255
    %v1295 = vpop.f32.mrf.mxu0
    %v1296 = vadd.f32 %v1276, %v1295
    %1297 = vmatmul.f32.gmra.mxu0 %v1256
    %v1298 = vpop.f32.mrf.mxu0
    %v1299 = vadd.f32 %v1276, %v1298
    %1300 = vdwg.mxu0
    %v1301 = vadd.f32 %v1296, %v1200
    %v1302 = vadd.f32 %v1299, %v1201
    %s1303 = scalar_lea.vmem %s6, 4
    %v1304 = vld [vmem:[%s1303] sm:$0x1]
    %s1305 = scalar_lea.vmem %s6, 5
    %v1306 = vld [vmem:[%s1305] sm:$0x1]
    %v1307 = vsel %vm41, %v1301, 0.0
    %1308 = vadd.xlane.f32.xlu0 %v1307
    %v1309 = vpop.xlane.xlu0 %1308
    %v1310 = vsel %vm41, %v1302, 0.0
    %1311 = vadd.xlane.f32.xlu0 %v1310
    %v1312 = vpop.xlane.xlu0 %1311
    %v1313 = vmul.f32 %v1309, %v54
    %v1314 = vmul.f32 %v1312, %v54
    %v1315 = vsub.f32 %v1301, %v1313
    %v1316 = vsub.f32 %v1302, %v1314
    %v1317 = vmul.f32 %v1315, %v1315
    %v1318 = vmul.f32 %v1316, %v1316
    %v1319 = vsel %vm41, %v1317, 0.0
    %1320 = vadd.xlane.f32.xlu0 %v1319
    %v1321 = vpop.xlane.xlu0 %1320
    %v1322 = vsel %vm41, %v1318, 0.0
    %1323 = vadd.xlane.f32.xlu0 %v1322
    %v1324 = vpop.xlane.xlu0 %1323
    %v1325 = vmul.f32 %v1321, %v54
    %v1326 = vmul.f32 %v1324, %v54
    %v1327 = vadd.f32 %v1325, 1e-05
    %v1328 = vadd.f32 %v1326, 1e-05
    %v1329 = vrsqrt.pop %v1327
    %v1330 = vmul.f32 %v1329, %v1327
    %v1331 = vmul.f32 %v1330, %v1329
    %v1332 = vmul.f32 0.5, %v1331
    %v1333 = vsub.f32 1.5, %v1332
    %v1334 = vmul.f32 %v1329, %v1333
    %vm1335 = vweird.f32 %v1327
    %vm1336 = vweird.f32 %v1329
    %vm1337 = vmor %vm1335, %vm1336
    %v1338 = vsel %vm1337, %v1329, %v1334
    %v1339 = vrsqrt.pop %v1328
    %v1340 = vmul.f32 %v1339, %v1328
    %v1341 = vmul.f32 %v1340, %v1339
    %v1342 = vmul.f32 0.5, %v1341
    %v1343 = vsub.f32 1.5, %v1342
    %v1344 = vmul.f32 %v1339, %v1343
    %vm1345 = vweird.f32 %v1328
    %vm1346 = vweird.f32 %v1339
    %vm1347 = vmor %vm1345, %vm1346
    %v1348 = vsel %vm1347, %v1339, %v1344
    %v1349 = vmul.f32 %v1315, %v1338
    %v1350 = vmul.f32 %v1316, %v1348
    %v1352 = vperm.slane %v1304, 0
    %v1354 = vmul.f32 %v1349, %v1352
    %v1355 = vmul.f32 %v1350, %v1352
    %v1357 = vperm.slane %v1306, 0
    %v1359 = vadd.f32 %v1354, %v1357
    %v1360 = vadd.f32 %v1355, %v1357
    %v1361 = vadd.f32 %v1359, 0.0
    %v1362 = vadd.f32 %v1360, 0.0
    %s1363 = scalar_lea.vmem %s3, 384
    %v1364 = vld [vmem:[%s1363] sm:$0xff]
    %v1365 = vld [vmem:[%s1363 + $0x8] sm:$0xff]
    %v1366 = vld [vmem:[%s1363 + $0x10] sm:$0xff]
    %v1367 = vld [vmem:[%s1363 + $0x18] sm:$0xff]
    %s1368 = scalar_lea.vmem %s4, 12
    %v1369 = vld [vmem:[%s1368] sm:$0x1]
    %v1371 = vperm.slane %v1369, 0
    %v1374 = vsel %vm41, %v1359, 0
    %v1377 = vsel %vm41, %v1360, 0
    %1379 = vmatpush.msra.mxu0 0.0
    %1380 = vmatpush.msra.mxu0 0.0
    %1381 = vmatpush.msra.mxu0 0.0
    %1382 = vmatpush.msra.mxu0 0.0
    %1383 = vmatpush.msra.mxu0 0.0
    %1384 = vmatpush.msra.mxu0 0.0
    %1385 = vmatpush.msra.mxu0 0.0
    %1386 = vmatpush.msra.mxu0 0.0
    %1387 = vmatpush.msra.mxu0 0.0
    %1388 = vmatpush.msra.mxu0 0.0
    %1389 = vmatpush.msra.mxu0 0.0
    %1390 = vmatpush.msra.mxu0 0.0
    %1391 = vmatpush.msra.mxu0 %v1367
    %1392 = vmatpush.msra.mxu0 %v1366
    %1393 = vmatpush.msra.mxu0 %v1365
    %1394 = vmatpush.msra.mxu0 %v1364
    %1395 = vmatmul.f32.gmra.mxu0 %v1374
    %v1396 = vpop.f32.mrf.mxu0
    %v1397 = vadd.f32 %v1371, %v1396
    %1398 = vmatmul.f32.gmra.mxu0 %v1377
    %v1399 = vpop.f32.mrf.mxu0
    %v1400 = vadd.f32 %v1371, %v1399
    %1401 = vdwg.mxu0
    %s1402 = scalar_lea.vmem %s3, 512
    %v1403 = vld [vmem:[%s1402] sm:$0xff]
    %v1404 = vld [vmem:[%s1402 + $0x8] sm:$0xff]
    %v1405 = vld [vmem:[%s1402 + $0x10] sm:$0xff]
    %v1406 = vld [vmem:[%s1402 + $0x18] sm:$0xff]
    %s1407 = scalar_lea.vmem %s4, 16
    %v1408 = vld [vmem:[%s1407] sm:$0x1]
    %v1410 = vperm.slane %v1408, 0
    %1412 = vmatpush.msra.mxu0 0.0
    %1413 = vmatpush.msra.mxu0 0.0
    %1414 = vmatpush.msra.mxu0 0.0
    %1415 = vmatpush.msra.mxu0 0.0
    %1416 = vmatpush.msra.mxu0 0.0
    %1417 = vmatpush.msra.mxu0 0.0
    %1418 = vmatpush.msra.mxu0 0.0
    %1419 = vmatpush.msra.mxu0 0.0
    %1420 = vmatpush.msra.mxu0 0.0
    %1421 = vmatpush.msra.mxu0 0.0
    %1422 = vmatpush.msra.mxu0 0.0
    %1423 = vmatpush.msra.mxu0 0.0
    %1424 = vmatpush.msra.mxu0 %v1406
    %1425 = vmatpush.msra.mxu0 %v1405
    %1426 = vmatpush.msra.mxu0 %v1404
    %1427 = vmatpush.msra.mxu0 %v1403
    %1428 = vmatmul.f32.gmra.mxu0 %v1374
    %v1429 = vpop.f32.mrf.mxu0
    %v1430 = vadd.f32 %v1410, %v1429
    %1431 = vmatmul.f32.gmra.mxu0 %v1377
    %v1432 = vpop.f32.mrf.mxu0
    %v1433 = vadd.f32 %v1410, %v1432
    %1434 = vdwg.mxu0
    %s1435 = scalar_lea.vmem %s3, 640
    %v1436 = vld [vmem:[%s1435] sm:$0xff]
    %v1437 = vld [vmem:[%s1435 + $0x8] sm:$0xff]
    %v1438 = vld [vmem:[%s1435 + $0x10] sm:$0xff]
    %v1439 = vld [vmem:[%s1435 + $0x18] sm:$0xff]
    %s1440 = scalar_lea.vmem %s4, 20
    %v1441 = vld [vmem:[%s1440] sm:$0x1]
    %v1443 = vperm.slane %v1441, 0
    %1445 = vmatpush.msra.mxu0 0.0
    %1446 = vmatpush.msra.mxu0 0.0
    %1447 = vmatpush.msra.mxu0 0.0
    %1448 = vmatpush.msra.mxu0 0.0
    %1449 = vmatpush.msra.mxu0 0.0
    %1450 = vmatpush.msra.mxu0 0.0
    %1451 = vmatpush.msra.mxu0 0.0
    %1452 = vmatpush.msra.mxu0 0.0
    %1453 = vmatpush.msra.mxu0 0.0
    %1454 = vmatpush.msra.mxu0 0.0
    %1455 = vmatpush.msra.mxu0 0.0
    %1456 = vmatpush.msra.mxu0 0.0
    %1457 = vmatpush.msra.mxu0 %v1439
    %1458 = vmatpush.msra.mxu0 %v1438
    %1459 = vmatpush.msra.mxu0 %v1437
    %1460 = vmatpush.msra.mxu0 %v1436
    %1461 = vmatmul.f32.gmra.mxu0 %v1374
    %v1462 = vpop.f32.mrf.mxu0
    %v1463 = vadd.f32 %v1443, %v1462
    %1464 = vmatmul.f32.gmra.mxu0 %v1377
    %v1465 = vpop.f32.mrf.mxu0
    %v1466 = vadd.f32 %v1443, %v1465
    %1467 = vdwg.mxu0
    %v1469 = vsel %vm211, %v1397, 0
    %v1472 = vsel %vm211, %v1430, 0
    %1474 = vmatpush.xpose.msra.mxu0 0.0
    %1475 = vmatpush.xpose.msra.mxu0 0.0
    %1476 = vmatpush.xpose.msra.mxu0 0.0
    %1477 = vmatpush.xpose.msra.mxu0 0.0
    %1478 = vmatpush.xpose.msra.mxu0 0.0
    %1479 = vmatpush.xpose.msra.mxu0 0.0
    %1480 = vmatpush.xpose.msra.mxu0 0.0
    %1481 = vmatpush.xpose.msra.mxu0 0.0
    %1482 = vmatpush.xpose.msra.mxu0 0.0
    %1483 = vmatpush.xpose.msra.mxu0 0.0
    %1484 = vmatpush.xpose.msra.mxu0 0.0
    %1485 = vmatpush.xpose.msra.mxu0 0.0
    %1486 = vmatpush.xpose.msra.mxu0 0.0
    %1487 = vmatpush.xpose.msra.mxu0 0.0
    %1488 = vmatpush.xpose.msra.mxu0 0.0
    %1489 = vmatpush.xpose.msra.mxu0 %v1472
    %1490 = vmatmul.f32.gmra.mxu0 %v1469
    %v1491 = vpop.f32.mrf.mxu0
    %v1492 = vadd.f32 0.0, %v1491
    %1493 = vdwg.mxu0
    %v1495 = vsel %vm211, %v1400, 0
    %v1498 = vsel %vm211, %v1433, 0
    %1500 = vmatpush.xpose.msra.mxu0 0.0
    %1501 = vmatpush.xpose.msra.mxu0 0.0
    %1502 = vmatpush.xpose.msra.mxu0 0.0
    %1503 = vmatpush.xpose.msra.mxu0 0.0
    %1504 = vmatpush.xpose.msra.mxu0 0.0
    %1505 = vmatpush.xpose.msra.mxu0 0.0
    %1506 = vmatpush.xpose.msra.mxu0 0.0
    %1507 = vmatpush.xpose.msra.mxu0 0.0
    %1508 = vmatpush.xpose.msra.mxu0 0.0
    %1509 = vmatpush.xpose.msra.mxu0 0.0
    %1510 = vmatpush.xpose.msra.mxu0 0.0
    %1511 = vmatpush.xpose.msra.mxu0 0.0
    %1512 = vmatpush.xpose.msra.mxu0 0.0
    %1513 = vmatpush.xpose.msra.mxu0 0.0
    %1514 = vmatpush.xpose.msra.mxu0 0.0
    %1515 = vmatpush.xpose.msra.mxu0 %v1498
    %1516 = vmatmul.f32.gmra.mxu0 %v1495
    %v1517 = vpop.f32.mrf.mxu0
    %v1518 = vadd.f32 0.0, %v1517
    %1519 = vdwg.mxu0
    %v1520 = vmul.f32 %v1492, 0.35355338
    %v1521 = vmul.f32 %v1518, 0.35355338
    %v1522 = vadd.f32 %v1520, %v266
    %v1523 = vadd.f32 %v1521, %v267
    %v1524 = vsel %vm211, %v1522, -inf
    %1525 = vmax.xlane.f32.xlu0 %v1524
    %v1526 = vpop.xlane.xlu0 %1525
    %v1527 = vsel %vm211, %v1523, -inf
    %1528 = vmax.xlane.f32.xlu0 %v1527
    %v1529 = vpop.xlane.xlu0 %1528
    %v1530 = vsub.f32 %v1522, %v1526
    %v1531 = vsub.f32 %v1523, %v1529
    %v1532 = vmul.f32 %v1530, 1.442695
    %v1533 = vpow.pop %v1532
    %v1534 = vmul.f32 %v1531, 1.442695
    %v1535 = vpow.pop %v1534
    %v1536 = vsel %vm211, %v1533, 0.0
    %1537 = vadd.xlane.f32.xlu0 %v1536
    %v1538 = vpop.xlane.xlu0 %1537
    %v1539 = vsel %vm211, %v1535, 0.0
    %1540 = vadd.xlane.f32.xlu0 %v1539
    %v1541 = vpop.xlane.xlu0 %1540
    %v1542 = vrcp.pop %v1538
    %v1543 = vrcp.pop %v1541
    %v1544 = vmul.f32 %v1533, %v1542
    %v1545 = vmul.f32 %v1535, %v1543
    %v1547 = vsel %vm211, %v1544, 0
    %1549 = vmatpush.msra.mxu0 0.0
    %1550 = vmatpush.msra.mxu0 0.0
    %1551 = vmatpush.msra.mxu0 0.0
    %1552 = vmatpush.msra.mxu0 0.0
    %1553 = vmatpush.msra.mxu0 0.0
    %1554 = vmatpush.msra.mxu0 0.0
    %1555 = vmatpush.msra.mxu0 0.0
    %1556 = vmatpush.msra.mxu0 0.0
    %1557 = vmatpush.msra.mxu0 0.0
    %1558 = vmatpush.msra.mxu0 0.0
    %1559 = vmatpush.msra.mxu0 0.0
    %1560 = vmatpush.msra.mxu0 0.0
    %1561 = vmatpush.msra.mxu0 0.0
    %1562 = vmatpush.msra.mxu0 0.0
    %1563 = vmatpush.msra.mxu0 0.0
    %1564 = vmatpush.msra.mxu0 %v1463
    %1565 = vmatmul.f32.gmra.mxu0 %v1547
    %v1566 = vpop.f32.mrf.mxu0
    %v1567 = vadd.f32 0.0, %v1566
    %1568 = vdwg.mxu0
    %v1570 = vsel %vm211, %v1545, 0
    %1572 = vmatpush.msra.mxu0 0.0
    %1573 = vmatpush.msra.mxu0 0.0
    %1574 = vmatpush.msra.mxu0 0.0
    %1575 = vmatpush.msra.mxu0 0.0
    %1576 = vmatpush.msra.mxu0 0.0
    %1577 = vmatpush.msra.mxu0 0.0
    %1578 = vmatpush.msra.mxu0 0.0
    %1579 = vmatpush.msra.mxu0 0.0
    %1580 = vmatpush.msra.mxu0 0.0
    %1581 = vmatpush.msra.mxu0 0.0
    %1582 = vmatpush.msra.mxu0 0.0
    %1583 = vmatpush.msra.mxu0 0.0
    %1584 = vmatpush.msra.mxu0 0.0
    %1585 = vmatpush.msra.mxu0 0.0
    %1586 = vmatpush.msra.mxu0 0.0
    %1587 = vmatpush.msra.mxu0 %v1466
    %1588 = vmatmul.f32.gmra.mxu0 %v1570
    %v1589 = vpop.f32.mrf.mxu0
    %v1590 = vadd.f32 0.0, %v1589
    %1591 = vdwg.mxu0
    %s1592 = scalar_lea.vmem %s5, 32
    %v1593 = vld [vmem:[%s1592] sm:$0xff]
    %s1594 = scalar_lea.vmem %s3, 416
    %v1595 = vld [vmem:[%s1594] sm:$0xff]
    %v1596 = vld [vmem:[%s1594 + $0x8] sm:$0xff]
    %v1597 = vld [vmem:[%s1594 + $0x10] sm:$0xff]
    %v1598 = vld [vmem:[%s1594 + $0x18] sm:$0xff]
    %s1599 = scalar_lea.vmem %s4, 13
    %v1600 = vld [vmem:[%s1599] sm:$0x1]
    %v1602 = vperm.slane %v1600, 0
    %1604 = vmatpush.msra.mxu0 0.0
    %1605 = vmatpush.msra.mxu0 0.0
    %1606 = vmatpush.msra.mxu0 0.0
    %1607 = vmatpush.msra.mxu0 0.0
    %1608 = vmatpush.msra.mxu0 0.0
    %1609 = vmatpush.msra.mxu0 0.0
    %1610 = vmatpush.msra.mxu0 0.0
    %1611 = vmatpush.msra.mxu0 0.0
    %1612 = vmatpush.msra.mxu0 0.0
    %1613 = vmatpush.msra.mxu0 0.0
    %1614 = vmatpush.msra.mxu0 0.0
    %1615 = vmatpush.msra.mxu0 0.0
    %1616 = vmatpush.msra.mxu0 %v1598
    %1617 = vmatpush.msra.mxu0 %v1597
    %1618 = vmatpush.msra.mxu0 %v1596
    %1619 = vmatpush.msra.mxu0 %v1595
    %1620 = vmatmul.f32.gmra.mxu0 %v1374
    %v1621 = vpop.f32.mrf.mxu0
    %v1622 = vadd.f32 %v1602, %v1621
    %1623 = vmatmul.f32.gmra.mxu0 %v1377
    %v1624 = vpop.f32.mrf.mxu0
    %v1625 = vadd.f32 %v1602, %v1624
    %1626 = vdwg.mxu0
    %s1627 = scalar_lea.vmem %s3, 544
    %v1628 = vld [vmem:[%s1627] sm:$0xff]
    %v1629 = vld [vmem:[%s1627 + $0x8] sm:$0xff]
    %v1630 = vld [vmem:[%s1627 + $0x10] sm:$0xff]
    %v1631 = vld [vmem:[%s1627 + $0x18] sm:$0xff]
    %s1632 = scalar_lea.vmem %s4, 17
    %v1633 = vld [vmem:[%s1632] sm:$0x1]
    %v1635 = vperm.slane %v1633, 0
    %1637 = vmatpush.msra.mxu0 0.0
    %1638 = vmatpush.msra.mxu0 0.0
    %1639 = vmatpush.msra.mxu0 0.0
    %1640 = vmatpush.msra.mxu0 0.0
    %1641 = vmatpush.msra.mxu0 0.0
    %1642 = vmatpush.msra.mxu0 0.0
    %1643 = vmatpush.msra.mxu0 0.0
    %1644 = vmatpush.msra.mxu0 0.0
    %1645 = vmatpush.msra.mxu0 0.0
    %1646 = vmatpush.msra.mxu0 0.0
    %1647 = vmatpush.msra.mxu0 0.0
    %1648 = vmatpush.msra.mxu0 0.0
    %1649 = vmatpush.msra.mxu0 %v1631
    %1650 = vmatpush.msra.mxu0 %v1630
    %1651 = vmatpush.msra.mxu0 %v1629
    %1652 = vmatpush.msra.mxu0 %v1628
    %1653 = vmatmul.f32.gmra.mxu0 %v1374
    %v1654 = vpop.f32.mrf.mxu0
    %v1655 = vadd.f32 %v1635, %v1654
    %1656 = vmatmul.f32.gmra.mxu0 %v1377
    %v1657 = vpop.f32.mrf.mxu0
    %v1658 = vadd.f32 %v1635, %v1657
    %1659 = vdwg.mxu0
    %s1660 = scalar_lea.vmem %s3, 672
    %v1661 = vld [vmem:[%s1660] sm:$0xff]
    %v1662 = vld [vmem:[%s1660 + $0x8] sm:$0xff]
    %v1663 = vld [vmem:[%s1660 + $0x10] sm:$0xff]
    %v1664 = vld [vmem:[%s1660 + $0x18] sm:$0xff]
    %s1665 = scalar_lea.vmem %s4, 21
    %v1666 = vld [vmem:[%s1665] sm:$0x1]
    %v1668 = vperm.slane %v1666, 0
    %1670 = vmatpush.msra.mxu0 0.0
    %1671 = vmatpush.msra.mxu0 0.0
    %1672 = vmatpush.msra.mxu0 0.0
    %1673 = vmatpush.msra.mxu0 0.0
    %1674 = vmatpush.msra.mxu0 0.0
    %1675 = vmatpush.msra.mxu0 0.0
    %1676 = vmatpush.msra.mxu0 0.0
    %1677 = vmatpush.msra.mxu0 0.0
    %1678 = vmatpush.msra.mxu0 0.0
    %1679 = vmatpush.msra.mxu0 0.0
    %1680 = vmatpush.msra.mxu0 0.0
    %1681 = vmatpush.msra.mxu0 0.0
    %1682 = vmatpush.msra.mxu0 %v1664
    %1683 = vmatpush.msra.mxu0 %v1663
    %1684 = vmatpush.msra.mxu0 %v1662
    %1685 = vmatpush.msra.mxu0 %v1661
    %1686 = vmatmul.f32.gmra.mxu0 %v1374
    %v1687 = vpop.f32.mrf.mxu0
    %v1688 = vadd.f32 %v1668, %v1687
    %1689 = vmatmul.f32.gmra.mxu0 %v1377
    %v1690 = vpop.f32.mrf.mxu0
    %v1691 = vadd.f32 %v1668, %v1690
    %1692 = vdwg.mxu0
    %v1694 = vsel %vm211, %v1622, 0
    %v1697 = vsel %vm211, %v1655, 0
    %1699 = vmatpush.xpose.msra.mxu0 0.0
    %1700 = vmatpush.xpose.msra.mxu0 0.0
    %1701 = vmatpush.xpose.msra.mxu0 0.0
    %1702 = vmatpush.xpose.msra.mxu0 0.0
    %1703 = vmatpush.xpose.msra.mxu0 0.0
    %1704 = vmatpush.xpose.msra.mxu0 0.0
    %1705 = vmatpush.xpose.msra.mxu0 0.0
    %1706 = vmatpush.xpose.msra.mxu0 0.0
    %1707 = vmatpush.xpose.msra.mxu0 0.0
    %1708 = vmatpush.xpose.msra.mxu0 0.0
    %1709 = vmatpush.xpose.msra.mxu0 0.0
    %1710 = vmatpush.xpose.msra.mxu0 0.0
    %1711 = vmatpush.xpose.msra.mxu0 0.0
    %1712 = vmatpush.xpose.msra.mxu0 0.0
    %1713 = vmatpush.xpose.msra.mxu0 0.0
    %1714 = vmatpush.xpose.msra.mxu0 %v1697
    %1715 = vmatmul.f32.gmra.mxu0 %v1694
    %v1716 = vpop.f32.mrf.mxu0
    %v1717 = vadd.f32 0.0, %v1716
    %1718 = vdwg.mxu0
    %v1720 = vsel %vm211, %v1625, 0
    %v1723 = vsel %vm211, %v1658, 0
    %1725 = vmatpush.xpose.msra.mxu0 0.0
    %1726 = vmatpush.xpose.msra.mxu0 0.0
    %1727 = vmatpush.xpose.msra.mxu0 0.0
    %1728 = vmatpush.xpose.msra.mxu0 0.0
    %1729 = vmatpush.xpose.msra.mxu0 0.0
    %1730 = vmatpush.xpose.msra.mxu0 0.0
    %1731 = vmatpush.xpose.msra.mxu0 0.0
    %1732 = vmatpush.xpose.msra.mxu0 0.0
    %1733 = vmatpush.xpose.msra.mxu0 0.0
    %1734 = vmatpush.xpose.msra.mxu0 0.0
    %1735 = vmatpush.xpose.msra.mxu0 0.0
    %1736 = vmatpush.xpose.msra.mxu0 0.0
    %1737 = vmatpush.xpose.msra.mxu0 0.0
    %1738 = vmatpush.xpose.msra.mxu0 0.0
    %1739 = vmatpush.xpose.msra.mxu0 0.0
    %1740 = vmatpush.xpose.msra.mxu0 %v1723
    %1741 = vmatmul.f32.gmra.mxu0 %v1720
    %v1742 = vpop.f32.mrf.mxu0
    %v1743 = vadd.f32 0.0, %v1742
    %1744 = vdwg.mxu0
    %v1745 = vmul.f32 %v1717, 0.35355338
    %v1746 = vmul.f32 %v1743, 0.35355338
    %v1747 = vadd.f32 %v1745, %v266
    %v1748 = vadd.f32 %v1746, %v267
    %v1749 = vsel %vm211, %v1747, -inf
    %1750 = vmax.xlane.f32.xlu0 %v1749
    %v1751 = vpop.xlane.xlu0 %1750
    %v1752 = vsel %vm211, %v1748, -inf
    %1753 = vmax.xlane.f32.xlu0 %v1752
    %v1754 = vpop.xlane.xlu0 %1753
    %v1755 = vsub.f32 %v1747, %v1751
    %v1756 = vsub.f32 %v1748, %v1754
    %v1757 = vmul.f32 %v1755, 1.442695
    %v1758 = vpow.pop %v1757
    %v1759 = vmul.f32 %v1756, 1.442695
    %v1760 = vpow.pop %v1759
    %v1761 = vsel %vm211, %v1758, 0.0
    %1762 = vadd.xlane.f32.xlu0 %v1761
    %v1763 = vpop.xlane.xlu0 %1762
    %v1764 = vsel %vm211, %v1760, 0.0
    %1765 = vadd.xlane.f32.xlu0 %v1764
    %v1766 = vpop.xlane.xlu0 %1765
    %v1767 = vrcp.pop %v1763
    %v1768 = vrcp.pop %v1766
    %v1769 = vmul.f32 %v1758, %v1767
    %v1770 = vmul.f32 %v1760, %v1768
    %v1772 = vsel %vm211, %v1769, 0
    %1774 = vmatpush.msra.mxu0 0.0
    %1775 = vmatpush.msra.mxu0 0.0
    %1776 = vmatpush.msra.mxu0 0.0
    %1777 = vmatpush.msra.mxu0 0.0
    %1778 = vmatpush.msra.mxu0 0.0
    %1779 = vmatpush.msra.mxu0 0.0
    %1780 = vmatpush.msra.mxu0 0.0
    %1781 = vmatpush.msra.mxu0 0.0
    %1782 = vmatpush.msra.mxu0 0.0
    %1783 = vmatpush.msra.mxu0 0.0
    %1784 = vmatpush.msra.mxu0 0.0
    %1785 = vmatpush.msra.mxu0 0.0
    %1786 = vmatpush.msra.mxu0 0.0
    %1787 = vmatpush.msra.mxu0 0.0
    %1788 = vmatpush.msra.mxu0 0.0
    %1789 = vmatpush.msra.mxu0 %v1688
    %1790 = vmatmul.f32.gmra.mxu0 %v1772
    %v1791 = vpop.f32.mrf.mxu0
    %v1792 = vadd.f32 0.0, %v1791
    %1793 = vdwg.mxu0
    %v1795 = vsel %vm211, %v1770, 0
    %1797 = vmatpush.msra.mxu0 0.0
    %1798 = vmatpush.msra.mxu0 0.0
    %1799 = vmatpush.msra.mxu0 0.0
    %1800 = vmatpush.msra.mxu0 0.0
    %1801 = vmatpush.msra.mxu0 0.0
    %1802 = vmatpush.msra.mxu0 0.0
    %1803 = vmatpush.msra.mxu0 0.0
    %1804 = vmatpush.msra.mxu0 0.0
    %1805 = vmatpush.msra.mxu0 0.0
    %1806 = vmatpush.msra.mxu0 0.0
    %1807 = vmatpush.msra.mxu0 0.0
    %1808 = vmatpush.msra.mxu0 0.0
    %1809 = vmatpush.msra.mxu0 0.0
    %1810 = vmatpush.msra.mxu0 0.0
    %1811 = vmatpush.msra.mxu0 0.0
    %1812 = vmatpush.msra.mxu0 %v1691
    %1813 = vmatmul.f32.gmra.mxu0 %v1795
    %v1814 = vpop.f32.mrf.mxu0
    %v1815 = vadd.f32 0.0, %v1814
    %1816 = vdwg.mxu0
    %s1817 = scalar_lea.vmem %s5, 40
    %v1818 = vld [vmem:[%s1817] sm:$0xff]
    %v1820 = vsel %vm211, %v1792, 0
    %v1823 = vsel %vm211, %v1815, 0
    %1825 = vmatpush.msra.mxu0 0.0
    %1826 = vmatpush.msra.mxu0 0.0
    %1827 = vmatpush.msra.mxu0 0.0
    %1828 = vmatpush.msra.mxu0 0.0
    %1829 = vmatpush.msra.mxu0 0.0
    %1830 = vmatpush.msra.mxu0 0.0
    %1831 = vmatpush.msra.mxu0 0.0
    %1832 = vmatpush.msra.mxu0 0.0
    %1833 = vmatpush.msra.mxu0 0.0
    %1834 = vmatpush.msra.mxu0 0.0
    %1835 = vmatpush.msra.mxu0 0.0
    %1836 = vmatpush.msra.mxu0 0.0
    %1837 = vmatpush.msra.mxu0 0.0
    %1838 = vmatpush.msra.mxu0 0.0
    %1839 = vmatpush.msra.mxu0 0.0
    %1840 = vmatpush.msra.mxu0 %v1818
    %1841 = vmatmul.f32.gmra.mxu0 %v1820
    %v1842 = vpop.f32.mrf.mxu0
    %v1843 = vadd.f32 0.0, %v1842
    %1844 = vmatmul.f32.gmra.mxu0 %v1823
    %v1845 = vpop.f32.mrf.mxu0
    %v1846 = vadd.f32 0.0, %v1845
    %1847 = vdwg.mxu0
    %v1849 = vsel %vm211, %v1567, 0
    %v1852 = vsel %vm211, %v1590, 0
    %1854 = vmatpush.msra.mxu0 0.0
    %1855 = vmatpush.msra.mxu0 0.0
    %1856 = vmatpush.msra.mxu0 0.0
    %1857 = vmatpush.msra.mxu0 0.0
    %1858 = vmatpush.msra.mxu0 0.0
    %1859 = vmatpush.msra.mxu0 0.0
    %1860 = vmatpush.msra.mxu0 0.0
    %1861 = vmatpush.msra.mxu0 0.0
    %1862 = vmatpush.msra.mxu0 0.0
    %1863 = vmatpush.msra.mxu0 0.0
    %1864 = vmatpush.msra.mxu0 0.0
    %1865 = vmatpush.msra.mxu0 0.0
    %1866 = vmatpush.msra.mxu0 0.0
    %1867 = vmatpush.msra.mxu0 0.0
    %1868 = vmatpush.msra.mxu0 0.0
    %1869 = vmatpush.msra.mxu0 %v1593
    %1870 = vmatmul.f32.gmra.mxu0 %v1849
    %v1871 = vpop.f32.mrf.mxu0
    %v1872 = vadd.f32 %v1843, %v1871
    %1873 = vmatmul.f32.gmra.mxu0 %v1852
    %v1874 = vpop.f32.mrf.mxu0
    %v1875 = vadd.f32 %v1846, %v1874
    %1876 = vdwg.mxu0
    %s1877 = scalar_lea.vmem %s3, 448
    %v1878 = vld [vmem:[%s1877] sm:$0xff]
    %v1879 = vld [vmem:[%s1877 + $0x8] sm:$0xff]
    %v1880 = vld [vmem:[%s1877 + $0x10] sm:$0xff]
    %v1881 = vld [vmem:[%s1877 + $0x18] sm:$0xff]
    %s1882 = scalar_lea.vmem %s4, 14
    %v1883 = vld [vmem:[%s1882] sm:$0x1]
    %v1885 = vperm.slane %v1883, 0
    %1887 = vmatpush.msra.mxu0 0.0
    %1888 = vmatpush.msra.mxu0 0.0
    %1889 = vmatpush.msra.mxu0 0.0
    %1890 = vmatpush.msra.mxu0 0.0
    %1891 = vmatpush.msra.mxu0 0.0
    %1892 = vmatpush.msra.mxu0 0.0
    %1893 = vmatpush.msra.mxu0 0.0
    %1894 = vmatpush.msra.mxu0 0.0
    %1895 = vmatpush.msra.mxu0 0.0
    %1896 = vmatpush.msra.mxu0 0.0
    %1897 = vmatpush.msra.mxu0 0.0
    %1898 = vmatpush.msra.mxu0 0.0
    %1899 = vmatpush.msra.mxu0 %v1881
    %1900 = vmatpush.msra.mxu0 %v1880
    %1901 = vmatpush.msra.mxu0 %v1879
    %1902 = vmatpush.msra.mxu0 %v1878
    %1903 = vmatmul.f32.gmra.mxu0 %v1374
    %v1904 = vpop.f32.mrf.mxu0
    %v1905 = vadd.f32 %v1885, %v1904
    %1906 = vmatmul.f32.gmra.mxu0 %v1377
    %v1907 = vpop.f32.mrf.mxu0
    %v1908 = vadd.f32 %v1885, %v1907
    %1909 = vdwg.mxu0
    %s1910 = scalar_lea.vmem %s3, 576
    %v1911 = vld [vmem:[%s1910] sm:$0xff]
    %v1912 = vld [vmem:[%s1910 + $0x8] sm:$0xff]
    %v1913 = vld [vmem:[%s1910 + $0x10] sm:$0xff]
    %v1914 = vld [vmem:[%s1910 + $0x18] sm:$0xff]
    %s1915 = scalar_lea.vmem %s4, 18
    %v1916 = vld [vmem:[%s1915] sm:$0x1]
    %v1918 = vperm.slane %v1916, 0
    %1920 = vmatpush.msra.mxu0 0.0
    %1921 = vmatpush.msra.mxu0 0.0
    %1922 = vmatpush.msra.mxu0 0.0
    %1923 = vmatpush.msra.mxu0 0.0
    %1924 = vmatpush.msra.mxu0 0.0
    %1925 = vmatpush.msra.mxu0 0.0
    %1926 = vmatpush.msra.mxu0 0.0
    %1927 = vmatpush.msra.mxu0 0.0
    %1928 = vmatpush.msra.mxu0 0.0
    %1929 = vmatpush.msra.mxu0 0.0
    %1930 = vmatpush.msra.mxu0 0.0
    %1931 = vmatpush.msra.mxu0 0.0
    %1932 = vmatpush.msra.mxu0 %v1914
    %1933 = vmatpush.msra.mxu0 %v1913
    %1934 = vmatpush.msra.mxu0 %v1912
    %1935 = vmatpush.msra.mxu0 %v1911
    %1936 = vmatmul.f32.gmra.mxu0 %v1374
    %v1937 = vpop.f32.mrf.mxu0
    %v1938 = vadd.f32 %v1918, %v1937
    %1939 = vmatmul.f32.gmra.mxu0 %v1377
    %v1940 = vpop.f32.mrf.mxu0
    %v1941 = vadd.f32 %v1918, %v1940
    %1942 = vdwg.mxu0
    %s1943 = scalar_lea.vmem %s3, 704
    %v1944 = vld [vmem:[%s1943] sm:$0xff]
    %v1945 = vld [vmem:[%s1943 + $0x8] sm:$0xff]
    %v1946 = vld [vmem:[%s1943 + $0x10] sm:$0xff]
    %v1947 = vld [vmem:[%s1943 + $0x18] sm:$0xff]
    %s1948 = scalar_lea.vmem %s4, 22
    %v1949 = vld [vmem:[%s1948] sm:$0x1]
    %v1951 = vperm.slane %v1949, 0
    %1953 = vmatpush.msra.mxu0 0.0
    %1954 = vmatpush.msra.mxu0 0.0
    %1955 = vmatpush.msra.mxu0 0.0
    %1956 = vmatpush.msra.mxu0 0.0
    %1957 = vmatpush.msra.mxu0 0.0
    %1958 = vmatpush.msra.mxu0 0.0
    %1959 = vmatpush.msra.mxu0 0.0
    %1960 = vmatpush.msra.mxu0 0.0
    %1961 = vmatpush.msra.mxu0 0.0
    %1962 = vmatpush.msra.mxu0 0.0
    %1963 = vmatpush.msra.mxu0 0.0
    %1964 = vmatpush.msra.mxu0 0.0
    %1965 = vmatpush.msra.mxu0 %v1947
    %1966 = vmatpush.msra.mxu0 %v1946
    %1967 = vmatpush.msra.mxu0 %v1945
    %1968 = vmatpush.msra.mxu0 %v1944
    %1969 = vmatmul.f32.gmra.mxu0 %v1374
    %v1970 = vpop.f32.mrf.mxu0
    %v1971 = vadd.f32 %v1951, %v1970
    %1972 = vmatmul.f32.gmra.mxu0 %v1377
    %v1973 = vpop.f32.mrf.mxu0
    %v1974 = vadd.f32 %v1951, %v1973
    %1975 = vdwg.mxu0
    %v1977 = vsel %vm211, %v1905, 0
    %v1980 = vsel %vm211, %v1938, 0
    %1982 = vmatpush.xpose.msra.mxu0 0.0
    %1983 = vmatpush.xpose.msra.mxu0 0.0
    %1984 = vmatpush.xpose.msra.mxu0 0.0
    %1985 = vmatpush.xpose.msra.mxu0 0.0
    %1986 = vmatpush.xpose.msra.mxu0 0.0
    %1987 = vmatpush.xpose.msra.mxu0 0.0
    %1988 = vmatpush.xpose.msra.mxu0 0.0
    %1989 = vmatpush.xpose.msra.mxu0 0.0
    %1990 = vmatpush.xpose.msra.mxu0 0.0
    %1991 = vmatpush.xpose.msra.mxu0 0.0
    %1992 = vmatpush.xpose.msra.mxu0 0.0
    %1993 = vmatpush.xpose.msra.mxu0 0.0
    %1994 = vmatpush.xpose.msra.mxu0 0.0
    %1995 = vmatpush.xpose.msra.mxu0 0.0
    %1996 = vmatpush.xpose.msra.mxu0 0.0
    %1997 = vmatpush.xpose.msra.mxu0 %v1980
    %1998 = vmatmul.f32.gmra.mxu0 %v1977
    %v1999 = vpop.f32.mrf.mxu0
    %v2000 = vadd.f32 0.0, %v1999
    %2001 = vdwg.mxu0
    %v2003 = vsel %vm211, %v1908, 0
    %v2006 = vsel %vm211, %v1941, 0
    %2008 = vmatpush.xpose.msra.mxu0 0.0
    %2009 = vmatpush.xpose.msra.mxu0 0.0
    %2010 = vmatpush.xpose.msra.mxu0 0.0
    %2011 = vmatpush.xpose.msra.mxu0 0.0
    %2012 = vmatpush.xpose.msra.mxu0 0.0
    %2013 = vmatpush.xpose.msra.mxu0 0.0
    %2014 = vmatpush.xpose.msra.mxu0 0.0
    %2015 = vmatpush.xpose.msra.mxu0 0.0
    %2016 = vmatpush.xpose.msra.mxu0 0.0
    %2017 = vmatpush.xpose.msra.mxu0 0.0
    %2018 = vmatpush.xpose.msra.mxu0 0.0
    %2019 = vmatpush.xpose.msra.mxu0 0.0
    %2020 = vmatpush.xpose.msra.mxu0 0.0
    %2021 = vmatpush.xpose.msra.mxu0 0.0
    %2022 = vmatpush.xpose.msra.mxu0 0.0
    %2023 = vmatpush.xpose.msra.mxu0 %v2006
    %2024 = vmatmul.f32.gmra.mxu0 %v2003
    %v2025 = vpop.f32.mrf.mxu0
    %v2026 = vadd.f32 0.0, %v2025
    %2027 = vdwg.mxu0
    %v2028 = vmul.f32 %v2000, 0.35355338
    %v2029 = vmul.f32 %v2026, 0.35355338
    %v2030 = vadd.f32 %v2028, %v266
    %v2031 = vadd.f32 %v2029, %v267
    %v2032 = vsel %vm211, %v2030, -inf
    %2033 = vmax.xlane.f32.xlu0 %v2032
    %v2034 = vpop.xlane.xlu0 %2033
    %v2035 = vsel %vm211, %v2031, -inf
    %2036 = vmax.xlane.f32.xlu0 %v2035
    %v2037 = vpop.xlane.xlu0 %2036
    %v2038 = vsub.f32 %v2030, %v2034
    %v2039 = vsub.f32 %v2031, %v2037
    %v2040 = vmul.f32 %v2038, 1.442695
    %v2041 = vpow.pop %v2040
    %v2042 = vmul.f32 %v2039, 1.442695
    %v2043 = vpow.pop %v2042
    %v2044 = vsel %vm211, %v2041, 0.0
    %2045 = vadd.xlane.f32.xlu0 %v2044
    %v2046 = vpop.xlane.xlu0 %2045
    %v2047 = vsel %vm211, %v2043, 0.0
    %2048 = vadd.xlane.f32.xlu0 %v2047
    %v2049 = vpop.xlane.xlu0 %2048
    %v2050 = vrcp.pop %v2046
    %v2051 = vrcp.pop %v2049
    %v2052 = vmul.f32 %v2041, %v2050
    %v2053 = vmul.f32 %v2043, %v2051
    %v2055 = vsel %vm211, %v2052, 0
    %2057 = vmatpush.msra.mxu0 0.0
    %2058 = vmatpush.msra.mxu0 0.0
    %2059 = vmatpush.msra.mxu0 0.0
    %2060 = vmatpush.msra.mxu0 0.0
    %2061 = vmatpush.msra.mxu0 0.0
    %2062 = vmatpush.msra.mxu0 0.0
    %2063 = vmatpush.msra.mxu0 0.0
    %2064 = vmatpush.msra.mxu0 0.0
    %2065 = vmatpush.msra.mxu0 0.0
    %2066 = vmatpush.msra.mxu0 0.0
    %2067 = vmatpush.msra.mxu0 0.0
    %2068 = vmatpush.msra.mxu0 0.0
    %2069 = vmatpush.msra.mxu0 0.0
    %2070 = vmatpush.msra.mxu0 0.0
    %2071 = vmatpush.msra.mxu0 0.0
    %2072 = vmatpush.msra.mxu0 %v1971
    %2073 = vmatmul.f32.gmra.mxu0 %v2055
    %v2074 = vpop.f32.mrf.mxu0
    %v2075 = vadd.f32 0.0, %v2074
    %2076 = vdwg.mxu0
    %v2078 = vsel %vm211, %v2053, 0
    %2080 = vmatpush.msra.mxu0 0.0
    %2081 = vmatpush.msra.mxu0 0.0
    %2082 = vmatpush.msra.mxu0 0.0
    %2083 = vmatpush.msra.mxu0 0.0
    %2084 = vmatpush.msra.mxu0 0.0
    %2085 = vmatpush.msra.mxu0 0.0
    %2086 = vmatpush.msra.mxu0 0.0
    %2087 = vmatpush.msra.mxu0 0.0
    %2088 = vmatpush.msra.mxu0 0.0
    %2089 = vmatpush.msra.mxu0 0.0
    %2090 = vmatpush.msra.mxu0 0.0
    %2091 = vmatpush.msra.mxu0 0.0
    %2092 = vmatpush.msra.mxu0 0.0
    %2093 = vmatpush.msra.mxu0 0.0
    %2094 = vmatpush.msra.mxu0 0.0
    %2095 = vmatpush.msra.mxu0 %v1974
    %2096 = vmatmul.f32.gmra.mxu0 %v2078
    %v2097 = vpop.f32.mrf.mxu0
    %v2098 = vadd.f32 0.0, %v2097
    %2099 = vdwg.mxu0
    %s2100 = scalar_lea.vmem %s5, 48
    %v2101 = vld [vmem:[%s2100] sm:$0xff]
    %v2103 = vsel %vm211, %v2075, 0
    %v2106 = vsel %vm211, %v2098, 0
    %2108 = vmatpush.msra.mxu0 0.0
    %2109 = vmatpush.msra.mxu0 0.0
    %2110 = vmatpush.msra.mxu0 0.0
    %2111 = vmatpush.msra.mxu0 0.0
    %2112 = vmatpush.msra.mxu0 0.0
    %2113 = vmatpush.msra.mxu0 0.0
    %2114 = vmatpush.msra.mxu0 0.0
    %2115 = vmatpush.msra.mxu0 0.0
    %2116 = vmatpush.msra.mxu0 0.0
    %2117 = vmatpush.msra.mxu0 0.0
    %2118 = vmatpush.msra.mxu0 0.0
    %2119 = vmatpush.msra.mxu0 0.0
    %2120 = vmatpush.msra.mxu0 0.0
    %2121 = vmatpush.msra.mxu0 0.0
    %2122 = vmatpush.msra.mxu0 0.0
    %2123 = vmatpush.msra.mxu0 %v2101
    %2124 = vmatmul.f32.gmra.mxu0 %v2103
    %v2125 = vpop.f32.mrf.mxu0
    %v2126 = vadd.f32 0.0, %v2125
    %2127 = vmatmul.f32.gmra.mxu0 %v2106
    %v2128 = vpop.f32.mrf.mxu0
    %v2129 = vadd.f32 0.0, %v2128
    %2130 = vdwg.mxu0
    %v2131 = vadd.f32 %v1872, %v2126
    %v2132 = vadd.f32 %v1875, %v2129
    %s2133 = scalar_lea.vmem %s3, 480
    %v2134 = vld [vmem:[%s2133] sm:$0xff]
    %v2135 = vld [vmem:[%s2133 + $0x8] sm:$0xff]
    %v2136 = vld [vmem:[%s2133 + $0x10] sm:$0xff]
    %v2137 = vld [vmem:[%s2133 + $0x18] sm:$0xff]
    %s2138 = scalar_lea.vmem %s4, 15
    %v2139 = vld [vmem:[%s2138] sm:$0x1]
    %v2141 = vperm.slane %v2139, 0
    %2143 = vmatpush.msra.mxu0 0.0
    %2144 = vmatpush.msra.mxu0 0.0
    %2145 = vmatpush.msra.mxu0 0.0
    %2146 = vmatpush.msra.mxu0 0.0
    %2147 = vmatpush.msra.mxu0 0.0
    %2148 = vmatpush.msra.mxu0 0.0
    %2149 = vmatpush.msra.mxu0 0.0
    %2150 = vmatpush.msra.mxu0 0.0
    %2151 = vmatpush.msra.mxu0 0.0
    %2152 = vmatpush.msra.mxu0 0.0
    %2153 = vmatpush.msra.mxu0 0.0
    %2154 = vmatpush.msra.mxu0 0.0
    %2155 = vmatpush.msra.mxu0 %v2137
    %2156 = vmatpush.msra.mxu0 %v2136
    %2157 = vmatpush.msra.mxu0 %v2135
    %2158 = vmatpush.msra.mxu0 %v2134
    %2159 = vmatmul.f32.gmra.mxu0 %v1374
    %v2160 = vpop.f32.mrf.mxu0
    %v2161 = vadd.f32 %v2141, %v2160
    %2162 = vmatmul.f32.gmra.mxu0 %v1377
    %v2163 = vpop.f32.mrf.mxu0
    %v2164 = vadd.f32 %v2141, %v2163
    %2165 = vdwg.mxu0
    %s2166 = scalar_lea.vmem %s3, 608
    %v2167 = vld [vmem:[%s2166] sm:$0xff]
    %v2168 = vld [vmem:[%s2166 + $0x8] sm:$0xff]
    %v2169 = vld [vmem:[%s2166 + $0x10] sm:$0xff]
    %v2170 = vld [vmem:[%s2166 + $0x18] sm:$0xff]
    %s2171 = scalar_lea.vmem %s4, 19
    %v2172 = vld [vmem:[%s2171] sm:$0x1]
    %v2174 = vperm.slane %v2172, 0
    %2176 = vmatpush.msra.mxu0 0.0
    %2177 = vmatpush.msra.mxu0 0.0
    %2178 = vmatpush.msra.mxu0 0.0
    %2179 = vmatpush.msra.mxu0 0.0
    %2180 = vmatpush.msra.mxu0 0.0
    %2181 = vmatpush.msra.mxu0 0.0
    %2182 = vmatpush.msra.mxu0 0.0
    %2183 = vmatpush.msra.mxu0 0.0
    %2184 = vmatpush.msra.mxu0 0.0
    %2185 = vmatpush.msra.mxu0 0.0
    %2186 = vmatpush.msra.mxu0 0.0
    %2187 = vmatpush.msra.mxu0 0.0
    %2188 = vmatpush.msra.mxu0 %v2170
    %2189 = vmatpush.msra.mxu0 %v2169
    %2190 = vmatpush.msra.mxu0 %v2168
    %2191 = vmatpush.msra.mxu0 %v2167
    %2192 = vmatmul.f32.gmra.mxu0 %v1374
    %v2193 = vpop.f32.mrf.mxu0
    %v2194 = vadd.f32 %v2174, %v2193
    %2195 = vmatmul.f32.gmra.mxu0 %v1377
    %v2196 = vpop.f32.mrf.mxu0
    %v2197 = vadd.f32 %v2174, %v2196
    %2198 = vdwg.mxu0
    %s2199 = scalar_lea.vmem %s3, 736
    %v2200 = vld [vmem:[%s2199] sm:$0xff]
    %v2201 = vld [vmem:[%s2199 + $0x8] sm:$0xff]
    %v2202 = vld [vmem:[%s2199 + $0x10] sm:$0xff]
    %v2203 = vld [vmem:[%s2199 + $0x18] sm:$0xff]
    %s2204 = scalar_lea.vmem %s4, 23
    %v2205 = vld [vmem:[%s2204] sm:$0x1]
    %v2207 = vperm.slane %v2205, 0
    %2209 = vmatpush.msra.mxu0 0.0
    %2210 = vmatpush.msra.mxu0 0.0
    %2211 = vmatpush.msra.mxu0 0.0
    %2212 = vmatpush.msra.mxu0 0.0
    %2213 = vmatpush.msra.mxu0 0.0
    %2214 = vmatpush.msra.mxu0 0.0
    %2215 = vmatpush.msra.mxu0 0.0
    %2216 = vmatpush.msra.mxu0 0.0
    %2217 = vmatpush.msra.mxu0 0.0
    %2218 = vmatpush.msra.mxu0 0.0
    %2219 = vmatpush.msra.mxu0 0.0
    %2220 = vmatpush.msra.mxu0 0.0
    %2221 = vmatpush.msra.mxu0 %v2203
    %2222 = vmatpush.msra.mxu0 %v2202
    %2223 = vmatpush.msra.mxu0 %v2201
    %2224 = vmatpush.msra.mxu0 %v2200
    %2225 = vmatmul.f32.gmra.mxu0 %v1374
    %v2226 = vpop.f32.mrf.mxu0
    %v2227 = vadd.f32 %v2207, %v2226
    %2228 = vmatmul.f32.gmra.mxu0 %v1377
    %v2229 = vpop.f32.mrf.mxu0
    %v2230 = vadd.f32 %v2207, %v2229
    %2231 = vdwg.mxu0
    %v2233 = vsel %vm211, %v2161, 0
    %v2236 = vsel %vm211, %v2194, 0
    %2238 = vmatpush.xpose.msra.mxu0 0.0
    %2239 = vmatpush.xpose.msra.mxu0 0.0
    %2240 = vmatpush.xpose.msra.mxu0 0.0
    %2241 = vmatpush.xpose.msra.mxu0 0.0
    %2242 = vmatpush.xpose.msra.mxu0 0.0
    %2243 = vmatpush.xpose.msra.mxu0 0.0
    %2244 = vmatpush.xpose.msra.mxu0 0.0
    %2245 = vmatpush.xpose.msra.mxu0 0.0
    %2246 = vmatpush.xpose.msra.mxu0 0.0
    %2247 = vmatpush.xpose.msra.mxu0 0.0
    %2248 = vmatpush.xpose.msra.mxu0 0.0
    %2249 = vmatpush.xpose.msra.mxu0 0.0
    %2250 = vmatpush.xpose.msra.mxu0 0.0
    %2251 = vmatpush.xpose.msra.mxu0 0.0
    %2252 = vmatpush.xpose.msra.mxu0 0.0
    %2253 = vmatpush.xpose.msra.mxu0 %v2236
    %2254 = vmatmul.f32.gmra.mxu0 %v2233
    %v2255 = vpop.f32.mrf.mxu0
    %v2256 = vadd.f32 0.0, %v2255
    %2257 = vdwg.mxu0
    %v2259 = vsel %vm211, %v2164, 0
    %v2262 = vsel %vm211, %v2197, 0
    %2264 = vmatpush.xpose.msra.mxu0 0.0
    %2265 = vmatpush.xpose.msra.mxu0 0.0
    %2266 = vmatpush.xpose.msra.mxu0 0.0
    %2267 = vmatpush.xpose.msra.mxu0 0.0
    %2268 = vmatpush.xpose.msra.mxu0 0.0
    %2269 = vmatpush.xpose.msra.mxu0 0.0
    %2270 = vmatpush.xpose.msra.mxu0 0.0
    %2271 = vmatpush.xpose.msra.mxu0 0.0
    %2272 = vmatpush.xpose.msra.mxu0 0.0
    %2273 = vmatpush.xpose.msra.mxu0 0.0
    %2274 = vmatpush.xpose.msra.mxu0 0.0
    %2275 = vmatpush.xpose.msra.mxu0 0.0
    %2276 = vmatpush.xpose.msra.mxu0 0.0
    %2277 = vmatpush.xpose.msra.mxu0 0.0
    %2278 = vmatpush.xpose.msra.mxu0 0.0
    %2279 = vmatpush.xpose.msra.mxu0 %v2262
    %2280 = vmatmul.f32.gmra.mxu0 %v2259
    %v2281 = vpop.f32.mrf.mxu0
    %v2282 = vadd.f32 0.0, %v2281
    %2283 = vdwg.mxu0
    %v2284 = vmul.f32 %v2256, 0.35355338
    %v2285 = vmul.f32 %v2282, 0.35355338
    %v2286 = vadd.f32 %v2284, %v266
    %v2287 = vadd.f32 %v2285, %v267
    %v2288 = vsel %vm211, %v2286, -inf
    %2289 = vmax.xlane.f32.xlu0 %v2288
    %v2290 = vpop.xlane.xlu0 %2289
    %v2291 = vsel %vm211, %v2287, -inf
    %2292 = vmax.xlane.f32.xlu0 %v2291
    %v2293 = vpop.xlane.xlu0 %2292
    %v2294 = vsub.f32 %v2286, %v2290
    %v2295 = vsub.f32 %v2287, %v2293
    %v2296 = vmul.f32 %v2294, 1.442695
    %v2297 = vpow.pop %v2296
    %v2298 = vmul.f32 %v2295, 1.442695
    %v2299 = vpow.pop %v2298
    %v2300 = vsel %vm211, %v2297, 0.0
    %2301 = vadd.xlane.f32.xlu0 %v2300
    %v2302 = vpop.xlane.xlu0 %2301
    %v2303 = vsel %vm211, %v2299, 0.0
    %2304 = vadd.xlane.f32.xlu0 %v2303
    %v2305 = vpop.xlane.xlu0 %2304
    %v2306 = vrcp.pop %v2302
    %v2307 = vrcp.pop %v2305
    %v2308 = vmul.f32 %v2297, %v2306
    %v2309 = vmul.f32 %v2299, %v2307
    %v2311 = vsel %vm211, %v2308, 0
    %2313 = vmatpush.msra.mxu0 0.0
    %2314 = vmatpush.msra.mxu0 0.0
    %2315 = vmatpush.msra.mxu0 0.0
    %2316 = vmatpush.msra.mxu0 0.0
    %2317 = vmatpush.msra.mxu0 0.0
    %2318 = vmatpush.msra.mxu0 0.0
    %2319 = vmatpush.msra.mxu0 0.0
    %2320 = vmatpush.msra.mxu0 0.0
    %2321 = vmatpush.msra.mxu0 0.0
    %2322 = vmatpush.msra.mxu0 0.0
    %2323 = vmatpush.msra.mxu0 0.0
    %2324 = vmatpush.msra.mxu0 0.0
    %2325 = vmatpush.msra.mxu0 0.0
    %2326 = vmatpush.msra.mxu0 0.0
    %2327 = vmatpush.msra.mxu0 0.0
    %2328 = vmatpush.msra.mxu0 %v2227
    %2329 = vmatmul.f32.gmra.mxu0 %v2311
    %v2330 = vpop.f32.mrf.mxu0
    %v2331 = vadd.f32 0.0, %v2330
    %2332 = vdwg.mxu0
    %v2334 = vsel %vm211, %v2309, 0
    %2336 = vmatpush.msra.mxu0 0.0
    %2337 = vmatpush.msra.mxu0 0.0
    %2338 = vmatpush.msra.mxu0 0.0
    %2339 = vmatpush.msra.mxu0 0.0
    %2340 = vmatpush.msra.mxu0 0.0
    %2341 = vmatpush.msra.mxu0 0.0
    %2342 = vmatpush.msra.mxu0 0.0
    %2343 = vmatpush.msra.mxu0 0.0
    %2344 = vmatpush.msra.mxu0 0.0
    %2345 = vmatpush.msra.mxu0 0.0
    %2346 = vmatpush.msra.mxu0 0.0
    %2347 = vmatpush.msra.mxu0 0.0
    %2348 = vmatpush.msra.mxu0 0.0
    %2349 = vmatpush.msra.mxu0 0.0
    %2350 = vmatpush.msra.mxu0 0.0
    %2351 = vmatpush.msra.mxu0 %v2230
    %2352 = vmatmul.f32.gmra.mxu0 %v2334
    %v2353 = vpop.f32.mrf.mxu0
    %v2354 = vadd.f32 0.0, %v2353
    %2355 = vdwg.mxu0
    %s2356 = scalar_lea.vmem %s5, 56
    %v2357 = vld [vmem:[%s2356] sm:$0xff]
    %v2359 = vsel %vm211, %v2331, 0
    %v2362 = vsel %vm211, %v2354, 0
    %2364 = vmatpush.msra.mxu0 0.0
    %2365 = vmatpush.msra.mxu0 0.0
    %2366 = vmatpush.msra.mxu0 0.0
    %2367 = vmatpush.msra.mxu0 0.0
    %2368 = vmatpush.msra.mxu0 0.0
    %2369 = vmatpush.msra.mxu0 0.0
    %2370 = vmatpush.msra.mxu0 0.0
    %2371 = vmatpush.msra.mxu0 0.0
    %2372 = vmatpush.msra.mxu0 0.0
    %2373 = vmatpush.msra.mxu0 0.0
    %2374 = vmatpush.msra.mxu0 0.0
    %2375 = vmatpush.msra.mxu0 0.0
    %2376 = vmatpush.msra.mxu0 0.0
    %2377 = vmatpush.msra.mxu0 0.0
    %2378 = vmatpush.msra.mxu0 0.0
    %2379 = vmatpush.msra.mxu0 %v2357
    %2380 = vmatmul.f32.gmra.mxu0 %v2359
    %v2381 = vpop.f32.mrf.mxu0
    %v2382 = vadd.f32 0.0, %v2381
    %2383 = vmatmul.f32.gmra.mxu0 %v2362
    %v2384 = vpop.f32.mrf.mxu0
    %v2385 = vadd.f32 0.0, %v2384
    %2386 = vdwg.mxu0
    %v2387 = vadd.f32 %v2131, %v2382
    %v2388 = vadd.f32 %v2132, %v2385
    %s2389 = scalar_lea.vmem %s6, 6
    %v2390 = vld [vmem:[%s2389] sm:$0x1]
    %v2392 = vperm.slane %v2390, 0
    %v2394 = vadd.f32 %v2387, %v2392
    %v2395 = vadd.f32 %v2388, %v2392
    %v2396 = vadd.f32 %v2394, %v1359
    %v2397 = vadd.f32 %v2395, %v1360
    %s2398 = scalar_lea.vmem %s6, 7
    %v2399 = vld [vmem:[%s2398] sm:$0x1]
    %s2400 = scalar_lea.vmem %s6, 8
    %v2401 = vld [vmem:[%s2400] sm:$0x1]
    %v2402 = vsel %vm41, %v2396, 0.0
    %2403 = vadd.xlane.f32.xlu0 %v2402
    %v2404 = vpop.xlane.xlu0 %2403
    %v2405 = vsel %vm41, %v2397, 0.0
    %2406 = vadd.xlane.f32.xlu0 %v2405
    %v2407 = vpop.xlane.xlu0 %2406
    %v2408 = vmul.f32 %v2404, %v54
    %v2409 = vmul.f32 %v2407, %v54
    %v2410 = vsub.f32 %v2396, %v2408
    %v2411 = vsub.f32 %v2397, %v2409
    %v2412 = vmul.f32 %v2410, %v2410
    %v2413 = vmul.f32 %v2411, %v2411
    %v2414 = vsel %vm41, %v2412, 0.0
    %2415 = vadd.xlane.f32.xlu0 %v2414
    %v2416 = vpop.xlane.xlu0 %2415
    %v2417 = vsel %vm41, %v2413, 0.0
    %2418 = vadd.xlane.f32.xlu0 %v2417
    %v2419 = vpop.xlane.xlu0 %2418
    %v2420 = vmul.f32 %v2416, %v54
    %v2421 = vmul.f32 %v2419, %v54
    %v2422 = vadd.f32 %v2420, 1e-05
    %v2423 = vadd.f32 %v2421, 1e-05
    %v2424 = vrsqrt.pop %v2422
    %v2425 = vmul.f32 %v2424, %v2422
    %v2426 = vmul.f32 %v2425, %v2424
    %v2427 = vmul.f32 0.5, %v2426
    %v2428 = vsub.f32 1.5, %v2427
    %v2429 = vmul.f32 %v2424, %v2428
    %vm2430 = vweird.f32 %v2422
    %vm2431 = vweird.f32 %v2424
    %vm2432 = vmor %vm2430, %vm2431
    %v2433 = vsel %vm2432, %v2424, %v2429
    %v2434 = vrsqrt.pop %v2423
    %v2435 = vmul.f32 %v2434, %v2423
    %v2436 = vmul.f32 %v2435, %v2434
    %v2437 = vmul.f32 0.5, %v2436
    %v2438 = vsub.f32 1.5, %v2437
    %v2439 = vmul.f32 %v2434, %v2438
    %vm2440 = vweird.f32 %v2423
    %vm2441 = vweird.f32 %v2434
    %vm2442 = vmor %vm2440, %vm2441
    %v2443 = vsel %vm2442, %v2434, %v2439
    %v2444 = vmul.f32 %v2410, %v2433
    %v2445 = vmul.f32 %v2411, %v2443
    %v2447 = vperm.slane %v2399, 0
    %v2449 = vmul.f32 %v2444, %v2447
    %v2450 = vmul.f32 %v2445, %v2447
    %v2452 = vperm.slane %v2401, 0
    %v2454 = vadd.f32 %v2449, %v2452
    %v2455 = vadd.f32 %v2450, %v2452
    %s2456 = scalar_lea.vmem %s7, 32
    %v2457 = vld [vmem:[%s2456] sm:$0xff]
    %v2458 = vld [vmem:[%s2456 + $0x8] sm:$0xff]
    %v2459 = vld [vmem:[%s2456 + $0x10] sm:$0xff]
    %v2460 = vld [vmem:[%s2456 + $0x18] sm:$0xff]
    %s2461 = scalar_lea.vmem %s8, 1
    %v2462 = vld [vmem:[%s2461] sm:$0x1]
    %v2464 = vperm.slane %v2462, 0
    %v2467 = vsel %vm41, %v2454, 0
    %v2470 = vsel %vm41, %v2455, 0
    %2472 = vmatpush.msra.mxu0 0.0
    %2473 = vmatpush.msra.mxu0 0.0
    %2474 = vmatpush.msra.mxu0 0.0
    %2475 = vmatpush.msra.mxu0 0.0
    %2476 = vmatpush.msra.mxu0 0.0
    %2477 = vmatpush.msra.mxu0 0.0
    %2478 = vmatpush.msra.mxu0 0.0
    %2479 = vmatpush.msra.mxu0 0.0
    %2480 = vmatpush.msra.mxu0 0.0
    %2481 = vmatpush.msra.mxu0 0.0
    %2482 = vmatpush.msra.mxu0 0.0
    %2483 = vmatpush.msra.mxu0 0.0
    %2484 = vmatpush.msra.mxu0 %v2460
    %2485 = vmatpush.msra.mxu0 %v2459
    %2486 = vmatpush.msra.mxu0 %v2458
    %2487 = vmatpush.msra.mxu0 %v2457
    %2488 = vmatmul.f32.gmra.mxu0 %v2467
    %v2489 = vpop.f32.mrf.mxu0
    %v2490 = vadd.f32 %v2464, %v2489
    %2491 = vmatmul.f32.gmra.mxu0 %v2470
    %v2492 = vpop.f32.mrf.mxu0
    %v2493 = vadd.f32 %v2464, %v2492
    %2494 = vdwg.mxu0
    %v2495 = vmul.f32 %v2490, %v2490
    %v2496 = vmul.f32 %v2493, %v2493
    %v2497 = vmul.f32 %v2490, %v2495
    %v2498 = vmul.f32 %v2493, %v2496
    %v2499 = vmul.f32 %v2497, 0.044715
    %v2500 = vmul.f32 %v2498, 0.044715
    %v2501 = vadd.f32 %v2490, %v2499
    %v2502 = vadd.f32 %v2493, %v2500
    %v2503 = vmul.f32 %v2501, 0.7978846
    %v2504 = vmul.f32 %v2502, 0.7978846
    %v2505 = vtanh.pop %v2503
    %v2506 = vtanh.pop %v2504
    %v2507 = vadd.f32 %v2505, 1.0
    %v2508 = vadd.f32 %v2506, 1.0
    %v2509 = vmul.f32 %v2507, 0.5
    %v2510 = vmul.f32 %v2508, 0.5
    %v2511 = vmul.f32 %v2490, %v2509
    %v2512 = vmul.f32 %v2493, %v2510
    %s2513 = scalar_lea.vmem %s9, 128
    %v2514 = vld [vmem:[%s2513] sm:$0xff]
    %v2515 = vld [vmem:[%s2513 + $0x8] sm:$0xff]
    %v2516 = vld [vmem:[%s2513 + $0x10] sm:$0xff]
    %v2517 = vld [vmem:[%s2513 + $0x18] sm:$0xff]
    %v2518 = vld [vmem:[%s2513 + $0x20] sm:$0xff]
    %v2519 = vld [vmem:[%s2513 + $0x28] sm:$0xff]
    %v2520 = vld [vmem:[%s2513 + $0x30] sm:$0xff]
    %v2521 = vld [vmem:[%s2513 + $0x38] sm:$0xff]
    %v2522 = vld [vmem:[%s2513 + $0x40] sm:$0xff]
    %v2523 = vld [vmem:[%s2513 + $0x48] sm:$0xff]
    %v2524 = vld [vmem:[%s2513 + $0x50] sm:$0xff]
    %v2525 = vld [vmem:[%s2513 + $0x58] sm:$0xff]
    %v2526 = vld [vmem:[%s2513 + $0x60] sm:$0xff]
    %v2527 = vld [vmem:[%s2513 + $0x68] sm:$0xff]
    %v2528 = vld [vmem:[%s2513 + $0x70] sm:$0xff]
    %v2529 = vld [vmem:[%s2513 + $0x78] sm:$0xff]
    %s2530 = scalar_lea.vmem %s6, 9
    %v2531 = vld [vmem:[%s2530] sm:$0x1]
    %v2533 = vperm.slane %v2531, 0
    %2535 = vmatpush.msra.mxu0 %v2529
    %2536 = vmatpush.msra.mxu0 %v2528
    %2537 = vmatpush.msra.mxu0 %v2527
    %2538 = vmatpush.msra.mxu0 %v2526
    %2539 = vmatpush.msra.mxu0 %v2525
    %2540 = vmatpush.msra.mxu0 %v2524
    %2541 = vmatpush.msra.mxu0 %v2523
    %2542 = vmatpush.msra.mxu0 %v2522
    %2543 = vmatpush.msra.mxu0 %v2521
    %2544 = vmatpush.msra.mxu0 %v2520
    %2545 = vmatpush.msra.mxu0 %v2519
    %2546 = vmatpush.msra.mxu0 %v2518
    %2547 = vmatpush.msra.mxu0 %v2517
    %2548 = vmatpush.msra.mxu0 %v2516
    %2549 = vmatpush.msra.mxu0 %v2515
    %2550 = vmatpush.msra.mxu0 %v2514
    %2551 = vmatmul.f32.gmra.mxu0 %v2511
    %v2552 = vpop.f32.mrf.mxu0
    %v2553 = vadd.f32 %v2533, %v2552
    %2554 = vmatmul.f32.gmra.mxu0 %v2512
    %v2555 = vpop.f32.mrf.mxu0
    %v2556 = vadd.f32 %v2533, %v2555
    %2557 = vdwg.mxu0
    %v2558 = vadd.f32 %v2553, %v2454
    %v2559 = vadd.f32 %v2556, %v2455
    %s2560 = scalar_lea.vmem %s6, 10
    %v2561 = vld [vmem:[%s2560] sm:$0x1]
    %s2562 = scalar_lea.vmem %s6, 11
    %v2563 = vld [vmem:[%s2562] sm:$0x1]
    %v2564 = vsel %vm41, %v2558, 0.0
    %2565 = vadd.xlane.f32.xlu0 %v2564
    %v2566 = vpop.xlane.xlu0 %2565
    %v2567 = vsel %vm41, %v2559, 0.0
    %2568 = vadd.xlane.f32.xlu0 %v2567
    %v2569 = vpop.xlane.xlu0 %2568
    %v2570 = vmul.f32 %v2566, %v54
    %v2571 = vmul.f32 %v2569, %v54
    %v2572 = vsub.f32 %v2558, %v2570
    %v2573 = vsub.f32 %v2559, %v2571
    %v2574 = vmul.f32 %v2572, %v2572
    %v2575 = vmul.f32 %v2573, %v2573
    %v2576 = vsel %vm41, %v2574, 0.0
    %2577 = vadd.xlane.f32.xlu0 %v2576
    %v2578 = vpop.xlane.xlu0 %2577
    %v2579 = vsel %vm41, %v2575, 0.0
    %2580 = vadd.xlane.f32.xlu0 %v2579
    %v2581 = vpop.xlane.xlu0 %2580
    %v2582 = vmul.f32 %v2578, %v54
    %v2583 = vmul.f32 %v2581, %v54
    %v2584 = vadd.f32 %v2582, 1e-05
    %v2585 = vadd.f32 %v2583, 1e-05
    %v2586 = vrsqrt.pop %v2584
    %v2587 = vmul.f32 %v2586, %v2584
    %v2588 = vmul.f32 %v2587, %v2586
    %v2589 = vmul.f32 0.5, %v2588
    %v2590 = vsub.f32 1.5, %v2589
    %v2591 = vmul.f32 %v2586, %v2590
    %vm2592 = vweird.f32 %v2584
    %vm2593 = vweird.f32 %v2586
    %vm2594 = vmor %vm2592, %vm2593
    %v2595 = vsel %vm2594, %v2586, %v2591
    %v2596 = vrsqrt.pop %v2585
    %v2597 = vmul.f32 %v2596, %v2585
    %v2598 = vmul.f32 %v2597, %v2596
    %v2599 = vmul.f32 0.5, %v2598
    %v2600 = vsub.f32 1.5, %v2599
    %v2601 = vmul.f32 %v2596, %v2600
    %vm2602 = vweird.f32 %v2585
    %vm2603 = vweird.f32 %v2596
    %vm2604 = vmor %vm2602, %vm2603
    %v2605 = vsel %vm2604, %v2596, %v2601
    %v2606 = vmul.f32 %v2572, %v2595
    %v2607 = vmul.f32 %v2573, %v2605
    %v2609 = vperm.slane %v2561, 0
    %v2611 = vmul.f32 %v2606, %v2609
    %v2612 = vmul.f32 %v2607, %v2609
    %v2614 = vperm.slane %v2563, 0
    %v2616 = vadd.f32 %v2611, %v2614
    %v2617 = vadd.f32 %v2612, %v2614
    %v2618 = vadd.f32 %v1361, %v2616
    %v2619 = vadd.f32 %v1362, %v2617
    %s2620 = scalar_lea.vmem %s3, 768
    %v2621 = vld [vmem:[%s2620] sm:$0xff]
    %v2622 = vld [vmem:[%s2620 + $0x8] sm:$0xff]
    %v2623 = vld [vmem:[%s2620 + $0x10] sm:$0xff]
    %v2624 = vld [vmem:[%s2620 + $0x18] sm:$0xff]
    %s2625 = scalar_lea.vmem %s4, 24
    %v2626 = vld [vmem:[%s2625] sm:$0x1]
    %v2628 = vperm.slane %v2626, 0
    %v2631 = vsel %vm41, %v2616, 0
    %v2634 = vsel %vm41, %v2617, 0
    %2636 = vmatpush.msra.mxu0 0.0
    %2637 = vmatpush.msra.mxu0 0.0
    %2638 = vmatpush.msra.mxu0 0.0
    %2639 = vmatpush.msra.mxu0 0.0
    %2640 = vmatpush.msra.mxu0 0.0
    %2641 = vmatpush.msra.mxu0 0.0
    %2642 = vmatpush.msra.mxu0 0.0
    %2643 = vmatpush.msra.mxu0 0.0
    %2644 = vmatpush.msra.mxu0 0.0
    %2645 = vmatpush.msra.mxu0 0.0
    %2646 = vmatpush.msra.mxu0 0.0
    %2647 = vmatpush.msra.mxu0 0.0
    %2648 = vmatpush.msra.mxu0 %v2624
    %2649 = vmatpush.msra.mxu0 %v2623
    %2650 = vmatpush.msra.mxu0 %v2622
    %2651 = vmatpush.msra.mxu0 %v2621
    %2652 = vmatmul.f32.gmra.mxu0 %v2631
    %v2653 = vpop.f32.mrf.mxu0
    %v2654 = vadd.f32 %v2628, %v2653
    %2655 = vmatmul.f32.gmra.mxu0 %v2634
    %v2656 = vpop.f32.mrf.mxu0
    %v2657 = vadd.f32 %v2628, %v2656
    %2658 = vdwg.mxu0
    %s2659 = scalar_lea.vmem %s3, 896
    %v2660 = vld [vmem:[%s2659] sm:$0xff]
    %v2661 = vld [vmem:[%s2659 + $0x8] sm:$0xff]
    %v2662 = vld [vmem:[%s2659 + $0x10] sm:$0xff]
    %v2663 = vld [vmem:[%s2659 + $0x18] sm:$0xff]
    %s2664 = scalar_lea.vmem %s4, 28
    %v2665 = vld [vmem:[%s2664] sm:$0x1]
    %v2667 = vperm.slane %v2665, 0
    %2669 = vmatpush.msra.mxu0 0.0
    %2670 = vmatpush.msra.mxu0 0.0
    %2671 = vmatpush.msra.mxu0 0.0
    %2672 = vmatpush.msra.mxu0 0.0
    %2673 = vmatpush.msra.mxu0 0.0
    %2674 = vmatpush.msra.mxu0 0.0
    %2675 = vmatpush.msra.mxu0 0.0
    %2676 = vmatpush.msra.mxu0 0.0
    %2677 = vmatpush.msra.mxu0 0.0
    %2678 = vmatpush.msra.mxu0 0.0
    %2679 = vmatpush.msra.mxu0 0.0
    %2680 = vmatpush.msra.mxu0 0.0
    %2681 = vmatpush.msra.mxu0 %v2663
    %2682 = vmatpush.msra.mxu0 %v2662
    %2683 = vmatpush.msra.mxu0 %v2661
    %2684 = vmatpush.msra.mxu0 %v2660
    %2685 = vmatmul.f32.gmra.mxu0 %v2631
    %v2686 = vpop.f32.mrf.mxu0
    %v2687 = vadd.f32 %v2667, %v2686
    %2688 = vmatmul.f32.gmra.mxu0 %v2634
    %v2689 = vpop.f32.mrf.mxu0
    %v2690 = vadd.f32 %v2667, %v2689
    %2691 = vdwg.mxu0
    %s2692 = scalar_lea.vmem %s3, 1024
    %v2693 = vld [vmem:[%s2692] sm:$0xff]
    %v2694 = vld [vmem:[%s2692 + $0x8] sm:$0xff]
    %v2695 = vld [vmem:[%s2692 + $0x10] sm:$0xff]
    %v2696 = vld [vmem:[%s2692 + $0x18] sm:$0xff]
    %s2697 = scalar_lea.vmem %s4, 32
    %v2698 = vld [vmem:[%s2697] sm:$0x1]
    %v2700 = vperm.slane %v2698, 0
    %2702 = vmatpush.msra.mxu0 0.0
    %2703 = vmatpush.msra.mxu0 0.0
    %2704 = vmatpush.msra.mxu0 0.0
    %2705 = vmatpush.msra.mxu0 0.0
    %2706 = vmatpush.msra.mxu0 0.0
    %2707 = vmatpush.msra.mxu0 0.0
    %2708 = vmatpush.msra.mxu0 0.0
    %2709 = vmatpush.msra.mxu0 0.0
    %2710 = vmatpush.msra.mxu0 0.0
    %2711 = vmatpush.msra.mxu0 0.0
    %2712 = vmatpush.msra.mxu0 0.0
    %2713 = vmatpush.msra.mxu0 0.0
    %2714 = vmatpush.msra.mxu0 %v2696
    %2715 = vmatpush.msra.mxu0 %v2695
    %2716 = vmatpush.msra.mxu0 %v2694
    %2717 = vmatpush.msra.mxu0 %v2693
    %2718 = vmatmul.f32.gmra.mxu0 %v2631
    %v2719 = vpop.f32.mrf.mxu0
    %v2720 = vadd.f32 %v2700, %v2719
    %2721 = vmatmul.f32.gmra.mxu0 %v2634
    %v2722 = vpop.f32.mrf.mxu0
    %v2723 = vadd.f32 %v2700, %v2722
    %2724 = vdwg.mxu0
    %v2726 = vsel %vm211, %v2654, 0
    %v2729 = vsel %vm211, %v2687, 0
    %2731 = vmatpush.xpose.msra.mxu0 0.0
    %2732 = vmatpush.xpose.msra.mxu0 0.0
    %2733 = vmatpush.xpose.msra.mxu0 0.0
    %2734 = vmatpush.xpose.msra.mxu0 0.0
    %2735 = vmatpush.xpose.msra.mxu0 0.0
    %2736 = vmatpush.xpose.msra.mxu0 0.0
    %2737 = vmatpush.xpose.msra.mxu0 0.0
    %2738 = vmatpush.xpose.msra.mxu0 0.0
    %2739 = vmatpush.xpose.msra.mxu0 0.0
    %2740 = vmatpush.xpose.msra.mxu0 0.0
    %2741 = vmatpush.xpose.msra.mxu0 0.0
    %2742 = vmatpush.xpose.msra.mxu0 0.0
    %2743 = vmatpush.xpose.msra.mxu0 0.0
    %2744 = vmatpush.xpose.msra.mxu0 0.0
    %2745 = vmatpush.xpose.msra.mxu0 0.0
    %2746 = vmatpush.xpose.msra.mxu0 %v2729
    %2747 = vmatmul.f32.gmra.mxu0 %v2726
    %v2748 = vpop.f32.mrf.mxu0
    %v2749 = vadd.f32 0.0, %v2748
    %2750 = vdwg.mxu0
    %v2752 = vsel %vm211, %v2657, 0
    %v2755 = vsel %vm211, %v2690, 0
    %2757 = vmatpush.xpose.msra.mxu0 0.0
    %2758 = vmatpush.xpose.msra.mxu0 0.0
    %2759 = vmatpush.xpose.msra.mxu0 0.0
    %2760 = vmatpush.xpose.msra.mxu0 0.0
    %2761 = vmatpush.xpose.msra.mxu0 0.0
    %2762 = vmatpush.xpose.msra.mxu0 0.0
    %2763 = vmatpush.xpose.msra.mxu0 0.0
    %2764 = vmatpush.xpose.msra.mxu0 0.0
    %2765 = vmatpush.xpose.msra.mxu0 0.0
    %2766 = vmatpush.xpose.msra.mxu0 0.0
    %2767 = vmatpush.xpose.msra.mxu0 0.0
    %2768 = vmatpush.xpose.msra.mxu0 0.0
    %2769 = vmatpush.xpose.msra.mxu0 0.0
    %2770 = vmatpush.xpose.msra.mxu0 0.0
    %2771 = vmatpush.xpose.msra.mxu0 0.0
    %2772 = vmatpush.xpose.msra.mxu0 %v2755
    %2773 = vmatmul.f32.gmra.mxu0 %v2752
    %v2774 = vpop.f32.mrf.mxu0
    %v2775 = vadd.f32 0.0, %v2774
    %2776 = vdwg.mxu0
    %v2777 = vmul.f32 %v2749, 0.35355338
    %v2778 = vmul.f32 %v2775, 0.35355338
    %v2779 = vadd.f32 %v2777, %v266
    %v2780 = vadd.f32 %v2778, %v267
    %v2781 = vsel %vm211, %v2779, -inf
    %2782 = vmax.xlane.f32.xlu0 %v2781
    %v2783 = vpop.xlane.xlu0 %2782
    %v2784 = vsel %vm211, %v2780, -inf
    %2785 = vmax.xlane.f32.xlu0 %v2784
    %v2786 = vpop.xlane.xlu0 %2785
    %v2787 = vsub.f32 %v2779, %v2783
    %v2788 = vsub.f32 %v2780, %v2786
    %v2789 = vmul.f32 %v2787, 1.442695
    %v2790 = vpow.pop %v2789
    %v2791 = vmul.f32 %v2788, 1.442695
    %v2792 = vpow.pop %v2791
    %v2793 = vsel %vm211, %v2790, 0.0
    %2794 = vadd.xlane.f32.xlu0 %v2793
    %v2795 = vpop.xlane.xlu0 %2794
    %v2796 = vsel %vm211, %v2792, 0.0
    %2797 = vadd.xlane.f32.xlu0 %v2796
    %v2798 = vpop.xlane.xlu0 %2797
    %v2799 = vrcp.pop %v2795
    %v2800 = vrcp.pop %v2798
    %v2801 = vmul.f32 %v2790, %v2799
    %v2802 = vmul.f32 %v2792, %v2800
    %v2804 = vsel %vm211, %v2801, 0
    %2806 = vmatpush.msra.mxu0 0.0
    %2807 = vmatpush.msra.mxu0 0.0
    %2808 = vmatpush.msra.mxu0 0.0
    %2809 = vmatpush.msra.mxu0 0.0
    %2810 = vmatpush.msra.mxu0 0.0
    %2811 = vmatpush.msra.mxu0 0.0
    %2812 = vmatpush.msra.mxu0 0.0
    %2813 = vmatpush.msra.mxu0 0.0
    %2814 = vmatpush.msra.mxu0 0.0
    %2815 = vmatpush.msra.mxu0 0.0
    %2816 = vmatpush.msra.mxu0 0.0
    %2817 = vmatpush.msra.mxu0 0.0
    %2818 = vmatpush.msra.mxu0 0.0
    %2819 = vmatpush.msra.mxu0 0.0
    %2820 = vmatpush.msra.mxu0 0.0
    %2821 = vmatpush.msra.mxu0 %v2720
    %2822 = vmatmul.f32.gmra.mxu0 %v2804
    %v2823 = vpop.f32.mrf.mxu0
    %v2824 = vadd.f32 0.0, %v2823
    %2825 = vdwg.mxu0
    %v2827 = vsel %vm211, %v2802, 0
    %2829 = vmatpush.msra.mxu0 0.0
    %2830 = vmatpush.msra.mxu0 0.0
    %2831 = vmatpush.msra.mxu0 0.0
    %2832 = vmatpush.msra.mxu0 0.0
    %2833 = vmatpush.msra.mxu0 0.0
    %2834 = vmatpush.msra.mxu0 0.0
    %2835 = vmatpush.msra.mxu0 0.0
    %2836 = vmatpush.msra.mxu0 0.0
    %2837 = vmatpush.msra.mxu0 0.0
    %2838 = vmatpush.msra.mxu0 0.0
    %2839 = vmatpush.msra.mxu0 0.0
    %2840 = vmatpush.msra.mxu0 0.0
    %2841 = vmatpush.msra.mxu0 0.0
    %2842 = vmatpush.msra.mxu0 0.0
    %2843 = vmatpush.msra.mxu0 0.0
    %2844 = vmatpush.msra.mxu0 %v2723
    %2845 = vmatmul.f32.gmra.mxu0 %v2827
    %v2846 = vpop.f32.mrf.mxu0
    %v2847 = vadd.f32 0.0, %v2846
    %2848 = vdwg.mxu0
    %s2849 = scalar_lea.vmem %s5, 64
    %v2850 = vld [vmem:[%s2849] sm:$0xff]
    %s2851 = scalar_lea.vmem %s3, 800
    %v2852 = vld [vmem:[%s2851] sm:$0xff]
    %v2853 = vld [vmem:[%s2851 + $0x8] sm:$0xff]
    %v2854 = vld [vmem:[%s2851 + $0x10] sm:$0xff]
    %v2855 = vld [vmem:[%s2851 + $0x18] sm:$0xff]
    %s2856 = scalar_lea.vmem %s4, 25
    %v2857 = vld [vmem:[%s2856] sm:$0x1]
    %v2859 = vperm.slane %v2857, 0
    %2861 = vmatpush.msra.mxu0 0.0
    %2862 = vmatpush.msra.mxu0 0.0
    %2863 = vmatpush.msra.mxu0 0.0
    %2864 = vmatpush.msra.mxu0 0.0
    %2865 = vmatpush.msra.mxu0 0.0
    %2866 = vmatpush.msra.mxu0 0.0
    %2867 = vmatpush.msra.mxu0 0.0
    %2868 = vmatpush.msra.mxu0 0.0
    %2869 = vmatpush.msra.mxu0 0.0
    %2870 = vmatpush.msra.mxu0 0.0
    %2871 = vmatpush.msra.mxu0 0.0
    %2872 = vmatpush.msra.mxu0 0.0
    %2873 = vmatpush.msra.mxu0 %v2855
    %2874 = vmatpush.msra.mxu0 %v2854
    %2875 = vmatpush.msra.mxu0 %v2853
    %2876 = vmatpush.msra.mxu0 %v2852
    %2877 = vmatmul.f32.gmra.mxu0 %v2631
    %v2878 = vpop.f32.mrf.mxu0
    %v2879 = vadd.f32 %v2859, %v2878
    %2880 = vmatmul.f32.gmra.mxu0 %v2634
    %v2881 = vpop.f32.mrf.mxu0
    %v2882 = vadd.f32 %v2859, %v2881
    %2883 = vdwg.mxu0
    %s2884 = scalar_lea.vmem %s3, 928
    %v2885 = vld [vmem:[%s2884] sm:$0xff]
    %v2886 = vld [vmem:[%s2884 + $0x8] sm:$0xff]
    %v2887 = vld [vmem:[%s2884 + $0x10] sm:$0xff]
    %v2888 = vld [vmem:[%s2884 + $0x18] sm:$0xff]
    %s2889 = scalar_lea.vmem %s4, 29
    %v2890 = vld [vmem:[%s2889] sm:$0x1]
    %v2892 = vperm.slane %v2890, 0
    %2894 = vmatpush.msra.mxu0 0.0
    %2895 = vmatpush.msra.mxu0 0.0
    %2896 = vmatpush.msra.mxu0 0.0
    %2897 = vmatpush.msra.mxu0 0.0
    %2898 = vmatpush.msra.mxu0 0.0
    %2899 = vmatpush.msra.mxu0 0.0
    %2900 = vmatpush.msra.mxu0 0.0
    %2901 = vmatpush.msra.mxu0 0.0
    %2902 = vmatpush.msra.mxu0 0.0
    %2903 = vmatpush.msra.mxu0 0.0
    %2904 = vmatpush.msra.mxu0 0.0
    %2905 = vmatpush.msra.mxu0 0.0
    %2906 = vmatpush.msra.mxu0 %v2888
    %2907 = vmatpush.msra.mxu0 %v2887
    %2908 = vmatpush.msra.mxu0 %v2886
    %2909 = vmatpush.msra.mxu0 %v2885
    %2910 = vmatmul.f32.gmra.mxu0 %v2631
    %v2911 = vpop.f32.mrf.mxu0
    %v2912 = vadd.f32 %v2892, %v2911
    %2913 = vmatmul.f32.gmra.mxu0 %v2634
    %v2914 = vpop.f32.mrf.mxu0
    %v2915 = vadd.f32 %v2892, %v2914
    %2916 = vdwg.mxu0
    %s2917 = scalar_lea.vmem %s3, 1056
    %v2918 = vld [vmem:[%s2917] sm:$0xff]
    %v2919 = vld [vmem:[%s2917 + $0x8] sm:$0xff]
    %v2920 = vld [vmem:[%s2917 + $0x10] sm:$0xff]
    %v2921 = vld [vmem:[%s2917 + $0x18] sm:$0xff]
    %s2922 = scalar_lea.vmem %s4, 33
    %v2923 = vld [vmem:[%s2922] sm:$0x1]
    %v2925 = vperm.slane %v2923, 0
    %2927 = vmatpush.msra.mxu0 0.0
    %2928 = vmatpush.msra.mxu0 0.0
    %2929 = vmatpush.msra.mxu0 0.0
    %2930 = vmatpush.msra.mxu0 0.0
    %2931 = vmatpush.msra.mxu0 0.0
    %2932 = vmatpush.msra.mxu0 0.0
    %2933 = vmatpush.msra.mxu0 0.0
    %2934 = vmatpush.msra.mxu0 0.0
    %2935 = vmatpush.msra.mxu0 0.0
    %2936 = vmatpush.msra.mxu0 0.0
    %2937 = vmatpush.msra.mxu0 0.0
    %2938 = vmatpush.msra.mxu0 0.0
    %2939 = vmatpush.msra.mxu0 %v2921
    %2940 = vmatpush.msra.mxu0 %v2920
    %2941 = vmatpush.msra.mxu0 %v2919
    %2942 = vmatpush.msra.mxu0 %v2918
    %2943 = vmatmul.f32.gmra.mxu0 %v2631
    %v2944 = vpop.f32.mrf.mxu0
    %v2945 = vadd.f32 %v2925, %v2944
    %2946 = vmatmul.f32.gmra.mxu0 %v2634
    %v2947 = vpop.f32.mrf.mxu0
    %v2948 = vadd.f32 %v2925, %v2947
    %2949 = vdwg.mxu0
    %v2951 = vsel %vm211, %v2879, 0
    %v2954 = vsel %vm211, %v2912, 0
    %2956 = vmatpush.xpose.msra.mxu0 0.0
    %2957 = vmatpush.xpose.msra.mxu0 0.0
    %2958 = vmatpush.xpose.msra.mxu0 0.0
    %2959 = vmatpush.xpose.msra.mxu0 0.0
    %2960 = vmatpush.xpose.msra.mxu0 0.0
    %2961 = vmatpush.xpose.msra.mxu0 0.0
    %2962 = vmatpush.xpose.msra.mxu0 0.0
    %2963 = vmatpush.xpose.msra.mxu0 0.0
    %2964 = vmatpush.xpose.msra.mxu0 0.0
    %2965 = vmatpush.xpose.msra.mxu0 0.0
    %2966 = vmatpush.xpose.msra.mxu0 0.0
    %2967 = vmatpush.xpose.msra.mxu0 0.0
    %2968 = vmatpush.xpose.msra.mxu0 0.0
    %2969 = vmatpush.xpose.msra.mxu0 0.0
    %2970 = vmatpush.xpose.msra.mxu0 0.0
    %2971 = vmatpush.xpose.msra.mxu0 %v2954
    %2972 = vmatmul.f32.gmra.mxu0 %v2951
    %v2973 = vpop.f32.mrf.mxu0
    %v2974 = vadd.f32 0.0, %v2973
    %2975 = vdwg.mxu0
    %v2977 = vsel %vm211, %v2882, 0
    %v2980 = vsel %vm211, %v2915, 0
    %2982 = vmatpush.xpose.msra.mxu0 0.0
    %2983 = vmatpush.xpose.msra.mxu0 0.0
    %2984 = vmatpush.xpose.msra.mxu0 0.0
    %2985 = vmatpush.xpose.msra.mxu0 0.0
    %2986 = vmatpush.xpose.msra.mxu0 0.0
    %2987 = vmatpush.xpose.msra.mxu0 0.0
    %2988 = vmatpush.xpose.msra.mxu0 0.0
    %2989 = vmatpush.xpose.msra.mxu0 0.0
    %2990 = vmatpush.xpose.msra.mxu0 0.0
    %2991 = vmatpush.xpose.msra.mxu0 0.0
    %2992 = vmatpush.xpose.msra.mxu0 0.0
    %2993 = vmatpush.xpose.msra.mxu0 0.0
    %2994 = vmatpush.xpose.msra.mxu0 0.0
    %2995 = vmatpush.xpose.msra.mxu0 0.0
    %2996 = vmatpush.xpose.msra.mxu0 0.0
    %2997 = vmatpush.xpose.msra.mxu0 %v2980
    %2998 = vmatmul.f32.gmra.mxu0 %v2977
    %v2999 = vpop.f32.mrf.mxu0
    %v3000 = vadd.f32 0.0, %v2999
    %3001 = vdwg.mxu0
    %v3002 = vmul.f32 %v2974, 0.35355338
    %v3003 = vmul.f32 %v3000, 0.35355338
    %v3004 = vadd.f32 %v3002, %v266
    %v3005 = vadd.f32 %v3003, %v267
    %v3006 = vsel %vm211, %v3004, -inf
    %3007 = vmax.xlane.f32.xlu0 %v3006
    %v3008 = vpop.xlane.xlu0 %3007
    %v3009 = vsel %vm211, %v3005, -inf
    %3010 = vmax.xlane.f32.xlu0 %v3009
    %v3011 = vpop.xlane.xlu0 %3010
    %v3012 = vsub.f32 %v3004, %v3008
    %v3013 = vsub.f32 %v3005, %v3011
    %v3014 = vmul.f32 %v3012, 1.442695
    %v3015 = vpow.pop %v3014
    %v3016 = vmul.f32 %v3013, 1.442695
    %v3017 = vpow.pop %v3016
    %v3018 = vsel %vm211, %v3015, 0.0
    %3019 = vadd.xlane.f32.xlu0 %v3018
    %v3020 = vpop.xlane.xlu0 %3019
    %v3021 = vsel %vm211, %v3017, 0.0
    %3022 = vadd.xlane.f32.xlu0 %v3021
    %v3023 = vpop.xlane.xlu0 %3022
    %v3024 = vrcp.pop %v3020
    %v3025 = vrcp.pop %v3023
    %v3026 = vmul.f32 %v3015, %v3024
    %v3027 = vmul.f32 %v3017, %v3025
    %v3029 = vsel %vm211, %v3026, 0
    %3031 = vmatpush.msra.mxu0 0.0
    %3032 = vmatpush.msra.mxu0 0.0
    %3033 = vmatpush.msra.mxu0 0.0
    %3034 = vmatpush.msra.mxu0 0.0
    %3035 = vmatpush.msra.mxu0 0.0
    %3036 = vmatpush.msra.mxu0 0.0
    %3037 = vmatpush.msra.mxu0 0.0
    %3038 = vmatpush.msra.mxu0 0.0
    %3039 = vmatpush.msra.mxu0 0.0
    %3040 = vmatpush.msra.mxu0 0.0
    %3041 = vmatpush.msra.mxu0 0.0
    %3042 = vmatpush.msra.mxu0 0.0
    %3043 = vmatpush.msra.mxu0 0.0
    %3044 = vmatpush.msra.mxu0 0.0
    %3045 = vmatpush.msra.mxu0 0.0
    %3046 = vmatpush.msra.mxu0 %v2945
    %3047 = vmatmul.f32.gmra.mxu0 %v3029
    %v3048 = vpop.f32.mrf.mxu0
    %v3049 = vadd.f32 0.0, %v3048
    %3050 = vdwg.mxu0
    %v3052 = vsel %vm211, %v3027, 0
    %3054 = vmatpush.msra.mxu0 0.0
    %3055 = vmatpush.msra.mxu0 0.0
    %3056 = vmatpush.msra.mxu0 0.0
    %3057 = vmatpush.msra.mxu0 0.0
    %3058 = vmatpush.msra.mxu0 0.0
    %3059 = vmatpush.msra.mxu0 0.0
    %3060 = vmatpush.msra.mxu0 0.0
    %3061 = vmatpush.msra.mxu0 0.0
    %3062 = vmatpush.msra.mxu0 0.0
    %3063 = vmatpush.msra.mxu0 0.0
    %3064 = vmatpush.msra.mxu0 0.0
    %3065 = vmatpush.msra.mxu0 0.0
    %3066 = vmatpush.msra.mxu0 0.0
    %3067 = vmatpush.msra.mxu0 0.0
    %3068 = vmatpush.msra.mxu0 0.0
    %3069 = vmatpush.msra.mxu0 %v2948
    %3070 = vmatmul.f32.gmra.mxu0 %v3052
    %v3071 = vpop.f32.mrf.mxu0
    %v3072 = vadd.f32 0.0, %v3071
    %3073 = vdwg.mxu0
    %s3074 = scalar_lea.vmem %s5, 72
    %v3075 = vld [vmem:[%s3074] sm:$0xff]
    %v3077 = vsel %vm211, %v3049, 0
    %v3080 = vsel %vm211, %v3072, 0
    %3082 = vmatpush.msra.mxu0 0.0
    %3083 = vmatpush.msra.mxu0 0.0
    %3084 = vmatpush.msra.mxu0 0.0
    %3085 = vmatpush.msra.mxu0 0.0
    %3086 = vmatpush.msra.mxu0 0.0
    %3087 = vmatpush.msra.mxu0 0.0
    %3088 = vmatpush.msra.mxu0 0.0
    %3089 = vmatpush.msra.mxu0 0.0
    %3090 = vmatpush.msra.mxu0 0.0
    %3091 = vmatpush.msra.mxu0 0.0
    %3092 = vmatpush.msra.mxu0 0.0
    %3093 = vmatpush.msra.mxu0 0.0
    %3094 = vmatpush.msra.mxu0 0.0
    %3095 = vmatpush.msra.mxu0 0.0
    %3096 = vmatpush.msra.mxu0 0.0
    %3097 = vmatpush.msra.mxu0 %v3075
    %3098 = vmatmul.f32.gmra.mxu0 %v3077
    %v3099 = vpop.f32.mrf.mxu0
    %v3100 = vadd.f32 0.0, %v3099
    %3101 = vmatmul.f32.gmra.mxu0 %v3080
    %v3102 = vpop.f32.mrf.mxu0
    %v3103 = vadd.f32 0.0, %v3102
    %3104 = vdwg.mxu0
    %v3106 = vsel %vm211, %v2824, 0
    %v3109 = vsel %vm211, %v2847, 0
    %3111 = vmatpush.msra.mxu0 0.0
    %3112 = vmatpush.msra.mxu0 0.0
    %3113 = vmatpush.msra.mxu0 0.0
    %3114 = vmatpush.msra.mxu0 0.0
    %3115 = vmatpush.msra.mxu0 0.0
    %3116 = vmatpush.msra.mxu0 0.0
    %3117 = vmatpush.msra.mxu0 0.0
    %3118 = vmatpush.msra.mxu0 0.0
    %3119 = vmatpush.msra.mxu0 0.0
    %3120 = vmatpush.msra.mxu0 0.0
    %3121 = vmatpush.msra.mxu0 0.0
    %3122 = vmatpush.msra.mxu0 0.0
    %3123 = vmatpush.msra.mxu0 0.0
    %3124 = vmatpush.msra.mxu0 0.0
    %3125 = vmatpush.msra.mxu0 0.0
    %3126 = vmatpush.msra.mxu0 %v2850
    %3127 = vmatmul.f32.gmra.mxu0 %v3106
    %v3128 = vpop.f32.mrf.mxu0
    %v3129 = vadd.f32 %v3100, %v3128
    %3130 = vmatmul.f32.gmra.mxu0 %v3109
    %v3131 = vpop.f32.mrf.mxu0
    %v3132 = vadd.f32 %v3103, %v3131
    %3133 = vdwg.mxu0
    %s3134 = scalar_lea.vmem %s3, 832
    %v3135 = vld [vmem:[%s3134] sm:$0xff]
    %v3136 = vld [vmem:[%s3134 + $0x8] sm:$0xff]
    %v3137 = vld [vmem:[%s3134 + $0x10] sm:$0xff]
    %v3138 = vld [vmem:[%s3134 + $0x18] sm:$0xff]
    %s3139 = scalar_lea.vmem %s4, 26
    %v3140 = vld [vmem:[%s3139] sm:$0x1]
    %v3142 = vperm.slane %v3140, 0
    %3144 = vmatpush.msra.mxu0 0.0
    %3145 = vmatpush.msra.mxu0 0.0
    %3146 = vmatpush.msra.mxu0 0.0
    %3147 = vmatpush.msra.mxu0 0.0
    %3148 = vmatpush.msra.mxu0 0.0
    %3149 = vmatpush.msra.mxu0 0.0
    %3150 = vmatpush.msra.mxu0 0.0
    %3151 = vmatpush.msra.mxu0 0.0
    %3152 = vmatpush.msra.mxu0 0.0
    %3153 = vmatpush.msra.mxu0 0.0
    %3154 = vmatpush.msra.mxu0 0.0
    %3155 = vmatpush.msra.mxu0 0.0
    %3156 = vmatpush.msra.mxu0 %v3138
    %3157 = vmatpush.msra.mxu0 %v3137
    %3158 = vmatpush.msra.mxu0 %v3136
    %3159 = vmatpush.msra.mxu0 %v3135
    %3160 = vmatmul.f32.gmra.mxu0 %v2631
    %v3161 = vpop.f32.mrf.mxu0
    %v3162 = vadd.f32 %v3142, %v3161
    %3163 = vmatmul.f32.gmra.mxu0 %v2634
    %v3164 = vpop.f32.mrf.mxu0
    %v3165 = vadd.f32 %v3142, %v3164
    %3166 = vdwg.mxu0
    %s3167 = scalar_lea.vmem %s3, 960
    %v3168 = vld [vmem:[%s3167] sm:$0xff]
    %v3169 = vld [vmem:[%s3167 + $0x8] sm:$0xff]
    %v3170 = vld [vmem:[%s3167 + $0x10] sm:$0xff]
    %v3171 = vld [vmem:[%s3167 + $0x18] sm:$0xff]
    %s3172 = scalar_lea.vmem %s4, 30
    %v3173 = vld [vmem:[%s3172] sm:$0x1]
    %v3175 = vperm.slane %v3173, 0
    %3177 = vmatpush.msra.mxu0 0.0
    %3178 = vmatpush.msra.mxu0 0.0
    %3179 = vmatpush.msra.mxu0 0.0
    %3180 = vmatpush.msra.mxu0 0.0
    %3181 = vmatpush.msra.mxu0 0.0
    %3182 = vmatpush.msra.mxu0 0.0
    %3183 = vmatpush.msra.mxu0 0.0
    %3184 = vmatpush.msra.mxu0 0.0
    %3185 = vmatpush.msra.mxu0 0.0
    %3186 = vmatpush.msra.mxu0 0.0
    %3187 = vmatpush.msra.mxu0 0.0
    %3188 = vmatpush.msra.mxu0 0.0
    %3189 = vmatpush.msra.mxu0 %v3171
    %3190 = vmatpush.msra.mxu0 %v3170
    %3191 = vmatpush.msra.mxu0 %v3169
    %3192 = vmatpush.msra.mxu0 %v3168
    %3193 = vmatmul.f32.gmra.mxu0 %v2631
    %v3194 = vpop.f32.mrf.mxu0
    %v3195 = vadd.f32 %v3175, %v3194
    %3196 = vmatmul.f32.gmra.mxu0 %v2634
    %v3197 = vpop.f32.mrf.mxu0
    %v3198 = vadd.f32 %v3175, %v3197
    %3199 = vdwg.mxu0
    %s3200 = scalar_lea.vmem %s3, 1088
    %v3201 = vld [vmem:[%s3200] sm:$0xff]
    %v3202 = vld [vmem:[%s3200 + $0x8] sm:$0xff]
    %v3203 = vld [vmem:[%s3200 + $0x10] sm:$0xff]
    %v3204 = vld [vmem:[%s3200 + $0x18] sm:$0xff]
    %s3205 = scalar_lea.vmem %s4, 34
    %v3206 = vld [vmem:[%s3205] sm:$0x1]
    %v3208 = vperm.slane %v3206, 0
    %3210 = vmatpush.msra.mxu0 0.0
    %3211 = vmatpush.msra.mxu0 0.0
    %3212 = vmatpush.msra.mxu0 0.0
    %3213 = vmatpush.msra.mxu0 0.0
    %3214 = vmatpush.msra.mxu0 0.0
    %3215 = vmatpush.msra.mxu0 0.0
    %3216 = vmatpush.msra.mxu0 0.0
    %3217 = vmatpush.msra.mxu0 0.0
    %3218 = vmatpush.msra.mxu0 0.0
    %3219 = vmatpush.msra.mxu0 0.0
    %3220 = vmatpush.msra.mxu0 0.0
    %3221 = vmatpush.msra.mxu0 0.0
    %3222 = vmatpush.msra.mxu0 %v3204
    %3223 = vmatpush.msra.mxu0 %v3203
    %3224 = vmatpush.msra.mxu0 %v3202
    %3225 = vmatpush.msra.mxu0 %v3201
    %3226 = vmatmul.f32.gmra.mxu0 %v2631
    %v3227 = vpop.f32.mrf.mxu0
    %v3228 = vadd.f32 %v3208, %v3227
    %3229 = vmatmul.f32.gmra.mxu0 %v2634
    %v3230 = vpop.f32.mrf.mxu0
    %v3231 = vadd.f32 %v3208, %v3230
    %3232 = vdwg.mxu0
    %v3234 = vsel %vm211, %v3162, 0
    %v3237 = vsel %vm211, %v3195, 0
    %3239 = vmatpush.xpose.msra.mxu0 0.0
    %3240 = vmatpush.xpose.msra.mxu0 0.0
    %3241 = vmatpush.xpose.msra.mxu0 0.0
    %3242 = vmatpush.xpose.msra.mxu0 0.0
    %3243 = vmatpush.xpose.msra.mxu0 0.0
    %3244 = vmatpush.xpose.msra.mxu0 0.0
    %3245 = vmatpush.xpose.msra.mxu0 0.0
    %3246 = vmatpush.xpose.msra.mxu0 0.0
    %3247 = vmatpush.xpose.msra.mxu0 0.0
    %3248 = vmatpush.xpose.msra.mxu0 0.0
    %3249 = vmatpush.xpose.msra.mxu0 0.0
    %3250 = vmatpush.xpose.msra.mxu0 0.0
    %3251 = vmatpush.xpose.msra.mxu0 0.0
    %3252 = vmatpush.xpose.msra.mxu0 0.0
    %3253 = vmatpush.xpose.msra.mxu0 0.0
    %3254 = vmatpush.xpose.msra.mxu0 %v3237
    %3255 = vmatmul.f32.gmra.mxu0 %v3234
    %v3256 = vpop.f32.mrf.mxu0
    %v3257 = vadd.f32 0.0, %v3256
    %3258 = vdwg.mxu0
    %v3260 = vsel %vm211, %v3165, 0
    %v3263 = vsel %vm211, %v3198, 0
    %3265 = vmatpush.xpose.msra.mxu0 0.0
    %3266 = vmatpush.xpose.msra.mxu0 0.0
    %3267 = vmatpush.xpose.msra.mxu0 0.0
    %3268 = vmatpush.xpose.msra.mxu0 0.0
    %3269 = vmatpush.xpose.msra.mxu0 0.0
    %3270 = vmatpush.xpose.msra.mxu0 0.0
    %3271 = vmatpush.xpose.msra.mxu0 0.0
    %3272 = vmatpush.xpose.msra.mxu0 0.0
    %3273 = vmatpush.xpose.msra.mxu0 0.0
    %3274 = vmatpush.xpose.msra.mxu0 0.0
    %3275 = vmatpush.xpose.msra.mxu0 0.0
    %3276 = vmatpush.xpose.msra.mxu0 0.0
    %3277 = vmatpush.xpose.msra.mxu0 0.0
    %3278 = vmatpush.xpose.msra.mxu0 0.0
    %3279 = vmatpush.xpose.msra.mxu0 0.0
    %3280 = vmatpush.xpose.msra.mxu0 %v3263
    %3281 = vmatmul.f32.gmra.mxu0 %v3260
    %v3282 = vpop.f32.mrf.mxu0
    %v3283 = vadd.f32 0.0, %v3282
    %3284 = vdwg.mxu0
    %v3285 = vmul.f32 %v3257, 0.35355338
    %v3286 = vmul.f32 %v3283, 0.35355338
    %v3287 = vadd.f32 %v3285, %v266
    %v3288 = vadd.f32 %v3286, %v267
    %v3289 = vsel %vm211, %v3287, -inf
    %3290 = vmax.xlane.f32.xlu0 %v3289
    %v3291 = vpop.xlane.xlu0 %3290
    %v3292 = vsel %vm211, %v3288, -inf
    %3293 = vmax.xlane.f32.xlu0 %v3292
    %v3294 = vpop.xlane.xlu0 %3293
    %v3295 = vsub.f32 %v3287, %v3291
    %v3296 = vsub.f32 %v3288, %v3294
    %v3297 = vmul.f32 %v3295, 1.442695
    %v3298 = vpow.pop %v3297
    %v3299 = vmul.f32 %v3296, 1.442695
    %v3300 = vpow.pop %v3299
    %v3301 = vsel %vm211, %v3298, 0.0
    %3302 = vadd.xlane.f32.xlu0 %v3301
    %v3303 = vpop.xlane.xlu0 %3302
    %v3304 = vsel %vm211, %v3300, 0.0
    %3305 = vadd.xlane.f32.xlu0 %v3304
    %v3306 = vpop.xlane.xlu0 %3305
    %v3307 = vrcp.pop %v3303
    %v3308 = vrcp.pop %v3306
    %v3309 = vmul.f32 %v3298, %v3307
    %v3310 = vmul.f32 %v3300, %v3308
    %v3312 = vsel %vm211, %v3309, 0
    %3314 = vmatpush.msra.mxu0 0.0
    %3315 = vmatpush.msra.mxu0 0.0
    %3316 = vmatpush.msra.mxu0 0.0
    %3317 = vmatpush.msra.mxu0 0.0
    %3318 = vmatpush.msra.mxu0 0.0
    %3319 = vmatpush.msra.mxu0 0.0
    %3320 = vmatpush.msra.mxu0 0.0
    %3321 = vmatpush.msra.mxu0 0.0
    %3322 = vmatpush.msra.mxu0 0.0
    %3323 = vmatpush.msra.mxu0 0.0
    %3324 = vmatpush.msra.mxu0 0.0
    %3325 = vmatpush.msra.mxu0 0.0
    %3326 = vmatpush.msra.mxu0 0.0
    %3327 = vmatpush.msra.mxu0 0.0
    %3328 = vmatpush.msra.mxu0 0.0
    %3329 = vmatpush.msra.mxu0 %v3228
    %3330 = vmatmul.f32.gmra.mxu0 %v3312
    %v3331 = vpop.f32.mrf.mxu0
    %v3332 = vadd.f32 0.0, %v3331
    %3333 = vdwg.mxu0
    %v3335 = vsel %vm211, %v3310, 0
    %3337 = vmatpush.msra.mxu0 0.0
    %3338 = vmatpush.msra.mxu0 0.0
    %3339 = vmatpush.msra.mxu0 0.0
    %3340 = vmatpush.msra.mxu0 0.0
    %3341 = vmatpush.msra.mxu0 0.0
    %3342 = vmatpush.msra.mxu0 0.0
    %3343 = vmatpush.msra.mxu0 0.0
    %3344 = vmatpush.msra.mxu0 0.0
    %3345 = vmatpush.msra.mxu0 0.0
    %3346 = vmatpush.msra.mxu0 0.0
    %3347 = vmatpush.msra.mxu0 0.0
    %3348 = vmatpush.msra.mxu0 0.0
    %3349 = vmatpush.msra.mxu0 0.0
    %3350 = vmatpush.msra.mxu0 0.0
    %3351 = vmatpush.msra.mxu0 0.0
    %3352 = vmatpush.msra.mxu0 %v3231
    %3353 = vmatmul.f32.gmra.mxu0 %v3335
    %v3354 = vpop.f32.mrf.mxu0
    %v3355 = vadd.f32 0.0, %v3354
    %3356 = vdwg.mxu0
    %s3357 = scalar_lea.vmem %s5, 80
    %v3358 = vld [vmem:[%s3357] sm:$0xff]
    %v3360 = vsel %vm211, %v3332, 0
    %v3363 = vsel %vm211, %v3355, 0
    %3365 = vmatpush.msra.mxu0 0.0
    %3366 = vmatpush.msra.mxu0 0.0
    %3367 = vmatpush.msra.mxu0 0.0
    %3368 = vmatpush.msra.mxu0 0.0
    %3369 = vmatpush.msra.mxu0 0.0
    %3370 = vmatpush.msra.mxu0 0.0
    %3371 = vmatpush.msra.mxu0 0.0
    %3372 = vmatpush.msra.mxu0 0.0
    %3373 = vmatpush.msra.mxu0 0.0
    %3374 = vmatpush.msra.mxu0 0.0
    %3375 = vmatpush.msra.mxu0 0.0
    %3376 = vmatpush.msra.mxu0 0.0
    %3377 = vmatpush.msra.mxu0 0.0
    %3378 = vmatpush.msra.mxu0 0.0
    %3379 = vmatpush.msra.mxu0 0.0
    %3380 = vmatpush.msra.mxu0 %v3358
    %3381 = vmatmul.f32.gmra.mxu0 %v3360
    %v3382 = vpop.f32.mrf.mxu0
    %v3383 = vadd.f32 0.0, %v3382
    %3384 = vmatmul.f32.gmra.mxu0 %v3363
    %v3385 = vpop.f32.mrf.mxu0
    %v3386 = vadd.f32 0.0, %v3385
    %3387 = vdwg.mxu0
    %v3388 = vadd.f32 %v3129, %v3383
    %v3389 = vadd.f32 %v3132, %v3386
    %s3390 = scalar_lea.vmem %s3, 864
    %v3391 = vld [vmem:[%s3390] sm:$0xff]
    %v3392 = vld [vmem:[%s3390 + $0x8] sm:$0xff]
    %v3393 = vld [vmem:[%s3390 + $0x10] sm:$0xff]
    %v3394 = vld [vmem:[%s3390 + $0x18] sm:$0xff]
    %s3395 = scalar_lea.vmem %s4, 27
    %v3396 = vld [vmem:[%s3395] sm:$0x1]
    %v3398 = vperm.slane %v3396, 0
    %3400 = vmatpush.msra.mxu0 0.0
    %3401 = vmatpush.msra.mxu0 0.0
    %3402 = vmatpush.msra.mxu0 0.0
    %3403 = vmatpush.msra.mxu0 0.0
    %3404 = vmatpush.msra.mxu0 0.0
    %3405 = vmatpush.msra.mxu0 0.0
    %3406 = vmatpush.msra.mxu0 0.0
    %3407 = vmatpush.msra.mxu0 0.0
    %3408 = vmatpush.msra.mxu0 0.0
    %3409 = vmatpush.msra.mxu0 0.0
    %3410 = vmatpush.msra.mxu0 0.0
    %3411 = vmatpush.msra.mxu0 0.0
    %3412 = vmatpush.msra.mxu0 %v3394
    %3413 = vmatpush.msra.mxu0 %v3393
    %3414 = vmatpush.msra.mxu0 %v3392
    %3415 = vmatpush.msra.mxu0 %v3391
    %3416 = vmatmul.f32.gmra.mxu0 %v2631
    %v3417 = vpop.f32.mrf.mxu0
    %v3418 = vadd.f32 %v3398, %v3417
    %3419 = vmatmul.f32.gmra.mxu0 %v2634
    %v3420 = vpop.f32.mrf.mxu0
    %v3421 = vadd.f32 %v3398, %v3420
    %3422 = vdwg.mxu0
    %s3423 = scalar_lea.vmem %s3, 992
    %v3424 = vld [vmem:[%s3423] sm:$0xff]
    %v3425 = vld [vmem:[%s3423 + $0x8] sm:$0xff]
    %v3426 = vld [vmem:[%s3423 + $0x10] sm:$0xff]
    %v3427 = vld [vmem:[%s3423 + $0x18] sm:$0xff]
    %s3428 = scalar_lea.vmem %s4, 31
    %v3429 = vld [vmem:[%s3428] sm:$0x1]
    %v3431 = vperm.slane %v3429, 0
    %3433 = vmatpush.msra.mxu0 0.0
    %3434 = vmatpush.msra.mxu0 0.0
    %3435 = vmatpush.msra.mxu0 0.0
    %3436 = vmatpush.msra.mxu0 0.0
    %3437 = vmatpush.msra.mxu0 0.0
    %3438 = vmatpush.msra.mxu0 0.0
    %3439 = vmatpush.msra.mxu0 0.0
    %3440 = vmatpush.msra.mxu0 0.0
    %3441 = vmatpush.msra.mxu0 0.0
    %3442 = vmatpush.msra.mxu0 0.0
    %3443 = vmatpush.msra.mxu0 0.0
    %3444 = vmatpush.msra.mxu0 0.0
    %3445 = vmatpush.msra.mxu0 %v3427
    %3446 = vmatpush.msra.mxu0 %v3426
    %3447 = vmatpush.msra.mxu0 %v3425
    %3448 = vmatpush.msra.mxu0 %v3424
    %3449 = vmatmul.f32.gmra.mxu0 %v2631
    %v3450 = vpop.f32.mrf.mxu0
    %v3451 = vadd.f32 %v3431, %v3450
    %3452 = vmatmul.f32.gmra.mxu0 %v2634
    %v3453 = vpop.f32.mrf.mxu0
    %v3454 = vadd.f32 %v3431, %v3453
    %3455 = vdwg.mxu0
    %s3456 = scalar_lea.vmem %s3, 1120
    %v3457 = vld [vmem:[%s3456] sm:$0xff]
    %v3458 = vld [vmem:[%s3456 + $0x8] sm:$0xff]
    %v3459 = vld [vmem:[%s3456 + $0x10] sm:$0xff]
    %v3460 = vld [vmem:[%s3456 + $0x18] sm:$0xff]
    %s3461 = scalar_lea.vmem %s4, 35
    %v3462 = vld [vmem:[%s3461] sm:$0x1]
    %v3464 = vperm.slane %v3462, 0
    %3466 = vmatpush.msra.mxu0 0.0
    %3467 = vmatpush.msra.mxu0 0.0
    %3468 = vmatpush.msra.mxu0 0.0
    %3469 = vmatpush.msra.mxu0 0.0
    %3470 = vmatpush.msra.mxu0 0.0
    %3471 = vmatpush.msra.mxu0 0.0
    %3472 = vmatpush.msra.mxu0 0.0
    %3473 = vmatpush.msra.mxu0 0.0
    %3474 = vmatpush.msra.mxu0 0.0
    %3475 = vmatpush.msra.mxu0 0.0
    %3476 = vmatpush.msra.mxu0 0.0
    %3477 = vmatpush.msra.mxu0 0.0
    %3478 = vmatpush.msra.mxu0 %v3460
    %3479 = vmatpush.msra.mxu0 %v3459
    %3480 = vmatpush.msra.mxu0 %v3458
    %3481 = vmatpush.msra.mxu0 %v3457
    %3482 = vmatmul.f32.gmra.mxu0 %v2631
    %v3483 = vpop.f32.mrf.mxu0
    %v3484 = vadd.f32 %v3464, %v3483
    %3485 = vmatmul.f32.gmra.mxu0 %v2634
    %v3486 = vpop.f32.mrf.mxu0
    %v3487 = vadd.f32 %v3464, %v3486
    %3488 = vdwg.mxu0
    %v3490 = vsel %vm211, %v3418, 0
    %v3493 = vsel %vm211, %v3451, 0
    %3495 = vmatpush.xpose.msra.mxu0 0.0
    %3496 = vmatpush.xpose.msra.mxu0 0.0
    %3497 = vmatpush.xpose.msra.mxu0 0.0
    %3498 = vmatpush.xpose.msra.mxu0 0.0
    %3499 = vmatpush.xpose.msra.mxu0 0.0
    %3500 = vmatpush.xpose.msra.mxu0 0.0
    %3501 = vmatpush.xpose.msra.mxu0 0.0
    %3502 = vmatpush.xpose.msra.mxu0 0.0
    %3503 = vmatpush.xpose.msra.mxu0 0.0
    %3504 = vmatpush.xpose.msra.mxu0 0.0
    %3505 = vmatpush.xpose.msra.mxu0 0.0
    %3506 = vmatpush.xpose.msra.mxu0 0.0
    %3507 = vmatpush.xpose.msra.mxu0 0.0
    %3508 = vmatpush.xpose.msra.mxu0 0.0
    %3509 = vmatpush.xpose.msra.mxu0 0.0
    %3510 = vmatpush.xpose.msra.mxu0 %v3493
    %3511 = vmatmul.f32.gmra.mxu0 %v3490
    %v3512 = vpop.f32.mrf.mxu0
    %v3513 = vadd.f32 0.0, %v3512
    %3514 = vdwg.mxu0
    %v3516 = vsel %vm211, %v3421, 0
    %v3519 = vsel %vm211, %v3454, 0
    %3521 = vmatpush.xpose.msra.mxu0 0.0
    %3522 = vmatpush.xpose.msra.mxu0 0.0
    %3523 = vmatpush.xpose.msra.mxu0 0.0
    %3524 = vmatpush.xpose.msra.mxu0 0.0
    %3525 = vmatpush.xpose.msra.mxu0 0.0
    %3526 = vmatpush.xpose.msra.mxu0 0.0
    %3527 = vmatpush.xpose.msra.mxu0 0.0
    %3528 = vmatpush.xpose.msra.mxu0 0.0
    %3529 = vmatpush.xpose.msra.mxu0 0.0
    %3530 = vmatpush.xpose.msra.mxu0 0.0
    %3531 = vmatpush.xpose.msra.mxu0 0.0
    %3532 = vmatpush.xpose.msra.mxu0 0.0
    %3533 = vmatpush.xpose.msra.mxu0 0.0
    %3534 = vmatpush.xpose.msra.mxu0 0.0
    %3535 = vmatpush.xpose.msra.mxu0 0.0
    %3536 = vmatpush.xpose.msra.mxu0 %v3519
    %3537 = vmatmul.f32.gmra.mxu0 %v3516
    %v3538 = vpop.f32.mrf.mxu0
    %v3539 = vadd.f32 0.0, %v3538
    %3540 = vdwg.mxu0
    %v3541 = vmul.f32 %v3513, 0.35355338
    %v3542 = vmul.f32 %v3539, 0.35355338
    %v3543 = vadd.f32 %v3541, %v266
    %v3544 = vadd.f32 %v3542, %v267
    %v3545 = vsel %vm211, %v3543, -inf
    %3546 = vmax.xlane.f32.xlu0 %v3545
    %v3547 = vpop.xlane.xlu0 %3546
    %v3548 = vsel %vm211, %v3544, -inf
    %3549 = vmax.xlane.f32.xlu0 %v3548
    %v3550 = vpop.xlane.xlu0 %3549
    %v3551 = vsub.f32 %v3543, %v3547
    %v3552 = vsub.f32 %v3544, %v3550
    %v3553 = vmul.f32 %v3551, 1.442695
    %v3554 = vpow.pop %v3553
    %v3555 = vmul.f32 %v3552, 1.442695
    %v3556 = vpow.pop %v3555
    %v3557 = vsel %vm211, %v3554, 0.0
    %3558 = vadd.xlane.f32.xlu0 %v3557
    %v3559 = vpop.xlane.xlu0 %3558
    %v3560 = vsel %vm211, %v3556, 0.0
    %3561 = vadd.xlane.f32.xlu0 %v3560
    %v3562 = vpop.xlane.xlu0 %3561
    %v3563 = vrcp.pop %v3559
    %v3564 = vrcp.pop %v3562
    %v3565 = vmul.f32 %v3554, %v3563
    %v3566 = vmul.f32 %v3556, %v3564
    %v3568 = vsel %vm211, %v3565, 0
    %3570 = vmatpush.msra.mxu0 0.0
    %3571 = vmatpush.msra.mxu0 0.0
    %3572 = vmatpush.msra.mxu0 0.0
    %3573 = vmatpush.msra.mxu0 0.0
    %3574 = vmatpush.msra.mxu0 0.0
    %3575 = vmatpush.msra.mxu0 0.0
    %3576 = vmatpush.msra.mxu0 0.0
    %3577 = vmatpush.msra.mxu0 0.0
    %3578 = vmatpush.msra.mxu0 0.0
    %3579 = vmatpush.msra.mxu0 0.0
    %3580 = vmatpush.msra.mxu0 0.0
    %3581 = vmatpush.msra.mxu0 0.0
    %3582 = vmatpush.msra.mxu0 0.0
    %3583 = vmatpush.msra.mxu0 0.0
    %3584 = vmatpush.msra.mxu0 0.0
    %3585 = vmatpush.msra.mxu0 %v3484
    %3586 = vmatmul.f32.gmra.mxu0 %v3568
    %v3587 = vpop.f32.mrf.mxu0
    %v3588 = vadd.f32 0.0, %v3587
    %3589 = vdwg.mxu0
    %v3591 = vsel %vm211, %v3566, 0
    %3593 = vmatpush.msra.mxu0 0.0
    %3594 = vmatpush.msra.mxu0 0.0
    %3595 = vmatpush.msra.mxu0 0.0
    %3596 = vmatpush.msra.mxu0 0.0
    %3597 = vmatpush.msra.mxu0 0.0
    %3598 = vmatpush.msra.mxu0 0.0
    %3599 = vmatpush.msra.mxu0 0.0
    %3600 = vmatpush.msra.mxu0 0.0
    %3601 = vmatpush.msra.mxu0 0.0
    %3602 = vmatpush.msra.mxu0 0.0
    %3603 = vmatpush.msra.mxu0 0.0
    %3604 = vmatpush.msra.mxu0 0.0
    %3605 = vmatpush.msra.mxu0 0.0
    %3606 = vmatpush.msra.mxu0 0.0
    %3607 = vmatpush.msra.mxu0 0.0
    %3608 = vmatpush.msra.mxu0 %v3487
    %3609 = vmatmul.f32.gmra.mxu0 %v3591
    %v3610 = vpop.f32.mrf.mxu0
    %v3611 = vadd.f32 0.0, %v3610
    %3612 = vdwg.mxu0
    %s3613 = scalar_lea.vmem %s5, 88
    %v3614 = vld [vmem:[%s3613] sm:$0xff]
    %v3616 = vsel %vm211, %v3588, 0
    %v3619 = vsel %vm211, %v3611, 0
    %3621 = vmatpush.msra.mxu0 0.0
    %3622 = vmatpush.msra.mxu0 0.0
    %3623 = vmatpush.msra.mxu0 0.0
    %3624 = vmatpush.msra.mxu0 0.0
    %3625 = vmatpush.msra.mxu0 0.0
    %3626 = vmatpush.msra.mxu0 0.0
    %3627 = vmatpush.msra.mxu0 0.0
    %3628 = vmatpush.msra.mxu0 0.0
    %3629 = vmatpush.msra.mxu0 0.0
    %3630 = vmatpush.msra.mxu0 0.0
    %3631 = vmatpush.msra.mxu0 0.0
    %3632 = vmatpush.msra.mxu0 0.0
    %3633 = vmatpush.msra.mxu0 0.0
    %3634 = vmatpush.msra.mxu0 0.0
    %3635 = vmatpush.msra.mxu0 0.0
    %3636 = vmatpush.msra.mxu0 %v3614
    %3637 = vmatmul.f32.gmra.mxu0 %v3616
    %v3638 = vpop.f32.mrf.mxu0
    %v3639 = vadd.f32 0.0, %v3638
    %3640 = vmatmul.f32.gmra.mxu0 %v3619
    %v3641 = vpop.f32.mrf.mxu0
    %v3642 = vadd.f32 0.0, %v3641
    %3643 = vdwg.mxu0
    %v3644 = vadd.f32 %v3388, %v3639
    %v3645 = vadd.f32 %v3389, %v3642
    %s3646 = scalar_lea.vmem %s6, 12
    %v3647 = vld [vmem:[%s3646] sm:$0x1]
    %v3649 = vperm.slane %v3647, 0
    %v3651 = vadd.f32 %v3644, %v3649
    %v3652 = vadd.f32 %v3645, %v3649
    %v3653 = vadd.f32 %v3651, %v2616
    %v3654 = vadd.f32 %v3652, %v2617
    %s3655 = scalar_lea.vmem %s6, 13
    %v3656 = vld [vmem:[%s3655] sm:$0x1]
    %s3657 = scalar_lea.vmem %s6, 14
    %v3658 = vld [vmem:[%s3657] sm:$0x1]
    %v3659 = vsel %vm41, %v3653, 0.0
    %3660 = vadd.xlane.f32.xlu0 %v3659
    %v3661 = vpop.xlane.xlu0 %3660
    %v3662 = vsel %vm41, %v3654, 0.0
    %3663 = vadd.xlane.f32.xlu0 %v3662
    %v3664 = vpop.xlane.xlu0 %3663
    %v3665 = vmul.f32 %v3661, %v54
    %v3666 = vmul.f32 %v3664, %v54
    %v3667 = vsub.f32 %v3653, %v3665
    %v3668 = vsub.f32 %v3654, %v3666
    %v3669 = vmul.f32 %v3667, %v3667
    %v3670 = vmul.f32 %v3668, %v3668
    %v3671 = vsel %vm41, %v3669, 0.0
    %3672 = vadd.xlane.f32.xlu0 %v3671
    %v3673 = vpop.xlane.xlu0 %3672
    %v3674 = vsel %vm41, %v3670, 0.0
    %3675 = vadd.xlane.f32.xlu0 %v3674
    %v3676 = vpop.xlane.xlu0 %3675
    %v3677 = vmul.f32 %v3673, %v54
    %v3678 = vmul.f32 %v3676, %v54
    %v3679 = vadd.f32 %v3677, 1e-05
    %v3680 = vadd.f32 %v3678, 1e-05
    %v3681 = vrsqrt.pop %v3679
    %v3682 = vmul.f32 %v3681, %v3679
    %v3683 = vmul.f32 %v3682, %v3681
    %v3684 = vmul.f32 0.5, %v3683
    %v3685 = vsub.f32 1.5, %v3684
    %v3686 = vmul.f32 %v3681, %v3685
    %vm3687 = vweird.f32 %v3679
    %vm3688 = vweird.f32 %v3681
    %vm3689 = vmor %vm3687, %vm3688
    %v3690 = vsel %vm3689, %v3681, %v3686
    %v3691 = vrsqrt.pop %v3680
    %v3692 = vmul.f32 %v3691, %v3680
    %v3693 = vmul.f32 %v3692, %v3691
    %v3694 = vmul.f32 0.5, %v3693
    %v3695 = vsub.f32 1.5, %v3694
    %v3696 = vmul.f32 %v3691, %v3695
    %vm3697 = vweird.f32 %v3680
    %vm3698 = vweird.f32 %v3691
    %vm3699 = vmor %vm3697, %vm3698
    %v3700 = vsel %vm3699, %v3691, %v3696
    %v3701 = vmul.f32 %v3667, %v3690
    %v3702 = vmul.f32 %v3668, %v3700
    %v3704 = vperm.slane %v3656, 0
    %v3706 = vmul.f32 %v3701, %v3704
    %v3707 = vmul.f32 %v3702, %v3704
    %v3709 = vperm.slane %v3658, 0
    %v3711 = vadd.f32 %v3706, %v3709
    %v3712 = vadd.f32 %v3707, %v3709
    %s3713 = scalar_lea.vmem %s7, 64
    %v3714 = vld [vmem:[%s3713] sm:$0xff]
    %v3715 = vld [vmem:[%s3713 + $0x8] sm:$0xff]
    %v3716 = vld [vmem:[%s3713 + $0x10] sm:$0xff]
    %v3717 = vld [vmem:[%s3713 + $0x18] sm:$0xff]
    %s3718 = scalar_lea.vmem %s8, 2
    %v3719 = vld [vmem:[%s3718] sm:$0x1]
    %v3721 = vperm.slane %v3719, 0
    %v3724 = vsel %vm41, %v3711, 0
    %v3727 = vsel %vm41, %v3712, 0
    %3729 = vmatpush.msra.mxu0 0.0
    %3730 = vmatpush.msra.mxu0 0.0
    %3731 = vmatpush.msra.mxu0 0.0
    %3732 = vmatpush.msra.mxu0 0.0
    %3733 = vmatpush.msra.mxu0 0.0
    %3734 = vmatpush.msra.mxu0 0.0
    %3735 = vmatpush.msra.mxu0 0.0
    %3736 = vmatpush.msra.mxu0 0.0
    %3737 = vmatpush.msra.mxu0 0.0
    %3738 = vmatpush.msra.mxu0 0.0
    %3739 = vmatpush.msra.mxu0 0.0
    %3740 = vmatpush.msra.mxu0 0.0
    %3741 = vmatpush.msra.mxu0 %v3717
    %3742 = vmatpush.msra.mxu0 %v3716
    %3743 = vmatpush.msra.mxu0 %v3715
    %3744 = vmatpush.msra.mxu0 %v3714
    %3745 = vmatmul.f32.gmra.mxu0 %v3724
    %v3746 = vpop.f32.mrf.mxu0
    %v3747 = vadd.f32 %v3721, %v3746
    %3748 = vmatmul.f32.gmra.mxu0 %v3727
    %v3749 = vpop.f32.mrf.mxu0
    %v3750 = vadd.f32 %v3721, %v3749
    %3751 = vdwg.mxu0
    %v3752 = vmul.f32 %v3747, %v3747
    %v3753 = vmul.f32 %v3750, %v3750
    %v3754 = vmul.f32 %v3747, %v3752
    %v3755 = vmul.f32 %v3750, %v3753
    %v3756 = vmul.f32 %v3754, 0.044715
    %v3757 = vmul.f32 %v3755, 0.044715
    %v3758 = vadd.f32 %v3747, %v3756
    %v3759 = vadd.f32 %v3750, %v3757
    %v3760 = vmul.f32 %v3758, 0.7978846
    %v3761 = vmul.f32 %v3759, 0.7978846
    %v3762 = vtanh.pop %v3760
    %v3763 = vtanh.pop %v3761
    %v3764 = vadd.f32 %v3762, 1.0
    %v3765 = vadd.f32 %v3763, 1.0
    %v3766 = vmul.f32 %v3764, 0.5
    %v3767 = vmul.f32 %v3765, 0.5
    %v3768 = vmul.f32 %v3747, %v3766
    %v3769 = vmul.f32 %v3750, %v3767
    %s3770 = scalar_lea.vmem %s9, 256
    %v3771 = vld [vmem:[%s3770] sm:$0xff]
    %v3772 = vld [vmem:[%s3770 + $0x8] sm:$0xff]
    %v3773 = vld [vmem:[%s3770 + $0x10] sm:$0xff]
    %v3774 = vld [vmem:[%s3770 + $0x18] sm:$0xff]
    %v3775 = vld [vmem:[%s3770 + $0x20] sm:$0xff]
    %v3776 = vld [vmem:[%s3770 + $0x28] sm:$0xff]
    %v3777 = vld [vmem:[%s3770 + $0x30] sm:$0xff]
    %v3778 = vld [vmem:[%s3770 + $0x38] sm:$0xff]
    %v3779 = vld [vmem:[%s3770 + $0x40] sm:$0xff]
    %v3780 = vld [vmem:[%s3770 + $0x48] sm:$0xff]
    %v3781 = vld [vmem:[%s3770 + $0x50] sm:$0xff]
    %v3782 = vld [vmem:[%s3770 + $0x58] sm:$0xff]
    %v3783 = vld [vmem:[%s3770 + $0x60] sm:$0xff]
    %v3784 = vld [vmem:[%s3770 + $0x68] sm:$0xff]
    %v3785 = vld [vmem:[%s3770 + $0x70] sm:$0xff]
    %v3786 = vld [vmem:[%s3770 + $0x78] sm:$0xff]
    %s3787 = scalar_lea.vmem %s6, 15
    %v3788 = vld [vmem:[%s3787] sm:$0x1]
    %v3790 = vperm.slane %v3788, 0
    %3792 = vmatpush.msra.mxu0 %v3786
    %3793 = vmatpush.msra.mxu0 %v3785
    %3794 = vmatpush.msra.mxu0 %v3784
    %3795 = vmatpush.msra.mxu0 %v3783
    %3796 = vmatpush.msra.mxu0 %v3782
    %3797 = vmatpush.msra.mxu0 %v3781
    %3798 = vmatpush.msra.mxu0 %v3780
    %3799 = vmatpush.msra.mxu0 %v3779
    %3800 = vmatpush.msra.mxu0 %v3778
    %3801 = vmatpush.msra.mxu0 %v3777
    %3802 = vmatpush.msra.mxu0 %v3776
    %3803 = vmatpush.msra.mxu0 %v3775
    %3804 = vmatpush.msra.mxu0 %v3774
    %3805 = vmatpush.msra.mxu0 %v3773
    %3806 = vmatpush.msra.mxu0 %v3772
    %3807 = vmatpush.msra.mxu0 %v3771
    %3808 = vmatmul.f32.gmra.mxu0 %v3768
    %v3809 = vpop.f32.mrf.mxu0
    %v3810 = vadd.f32 %v3790, %v3809
    %3811 = vmatmul.f32.gmra.mxu0 %v3769
    %v3812 = vpop.f32.mrf.mxu0
    %v3813 = vadd.f32 %v3790, %v3812
    %3814 = vdwg.mxu0
    %v3815 = vadd.f32 %v3810, %v3711
    %v3816 = vadd.f32 %v3813, %v3712
    %s3817 = scalar_lea.vmem %s6, 16
    %v3818 = vld [vmem:[%s3817] sm:$0x1]
    %s3819 = scalar_lea.vmem %s6, 17
    %v3820 = vld [vmem:[%s3819] sm:$0x1]
    %v3821 = vsel %vm41, %v3815, 0.0
    %3822 = vadd.xlane.f32.xlu0 %v3821
    %v3823 = vpop.xlane.xlu0 %3822
    %v3824 = vsel %vm41, %v3816, 0.0
    %3825 = vadd.xlane.f32.xlu0 %v3824
    %v3826 = vpop.xlane.xlu0 %3825
    %v3827 = vmul.f32 %v3823, %v54
    %v3828 = vmul.f32 %v3826, %v54
    %v3829 = vsub.f32 %v3815, %v3827
    %v3830 = vsub.f32 %v3816, %v3828
    %v3831 = vmul.f32 %v3829, %v3829
    %v3832 = vmul.f32 %v3830, %v3830
    %v3833 = vsel %vm41, %v3831, 0.0
    %3834 = vadd.xlane.f32.xlu0 %v3833
    %v3835 = vpop.xlane.xlu0 %3834
    %v3836 = vsel %vm41, %v3832, 0.0
    %3837 = vadd.xlane.f32.xlu0 %v3836
    %v3838 = vpop.xlane.xlu0 %3837
    %v3839 = vmul.f32 %v3835, %v54
    %v3840 = vmul.f32 %v3838, %v54
    %v3841 = vadd.f32 %v3839, 1e-05
    %v3842 = vadd.f32 %v3840, 1e-05
    %v3843 = vrsqrt.pop %v3841
    %v3844 = vmul.f32 %v3843, %v3841
    %v3845 = vmul.f32 %v3844, %v3843
    %v3846 = vmul.f32 0.5, %v3845
    %v3847 = vsub.f32 1.5, %v3846
    %v3848 = vmul.f32 %v3843, %v3847
    %vm3849 = vweird.f32 %v3841
    %vm3850 = vweird.f32 %v3843
    %vm3851 = vmor %vm3849, %vm3850
    %v3852 = vsel %vm3851, %v3843, %v3848
    %v3853 = vrsqrt.pop %v3842
    %v3854 = vmul.f32 %v3853, %v3842
    %v3855 = vmul.f32 %v3854, %v3853
    %v3856 = vmul.f32 0.5, %v3855
    %v3857 = vsub.f32 1.5, %v3856
    %v3858 = vmul.f32 %v3853, %v3857
    %vm3859 = vweird.f32 %v3842
    %vm3860 = vweird.f32 %v3853
    %vm3861 = vmor %vm3859, %vm3860
    %v3862 = vsel %vm3861, %v3853, %v3858
    %v3863 = vmul.f32 %v3829, %v3852
    %v3864 = vmul.f32 %v3830, %v3862
    %v3866 = vperm.slane %v3818, 0
    %v3868 = vmul.f32 %v3863, %v3866
    %v3869 = vmul.f32 %v3864, %v3866
    %v3871 = vperm.slane %v3820, 0
    %v3873 = vadd.f32 %v3868, %v3871
    %v3874 = vadd.f32 %v3869, %v3871
    %v3875 = vadd.f32 %v2618, %v3873
    %v3876 = vadd.f32 %v2619, %v3874
    %s3877 = scalar_lea.vmem %s3, 1152
    %v3878 = vld [vmem:[%s3877] sm:$0xff]
    %v3879 = vld [vmem:[%s3877 + $0x8] sm:$0xff]
    %v3880 = vld [vmem:[%s3877 + $0x10] sm:$0xff]
    %v3881 = vld [vmem:[%s3877 + $0x18] sm:$0xff]
    %s3882 = scalar_lea.vmem %s4, 36
    %v3883 = vld [vmem:[%s3882] sm:$0x1]
    %v3885 = vperm.slane %v3883, 0
    %v3888 = vsel %vm41, %v3873, 0
    %v3891 = vsel %vm41, %v3874, 0
    %3893 = vmatpush.msra.mxu0 0.0
    %3894 = vmatpush.msra.mxu0 0.0
    %3895 = vmatpush.msra.mxu0 0.0
    %3896 = vmatpush.msra.mxu0 0.0
    %3897 = vmatpush.msra.mxu0 0.0
    %3898 = vmatpush.msra.mxu0 0.0
    %3899 = vmatpush.msra.mxu0 0.0
    %3900 = vmatpush.msra.mxu0 0.0
    %3901 = vmatpush.msra.mxu0 0.0
    %3902 = vmatpush.msra.mxu0 0.0
    %3903 = vmatpush.msra.mxu0 0.0
    %3904 = vmatpush.msra.mxu0 0.0
    %3905 = vmatpush.msra.mxu0 %v3881
    %3906 = vmatpush.msra.mxu0 %v3880
    %3907 = vmatpush.msra.mxu0 %v3879
    %3908 = vmatpush.msra.mxu0 %v3878
    %3909 = vmatmul.f32.gmra.mxu0 %v3888
    %v3910 = vpop.f32.mrf.mxu0
    %v3911 = vadd.f32 %v3885, %v3910
    %3912 = vmatmul.f32.gmra.mxu0 %v3891
    %v3913 = vpop.f32.mrf.mxu0
    %v3914 = vadd.f32 %v3885, %v3913
    %3915 = vdwg.mxu0
    %s3916 = scalar_lea.vmem %s3, 1280
    %v3917 = vld [vmem:[%s3916] sm:$0xff]
    %v3918 = vld [vmem:[%s3916 + $0x8] sm:$0xff]
    %v3919 = vld [vmem:[%s3916 + $0x10] sm:$0xff]
    %v3920 = vld [vmem:[%s3916 + $0x18] sm:$0xff]
    %s3921 = scalar_lea.vmem %s4, 40
    %v3922 = vld [vmem:[%s3921] sm:$0x1]
    %v3924 = vperm.slane %v3922, 0
    %3926 = vmatpush.msra.mxu0 0.0
    %3927 = vmatpush.msra.mxu0 0.0
    %3928 = vmatpush.msra.mxu0 0.0
    %3929 = vmatpush.msra.mxu0 0.0
    %3930 = vmatpush.msra.mxu0 0.0
    %3931 = vmatpush.msra.mxu0 0.0
    %3932 = vmatpush.msra.mxu0 0.0
    %3933 = vmatpush.msra.mxu0 0.0
    %3934 = vmatpush.msra.mxu0 0.0
    %3935 = vmatpush.msra.mxu0 0.0
    %3936 = vmatpush.msra.mxu0 0.0
    %3937 = vmatpush.msra.mxu0 0.0
    %3938 = vmatpush.msra.mxu0 %v3920
    %3939 = vmatpush.msra.mxu0 %v3919
    %3940 = vmatpush.msra.mxu0 %v3918
    %3941 = vmatpush.msra.mxu0 %v3917
    %3942 = vmatmul.f32.gmra.mxu0 %v3888
    %v3943 = vpop.f32.mrf.mxu0
    %v3944 = vadd.f32 %v3924, %v3943
    %3945 = vmatmul.f32.gmra.mxu0 %v3891
    %v3946 = vpop.f32.mrf.mxu0
    %v3947 = vadd.f32 %v3924, %v3946
    %3948 = vdwg.mxu0
    %s3949 = scalar_lea.vmem %s3, 1408
    %v3950 = vld [vmem:[%s3949] sm:$0xff]
    %v3951 = vld [vmem:[%s3949 + $0x8] sm:$0xff]
    %v3952 = vld [vmem:[%s3949 + $0x10] sm:$0xff]
    %v3953 = vld [vmem:[%s3949 + $0x18] sm:$0xff]
    %s3954 = scalar_lea.vmem %s4, 44
    %v3955 = vld [vmem:[%s3954] sm:$0x1]
    %v3957 = vperm.slane %v3955, 0
    %3959 = vmatpush.msra.mxu0 0.0
    %3960 = vmatpush.msra.mxu0 0.0
    %3961 = vmatpush.msra.mxu0 0.0
    %3962 = vmatpush.msra.mxu0 0.0
    %3963 = vmatpush.msra.mxu0 0.0
    %3964 = vmatpush.msra.mxu0 0.0
    %3965 = vmatpush.msra.mxu0 0.0
    %3966 = vmatpush.msra.mxu0 0.0
    %3967 = vmatpush.msra.mxu0 0.0
    %3968 = vmatpush.msra.mxu0 0.0
    %3969 = vmatpush.msra.mxu0 0.0
    %3970 = vmatpush.msra.mxu0 0.0
    %3971 = vmatpush.msra.mxu0 %v3953
    %3972 = vmatpush.msra.mxu0 %v3952
    %3973 = vmatpush.msra.mxu0 %v3951
    %3974 = vmatpush.msra.mxu0 %v3950
    %3975 = vmatmul.f32.gmra.mxu0 %v3888
    %v3976 = vpop.f32.mrf.mxu0
    %v3977 = vadd.f32 %v3957, %v3976
    %3978 = vmatmul.f32.gmra.mxu0 %v3891
    %v3979 = vpop.f32.mrf.mxu0
    %v3980 = vadd.f32 %v3957, %v3979
    %3981 = vdwg.mxu0
    %v3983 = vsel %vm211, %v3911, 0
    %v3986 = vsel %vm211, %v3944, 0
    %3988 = vmatpush.xpose.msra.mxu0 0.0
    %3989 = vmatpush.xpose.msra.mxu0 0.0
    %3990 = vmatpush.xpose.msra.mxu0 0.0
    %3991 = vmatpush.xpose.msra.mxu0 0.0
    %3992 = vmatpush.xpose.msra.mxu0 0.0
    %3993 = vmatpush.xpose.msra.mxu0 0.0
    %3994 = vmatpush.xpose.msra.mxu0 0.0
    %3995 = vmatpush.xpose.msra.mxu0 0.0
    %3996 = vmatpush.xpose.msra.mxu0 0.0
    %3997 = vmatpush.xpose.msra.mxu0 0.0
    %3998 = vmatpush.xpose.msra.mxu0 0.0
    %3999 = vmatpush.xpose.msra.mxu0 0.0
    %4000 = vmatpush.xpose.msra.mxu0 0.0
    %4001 = vmatpush.xpose.msra.mxu0 0.0
    %4002 = vmatpush.xpose.msra.mxu0 0.0
    %4003 = vmatpush.xpose.msra.mxu0 %v3986
    %4004 = vmatmul.f32.gmra.mxu0 %v3983
    %v4005 = vpop.f32.mrf.mxu0
    %v4006 = vadd.f32 0.0, %v4005
    %4007 = vdwg.mxu0
    %v4009 = vsel %vm211, %v3914, 0
    %v4012 = vsel %vm211, %v3947, 0
    %4014 = vmatpush.xpose.msra.mxu0 0.0
    %4015 = vmatpush.xpose.msra.mxu0 0.0
    %4016 = vmatpush.xpose.msra.mxu0 0.0
    %4017 = vmatpush.xpose.msra.mxu0 0.0
    %4018 = vmatpush.xpose.msra.mxu0 0.0
    %4019 = vmatpush.xpose.msra.mxu0 0.0
    %4020 = vmatpush.xpose.msra.mxu0 0.0
    %4021 = vmatpush.xpose.msra.mxu0 0.0
    %4022 = vmatpush.xpose.msra.mxu0 0.0
    %4023 = vmatpush.xpose.msra.mxu0 0.0
    %4024 = vmatpush.xpose.msra.mxu0 0.0
    %4025 = vmatpush.xpose.msra.mxu0 0.0
    %4026 = vmatpush.xpose.msra.mxu0 0.0
    %4027 = vmatpush.xpose.msra.mxu0 0.0
    %4028 = vmatpush.xpose.msra.mxu0 0.0
    %4029 = vmatpush.xpose.msra.mxu0 %v4012
    %4030 = vmatmul.f32.gmra.mxu0 %v4009
    %v4031 = vpop.f32.mrf.mxu0
    %v4032 = vadd.f32 0.0, %v4031
    %4033 = vdwg.mxu0
    %v4034 = vmul.f32 %v4006, 0.35355338
    %v4035 = vmul.f32 %v4032, 0.35355338
    %v4036 = vadd.f32 %v4034, %v266
    %v4037 = vadd.f32 %v4035, %v267
    %v4038 = vsel %vm211, %v4036, -inf
    %4039 = vmax.xlane.f32.xlu0 %v4038
    %v4040 = vpop.xlane.xlu0 %4039
    %v4041 = vsel %vm211, %v4037, -inf
    %4042 = vmax.xlane.f32.xlu0 %v4041
    %v4043 = vpop.xlane.xlu0 %4042
    %v4044 = vsub.f32 %v4036, %v4040
    %v4045 = vsub.f32 %v4037, %v4043
    %v4046 = vmul.f32 %v4044, 1.442695
    %v4047 = vpow.pop %v4046
    %v4048 = vmul.f32 %v4045, 1.442695
    %v4049 = vpow.pop %v4048
    %v4050 = vsel %vm211, %v4047, 0.0
    %4051 = vadd.xlane.f32.xlu0 %v4050
    %v4052 = vpop.xlane.xlu0 %4051
    %v4053 = vsel %vm211, %v4049, 0.0
    %4054 = vadd.xlane.f32.xlu0 %v4053
    %v4055 = vpop.xlane.xlu0 %4054
    %v4056 = vrcp.pop %v4052
    %v4057 = vrcp.pop %v4055
    %v4058 = vmul.f32 %v4047, %v4056
    %v4059 = vmul.f32 %v4049, %v4057
    %v4061 = vsel %vm211, %v4058, 0
    %4063 = vmatpush.msra.mxu0 0.0
    %4064 = vmatpush.msra.mxu0 0.0
    %4065 = vmatpush.msra.mxu0 0.0
    %4066 = vmatpush.msra.mxu0 0.0
    %4067 = vmatpush.msra.mxu0 0.0
    %4068 = vmatpush.msra.mxu0 0.0
    %4069 = vmatpush.msra.mxu0 0.0
    %4070 = vmatpush.msra.mxu0 0.0
    %4071 = vmatpush.msra.mxu0 0.0
    %4072 = vmatpush.msra.mxu0 0.0
    %4073 = vmatpush.msra.mxu0 0.0
    %4074 = vmatpush.msra.mxu0 0.0
    %4075 = vmatpush.msra.mxu0 0.0
    %4076 = vmatpush.msra.mxu0 0.0
    %4077 = vmatpush.msra.mxu0 0.0
    %4078 = vmatpush.msra.mxu0 %v3977
    %4079 = vmatmul.f32.gmra.mxu0 %v4061
    %v4080 = vpop.f32.mrf.mxu0
    %v4081 = vadd.f32 0.0, %v4080
    %4082 = vdwg.mxu0
    %v4084 = vsel %vm211, %v4059, 0
    %4086 = vmatpush.msra.mxu0 0.0
    %4087 = vmatpush.msra.mxu0 0.0
    %4088 = vmatpush.msra.mxu0 0.0
    %4089 = vmatpush.msra.mxu0 0.0
    %4090 = vmatpush.msra.mxu0 0.0
    %4091 = vmatpush.msra.mxu0 0.0
    %4092 = vmatpush.msra.mxu0 0.0
    %4093 = vmatpush.msra.mxu0 0.0
    %4094 = vmatpush.msra.mxu0 0.0
    %4095 = vmatpush.msra.mxu0 0.0
    %4096 = vmatpush.msra.mxu0 0.0
    %4097 = vmatpush.msra.mxu0 0.0
    %4098 = vmatpush.msra.mxu0 0.0
    %4099 = vmatpush.msra.mxu0 0.0
    %4100 = vmatpush.msra.mxu0 0.0
    %4101 = vmatpush.msra.mxu0 %v3980
    %4102 = vmatmul.f32.gmra.mxu0 %v4084
    %v4103 = vpop.f32.mrf.mxu0
    %v4104 = vadd.f32 0.0, %v4103
    %4105 = vdwg.mxu0
    %s4106 = scalar_lea.vmem %s5, 96
    %v4107 = vld [vmem:[%s4106] sm:$0xff]
    %s4108 = scalar_lea.vmem %s3, 1184
    %v4109 = vld [vmem:[%s4108] sm:$0xff]
    %v4110 = vld [vmem:[%s4108 + $0x8] sm:$0xff]
    %v4111 = vld [vmem:[%s4108 + $0x10] sm:$0xff]
    %v4112 = vld [vmem:[%s4108 + $0x18] sm:$0xff]
    %s4113 = scalar_lea.vmem %s4, 37
    %v4114 = vld [vmem:[%s4113] sm:$0x1]
    %v4116 = vperm.slane %v4114, 0
    %4118 = vmatpush.msra.mxu0 0.0
    %4119 = vmatpush.msra.mxu0 0.0
    %4120 = vmatpush.msra.mxu0 0.0
    %4121 = vmatpush.msra.mxu0 0.0
    %4122 = vmatpush.msra.mxu0 0.0
    %4123 = vmatpush.msra.mxu0 0.0
    %4124 = vmatpush.msra.mxu0 0.0
    %4125 = vmatpush.msra.mxu0 0.0
    %4126 = vmatpush.msra.mxu0 0.0
    %4127 = vmatpush.msra.mxu0 0.0
    %4128 = vmatpush.msra.mxu0 0.0
    %4129 = vmatpush.msra.mxu0 0.0
    %4130 = vmatpush.msra.mxu0 %v4112
    %4131 = vmatpush.msra.mxu0 %v4111
    %4132 = vmatpush.msra.mxu0 %v4110
    %4133 = vmatpush.msra.mxu0 %v4109
    %4134 = vmatmul.f32.gmra.mxu0 %v3888
    %v4135 = vpop.f32.mrf.mxu0
    %v4136 = vadd.f32 %v4116, %v4135
    %4137 = vmatmul.f32.gmra.mxu0 %v3891
    %v4138 = vpop.f32.mrf.mxu0
    %v4139 = vadd.f32 %v4116, %v4138
    %4140 = vdwg.mxu0
    %s4141 = scalar_lea.vmem %s3, 1312
    %v4142 = vld [vmem:[%s4141] sm:$0xff]
    %v4143 = vld [vmem:[%s4141 + $0x8] sm:$0xff]
    %v4144 = vld [vmem:[%s4141 + $0x10] sm:$0xff]
    %v4145 = vld [vmem:[%s4141 + $0x18] sm:$0xff]
    %s4146 = scalar_lea.vmem %s4, 41
    %v4147 = vld [vmem:[%s4146] sm:$0x1]
    %v4149 = vperm.slane %v4147, 0
    %4151 = vmatpush.msra.mxu0 0.0
    %4152 = vmatpush.msra.mxu0 0.0
    %4153 = vmatpush.msra.mxu0 0.0
    %4154 = vmatpush.msra.mxu0 0.0
    %4155 = vmatpush.msra.mxu0 0.0
    %4156 = vmatpush.msra.mxu0 0.0
    %4157 = vmatpush.msra.mxu0 0.0
    %4158 = vmatpush.msra.mxu0 0.0
    %4159 = vmatpush.msra.mxu0 0.0
    %4160 = vmatpush.msra.mxu0 0.0
    %4161 = vmatpush.msra.mxu0 0.0
    %4162 = vmatpush.msra.mxu0 0.0
    %4163 = vmatpush.msra.mxu0 %v4145
    %4164 = vmatpush.msra.mxu0 %v4144
    %4165 = vmatpush.msra.mxu0 %v4143
    %4166 = vmatpush.msra.mxu0 %v4142
    %4167 = vmatmul.f32.gmra.mxu0 %v3888
    %v4168 = vpop.f32.mrf.mxu0
    %v4169 = vadd.f32 %v4149, %v4168
    %4170 = vmatmul.f32.gmra.mxu0 %v3891
    %v4171 = vpop.f32.mrf.mxu0
    %v4172 = vadd.f32 %v4149, %v4171
    %4173 = vdwg.mxu0
    %s4174 = scalar_lea.vmem %s3, 1440
    %v4175 = vld [vmem:[%s4174] sm:$0xff]
    %v4176 = vld [vmem:[%s4174 + $0x8] sm:$0xff]
    %v4177 = vld [vmem:[%s4174 + $0x10] sm:$0xff]
    %v4178 = vld [vmem:[%s4174 + $0x18] sm:$0xff]
    %s4179 = scalar_lea.vmem %s4, 45
    %v4180 = vld [vmem:[%s4179] sm:$0x1]
    %v4182 = vperm.slane %v4180, 0
    %4184 = vmatpush.msra.mxu0 0.0
    %4185 = vmatpush.msra.mxu0 0.0
    %4186 = vmatpush.msra.mxu0 0.0
    %4187 = vmatpush.msra.mxu0 0.0
    %4188 = vmatpush.msra.mxu0 0.0
    %4189 = vmatpush.msra.mxu0 0.0
    %4190 = vmatpush.msra.mxu0 0.0
    %4191 = vmatpush.msra.mxu0 0.0
    %4192 = vmatpush.msra.mxu0 0.0
    %4193 = vmatpush.msra.mxu0 0.0
    %4194 = vmatpush.msra.mxu0 0.0
    %4195 = vmatpush.msra.mxu0 0.0
    %4196 = vmatpush.msra.mxu0 %v4178
    %4197 = vmatpush.msra.mxu0 %v4177
    %4198 = vmatpush.msra.mxu0 %v4176
    %4199 = vmatpush.msra.mxu0 %v4175
    %4200 = vmatmul.f32.gmra.mxu0 %v3888
    %v4201 = vpop.f32.mrf.mxu0
    %v4202 = vadd.f32 %v4182, %v4201
    %4203 = vmatmul.f32.gmra.mxu0 %v3891
    %v4204 = vpop.f32.mrf.mxu0
    %v4205 = vadd.f32 %v4182, %v4204
    %4206 = vdwg.mxu0
    %v4208 = vsel %vm211, %v4136, 0
    %v4211 = vsel %vm211, %v4169, 0
    %4213 = vmatpush.xpose.msra.mxu0 0.0
    %4214 = vmatpush.xpose.msra.mxu0 0.0
    %4215 = vmatpush.xpose.msra.mxu0 0.0
    %4216 = vmatpush.xpose.msra.mxu0 0.0
    %4217 = vmatpush.xpose.msra.mxu0 0.0
    %4218 = vmatpush.xpose.msra.mxu0 0.0
    %4219 = vmatpush.xpose.msra.mxu0 0.0
    %4220 = vmatpush.xpose.msra.mxu0 0.0
    %4221 = vmatpush.xpose.msra.mxu0 0.0
    %4222 = vmatpush.xpose.msra.mxu0 0.0
    %4223 = vmatpush.xpose.msra.mxu0 0.0
    %4224 = vmatpush.xpose.msra.mxu0 0.0
    %4225 = vmatpush.xpose.msra.mxu0 0.0
    %4226 = vmatpush.xpose.msra.mxu0 0.0
    %4227 = vmatpush.xpose.msra.mxu0 0.0
    %4228 = vmatpush.xpose.msra.mxu0 %v4211
    %4229 = vmatmul.f32.gmra.mxu0 %v4208
    %v4230 = vpop.f32.mrf.mxu0
    %v4231 = vadd.f32 0.0, %v4230
    %4232 = vdwg.mxu0
    %v4234 = vsel %vm211, %v4139, 0
    %v4237 = vsel %vm211, %v4172, 0
    %4239 = vmatpush.xpose.msra.mxu0 0.0
    %4240 = vmatpush.xpose.msra.mxu0 0.0
    %4241 = vmatpush.xpose.msra.mxu0 0.0
    %4242 = vmatpush.xpose.msra.mxu0 0.0
    %4243 = vmatpush.xpose.msra.mxu0 0.0
    %4244 = vmatpush.xpose.msra.mxu0 0.0
    %4245 = vmatpush.xpose.msra.mxu0 0.0
    %4246 = vmatpush.xpose.msra.mxu0 0.0
    %4247 = vmatpush.xpose.msra.mxu0 0.0
    %4248 = vmatpush.xpose.msra.mxu0 0.0
    %4249 = vmatpush.xpose.msra.mxu0 0.0
    %4250 = vmatpush.xpose.msra.mxu0 0.0
    %4251 = vmatpush.xpose.msra.mxu0 0.0
    %4252 = vmatpush.xpose.msra.mxu0 0.0
    %4253 = vmatpush.xpose.msra.mxu0 0.0
    %4254 = vmatpush.xpose.msra.mxu0 %v4237
    %4255 = vmatmul.f32.gmra.mxu0 %v4234
    %v4256 = vpop.f32.mrf.mxu0
    %v4257 = vadd.f32 0.0, %v4256
    %4258 = vdwg.mxu0
    %v4259 = vmul.f32 %v4231, 0.35355338
    %v4260 = vmul.f32 %v4257, 0.35355338
    %v4261 = vadd.f32 %v4259, %v266
    %v4262 = vadd.f32 %v4260, %v267
    %v4263 = vsel %vm211, %v4261, -inf
    %4264 = vmax.xlane.f32.xlu0 %v4263
    %v4265 = vpop.xlane.xlu0 %4264
    %v4266 = vsel %vm211, %v4262, -inf
    %4267 = vmax.xlane.f32.xlu0 %v4266
    %v4268 = vpop.xlane.xlu0 %4267
    %v4269 = vsub.f32 %v4261, %v4265
    %v4270 = vsub.f32 %v4262, %v4268
    %v4271 = vmul.f32 %v4269, 1.442695
    %v4272 = vpow.pop %v4271
    %v4273 = vmul.f32 %v4270, 1.442695
    %v4274 = vpow.pop %v4273
    %v4275 = vsel %vm211, %v4272, 0.0
    %4276 = vadd.xlane.f32.xlu0 %v4275
    %v4277 = vpop.xlane.xlu0 %4276
    %v4278 = vsel %vm211, %v4274, 0.0
    %4279 = vadd.xlane.f32.xlu0 %v4278
    %v4280 = vpop.xlane.xlu0 %4279
    %v4281 = vrcp.pop %v4277
    %v4282 = vrcp.pop %v4280
    %v4283 = vmul.f32 %v4272, %v4281
    %v4284 = vmul.f32 %v4274, %v4282
    %v4286 = vsel %vm211, %v4283, 0
    %4288 = vmatpush.msra.mxu0 0.0
    %4289 = vmatpush.msra.mxu0 0.0
    %4290 = vmatpush.msra.mxu0 0.0
    %4291 = vmatpush.msra.mxu0 0.0
    %4292 = vmatpush.msra.mxu0 0.0
    %4293 = vmatpush.msra.mxu0 0.0
    %4294 = vmatpush.msra.mxu0 0.0
    %4295 = vmatpush.msra.mxu0 0.0
    %4296 = vmatpush.msra.mxu0 0.0
    %4297 = vmatpush.msra.mxu0 0.0
    %4298 = vmatpush.msra.mxu0 0.0
    %4299 = vmatpush.msra.mxu0 0.0
    %4300 = vmatpush.msra.mxu0 0.0
    %4301 = vmatpush.msra.mxu0 0.0
    %4302 = vmatpush.msra.mxu0 0.0
    %4303 = vmatpush.msra.mxu0 %v4202
    %4304 = vmatmul.f32.gmra.mxu0 %v4286
    %v4305 = vpop.f32.mrf.mxu0
    %v4306 = vadd.f32 0.0, %v4305
    %4307 = vdwg.mxu0
    %v4309 = vsel %vm211, %v4284, 0
    %4311 = vmatpush.msra.mxu0 0.0
    %4312 = vmatpush.msra.mxu0 0.0
    %4313 = vmatpush.msra.mxu0 0.0
    %4314 = vmatpush.msra.mxu0 0.0
    %4315 = vmatpush.msra.mxu0 0.0
    %4316 = vmatpush.msra.mxu0 0.0
    %4317 = vmatpush.msra.mxu0 0.0
    %4318 = vmatpush.msra.mxu0 0.0
    %4319 = vmatpush.msra.mxu0 0.0
    %4320 = vmatpush.msra.mxu0 0.0
    %4321 = vmatpush.msra.mxu0 0.0
    %4322 = vmatpush.msra.mxu0 0.0
    %4323 = vmatpush.msra.mxu0 0.0
    %4324 = vmatpush.msra.mxu0 0.0
    %4325 = vmatpush.msra.mxu0 0.0
    %4326 = vmatpush.msra.mxu0 %v4205
    %4327 = vmatmul.f32.gmra.mxu0 %v4309
    %v4328 = vpop.f32.mrf.mxu0
    %v4329 = vadd.f32 0.0, %v4328
    %4330 = vdwg.mxu0
    %s4331 = scalar_lea.vmem %s5, 104
    %v4332 = vld [vmem:[%s4331] sm:$0xff]
    %v4334 = vsel %vm211, %v4306, 0
    %v4337 = vsel %vm211, %v4329, 0
    %4339 = vmatpush.msra.mxu0 0.0
    %4340 = vmatpush.msra.mxu0 0.0
    %4341 = vmatpush.msra.mxu0 0.0
    %4342 = vmatpush.msra.mxu0 0.0
    %4343 = vmatpush.msra.mxu0 0.0
    %4344 = vmatpush.msra.mxu0 0.0
    %4345 = vmatpush.msra.mxu0 0.0
    %4346 = vmatpush.msra.mxu0 0.0
    %4347 = vmatpush.msra.mxu0 0.0
    %4348 = vmatpush.msra.mxu0 0.0
    %4349 = vmatpush.msra.mxu0 0.0
    %4350 = vmatpush.msra.mxu0 0.0
    %4351 = vmatpush.msra.mxu0 0.0
    %4352 = vmatpush.msra.mxu0 0.0
    %4353 = vmatpush.msra.mxu0 0.0
    %4354 = vmatpush.msra.mxu0 %v4332
    %4355 = vmatmul.f32.gmra.mxu0 %v4334
    %v4356 = vpop.f32.mrf.mxu0
    %v4357 = vadd.f32 0.0, %v4356
    %4358 = vmatmul.f32.gmra.mxu0 %v4337
    %v4359 = vpop.f32.mrf.mxu0
    %v4360 = vadd.f32 0.0, %v4359
    %4361 = vdwg.mxu0
    %v4363 = vsel %vm211, %v4081, 0
    %v4366 = vsel %vm211, %v4104, 0
    %4368 = vmatpush.msra.mxu0 0.0
    %4369 = vmatpush.msra.mxu0 0.0
    %4370 = vmatpush.msra.mxu0 0.0
    %4371 = vmatpush.msra.mxu0 0.0
    %4372 = vmatpush.msra.mxu0 0.0
    %4373 = vmatpush.msra.mxu0 0.0
    %4374 = vmatpush.msra.mxu0 0.0
    %4375 = vmatpush.msra.mxu0 0.0
    %4376 = vmatpush.msra.mxu0 0.0
    %4377 = vmatpush.msra.mxu0 0.0
    %4378 = vmatpush.msra.mxu0 0.0
    %4379 = vmatpush.msra.mxu0 0.0
    %4380 = vmatpush.msra.mxu0 0.0
    %4381 = vmatpush.msra.mxu0 0.0
    %4382 = vmatpush.msra.mxu0 0.0
    %4383 = vmatpush.msra.mxu0 %v4107
    %4384 = vmatmul.f32.gmra.mxu0 %v4363
    %v4385 = vpop.f32.mrf.mxu0
    %v4386 = vadd.f32 %v4357, %v4385
    %4387 = vmatmul.f32.gmra.mxu0 %v4366
    %v4388 = vpop.f32.mrf.mxu0
    %v4389 = vadd.f32 %v4360, %v4388
    %4390 = vdwg.mxu0
    %s4391 = scalar_lea.vmem %s3, 1216
    %v4392 = vld [vmem:[%s4391] sm:$0xff]
    %v4393 = vld [vmem:[%s4391 + $0x8] sm:$0xff]
    %v4394 = vld [vmem:[%s4391 + $0x10] sm:$0xff]
    %v4395 = vld [vmem:[%s4391 + $0x18] sm:$0xff]
    %s4396 = scalar_lea.vmem %s4, 38
    %v4397 = vld [vmem:[%s4396] sm:$0x1]
    %v4399 = vperm.slane %v4397, 0
    %4401 = vmatpush.msra.mxu0 0.0
    %4402 = vmatpush.msra.mxu0 0.0
    %4403 = vmatpush.msra.mxu0 0.0
    %4404 = vmatpush.msra.mxu0 0.0
    %4405 = vmatpush.msra.mxu0 0.0
    %4406 = vmatpush.msra.mxu0 0.0
    %4407 = vmatpush.msra.mxu0 0.0
    %4408 = vmatpush.msra.mxu0 0.0
    %4409 = vmatpush.msra.mxu0 0.0
    %4410 = vmatpush.msra.mxu0 0.0
    %4411 = vmatpush.msra.mxu0 0.0
    %4412 = vmatpush.msra.mxu0 0.0
    %4413 = vmatpush.msra.mxu0 %v4395
    %4414 = vmatpush.msra.mxu0 %v4394
    %4415 = vmatpush.msra.mxu0 %v4393
    %4416 = vmatpush.msra.mxu0 %v4392
    %4417 = vmatmul.f32.gmra.mxu0 %v3888
    %v4418 = vpop.f32.mrf.mxu0
    %v4419 = vadd.f32 %v4399, %v4418
    %4420 = vmatmul.f32.gmra.mxu0 %v3891
    %v4421 = vpop.f32.mrf.mxu0
    %v4422 = vadd.f32 %v4399, %v4421
    %4423 = vdwg.mxu0
    %s4424 = scalar_lea.vmem %s3, 1344
    %v4425 = vld [vmem:[%s4424] sm:$0xff]
    %v4426 = vld [vmem:[%s4424 + $0x8] sm:$0xff]
    %v4427 = vld [vmem:[%s4424 + $0x10] sm:$0xff]
    %v4428 = vld [vmem:[%s4424 + $0x18] sm:$0xff]
    %s4429 = scalar_lea.vmem %s4, 42
    %v4430 = vld [vmem:[%s4429] sm:$0x1]
    %v4432 = vperm.slane %v4430, 0
    %4434 = vmatpush.msra.mxu0 0.0
    %4435 = vmatpush.msra.mxu0 0.0
    %4436 = vmatpush.msra.mxu0 0.0
    %4437 = vmatpush.msra.mxu0 0.0
    %4438 = vmatpush.msra.mxu0 0.0
    %4439 = vmatpush.msra.mxu0 0.0
    %4440 = vmatpush.msra.mxu0 0.0
    %4441 = vmatpush.msra.mxu0 0.0
    %4442 = vmatpush.msra.mxu0 0.0
    %4443 = vmatpush.msra.mxu0 0.0
    %4444 = vmatpush.msra.mxu0 0.0
    %4445 = vmatpush.msra.mxu0 0.0
    %4446 = vmatpush.msra.mxu0 %v4428
    %4447 = vmatpush.msra.mxu0 %v4427
    %4448 = vmatpush.msra.mxu0 %v4426
    %4449 = vmatpush.msra.mxu0 %v4425
    %4450 = vmatmul.f32.gmra.mxu0 %v3888
    %v4451 = vpop.f32.mrf.mxu0
    %v4452 = vadd.f32 %v4432, %v4451
    %4453 = vmatmul.f32.gmra.mxu0 %v3891
    %v4454 = vpop.f32.mrf.mxu0
    %v4455 = vadd.f32 %v4432, %v4454
    %4456 = vdwg.mxu0
    %s4457 = scalar_lea.vmem %s3, 1472
    %v4458 = vld [vmem:[%s4457] sm:$0xff]
    %v4459 = vld [vmem:[%s4457 + $0x8] sm:$0xff]
    %v4460 = vld [vmem:[%s4457 + $0x10] sm:$0xff]
    %v4461 = vld [vmem:[%s4457 + $0x18] sm:$0xff]
    %s4462 = scalar_lea.vmem %s4, 46
    %v4463 = vld [vmem:[%s4462] sm:$0x1]
    %v4465 = vperm.slane %v4463, 0
    %4467 = vmatpush.msra.mxu0 0.0
    %4468 = vmatpush.msra.mxu0 0.0
    %4469 = vmatpush.msra.mxu0 0.0
    %4470 = vmatpush.msra.mxu0 0.0
    %4471 = vmatpush.msra.mxu0 0.0
    %4472 = vmatpush.msra.mxu0 0.0
    %4473 = vmatpush.msra.mxu0 0.0
    %4474 = vmatpush.msra.mxu0 0.0
    %4475 = vmatpush.msra.mxu0 0.0
    %4476 = vmatpush.msra.mxu0 0.0
    %4477 = vmatpush.msra.mxu0 0.0
    %4478 = vmatpush.msra.mxu0 0.0
    %4479 = vmatpush.msra.mxu0 %v4461
    %4480 = vmatpush.msra.mxu0 %v4460
    %4481 = vmatpush.msra.mxu0 %v4459
    %4482 = vmatpush.msra.mxu0 %v4458
    %4483 = vmatmul.f32.gmra.mxu0 %v3888
    %v4484 = vpop.f32.mrf.mxu0
    %v4485 = vadd.f32 %v4465, %v4484
    %4486 = vmatmul.f32.gmra.mxu0 %v3891
    %v4487 = vpop.f32.mrf.mxu0
    %v4488 = vadd.f32 %v4465, %v4487
    %4489 = vdwg.mxu0
    %v4491 = vsel %vm211, %v4419, 0
    %v4494 = vsel %vm211, %v4452, 0
    %4496 = vmatpush.xpose.msra.mxu0 0.0
    %4497 = vmatpush.xpose.msra.mxu0 0.0
    %4498 = vmatpush.xpose.msra.mxu0 0.0
    %4499 = vmatpush.xpose.msra.mxu0 0.0
    %4500 = vmatpush.xpose.msra.mxu0 0.0
    %4501 = vmatpush.xpose.msra.mxu0 0.0
    %4502 = vmatpush.xpose.msra.mxu0 0.0
    %4503 = vmatpush.xpose.msra.mxu0 0.0
    %4504 = vmatpush.xpose.msra.mxu0 0.0
    %4505 = vmatpush.xpose.msra.mxu0 0.0
    %4506 = vmatpush.xpose.msra.mxu0 0.0
    %4507 = vmatpush.xpose.msra.mxu0 0.0
    %4508 = vmatpush.xpose.msra.mxu0 0.0
    %4509 = vmatpush.xpose.msra.mxu0 0.0
    %4510 = vmatpush.xpose.msra.mxu0 0.0
    %4511 = vmatpush.xpose.msra.mxu0 %v4494
    %4512 = vmatmul.f32.gmra.mxu0 %v4491
    %v4513 = vpop.f32.mrf.mxu0
    %v4514 = vadd.f32 0.0, %v4513
    %4515 = vdwg.mxu0
    %v4517 = vsel %vm211, %v4422, 0
    %v4520 = vsel %vm211, %v4455, 0
    %4522 = vmatpush.xpose.msra.mxu0 0.0
    %4523 = vmatpush.xpose.msra.mxu0 0.0
    %4524 = vmatpush.xpose.msra.mxu0 0.0
    %4525 = vmatpush.xpose.msra.mxu0 0.0
    %4526 = vmatpush.xpose.msra.mxu0 0.0
    %4527 = vmatpush.xpose.msra.mxu0 0.0
    %4528 = vmatpush.xpose.msra.mxu0 0.0
    %4529 = vmatpush.xpose.msra.mxu0 0.0
    %4530 = vmatpush.xpose.msra.mxu0 0.0
    %4531 = vmatpush.xpose.msra.mxu0 0.0
    %4532 = vmatpush.xpose.msra.mxu0 0.0
    %4533 = vmatpush.xpose.msra.mxu0 0.0
    %4534 = vmatpush.xpose.msra.mxu0 0.0
    %4535 = vmatpush.xpose.msra.mxu0 0.0
    %4536 = vmatpush.xpose.msra.mxu0 0.0
    %4537 = vmatpush.xpose.msra.mxu0 %v4520
    %4538 = vmatmul.f32.gmra.mxu0 %v4517
    %v4539 = vpop.f32.mrf.mxu0
    %v4540 = vadd.f32 0.0, %v4539
    %4541 = vdwg.mxu0
    %v4542 = vmul.f32 %v4514, 0.35355338
    %v4543 = vmul.f32 %v4540, 0.35355338
    %v4544 = vadd.f32 %v4542, %v266
    %v4545 = vadd.f32 %v4543, %v267
    %v4546 = vsel %vm211, %v4544, -inf
    %4547 = vmax.xlane.f32.xlu0 %v4546
    %v4548 = vpop.xlane.xlu0 %4547
    %v4549 = vsel %vm211, %v4545, -inf
    %4550 = vmax.xlane.f32.xlu0 %v4549
    %v4551 = vpop.xlane.xlu0 %4550
    %v4552 = vsub.f32 %v4544, %v4548
    %v4553 = vsub.f32 %v4545, %v4551
    %v4554 = vmul.f32 %v4552, 1.442695
    %v4555 = vpow.pop %v4554
    %v4556 = vmul.f32 %v4553, 1.442695
    %v4557 = vpow.pop %v4556
    %v4558 = vsel %vm211, %v4555, 0.0
    %4559 = vadd.xlane.f32.xlu0 %v4558
    %v4560 = vpop.xlane.xlu0 %4559
    %v4561 = vsel %vm211, %v4557, 0.0
    %4562 = vadd.xlane.f32.xlu0 %v4561
    %v4563 = vpop.xlane.xlu0 %4562
    %v4564 = vrcp.pop %v4560
    %v4565 = vrcp.pop %v4563
    %v4566 = vmul.f32 %v4555, %v4564
    %v4567 = vmul.f32 %v4557, %v4565
    %v4569 = vsel %vm211, %v4566, 0
    %4571 = vmatpush.msra.mxu0 0.0
    %4572 = vmatpush.msra.mxu0 0.0
    %4573 = vmatpush.msra.mxu0 0.0
    %4574 = vmatpush.msra.mxu0 0.0
    %4575 = vmatpush.msra.mxu0 0.0
    %4576 = vmatpush.msra.mxu0 0.0
    %4577 = vmatpush.msra.mxu0 0.0
    %4578 = vmatpush.msra.mxu0 0.0
    %4579 = vmatpush.msra.mxu0 0.0
    %4580 = vmatpush.msra.mxu0 0.0
    %4581 = vmatpush.msra.mxu0 0.0
    %4582 = vmatpush.msra.mxu0 0.0
    %4583 = vmatpush.msra.mxu0 0.0
    %4584 = vmatpush.msra.mxu0 0.0
    %4585 = vmatpush.msra.mxu0 0.0
    %4586 = vmatpush.msra.mxu0 %v4485
    %4587 = vmatmul.f32.gmra.mxu0 %v4569
    %v4588 = vpop.f32.mrf.mxu0
    %v4589 = vadd.f32 0.0, %v4588
    %4590 = vdwg.mxu0
    %v4592 = vsel %vm211, %v4567, 0
    %4594 = vmatpush.msra.mxu0 0.0
    %4595 = vmatpush.msra.mxu0 0.0
    %4596 = vmatpush.msra.mxu0 0.0
    %4597 = vmatpush.msra.mxu0 0.0
    %4598 = vmatpush.msra.mxu0 0.0
    %4599 = vmatpush.msra.mxu0 0.0
    %4600 = vmatpush.msra.mxu0 0.0
    %4601 = vmatpush.msra.mxu0 0.0
    %4602 = vmatpush.msra.mxu0 0.0
    %4603 = vmatpush.msra.mxu0 0.0
    %4604 = vmatpush.msra.mxu0 0.0
    %4605 = vmatpush.msra.mxu0 0.0
    %4606 = vmatpush.msra.mxu0 0.0
    %4607 = vmatpush.msra.mxu0 0.0
    %4608 = vmatpush.msra.mxu0 0.0
    %4609 = vmatpush.msra.mxu0 %v4488
    %4610 = vmatmul.f32.gmra.mxu0 %v4592
    %v4611 = vpop.f32.mrf.mxu0
    %v4612 = vadd.f32 0.0, %v4611
    %4613 = vdwg.mxu0
    %s4614 = scalar_lea.vmem %s5, 112
    %v4615 = vld [vmem:[%s4614] sm:$0xff]
    %v4617 = vsel %vm211, %v4589, 0
    %v4620 = vsel %vm211, %v4612, 0
    %4622 = vmatpush.msra.mxu0 0.0
    %4623 = vmatpush.msra.mxu0 0.0
    %4624 = vmatpush.msra.mxu0 0.0
    %4625 = vmatpush.msra.mxu0 0.0
    %4626 = vmatpush.msra.mxu0 0.0
    %4627 = vmatpush.msra.mxu0 0.0
    %4628 = vmatpush.msra.mxu0 0.0
    %4629 = vmatpush.msra.mxu0 0.0
    %4630 = vmatpush.msra.mxu0 0.0
    %4631 = vmatpush.msra.mxu0 0.0
    %4632 = vmatpush.msra.mxu0 0.0
    %4633 = vmatpush.msra.mxu0 0.0
    %4634 = vmatpush.msra.mxu0 0.0
    %4635 = vmatpush.msra.mxu0 0.0
    %4636 = vmatpush.msra.mxu0 0.0
    %4637 = vmatpush.msra.mxu0 %v4615
    %4638 = vmatmul.f32.gmra.mxu0 %v4617
    %v4639 = vpop.f32.mrf.mxu0
    %v4640 = vadd.f32 0.0, %v4639
    %4641 = vmatmul.f32.gmra.mxu0 %v4620
    %v4642 = vpop.f32.mrf.mxu0
    %v4643 = vadd.f32 0.0, %v4642
    %4644 = vdwg.mxu0
    %v4645 = vadd.f32 %v4386, %v4640
    %v4646 = vadd.f32 %v4389, %v4643
    %s4647 = scalar_lea.vmem %s3, 1248
    %v4648 = vld [vmem:[%s4647] sm:$0xff]
    %v4649 = vld [vmem:[%s4647 + $0x8] sm:$0xff]
    %v4650 = vld [vmem:[%s4647 + $0x10] sm:$0xff]
    %v4651 = vld [vmem:[%s4647 + $0x18] sm:$0xff]
    %s4652 = scalar_lea.vmem %s4, 39
    %v4653 = vld [vmem:[%s4652] sm:$0x1]
    %v4655 = vperm.slane %v4653, 0
    %4657 = vmatpush.msra.mxu0 0.0
    %4658 = vmatpush.msra.mxu0 0.0
    %4659 = vmatpush.msra.mxu0 0.0
    %4660 = vmatpush.msra.mxu0 0.0
    %4661 = vmatpush.msra.mxu0 0.0
    %4662 = vmatpush.msra.mxu0 0.0
    %4663 = vmatpush.msra.mxu0 0.0
    %4664 = vmatpush.msra.mxu0 0.0
    %4665 = vmatpush.msra.mxu0 0.0
    %4666 = vmatpush.msra.mxu0 0.0
    %4667 = vmatpush.msra.mxu0 0.0
    %4668 = vmatpush.msra.mxu0 0.0
    %4669 = vmatpush.msra.mxu0 %v4651
    %4670 = vmatpush.msra.mxu0 %v4650
    %4671 = vmatpush.msra.mxu0 %v4649
    %4672 = vmatpush.msra.mxu0 %v4648
    %4673 = vmatmul.f32.gmra.mxu0 %v3888
    %v4674 = vpop.f32.mrf.mxu0
    %v4675 = vadd.f32 %v4655, %v4674
    %4676 = vmatmul.f32.gmra.mxu0 %v3891
    %v4677 = vpop.f32.mrf.mxu0
    %v4678 = vadd.f32 %v4655, %v4677
    %4679 = vdwg.mxu0
    %s4680 = scalar_lea.vmem %s3, 1376
    %v4681 = vld [vmem:[%s4680] sm:$0xff]
    %v4682 = vld [vmem:[%s4680 + $0x8] sm:$0xff]
    %v4683 = vld [vmem:[%s4680 + $0x10] sm:$0xff]
    %v4684 = vld [vmem:[%s4680 + $0x18] sm:$0xff]
    %s4685 = scalar_lea.vmem %s4, 43
    %v4686 = vld [vmem:[%s4685] sm:$0x1]
    %v4688 = vperm.slane %v4686, 0
    %4690 = vmatpush.msra.mxu0 0.0
    %4691 = vmatpush.msra.mxu0 0.0
    %4692 = vmatpush.msra.mxu0 0.0
    %4693 = vmatpush.msra.mxu0 0.0
    %4694 = vmatpush.msra.mxu0 0.0
    %4695 = vmatpush.msra.mxu0 0.0
    %4696 = vmatpush.msra.mxu0 0.0
    %4697 = vmatpush.msra.mxu0 0.0
    %4698 = vmatpush.msra.mxu0 0.0
    %4699 = vmatpush.msra.mxu0 0.0
    %4700 = vmatpush.msra.mxu0 0.0
    %4701 = vmatpush.msra.mxu0 0.0
    %4702 = vmatpush.msra.mxu0 %v4684
    %4703 = vmatpush.msra.mxu0 %v4683
    %4704 = vmatpush.msra.mxu0 %v4682
    %4705 = vmatpush.msra.mxu0 %v4681
    %4706 = vmatmul.f32.gmra.mxu0 %v3888
    %v4707 = vpop.f32.mrf.mxu0
    %v4708 = vadd.f32 %v4688, %v4707
    %4709 = vmatmul.f32.gmra.mxu0 %v3891
    %v4710 = vpop.f32.mrf.mxu0
    %v4711 = vadd.f32 %v4688, %v4710
    %4712 = vdwg.mxu0
    %s4713 = scalar_lea.vmem %s3, 1504
    %v4714 = vld [vmem:[%s4713] sm:$0xff]
    %v4715 = vld [vmem:[%s4713 + $0x8] sm:$0xff]
    %v4716 = vld [vmem:[%s4713 + $0x10] sm:$0xff]
    %v4717 = vld [vmem:[%s4713 + $0x18] sm:$0xff]
    %s4718 = scalar_lea.vmem %s4, 47
    %v4719 = vld [vmem:[%s4718] sm:$0x1]
    %v4721 = vperm.slane %v4719, 0
    %4723 = vmatpush.msra.mxu0 0.0
    %4724 = vmatpush.msra.mxu0 0.0
    %4725 = vmatpush.msra.mxu0 0.0
    %4726 = vmatpush.msra.mxu0 0.0
    %4727 = vmatpush.msra.mxu0 0.0
    %4728 = vmatpush.msra.mxu0 0.0
    %4729 = vmatpush.msra.mxu0 0.0
    %4730 = vmatpush.msra.mxu0 0.0
    %4731 = vmatpush.msra.mxu0 0.0
    %4732 = vmatpush.msra.mxu0 0.0
    %4733 = vmatpush.msra.mxu0 0.0
    %4734 = vmatpush.msra.mxu0 0.0
    %4735 = vmatpush.msra.mxu0 %v4717
    %4736 = vmatpush.msra.mxu0 %v4716
    %4737 = vmatpush.msra.mxu0 %v4715
    %4738 = vmatpush.msra.mxu0 %v4714
    %4739 = vmatmul.f32.gmra.mxu0 %v3888
    %v4740 = vpop.f32.mrf.mxu0
    %v4741 = vadd.f32 %v4721, %v4740
    %4742 = vmatmul.f32.gmra.mxu0 %v3891
    %v4743 = vpop.f32.mrf.mxu0
    %v4744 = vadd.f32 %v4721, %v4743
    %4745 = vdwg.mxu0
    %v4747 = vsel %vm211, %v4675, 0
    %v4750 = vsel %vm211, %v4708, 0
    %4752 = vmatpush.xpose.msra.mxu0 0.0
    %4753 = vmatpush.xpose.msra.mxu0 0.0
    %4754 = vmatpush.xpose.msra.mxu0 0.0
    %4755 = vmatpush.xpose.msra.mxu0 0.0
    %4756 = vmatpush.xpose.msra.mxu0 0.0
    %4757 = vmatpush.xpose.msra.mxu0 0.0
    %4758 = vmatpush.xpose.msra.mxu0 0.0
    %4759 = vmatpush.xpose.msra.mxu0 0.0
    %4760 = vmatpush.xpose.msra.mxu0 0.0
    %4761 = vmatpush.xpose.msra.mxu0 0.0
    %4762 = vmatpush.xpose.msra.mxu0 0.0
    %4763 = vmatpush.xpose.msra.mxu0 0.0
    %4764 = vmatpush.xpose.msra.mxu0 0.0
    %4765 = vmatpush.xpose.msra.mxu0 0.0
    %4766 = vmatpush.xpose.msra.mxu0 0.0
    %4767 = vmatpush.xpose.msra.mxu0 %v4750
    %4768 = vmatmul.f32.gmra.mxu0 %v4747
    %v4769 = vpop.f32.mrf.mxu0
    %v4770 = vadd.f32 0.0, %v4769
    %4771 = vdwg.mxu0
    %v4773 = vsel %vm211, %v4678, 0
    %v4776 = vsel %vm211, %v4711, 0
    %4778 = vmatpush.xpose.msra.mxu0 0.0
    %4779 = vmatpush.xpose.msra.mxu0 0.0
    %4780 = vmatpush.xpose.msra.mxu0 0.0
    %4781 = vmatpush.xpose.msra.mxu0 0.0
    %4782 = vmatpush.xpose.msra.mxu0 0.0
    %4783 = vmatpush.xpose.msra.mxu0 0.0
    %4784 = vmatpush.xpose.msra.mxu0 0.0
    %4785 = vmatpush.xpose.msra.mxu0 0.0
    %4786 = vmatpush.xpose.msra.mxu0 0.0
    %4787 = vmatpush.xpose.msra.mxu0 0.0
    %4788 = vmatpush.xpose.msra.mxu0 0.0
    %4789 = vmatpush.xpose.msra.mxu0 0.0
    %4790 = vmatpush.xpose.msra.mxu0 0.0
    %4791 = vmatpush.xpose.msra.mxu0 0.0
    %4792 = vmatpush.xpose.msra.mxu0 0.0
    %4793 = vmatpush.xpose.msra.mxu0 %v4776
    %4794 = vmatmul.f32.gmra.mxu0 %v4773
    %v4795 = vpop.f32.mrf.mxu0
    %v4796 = vadd.f32 0.0, %v4795
    %4797 = vdwg.mxu0
    %v4798 = vmul.f32 %v4770, 0.35355338
    %v4799 = vmul.f32 %v4796, 0.35355338
    %v4800 = vadd.f32 %v4798, %v266
    %v4801 = vadd.f32 %v4799, %v267
    %v4802 = vsel %vm211, %v4800, -inf
    %4803 = vmax.xlane.f32.xlu0 %v4802
    %v4804 = vpop.xlane.xlu0 %4803
    %v4805 = vsel %vm211, %v4801, -inf
    %4806 = vmax.xlane.f32.xlu0 %v4805
    %v4807 = vpop.xlane.xlu0 %4806
    %v4808 = vsub.f32 %v4800, %v4804
    %v4809 = vsub.f32 %v4801, %v4807
    %v4810 = vmul.f32 %v4808, 1.442695
    %v4811 = vpow.pop %v4810
    %v4812 = vmul.f32 %v4809, 1.442695
    %v4813 = vpow.pop %v4812
    %v4814 = vsel %vm211, %v4811, 0.0
    %4815 = vadd.xlane.f32.xlu0 %v4814
    %v4816 = vpop.xlane.xlu0 %4815
    %v4817 = vsel %vm211, %v4813, 0.0
    %4818 = vadd.xlane.f32.xlu0 %v4817
    %v4819 = vpop.xlane.xlu0 %4818
    %v4820 = vrcp.pop %v4816
    %v4821 = vrcp.pop %v4819
    %v4822 = vmul.f32 %v4811, %v4820
    %v4823 = vmul.f32 %v4813, %v4821
    %v4825 = vsel %vm211, %v4822, 0
    %4827 = vmatpush.msra.mxu0 0.0
    %4828 = vmatpush.msra.mxu0 0.0
    %4829 = vmatpush.msra.mxu0 0.0
    %4830 = vmatpush.msra.mxu0 0.0
    %4831 = vmatpush.msra.mxu0 0.0
    %4832 = vmatpush.msra.mxu0 0.0
    %4833 = vmatpush.msra.mxu0 0.0
    %4834 = vmatpush.msra.mxu0 0.0
    %4835 = vmatpush.msra.mxu0 0.0
    %4836 = vmatpush.msra.mxu0 0.0
    %4837 = vmatpush.msra.mxu0 0.0
    %4838 = vmatpush.msra.mxu0 0.0
    %4839 = vmatpush.msra.mxu0 0.0
    %4840 = vmatpush.msra.mxu0 0.0
    %4841 = vmatpush.msra.mxu0 0.0
    %4842 = vmatpush.msra.mxu0 %v4741
    %4843 = vmatmul.f32.gmra.mxu0 %v4825
    %v4844 = vpop.f32.mrf.mxu0
    %v4845 = vadd.f32 0.0, %v4844
    %4846 = vdwg.mxu0
    %v4848 = vsel %vm211, %v4823, 0
    %4850 = vmatpush.msra.mxu0 0.0
    %4851 = vmatpush.msra.mxu0 0.0
    %4852 = vmatpush.msra.mxu0 0.0
    %4853 = vmatpush.msra.mxu0 0.0
    %4854 = vmatpush.msra.mxu0 0.0
    %4855 = vmatpush.msra.mxu0 0.0
    %4856 = vmatpush.msra.mxu0 0.0
    %4857 = vmatpush.msra.mxu0 0.0
    %4858 = vmatpush.msra.mxu0 0.0
    %4859 = vmatpush.msra.mxu0 0.0
    %4860 = vmatpush.msra.mxu0 0.0
    %4861 = vmatpush.msra.mxu0 0.0
    %4862 = vmatpush.msra.mxu0 0.0
    %4863 = vmatpush.msra.mxu0 0.0
    %4864 = vmatpush.msra.mxu0 0.0
    %4865 = vmatpush.msra.mxu0 %v4744
    %4866 = vmatmul.f32.gmra.mxu0 %v4848
    %v4867 = vpop.f32.mrf.mxu0
    %v4868 = vadd.f32 0.0, %v4867
    %4869 = vdwg.mxu0
    %s4870 = scalar_lea.vmem %s5, 120
    %v4871 = vld [vmem:[%s4870] sm:$0xff]
    %v4873 = vsel %vm211, %v4845, 0
    %v4876 = vsel %vm211, %v4868, 0
    %4878 = vmatpush.msra.mxu0 0.0
    %4879 = vmatpush.msra.mxu0 0.0
    %4880 = vmatpush.msra.mxu0 0.0
    %4881 = vmatpush.msra.mxu0 0.0
    %4882 = vmatpush.msra.mxu0 0.0
    %4883 = vmatpush.msra.mxu0 0.0
    %4884 = vmatpush.msra.mxu0 0.0
    %4885 = vmatpush.msra.mxu0 0.0
    %4886 = vmatpush.msra.mxu0 0.0
    %4887 = vmatpush.msra.mxu0 0.0
    %4888 = vmatpush.msra.mxu0 0.0
    %4889 = vmatpush.msra.mxu0 0.0
    %4890 = vmatpush.msra.mxu0 0.0
    %4891 = vmatpush.msra.mxu0 0.0
    %4892 = vmatpush.msra.mxu0 0.0
    %4893 = vmatpush.msra.mxu0 %v4871
    %4894 = vmatmul.f32.gmra.mxu0 %v4873
    %v4895 = vpop.f32.mrf.mxu0
    %v4896 = vadd.f32 0.0, %v4895
    %4897 = vmatmul.f32.gmra.mxu0 %v4876
    %v4898 = vpop.f32.mrf.mxu0
    %v4899 = vadd.f32 0.0, %v4898
    %4900 = vdwg.mxu0
    %v4901 = vadd.f32 %v4645, %v4896
    %v4902 = vadd.f32 %v4646, %v4899
    %s4903 = scalar_lea.vmem %s6, 18
    %v4904 = vld [vmem:[%s4903] sm:$0x1]
    %v4906 = vperm.slane %v4904, 0
    %v4908 = vadd.f32 %v4901, %v4906
    %v4909 = vadd.f32 %v4902, %v4906
    %v4910 = vadd.f32 %v4908, %v3873
    %v4911 = vadd.f32 %v4909, %v3874
    %s4912 = scalar_lea.vmem %s6, 19
    %v4913 = vld [vmem:[%s4912] sm:$0x1]
    %s4914 = scalar_lea.vmem %s6, 20
    %v4915 = vld [vmem:[%s4914] sm:$0x1]
    %v4916 = vsel %vm41, %v4910, 0.0
    %4917 = vadd.xlane.f32.xlu0 %v4916
    %v4918 = vpop.xlane.xlu0 %4917
    %v4919 = vsel %vm41, %v4911, 0.0
    %4920 = vadd.xlane.f32.xlu0 %v4919
    %v4921 = vpop.xlane.xlu0 %4920
    %v4922 = vmul.f32 %v4918, %v54
    %v4923 = vmul.f32 %v4921, %v54
    %v4924 = vsub.f32 %v4910, %v4922
    %v4925 = vsub.f32 %v4911, %v4923
    %v4926 = vmul.f32 %v4924, %v4924
    %v4927 = vmul.f32 %v4925, %v4925
    %v4928 = vsel %vm41, %v4926, 0.0
    %4929 = vadd.xlane.f32.xlu0 %v4928
    %v4930 = vpop.xlane.xlu0 %4929
    %v4931 = vsel %vm41, %v4927, 0.0
    %4932 = vadd.xlane.f32.xlu0 %v4931
    %v4933 = vpop.xlane.xlu0 %4932
    %v4934 = vmul.f32 %v4930, %v54
    %v4935 = vmul.f32 %v4933, %v54
    %v4936 = vadd.f32 %v4934, 1e-05
    %v4937 = vadd.f32 %v4935, 1e-05
    %v4938 = vrsqrt.pop %v4936
    %v4939 = vmul.f32 %v4938, %v4936
    %v4940 = vmul.f32 %v4939, %v4938
    %v4941 = vmul.f32 0.5, %v4940
    %v4942 = vsub.f32 1.5, %v4941
    %v4943 = vmul.f32 %v4938, %v4942
    %vm4944 = vweird.f32 %v4936
    %vm4945 = vweird.f32 %v4938
    %vm4946 = vmor %vm4944, %vm4945
    %v4947 = vsel %vm4946, %v4938, %v4943
    %v4948 = vrsqrt.pop %v4937
    %v4949 = vmul.f32 %v4948, %v4937
    %v4950 = vmul.f32 %v4949, %v4948
    %v4951 = vmul.f32 0.5, %v4950
    %v4952 = vsub.f32 1.5, %v4951
    %v4953 = vmul.f32 %v4948, %v4952
    %vm4954 = vweird.f32 %v4937
    %vm4955 = vweird.f32 %v4948
    %vm4956 = vmor %vm4954, %vm4955
    %v4957 = vsel %vm4956, %v4948, %v4953
    %v4958 = vmul.f32 %v4924, %v4947
    %v4959 = vmul.f32 %v4925, %v4957
    %v4961 = vperm.slane %v4913, 0
    %v4963 = vmul.f32 %v4958, %v4961
    %v4964 = vmul.f32 %v4959, %v4961
    %v4966 = vperm.slane %v4915, 0
    %v4968 = vadd.f32 %v4963, %v4966
    %v4969 = vadd.f32 %v4964, %v4966
    %s4970 = scalar_lea.vmem %s7, 96
    %v4971 = vld [vmem:[%s4970] sm:$0xff]
    %v4972 = vld [vmem:[%s4970 + $0x8] sm:$0xff]
    %v4973 = vld [vmem:[%s4970 + $0x10] sm:$0xff]
    %v4974 = vld [vmem:[%s4970 + $0x18] sm:$0xff]
    %s4975 = scalar_lea.vmem %s8, 3
    %v4976 = vld [vmem:[%s4975] sm:$0x1]
    %v4978 = vperm.slane %v4976, 0
    %v4981 = vsel %vm41, %v4968, 0
    %v4984 = vsel %vm41, %v4969, 0
    %4986 = vmatpush.msra.mxu0 0.0
    %4987 = vmatpush.msra.mxu0 0.0
    %4988 = vmatpush.msra.mxu0 0.0
    %4989 = vmatpush.msra.mxu0 0.0
    %4990 = vmatpush.msra.mxu0 0.0
    %4991 = vmatpush.msra.mxu0 0.0
    %4992 = vmatpush.msra.mxu0 0.0
    %4993 = vmatpush.msra.mxu0 0.0
    %4994 = vmatpush.msra.mxu0 0.0
    %4995 = vmatpush.msra.mxu0 0.0
    %4996 = vmatpush.msra.mxu0 0.0
    %4997 = vmatpush.msra.mxu0 0.0
    %4998 = vmatpush.msra.mxu0 %v4974
    %4999 = vmatpush.msra.mxu0 %v4973
    %5000 = vmatpush.msra.mxu0 %v4972
    %5001 = vmatpush.msra.mxu0 %v4971
    %5002 = vmatmul.f32.gmra.mxu0 %v4981
    %v5003 = vpop.f32.mrf.mxu0
    %v5004 = vadd.f32 %v4978, %v5003
    %5005 = vmatmul.f32.gmra.mxu0 %v4984
    %v5006 = vpop.f32.mrf.mxu0
    %v5007 = vadd.f32 %v4978, %v5006
    %5008 = vdwg.mxu0
    %v5009 = vmul.f32 %v5004, %v5004
    %v5010 = vmul.f32 %v5007, %v5007
    %v5011 = vmul.f32 %v5004, %v5009
    %v5012 = vmul.f32 %v5007, %v5010
    %v5013 = vmul.f32 %v5011, 0.044715
    %v5014 = vmul.f32 %v5012, 0.044715
    %v5015 = vadd.f32 %v5004, %v5013
    %v5016 = vadd.f32 %v5007, %v5014
    %v5017 = vmul.f32 %v5015, 0.7978846
    %v5018 = vmul.f32 %v5016, 0.7978846
    %v5019 = vtanh.pop %v5017
    %v5020 = vtanh.pop %v5018
    %v5021 = vadd.f32 %v5019, 1.0
    %v5022 = vadd.f32 %v5020, 1.0
    %v5023 = vmul.f32 %v5021, 0.5
    %v5024 = vmul.f32 %v5022, 0.5
    %v5025 = vmul.f32 %v5004, %v5023
    %v5026 = vmul.f32 %v5007, %v5024
    %s5027 = scalar_lea.vmem %s9, 384
    %v5028 = vld [vmem:[%s5027] sm:$0xff]
    %v5029 = vld [vmem:[%s5027 + $0x8] sm:$0xff]
    %v5030 = vld [vmem:[%s5027 + $0x10] sm:$0xff]
    %v5031 = vld [vmem:[%s5027 + $0x18] sm:$0xff]
    %v5032 = vld [vmem:[%s5027 + $0x20] sm:$0xff]
    %v5033 = vld [vmem:[%s5027 + $0x28] sm:$0xff]
    %v5034 = vld [vmem:[%s5027 + $0x30] sm:$0xff]
    %v5035 = vld [vmem:[%s5027 + $0x38] sm:$0xff]
    %v5036 = vld [vmem:[%s5027 + $0x40] sm:$0xff]
    %v5037 = vld [vmem:[%s5027 + $0x48] sm:$0xff]
    %v5038 = vld [vmem:[%s5027 + $0x50] sm:$0xff]
    %v5039 = vld [vmem:[%s5027 + $0x58] sm:$0xff]
    %v5040 = vld [vmem:[%s5027 + $0x60] sm:$0xff]
    %v5041 = vld [vmem:[%s5027 + $0x68] sm:$0xff]
    %v5042 = vld [vmem:[%s5027 + $0x70] sm:$0xff]
    %v5043 = vld [vmem:[%s5027 + $0x78] sm:$0xff]
    %s5044 = scalar_lea.vmem %s6, 21
    %v5045 = vld [vmem:[%s5044] sm:$0x1]
    %v5047 = vperm.slane %v5045, 0
    %5049 = vmatpush.msra.mxu0 %v5043
    %5050 = vmatpush.msra.mxu0 %v5042
    %5051 = vmatpush.msra.mxu0 %v5041
    %5052 = vmatpush.msra.mxu0 %v5040
    %5053 = vmatpush.msra.mxu0 %v5039
    %5054 = vmatpush.msra.mxu0 %v5038
    %5055 = vmatpush.msra.mxu0 %v5037
    %5056 = vmatpush.msra.mxu0 %v5036
    %5057 = vmatpush.msra.mxu0 %v5035
    %5058 = vmatpush.msra.mxu0 %v5034
    %5059 = vmatpush.msra.mxu0 %v5033
    %5060 = vmatpush.msra.mxu0 %v5032
    %5061 = vmatpush.msra.mxu0 %v5031
    %5062 = vmatpush.msra.mxu0 %v5030
    %5063 = vmatpush.msra.mxu0 %v5029
    %5064 = vmatpush.msra.mxu0 %v5028
    %5065 = vmatmul.f32.gmra.mxu0 %v5025
    %v5066 = vpop.f32.mrf.mxu0
    %v5067 = vadd.f32 %v5047, %v5066
    %5068 = vmatmul.f32.gmra.mxu0 %v5026
    %v5069 = vpop.f32.mrf.mxu0
    %v5070 = vadd.f32 %v5047, %v5069
    %5071 = vdwg.mxu0
    %v5072 = vadd.f32 %v5067, %v4968
    %v5073 = vadd.f32 %v5070, %v4969
    %s5074 = scalar_lea.vmem %s6, 22
    %v5075 = vld [vmem:[%s5074] sm:$0x1]
    %s5076 = scalar_lea.vmem %s6, 23
    %v5077 = vld [vmem:[%s5076] sm:$0x1]
    %v5078 = vsel %vm41, %v5072, 0.0
    %5079 = vadd.xlane.f32.xlu0 %v5078
    %v5080 = vpop.xlane.xlu0 %5079
    %v5081 = vsel %vm41, %v5073, 0.0
    %5082 = vadd.xlane.f32.xlu0 %v5081
    %v5083 = vpop.xlane.xlu0 %5082
    %v5084 = vmul.f32 %v5080, %v54
    %v5085 = vmul.f32 %v5083, %v54
    %v5086 = vsub.f32 %v5072, %v5084
    %v5087 = vsub.f32 %v5073, %v5085
    %v5088 = vmul.f32 %v5086, %v5086
    %v5089 = vmul.f32 %v5087, %v5087
    %v5090 = vsel %vm41, %v5088, 0.0
    %5091 = vadd.xlane.f32.xlu0 %v5090
    %v5092 = vpop.xlane.xlu0 %5091
    %v5093 = vsel %vm41, %v5089, 0.0
    %5094 = vadd.xlane.f32.xlu0 %v5093
    %v5095 = vpop.xlane.xlu0 %5094
    %v5096 = vmul.f32 %v5092, %v54
    %v5097 = vmul.f32 %v5095, %v54
    %v5098 = vadd.f32 %v5096, 1e-05
    %v5099 = vadd.f32 %v5097, 1e-05
    %v5100 = vrsqrt.pop %v5098
    %v5101 = vmul.f32 %v5100, %v5098
    %v5102 = vmul.f32 %v5101, %v5100
    %v5103 = vmul.f32 0.5, %v5102
    %v5104 = vsub.f32 1.5, %v5103
    %v5105 = vmul.f32 %v5100, %v5104
    %vm5106 = vweird.f32 %v5098
    %vm5107 = vweird.f32 %v5100
    %vm5108 = vmor %vm5106, %vm5107
    %v5109 = vsel %vm5108, %v5100, %v5105
    %v5110 = vrsqrt.pop %v5099
    %v5111 = vmul.f32 %v5110, %v5099
    %v5112 = vmul.f32 %v5111, %v5110
    %v5113 = vmul.f32 0.5, %v5112
    %v5114 = vsub.f32 1.5, %v5113
    %v5115 = vmul.f32 %v5110, %v5114
    %vm5116 = vweird.f32 %v5099
    %vm5117 = vweird.f32 %v5110
    %vm5118 = vmor %vm5116, %vm5117
    %v5119 = vsel %vm5118, %v5110, %v5115
    %v5120 = vmul.f32 %v5086, %v5109
    %v5121 = vmul.f32 %v5087, %v5119
    %v5123 = vperm.slane %v5075, 0
    %v5125 = vmul.f32 %v5120, %v5123
    %v5126 = vmul.f32 %v5121, %v5123
    %v5128 = vperm.slane %v5077, 0
    %v5130 = vadd.f32 %v5125, %v5128
    %v5131 = vadd.f32 %v5126, %v5128
    %v5132 = vadd.f32 %v3875, %v5130
    %v5133 = vadd.f32 %v3876, %v5131
    %5134 = vst.msk [vmem:[#allocation2] sm:$0xff] %vm41, %v5132
    %5135 = vst.msk [vmem:[#allocation2 + $0x8] sm:$0xff] %vm41, %v5133
    // Predicated region
    $region42: #{comparison_sentence_words_embeddings.1} parent=1 // pred_check
      _
    $region43: #{comparison_sentence_words_embeddings.1} parent=1 // pred_check_branch
      %5137 = sbr.rel (0) target = $region45
    $region44: #{comparison_sentence_words_embeddings.1} parent=1 // pred_region
      %5139 = vsyncadd [#allocation3], 0
      %s5140 = sshll.u32 [#allocation2], 4
      %s5141 = int_to_ptr.vmem [resolvable:$true] %s5140
      %s5142 = sshll.u32 %s10, 4
      %s5143 = int_to_ptr.hbm [resolvable:$true] %s5142
      %5148 = dma.vmem_to_hbm [thread:$0]  %s5141, 256, %s5143, [#allocation3], 128, 128, 8
    $region45: #{comparison_sentence_words_embeddings.1} parent=1 // pred_fallthru
      _
    // Predicated region
    $region46: #{comparison_sentence_words_embeddings.1} parent=1 // pred_check
      _
    $region47: #{comparison_sentence_words_embeddings.1} parent=1 // pred_check_branch
      %5150 = sbr.rel (0) target = $region49
    $region48: #{comparison_sentence_words_embeddings.1} parent=1 // pred_region
      %5152 = dma.done [#allocation3], 256
    $region49: #{comparison_sentence_words_embeddings.1} parent=1 // pred_fallthru
      _
    %5153 = vsyncpa [#allocation3], 1

</llo_original>
